<compile_context>
chip_gen: v7x
topology: tpu7x:2x2x1
jax: 0.10.0
libtpu: 0.0.40
codegen_flags: <defaults>
</compile_context>

<pallas_src>
import jax
import jax.numpy as jnp
from jax import lax
from jax.experimental import pallas as pl
from jax.experimental.pallas import tpu as pltpu

VMEM_SPEC = pl.BlockSpec(memory_space=pltpu.MemorySpace.VMEM)


def _pick_tile(dim, prefs):
    for p in prefs:
        if dim >= p and dim % p == 0:
            return p
    return dim


# --------------------------- tiled linear (MXU) ----------------------------

def _matmul_bias_kernel(x_ref, w_ref, b_ref, o_ref, acc_ref):
    @pl.when(pl.program_id(2) == 0)
    def _():
        acc_ref[...] = jnp.zeros_like(acc_ref)

    acc_ref[...] += jnp.dot(x_ref[...], w_ref[...],
                            preferred_element_type=jnp.float32)

    @pl.when(pl.program_id(2) == pl.num_programs(2) - 1)
    def _():
        o_ref[...] = acc_ref[...] + b_ref[...]


def pallas_linear(x2d, w, b):
    """y = x2d @ w + b, tiled over (M, N, K) with a VMEM f32 accumulator."""
    M, K = x2d.shape
    K2, N = w.shape
    assert K == K2
    tm = _pick_tile(M, (256, 128, 64, 32, 16, 8))
    tn = _pick_tile(N, (256, 128))
    tk = _pick_tile(K, (512, 256, 128))
    return pl.pallas_call(
        _matmul_bias_kernel,
        out_shape=jax.ShapeDtypeStruct((M, N), jnp.float32),
        grid_spec=pltpu.PrefetchScalarGridSpec(
            num_scalar_prefetch=0,
            grid=(M // tm, N // tn, K // tk),
            in_specs=[
                pl.BlockSpec((tm, tk), lambda i, j, k: (i, k)),
                pl.BlockSpec((tk, tn), lambda i, j, k: (k, j)),
                pl.BlockSpec((1, tn), lambda i, j, k: (0, j)),
            ],
            out_specs=pl.BlockSpec((tm, tn), lambda i, j, k: (i, j)),
            scratch_shapes=[pltpu.VMEM((tm, tn), jnp.float32)],
        ),
        compiler_params=pltpu.CompilerParams(
            dimension_semantics=("parallel", "parallel", "arbitrary")),
    )(x2d.astype(jnp.float32), w.astype(jnp.float32),
      b.reshape(1, N).astype(jnp.float32))


# ------------------------ GRU encoder (recurrence only) ---------------------

def _gru_encoder_kernel(gi_ref, whh_ref, bhh_ref, o_ref):
    # gi_ref : (T, B, 3H) precomputed x@Wih + bih (time-major)
    # o_ref  : (T, B, H)
    T, B, G = gi_ref.shape
    H = whh_ref.shape[0]
    whh = whh_ref[...]
    bhh = jnp.broadcast_to(bhh_ref[...], (B, G))          # hoisted, loop-invariant

    def step(t, h):
        gi = gi_ref[t]                                    # (B, 3H), lane-aligned gates
        gh = jnp.dot(h, whh, preferred_element_type=jnp.float32) + bhh
        r = jax.nn.sigmoid(gi[:, :H] + gh[:, :H])
        z = jax.nn.sigmoid(gi[:, H:2 * H] + gh[:, H:2 * H])
        n = jnp.tanh(gi[:, 2 * H:] + r * gh[:, 2 * H:])
        h_new = (1.0 - z) * n + z * h
        o_ref[t] = h_new
        return h_new

    lax.fori_loop(0, T, step, jnp.zeros((B, H), jnp.float32))


def pallas_gru_encoder(gi_tbg, whh, bhh):
    # TODO(synk): for v7x (2 TCs) a leading "parallel" batch grid axis would let
    # each core take half the batch; B=8 here is too small to split cleanly.
    T, B, _ = gi_tbg.shape
    H = whh.shape[0]
    return pl.pallas_call(
        _gru_encoder_kernel,
        out_shape=jax.ShapeDtypeStruct((T, B, H), jnp.float32),
        in_specs=[VMEM_SPEC] * 3,
        out_specs=VMEM_SPEC,
    )(gi_tbg, whh, bhh.reshape(1, -1))


# ---------------- GRU decoder with masked dot attention ---------------------

def _gru_attn_decoder_kernel(gi_ref, value_ref, mask_ref, state0_ref,
                             whh_ref, bhh_ref, wcs_ref, wcc_ref, bc_ref,
                             o_ref):
    # gi_ref    : (Td, B, 3H) precomputed emb@Wih + bih (time-major)
    # value_ref : (B, N, H)   encoder values
    # mask_ref  : (B, N)      float encoder mask
    # state0_ref: (B, H)
    # o_ref     : (Td, B, H)
    Td, B, G = gi_ref.shape
    H = whh_ref.shape[0]

    # loop-invariant loads / broadcasts hoisted out of the time loop
    value = value_ref[...]                                # (B, N, H)
    N = value.shape[1]
    mvalid = mask_ref[...] > 0.0
    mvalid_f = mvalid.astype(jnp.float32)
    neg = jnp.full((B, N), -1e30, jnp.float32)
    whh = whh_ref[...]
    bhh = jnp.broadcast_to(bhh_ref[...], (B, G))
    wcs = wcs_ref[...]
    wcc = wcc_ref[...]
    bc = jnp.broadcast_to(bc_ref[...], (B, H))

    def step(t, s):
        gi = gi_ref[t]                                    # (B, 3H)
        gh = jnp.dot(s, whh, preferred_element_type=jnp.float32) + bhh
        r = jax.nn.sigmoid(gi[:, :H] + gh[:, :H])
        z = jax.nn.sigmoid(gi[:, H:2 * H] + gh[:, H:2 * H])
        n = jnp.tanh(gi[:, 2 * H:] + r * gh[:, 2 * H:])
        s_new = (1.0 - z) * n + z * s                     # (B, H)

        # masked dot attention; both contractions via batched dot_general (MXU)
        scores = jnp.einsum('bqh,bnh->bqn', s_new[:, None, :], value,
                            preferred_element_type=jnp.float32)[:, 0, :]   # (B,N)
        scores = jnp.where(mvalid, scores, neg)
        scores = scores - jnp.max(scores, axis=-1, keepdims=True)
        p = jnp.exp(scores) * mvalid_f
        attn = p * pl.reciprocal(jnp.sum(p, axis=-1, keepdims=True) + 1e-13,
                                 approx=True)
        ctx = jnp.einsum('bqn,bnh->bqh', attn[:, None, :], value,
                         preferred_element_type=jnp.float32)[:, 0, :]      # (B,H)

        # split-Wc projection (no lane-axis concat inside the loop)
        out = jnp.tanh(jnp.dot(s_new, wcs, preferred_element_type=jnp.float32)
                       + jnp.dot(ctx, wcc, preferred_element_type=jnp.float32)
                       + bc)
        o_ref[t] = out
        return s_new

    lax.fori_loop(0, Td, step, state0_ref[...])


def pallas_attn_decoder(gi_tbg, value, mask_f32, state0, params):
    Td, B, _ = gi_tbg.shape
    H = params["dec_whh"].shape[0]
    return pl.pallas_call(
        _gru_attn_decoder_kernel,
        out_shape=jax.ShapeDtypeStruct((Td, B, H), jnp.float32),
        in_specs=[VMEM_SPEC] * 9,
        out_specs=VMEM_SPEC,
    )(gi_tbg, value, mask_f32, state0,
      params["dec_whh"], params["dec_bhh"].reshape(1, -1),
      params["dec_wcs"], params["dec_wcc"], params["dec_bc"].reshape(1, -1))


# -------- masked sequence cross entropy (tiled over rows and vocab) ---------

def _seq_ce_nll_kernel(logits_ref, tgt_ref, w_ref, o_ref, m_ref, l_ref, t_ref):
    # Per row: running logsumexp + running target logit over vocab tiles.
    # Emits weighted NLL per row; no logp / one-hot temporaries materialized.
    j = pl.program_id(1)

    @pl.when(j == 0)
    def _():
        m_ref[...] = jnp.full_like(m_ref, -1e30)
        l_ref[...] = jnp.zeros_like(l_ref)
        t_ref[...] = jnp.zeros_like(t_ref)

    logits = logits_ref[...]                               # (tm, tv)
    tv = logits.shape[1]
    col = lax.broadcasted_iota(jnp.int32, logits.shape, 1) + j * tv
    t_ref[...] += jnp.sum(jnp.where(col == tgt_ref[...], logits, 0.0),
                          axis=-1, keepdims=True)

    m_old = m_ref[...]
    m_new = jnp.maximum(m_old, jnp.max(logits, axis=-1, keepdims=True))
    l_ref[...] = (l_ref[...] * jnp.exp(m_old - m_new)
                  + jnp.sum(jnp.exp(logits - m_new), axis=-1, keepdims=True))
    m_ref[...] = m_new

    @pl.when(j == pl.num_programs(1) - 1)
    def _():
        lse = m_ref[...] + jnp.log(l_ref[...])
        o_ref[...] = (lse - t_ref[...]) * w_ref[...]


def pallas_sequence_nll(logits2d, targets_col, scaled_w_col):
    M, V = logits2d.shape
    tm = _pick_tile(M, (256, 128, 64, 32, 16, 8))
    tv = _pick_tile(V, (512, 256, 128))
    return pl.pallas_call(
        _seq_ce_nll_kernel,
        out_shape=jax.ShapeDtypeStruct((M, 1), jnp.float32),
        grid_spec=pltpu.PrefetchScalarGridSpec(
            num_scalar_prefetch=0,
            grid=(M // tm, V // tv),
            in_specs=[
                pl.BlockSpec((tm, tv), lambda i, j: (i, j)),
                pl.BlockSpec((tm, 1), lambda i, j: (i, 0)),
                pl.BlockSpec((tm, 1), lambda i, j: (i, 0)),
            ],
            out_specs=pl.BlockSpec((tm, 1), lambda i, j: (i, 0)),
            scratch_shapes=[pltpu.VMEM((tm, 1), jnp.float32),
                            pltpu.VMEM((tm, 1), jnp.float32),
                            pltpu.VMEM((tm, 1), jnp.float32)],
        ),
        compiler_params=pltpu.CompilerParams(
            dimension_semantics=("parallel", "arbitrary")),
    )(logits2d, targets_col, scaled_w_col)


# ------------------------------- model glue --------------------------------

def init_params(key, *, vocab_node, vocab_tok, emb_node, emb_tok, hidden):
    ks = jax.random.split(key, 10)
    s = 0.1

    def rn(k, shape):
        return s * jax.random.normal(k, shape, jnp.float32)

    return {
        "node_emb": rn(ks[0], (vocab_node, emb_node)),
        "tok_emb":  rn(ks[1], (vocab_tok, emb_tok)),
        "emb2hid_w": rn(ks[2], (emb_node, hidden)),
        "emb2hid_b": jnp.zeros((hidden,), jnp.float32),
        "enc_wih": rn(ks[3], (hidden, 3 * hidden)),
        "enc_whh": rn(ks[4], (hidden, 3 * hidden)),
        "enc_bih": jnp.zeros((3 * hidden,), jnp.float32),
        "enc_bhh": jnp.zeros((3 * hidden,), jnp.float32),
        "dec_wih": rn(ks[5], (emb_tok, 3 * hidden)),
        "dec_whh": rn(ks[6], (hidden, 3 * hidden)),
        "dec_bih": jnp.zeros((3 * hidden,), jnp.float32),
        "dec_bhh": jnp.zeros((3 * hidden,), jnp.float32),
        "dec_wcs": rn(ks[7], (hidden, hidden)),     # split of concat-Wc: state half
        "dec_wcc": rn(ks[8], (hidden, hidden)),     # split of concat-Wc: context half
        "dec_bc":  jnp.zeros((hidden,), jnp.float32),
        "proj_w":  rn(ks[9], (hidden, vocab_tok)),
        "proj_b":  jnp.zeros((vocab_tok,), jnp.float32),
    }


def get_last_value(value, mask):
    """value: (B, N, H), mask: (B, N) -> value[b, sum(mask[b])-1] (torch.gather)."""
    B = value.shape[0]
    # clamp guards the all-zero-mask row (torch would error on index -1)
    idx = jnp.maximum(jnp.sum(mask, axis=-1) - 1, 0).astype(jnp.int32)
    return value[jnp.arange(B), idx]


def forward(params, nlabel, npos, adjs, relative_pos, node_mask,
            tokens, token_mask, linear_amr, linear_amr_mask, aligns):
    # encoder_type == 'rnn' path of Model.forward.
    # TODO(synk): 'gcn' / 'both' paths require the injected graph encoder,
    # which the reference leaves unspecified; only the 'rnn' path is built.
    del nlabel, npos, adjs, relative_pos, node_mask, aligns

    B, N = linear_amr.shape
    E = params["node_emb"].shape[1]
    H = params["enc_whh"].shape[0]

    # embedding_linear_amr + hoisted encoder input projection (one big matmul
    # over all T*B positions instead of per-step (B,3H) matmuls). IDs are
    # transposed (tiny) so the dense activations are born time-major.
    amr_t = linear_amr.T                                         # (N, B)
    emb_t = jnp.take(params["node_emb"], amr_t, axis=0)          # (N, B, E)
    h2d = pallas_linear(emb_t.reshape(N * B, E),
                        params["emb2hid_w"], params["emb2hid_b"])        # (N*B, H)
    gi_enc = pallas_linear(h2d, params["enc_wih"], params["enc_bih"])    # (N*B, 3H)
    gi_enc_t = gi_enc.reshape(N, B, 3 * H)

    # encode_linear_amr: only the recurrence runs in the sequential kernel
    value_t = pallas_gru_encoder(gi_enc_t, params["enc_whh"], params["enc_bhh"])
    value = jnp.transpose(value_t, (1, 0, 2))                    # (B, N, H) for attention
    state = get_last_value(value, linear_amr_mask)               # (B, H)

    # decode_tokens: hoisted decoder input projection + attentive GRU + projector
    dec_in_t = tokens[:, :-1].T                                  # (Td, B)
    Td = dec_in_t.shape[0]
    demb_t = jnp.take(params["tok_emb"], dec_in_t, axis=0)       # (Td, B, Et)
    Et = demb_t.shape[-1]
    gi_dec = pallas_linear(demb_t.reshape(Td * B, Et),
                           params["dec_wih"], params["dec_bih"])         # (Td*B, 3H)
    gi_dec_t = gi_dec.reshape(Td, B, 3 * H)
    dec_out_t = pallas_attn_decoder(gi_dec_t, value,
                                    linear_amr_mask.astype(jnp.float32),
                                    state, params)               # (Td, B, H)
    logits2d = pallas_linear(dec_out_t.reshape(Td * B, H),
                             params["proj_w"], params["proj_b"])         # (Td*B, V)

    # sequence_cross_entropy_with_logits (average='batch'): fold the
    # per-sequence / per-batch normalization into per-row weights so the loss
    # kernel only accumulates a weighted per-row NLL.
    targets_col = tokens[:, 1:].T.reshape(Td * B, 1).astype(jnp.int32)
    w = token_mask[:, 1:].astype(jnp.float32)                    # (B, Td)
    w_sum = jnp.sum(w, axis=-1)                                  # (B,)
    num_nonempty = jnp.sum((w_sum > 0.0).astype(jnp.float32)) + 1e-13
    scaled_w = w / ((w_sum[:, None] + 1e-13) * num_nonempty)
    scaled_w_col = scaled_w.T.reshape(Td * B, 1)

    nll = pallas_sequence_nll(logits2d, targets_col, scaled_w_col)  # (Td*B, 1)
    return jnp.sum(nll)


# ---------------------------------- main ------------------------------------

if __name__ == "__main__":
    key = jax.random.PRNGKey(0)
    # small but tile-aligned shapes: B=8 sublanes, H/E=128 lanes, V multiple of 128
    B, N, T_TOK = 8, 16, 17
    V_NODE, V_TOK = 256, 1024
    E_NODE, E_TOK, H = 128, 128, 128

    k_par, k1, k2 = jax.random.split(key, 3)
    params = init_params(k_par, vocab_node=V_NODE, vocab_tok=V_TOK,
                         emb_node=E_NODE, emb_tok=E_TOK, hidden=H)

    linear_amr = jax.random.randint(k1, (B, N), 0, V_NODE, dtype=jnp.int32)
    amr_lens = jnp.array([16, 12, 9, 16, 5, 8, 16, 3], dtype=jnp.int32)
    linear_amr_mask = (jnp.arange(N)[None, :] < amr_lens[:, None]).astype(jnp.int32)

    tokens = jax.random.randint(k2, (B, T_TOK), 0, V_TOK, dtype=jnp.int32)
    tok_lens = jnp.array([17, 10, 13, 17, 6, 9, 15, 4], dtype=jnp.int32)
    token_mask = (jnp.arange(T_TOK)[None, :] < tok_lens[:, None]).astype(jnp.int32)

    # Unused graph-side inputs (gcn/both paths) — supplied for signature fidelity.
    nlabel = jnp.zeros((B, N), jnp.int32)
    npos = jnp.zeros((B, N), jnp.int32)
    adjs = jnp.zeros((B, N, N), jnp.float32)
    relative_pos = jnp.zeros((B, N, N), jnp.int32)
    node_mask = linear_amr_mask
    aligns = jnp.zeros((B, N), jnp.int32)

    fwd = jax.jit(forward)
    loss = fwd(params, nlabel, npos, adjs, relative_pos, node_mask,
               tokens, token_mask, linear_amr, linear_amr_mask, aligns)
    loss = jax.block_until_ready(loss)
    assert loss.shape == () and bool(jnp.isfinite(loss)), f"bad loss: {loss}"
    print("KERNEL_OK")
</pallas_src>

<mosaic_0001>
module attributes {stable_mosaic.version = 11 : i64} {
  func.func @_matmul_bias_kernel(%arg0: i32, %arg1: i32, %arg2: i32, %arg3: memref<128x128xf32, #tpu.memory_space<vmem>>, %arg4: memref<128x128xf32, #tpu.memory_space<vmem>>, %arg5: memref<1x128xf32, #tpu.memory_space<vmem>>, %arg6: memref<128x128xf32, #tpu.memory_space<vmem>>, %arg7: memref<128x128xf32, #tpu.memory_space<vmem>>) attributes {dimension_semantics = [#tpu.dimension_semantics<parallel>, #tpu.dimension_semantics<parallel>, #tpu.dimension_semantics<arbitrary>], iteration_bounds = array<i64: 1, 1, 1>, scalar_prefetch = 0 : i64, scratch_operands = 1 : i64, tpu.core_type = #tpu.core_type<tc>, window_params = [{transform_indices = @transform_0, window_bounds = array<i64: 128, 128>}, {transform_indices = @transform_1, window_bounds = array<i64: 128, 128>}, {transform_indices = @transform_2, window_bounds = array<i64: 1, 128>}, {transform_indices = @transform_3, window_bounds = array<i64: 128, 128>}]} {
    %c0_i32 = arith.constant 0 : i32
    %0 = arith.cmpi eq, %arg2, %c0_i32 : i32
    %1 = arith.extui %0 : i1 to i32
    %c0_i32_0 = arith.constant 0 : i32
    %2 = arith.cmpi ne, %1, %c0_i32_0 : i32
    scf.if %2 {
      %cst_10 = arith.constant 0.000000e+00 : f32
      %12 = vector.broadcast %cst_10 : f32 to vector<128x128xf32>
      %c0_11 = arith.constant 0 : index
      %c0_12 = arith.constant 0 : index
      %13 = vector.load %arg7[%c0_11, %c0_12] : memref<128x128xf32, #tpu.memory_space<vmem>>, vector<128x128xf32>
      tpu.vector_store %arg7[%c0_11, %c0_12], %12 {strides = array<i32>} : memref<128x128xf32, #tpu.memory_space<vmem>>, vector<128x128xf32>,
    } else {
    }
    %c0 = arith.constant 0 : index
    %c0_1 = arith.constant 0 : index
    %3 = vector.load %arg7[%c0, %c0_1] : memref<128x128xf32, #tpu.memory_space<vmem>>, vector<128x128xf32>
    %c0_2 = arith.constant 0 : index
    %c0_3 = arith.constant 0 : index
    %4 = vector.load %arg3[%c0_2, %c0_3] : memref<128x128xf32, #tpu.memory_space<vmem>>, vector<128x128xf32>
    %c0_4 = arith.constant 0 : index
    %c0_5 = arith.constant 0 : index
    %5 = vector.load %arg4[%c0_4, %c0_5] : memref<128x128xf32, #tpu.memory_space<vmem>>, vector<128x128xf32>
    %cst = arith.constant dense<0.000000e+00> : vector<128x128xf32>
    %6 = tpu.matmul %4, %5, %cst {dimension_numbers = #tpu.dot_dimension_numbers<[1], [0], [0], [1], [0, 0, 1, 1], [], []>} : vector<128x128xf32>, vector<128x128xf32>, vector<128x128xf32> -> vector<128x128xf32>
    %7 = arith.addf %3, %6 : vector<128x128xf32>
    %c0_6 = arith.constant 0 : index
    %c0_7 = arith.constant 0 : index
    %8 = vector.load %arg7[%c0_6, %c0_7] : memref<128x128xf32, #tpu.memory_space<vmem>>, vector<128x128xf32>
    tpu.vector_store %arg7[%c0_6, %c0_7], %7 {strides = array<i32>} : memref<128x128xf32, #tpu.memory_space<vmem>>, vector<128x128xf32>,
    %c0_i32_8 = arith.constant 0 : i32
    %9 = arith.cmpi eq, %arg2, %c0_i32_8 : i32
    %10 = arith.extui %9 : i1 to i32
    %c0_i32_9 = arith.constant 0 : i32
    %11 = arith.cmpi ne, %10, %c0_i32_9 : i32
    scf.if %11 {
      %c0_10 = arith.constant 0 : index
      %c0_11 = arith.constant 0 : index
      %12 = vector.load %arg7[%c0_10, %c0_11] : memref<128x128xf32, #tpu.memory_space<vmem>>, vector<128x128xf32>
      %c0_12 = arith.constant 0 : index
      %c0_13 = arith.constant 0 : index
      %13 = vector.load %arg5[%c0_12, %c0_13] : memref<1x128xf32, #tpu.memory_space<vmem>>, vector<1x128xf32>
      %14 = vector.broadcast %13 : vector<1x128xf32> to vector<128x128xf32>
      %15 = arith.addf %12, %14 : vector<128x128xf32>
      %c0_14 = arith.constant 0 : index
      %c0_15 = arith.constant 0 : index
      %16 = vector.load %arg6[%c0_14, %c0_15] : memref<128x128xf32, #tpu.memory_space<vmem>>, vector<128x128xf32>
      tpu.vector_store %arg6[%c0_14, %c0_15], %15 {strides = array<i32>} : memref<128x128xf32, #tpu.memory_space<vmem>>, vector<128x128xf32>,
    } else {
    }
    return
  }
  func.func @transform_0(%arg0: i32, %arg1: i32, %arg2: i32) -> (i32, i32) {
    %c0_i32 = arith.constant 0 : i32
    return %arg0, %arg2 : i32, i32
  }
  func.func @transform_1(%arg0: i32, %arg1: i32, %arg2: i32) -> (i32, i32) {
    %c0_i32 = arith.constant 0 : i32
    return %arg2, %arg1 : i32, i32
  }
  func.func @transform_2(%arg0: i32, %arg1: i32, %arg2: i32) -> (i32, i32) {
    %c0_i32 = arith.constant 0 : i32
    %c0_i32_0 = arith.constant 0 : i32
    return %c0_i32, %arg1 : i32, i32
  }
  func.func @transform_3(%arg0: i32, %arg1: i32, %arg2: i32) -> (i32, i32) {
    %c0_i32 = arith.constant 0 : i32
    return %arg0, %arg1 : i32, i32
  }
}

module attributes {stable_mosaic.version = 11 : i64} {
  func.func @_matmul_bias_kernel(%arg0: i32, %arg1: i32, %arg2: i32, %arg3: memref<128x128xf32, #tpu.memory_space<vmem>>, %arg4: memref<128x128xf32, #tpu.memory_space<vmem>>, %arg5: memref<1x128xf32, #tpu.memory_space<vmem>>, %arg6: memref<128x128xf32, #tpu.memory_space<vmem>>, %arg7: memref<128x128xf32, #tpu.memory_space<vmem>>) attributes {dimension_semantics = [#tpu.dimension_semantics<parallel>, #tpu.dimension_semantics<parallel>, #tpu.dimension_semantics<arbitrary>], iteration_bounds = array<i64: 1, 3, 1>, scalar_prefetch = 0 : i64, scratch_operands = 1 : i64, tpu.core_type = #tpu.core_type<tc>, window_params = [{transform_indices = @transform_0, window_bounds = array<i64: 128, 128>}, {transform_indices = @transform_1, window_bounds = array<i64: 128, 128>}, {transform_indices = @transform_2, window_bounds = array<i64: 1, 128>}, {transform_indices = @transform_3, window_bounds = array<i64: 128, 128>}]} {
    %c0_i32 = arith.constant 0 : i32
    %0 = arith.cmpi eq, %arg2, %c0_i32 : i32
    %1 = arith.extui %0 : i1 to i32
    %c0_i32_0 = arith.constant 0 : i32
    %2 = arith.cmpi ne, %1, %c0_i32_0 : i32
    scf.if %2 {
      %cst_10 = arith.constant 0.000000e+00 : f32
      %12 = vector.broadcast %cst_10 : f32 to vector<128x128xf32>
      %c0_11 = arith.constant 0 : index
      %c0_12 = arith.constant 0 : index
      %13 = vector.load %arg7[%c0_11, %c0_12] : memref<128x128xf32, #tpu.memory_space<vmem>>, vector<128x128xf32>
      tpu.vector_store %arg7[%c0_11, %c0_12], %12 {strides = array<i32>} : memref<128x128xf32, #tpu.memory_space<vmem>>, vector<128x128xf32>,
    } else {
    }
    %c0 = arith.constant 0 : index
    %c0_1 = arith.constant 0 : index
    %3 = vector.load %arg7[%c0, %c0_1] : memref<128x128xf32, #tpu.memory_space<vmem>>, vector<128x128xf32>
    %c0_2 = arith.constant 0 : index
    %c0_3 = arith.constant 0 : index
    %4 = vector.load %arg3[%c0_2, %c0_3] : memref<128x128xf32, #tpu.memory_space<vmem>>, vector<128x128xf32>
    %c0_4 = arith.constant 0 : index
    %c0_5 = arith.constant 0 : index
    %5 = vector.load %arg4[%c0_4, %c0_5] : memref<128x128xf32, #tpu.memory_space<vmem>>, vector<128x128xf32>
    %cst = arith.constant dense<0.000000e+00> : vector<128x128xf32>
    %6 = tpu.matmul %4, %5, %cst {dimension_numbers = #tpu.dot_dimension_numbers<[1], [0], [0], [1], [0, 0, 1, 1], [], []>} : vector<128x128xf32>, vector<128x128xf32>, vector<128x128xf32> -> vector<128x128xf32>
    %7 = arith.addf %3, %6 : vector<128x128xf32>
    %c0_6 = arith.constant 0 : index
    %c0_7 = arith.constant 0 : index
    %8 = vector.load %arg7[%c0_6, %c0_7] : memref<128x128xf32, #tpu.memory_space<vmem>>, vector<128x128xf32>
    tpu.vector_store %arg7[%c0_6, %c0_7], %7 {strides = array<i32>} : memref<128x128xf32, #tpu.memory_space<vmem>>, vector<128x128xf32>,
    %c0_i32_8 = arith.constant 0 : i32
    %9 = arith.cmpi eq, %arg2, %c0_i32_8 : i32
    %10 = arith.extui %9 : i1 to i32
    %c0_i32_9 = arith.constant 0 : i32
    %11 = arith.cmpi ne, %10, %c0_i32_9 : i32
    scf.if %11 {
      %c0_10 = arith.constant 0 : index
      %c0_11 = arith.constant 0 : index
      %12 = vector.load %arg7[%c0_10, %c0_11] : memref<128x128xf32, #tpu.memory_space<vmem>>, vector<128x128xf32>
      %c0_12 = arith.constant 0 : index
      %c0_13 = arith.constant 0 : index
      %13 = vector.load %arg5[%c0_12, %c0_13] : memref<1x128xf32, #tpu.memory_space<vmem>>, vector<1x128xf32>
      %14 = vector.broadcast %13 : vector<1x128xf32> to vector<128x128xf32>
      %15 = arith.addf %12, %14 : vector<128x128xf32>
      %c0_14 = arith.constant 0 : index
      %c0_15 = arith.constant 0 : index
      %16 = vector.load %arg6[%c0_14, %c0_15] : memref<128x128xf32, #tpu.memory_space<vmem>>, vector<128x128xf32>
      tpu.vector_store %arg6[%c0_14, %c0_15], %15 {strides = array<i32>} : memref<128x128xf32, #tpu.memory_space<vmem>>, vector<128x128xf32>,
    } else {
    }
    return
  }
  func.func @transform_0(%arg0: i32, %arg1: i32, %arg2: i32) -> (i32, i32) {
    %c0_i32 = arith.constant 0 : i32
    return %arg0, %arg2 : i32, i32
  }
  func.func @transform_1(%arg0: i32, %arg1: i32, %arg2: i32) -> (i32, i32) {
    %c0_i32 = arith.constant 0 : i32
    return %arg2, %arg1 : i32, i32
  }
  func.func @transform_2(%arg0: i32, %arg1: i32, %arg2: i32) -> (i32, i32) {
    %c0_i32 = arith.constant 0 : i32
    %c0_i32_0 = arith.constant 0 : i32
    return %c0_i32, %arg1 : i32, i32
  }
  func.func @transform_3(%arg0: i32, %arg1: i32, %arg2: i32) -> (i32, i32) {
    %c0_i32 = arith.constant 0 : i32
    return %arg0, %arg1 : i32, i32
  }
}

module attributes {stable_mosaic.version = 11 : i64} {
  func.func @_gru_encoder_kernel(%arg0: memref<16x8x384xf32, #tpu.memory_space<vmem>>, %arg1: memref<128x384xf32, #tpu.memory_space<vmem>>, %arg2: memref<1x384xf32, #tpu.memory_space<vmem>>, %arg3: memref<16x8x128xf32, #tpu.memory_space<vmem>>) attributes {dimension_semantics = [], scalar_prefetch = 0 : i64, scratch_operands = 0 : i64, tpu.core_type = #tpu.core_type<tc>} {
    %c0 = arith.constant 0 : index
    %c0_0 = arith.constant 0 : index
    %0 = vector.load %arg1[%c0, %c0_0] : memref<128x384xf32, #tpu.memory_space<vmem>>, vector<128x384xf32>
    %c0_1 = arith.constant 0 : index
    %c0_2 = arith.constant 0 : index
    %1 = vector.load %arg2[%c0_1, %c0_2] : memref<1x384xf32, #tpu.memory_space<vmem>>, vector<1x384xf32>
    %2 = vector.shape_cast %1 : vector<1x384xf32> to vector<1x384xf32>
    %3 = vector.broadcast %2 : vector<1x384xf32> to vector<8x384xf32>
    %cst = arith.constant 0.000000e+00 : f32
    %4 = vector.broadcast %cst : f32 to vector<8x128xf32>
    %c0_i32 = arith.constant 0 : i32
    %c16_i32 = arith.constant 16 : i32
    %5 = arith.addi %c0_i32, %c16_i32 : i32
    %c1_i32 = arith.constant 1 : i32
    %6 = scf.for %arg4 = %c0_i32 to %5 step %c1_i32 iter_args(%arg5 = %4) -> (vector<8x128xf32>)  : i32 {
      %7 = arith.index_cast %arg4 : i32 to index
      %c0_4 = arith.constant 0 : index
      %c0_5 = arith.constant 0 : index
      %8 = vector.load %arg0[%7, %c0_4, %c0_5] : memref<16x8x384xf32, #tpu.memory_space<vmem>>, vector<1x8x384xf32>
      %9 = vector.shape_cast %8 : vector<1x8x384xf32> to vector<8x384xf32>
      %cst_6 = arith.constant dense<0.000000e+00> : vector<8x384xf32>
      %10 = tpu.matmul %arg5, %0, %cst_6 {dimension_numbers = #tpu.dot_dimension_numbers<[1], [0], [0], [1], [0, 0, 1, 1], [], []>} : vector<8x128xf32>, vector<128x384xf32>, vector<8x384xf32> -> vector<8x384xf32>
      %11 = arith.addf %10, %3 : vector<8x384xf32>
      %12 = vector.extract_strided_slice %9 {offsets = [0, 0], sizes = [8, 128], strides = [1, 1]} : vector<8x384xf32> to vector<8x128xf32>
      %13 = vector.extract_strided_slice %11 {offsets = [0, 0], sizes = [8, 128], strides = [1, 1]} : vector<8x384xf32> to vector<8x128xf32>
      %14 = arith.addf %12, %13 : vector<8x128xf32>
      %15 = arith.negf %14 : vector<8x128xf32>
      %16 = math.exp %15 : vector<8x128xf32>
      %cst_7 = arith.constant 1.000000e+00 : f32
      %17 = vector.broadcast %cst_7 : f32 to vector<8x128xf32>
      %18 = arith.addf %17, %16 : vector<8x128xf32>
      %19 = arith.divf %17, %18 : vector<8x128xf32>
      %20 = vector.extract_strided_slice %9 {offsets = [0, 128], sizes = [8, 128], strides = [1, 1]} : vector<8x384xf32> to vector<8x128xf32>
      %21 = vector.extract_strided_slice %11 {offsets = [0, 128], sizes = [8, 128], strides = [1, 1]} : vector<8x384xf32> to vector<8x128xf32>
      %22 = arith.addf %20, %21 : vector<8x128xf32>
      %23 = arith.negf %22 : vector<8x128xf32>
      %24 = math.exp %23 : vector<8x128xf32>
      %cst_8 = arith.constant 1.000000e+00 : f32
      %25 = vector.broadcast %cst_8 : f32 to vector<8x128xf32>
      %26 = arith.addf %25, %24 : vector<8x128xf32>
      %27 = arith.divf %25, %26 : vector<8x128xf32>
      %28 = vector.extract_strided_slice %9 {offsets = [0, 256], sizes = [8, 128], strides = [1, 1]} : vector<8x384xf32> to vector<8x128xf32>
      %29 = vector.extract_strided_slice %11 {offsets = [0, 256], sizes = [8, 128], strides = [1, 1]} : vector<8x384xf32> to vector<8x128xf32>
      %30 = arith.mulf %19, %29 : vector<8x128xf32>
      %31 = arith.addf %28, %30 : vector<8x128xf32>
      %32 = math.tanh %31 : vector<8x128xf32>
      %cst_9 = arith.constant 1.000000e+00 : f32
      %33 = vector.broadcast %cst_9 : f32 to vector<8x128xf32>
      %34 = arith.subf %33, %27 : vector<8x128xf32>
      %35 = arith.mulf %34, %32 : vector<8x128xf32>
      %36 = arith.mulf %27, %arg5 : vector<8x128xf32>
      %37 = arith.addf %35, %36 : vector<8x128xf32>
      %38 = arith.index_cast %arg4 : i32 to index
      %c0_10 = arith.constant 0 : index
      %c0_11 = arith.constant 0 : index
      %39 = vector.load %arg3[%38, %c0_10, %c0_11] : memref<16x8x128xf32, #tpu.memory_space<vmem>>, vector<1x8x128xf32>
      %40 = vector.shape_cast %39 : vector<1x8x128xf32> to vector<8x128xf32>
      %41 = vector.shape_cast %37 : vector<8x128xf32> to vector<1x8x128xf32>
      tpu.vector_store %arg3[%38, %c0_10, %c0_11], %41 {strides = array<i32>} : memref<16x8x128xf32, #tpu.memory_space<vmem>>, vector<1x8x128xf32>,
      scf.yield %37 : vector<8x128xf32>
    }
    %c16_i32_3 = arith.constant 16 : i32
    return
  }
}

module attributes {stable_mosaic.version = 11 : i64} {
  func.func @_gru_attn_decoder_kernel(%arg0: memref<16x8x384xf32, #tpu.memory_space<vmem>>, %arg1: memref<8x16x128xf32, #tpu.memory_space<vmem>>, %arg2: memref<8x16xf32, #tpu.memory_space<vmem>>, %arg3: memref<8x128xf32, #tpu.memory_space<vmem>>, %arg4: memref<128x384xf32, #tpu.memory_space<vmem>>, %arg5: memref<1x384xf32, #tpu.memory_space<vmem>>, %arg6: memref<128x128xf32, #tpu.memory_space<vmem>>, %arg7: memref<128x128xf32, #tpu.memory_space<vmem>>, %arg8: memref<1x128xf32, #tpu.memory_space<vmem>>, %arg9: memref<16x8x128xf32, #tpu.memory_space<vmem>>) attributes {dimension_semantics = [], scalar_prefetch = 0 : i64, scratch_operands = 0 : i64, tpu.core_type = #tpu.core_type<tc>} {
    %c0 = arith.constant 0 : index
    %c0_0 = arith.constant 0 : index
    %c0_1 = arith.constant 0 : index
    %0 = vector.load %arg1[%c0, %c0_0, %c0_1] : memref<8x16x128xf32, #tpu.memory_space<vmem>>, vector<8x16x128xf32>
    %c0_2 = arith.constant 0 : index
    %c0_3 = arith.constant 0 : index
    %1 = vector.load %arg2[%c0_2, %c0_3] : memref<8x16xf32, #tpu.memory_space<vmem>>, vector<8x16xf32>
    %cst = arith.constant 0.000000e+00 : f32
    %2 = vector.broadcast %cst : f32 to vector<8x16xf32>
    %3 = arith.cmpf ogt, %1, %2 : vector<8x16xf32>
    %4 = arith.extui %3 : vector<8x16xi1> to vector<8x16xi32>
    %5 = arith.sitofp %4 : vector<8x16xi32> to vector<8x16xf32>
    %cst_4 = arith.constant -1.000000e+30 : f32
    %6 = vector.broadcast %cst_4 : f32 to vector<8x16xf32>
    %c0_5 = arith.constant 0 : index
    %c0_6 = arith.constant 0 : index
    %7 = vector.load %arg4[%c0_5, %c0_6] : memref<128x384xf32, #tpu.memory_space<vmem>>, vector<128x384xf32>
    %c0_7 = arith.constant 0 : index
    %c0_8 = arith.constant 0 : index
    %8 = vector.load %arg5[%c0_7, %c0_8] : memref<1x384xf32, #tpu.memory_space<vmem>>, vector<1x384xf32>
    %9 = vector.shape_cast %8 : vector<1x384xf32> to vector<1x384xf32>
    %10 = vector.broadcast %9 : vector<1x384xf32> to vector<8x384xf32>
    %c0_9 = arith.constant 0 : index
    %c0_10 = arith.constant 0 : index
    %11 = vector.load %arg6[%c0_9, %c0_10] : memref<128x128xf32, #tpu.memory_space<vmem>>, vector<128x128xf32>
    %c0_11 = arith.constant 0 : index
    %c0_12 = arith.constant 0 : index
    %12 = vector.load %arg7[%c0_11, %c0_12] : memref<128x128xf32, #tpu.memory_space<vmem>>, vector<128x128xf32>
    %c0_13 = arith.constant 0 : index
    %c0_14 = arith.constant 0 : index
    %13 = vector.load %arg8[%c0_13, %c0_14] : memref<1x128xf32, #tpu.memory_space<vmem>>, vector<1x128xf32>
    %14 = vector.shape_cast %13 : vector<1x128xf32> to vector<1x128xf32>
    %15 = vector.broadcast %14 : vector<1x128xf32> to vector<8x128xf32>
    %c0_15 = arith.constant 0 : index
    %c0_16 = arith.constant 0 : index
    %16 = vector.load %arg3[%c0_15, %c0_16] : memref<8x128xf32, #tpu.memory_space<vmem>>, vector<8x128xf32>
    %c0_i32 = arith.constant 0 : i32
    %c16_i32 = arith.constant 16 : i32
    %17 = arith.addi %c0_i32, %c16_i32 : i32
    %c1_i32 = arith.constant 1 : i32
    %18 = scf.for %arg10 = %c0_i32 to %17 step %c1_i32 iter_args(%arg11 = %16) -> (vector<8x128xf32>)  : i32 {
      %19 = arith.index_cast %arg10 : i32 to index
      %c0_18 = arith.constant 0 : index
      %c0_19 = arith.constant 0 : index
      %20 = vector.load %arg0[%19, %c0_18, %c0_19] : memref<16x8x384xf32, #tpu.memory_space<vmem>>, vector<1x8x384xf32>
      %21 = vector.shape_cast %20 : vector<1x8x384xf32> to vector<8x384xf32>
      %cst_20 = arith.constant dense<0.000000e+00> : vector<8x384xf32>
      %22 = tpu.matmul %arg11, %7, %cst_20 {dimension_numbers = #tpu.dot_dimension_numbers<[1], [0], [0], [1], [0, 0, 1, 1], [], []>} : vector<8x128xf32>, vector<128x384xf32>, vector<8x384xf32> -> vector<8x384xf32>
      %23 = arith.addf %22, %10 : vector<8x384xf32>
      %24 = vector.extract_strided_slice %21 {offsets = [0, 0], sizes = [8, 128], strides = [1, 1]} : vector<8x384xf32> to vector<8x128xf32>
      %25 = vector.extract_strided_slice %23 {offsets = [0, 0], sizes = [8, 128], strides = [1, 1]} : vector<8x384xf32> to vector<8x128xf32>
      %26 = arith.addf %24, %25 : vector<8x128xf32>
      %27 = arith.negf %26 : vector<8x128xf32>
      %28 = math.exp %27 : vector<8x128xf32>
      %cst_21 = arith.constant 1.000000e+00 : f32
      %29 = vector.broadcast %cst_21 : f32 to vector<8x128xf32>
      %30 = arith.addf %29, %28 : vector<8x128xf32>
      %31 = arith.divf %29, %30 : vector<8x128xf32>
      %32 = vector.extract_strided_slice %21 {offsets = [0, 128], sizes = [8, 128], strides = [1, 1]} : vector<8x384xf32> to vector<8x128xf32>
      %33 = vector.extract_strided_slice %23 {offsets = [0, 128], sizes = [8, 128], strides = [1, 1]} : vector<8x384xf32> to vector<8x128xf32>
      %34 = arith.addf %32, %33 : vector<8x128xf32>
      %35 = arith.negf %34 : vector<8x128xf32>
      %36 = math.exp %35 : vector<8x128xf32>
      %cst_22 = arith.constant 1.000000e+00 : f32
      %37 = vector.broadcast %cst_22 : f32 to vector<8x128xf32>
      %38 = arith.addf %37, %36 : vector<8x128xf32>
      %39 = arith.divf %37, %38 : vector<8x128xf32>
      %40 = vector.extract_strided_slice %21 {offsets = [0, 256], sizes = [8, 128], strides = [1, 1]} : vector<8x384xf32> to vector<8x128xf32>
      %41 = vector.extract_strided_slice %23 {offsets = [0, 256], sizes = [8, 128], strides = [1, 1]} : vector<8x384xf32> to vector<8x128xf32>
      %42 = arith.mulf %31, %41 : vector<8x128xf32>
      %43 = arith.addf %40, %42 : vector<8x128xf32>
      %44 = math.tanh %43 : vector<8x128xf32>
      %cst_23 = arith.constant 1.000000e+00 : f32
      %45 = vector.broadcast %cst_23 : f32 to vector<8x128xf32>
      %46 = arith.subf %45, %39 : vector<8x128xf32>
      %47 = arith.mulf %46, %44 : vector<8x128xf32>
      %48 = arith.mulf %39, %arg11 : vector<8x128xf32>
      %49 = arith.addf %47, %48 : vector<8x128xf32>
      %50 = vector.shape_cast %49 : vector<8x128xf32> to vector<8x1x128xf32>
      "tpu.trace_start"() <{level = 10 : i32, message = "bqh,bnh->bqn"}> : () -> ()
      %cst_24 = arith.constant dense<0.000000e+00> : vector<8x1x16xf32>
      %51 = tpu.matmul %50, %0, %cst_24 {dimension_numbers = #tpu.dot_dimension_numbers<[2], [2], [1], [1], [0, 0, 0, 1, 1, 1], [0], [0]>} : vector<8x1x128xf32>, vector<8x16x128xf32>, vector<8x1x16xf32> -> vector<8x1x16xf32>
      "tpu.trace_stop"() : () -> ()
      %52 = vector.shape_cast %51 : vector<8x1x16xf32> to vector<8x16xf32>
      %53 = arith.select %3, %52, %6 : vector<8x16xi1>, vector<8x16xf32>
      %cst_25 = arith.constant dense<0xFF800000> : vector<8xf32>
      %54 = vector.multi_reduction <maximumf>, %53, %cst_25 [1] : vector<8x16xf32> to vector<8xf32>
      %55 = vector.shape_cast %54 : vector<8xf32> to vector<8x1xf32>
      %56 = vector.broadcast %55 : vector<8x1xf32> to vector<8x16xf32>
      %57 = arith.subf %53, %56 : vector<8x16xf32>
      %58 = math.exp %57 : vector<8x16xf32>
      %59 = arith.mulf %58, %5 : vector<8x16xf32>
      %cst_26 = arith.constant dense<0.000000e+00> : vector<8xf32>
      %60 = vector.multi_reduction <add>, %59, %cst_26 [1] : vector<8x16xf32> to vector<8xf32>
      %61 = vector.shape_cast %60 : vector<8xf32> to vector<8x1xf32>
      %cst_27 = arith.constant 9.99999982E-14 : f32
      %62 = vector.broadcast %cst_27 : f32 to vector<8x1xf32>
      %63 = arith.addf %61, %62 : vector<8x1xf32>
      %64 = tpu.reciprocal %63 {approx = true} : vector<8x1xf32> -> vector<8x1xf32>
      %65 = vector.broadcast %64 : vector<8x1xf32> to vector<8x16xf32>
      %66 = arith.mulf %59, %65 : vector<8x16xf32>
      %67 = vector.shape_cast %66 : vector<8x16xf32> to vector<8x1x16xf32>
      "tpu.trace_start"() <{level = 10 : i32, message = "bqn,bnh->bqh"}> : () -> ()
      %cst_28 = arith.constant dense<0.000000e+00> : vector<8x1x128xf32>
      %68 = tpu.matmul %67, %0, %cst_28 {dimension_numbers = #tpu.dot_dimension_numbers<[2], [1], [1], [2], [0, 0, 0, 1, 1, 2], [0], [0]>} : vector<8x1x16xf32>, vector<8x16x128xf32>, vector<8x1x128xf32> -> vector<8x1x128xf32>
      "tpu.trace_stop"() : () -> ()
      %69 = vector.shape_cast %68 : vector<8x1x128xf32> to vector<8x128xf32>
      %cst_29 = arith.constant dense<0.000000e+00> : vector<8x128xf32>
      %70 = tpu.matmul %49, %11, %cst_29 {dimension_numbers = #tpu.dot_dimension_numbers<[1], [0], [0], [1], [0, 0, 1, 1], [], []>} : vector<8x128xf32>, vector<128x128xf32>, vector<8x128xf32> -> vector<8x128xf32>
      %cst_30 = arith.constant dense<0.000000e+00> : vector<8x128xf32>
      %71 = tpu.matmul %69, %12, %cst_30 {dimension_numbers = #tpu.dot_dimension_numbers<[1], [0], [0], [1], [0, 0, 1, 1], [], []>} : vector<8x128xf32>, vector<128x128xf32>, vector<8x128xf32> -> vector<8x128xf32>
      %72 = arith.addf %70, %71 : vector<8x128xf32>
      %73 = arith.addf %72, %15 : vector<8x128xf32>
      %74 = math.tanh %73 : vector<8x128xf32>
      %75 = arith.index_cast %arg10 : i32 to index
      %c0_31 = arith.constant 0 : index
      %c0_32 = arith.constant 0 : index
      %76 = vector.load %arg9[%75, %c0_31, %c0_32] : memref<16x8x128xf32, #tpu.memory_space<vmem>>, vector<1x8x128xf32>
      %77 = vector.shape_cast %76 : vector<1x8x128xf32> to vector<8x128xf32>
      %78 = vector.shape_cast %74 : vector<8x128xf32> to vector<1x8x128xf32>
      tpu.vector_store %arg9[%75, %c0_31, %c0_32], %78 {strides = array<i32>} : memref<16x8x128xf32, #tpu.memory_space<vmem>>, vector<1x8x128xf32>,
      scf.yield %49 : vector<8x128xf32>
    }
    %c16_i32_17 = arith.constant 16 : i32
    return
  }
}

module attributes {stable_mosaic.version = 11 : i64} {
  func.func @_matmul_bias_kernel(%arg0: i32, %arg1: i32, %arg2: i32, %arg3: memref<128x128xf32, #tpu.memory_space<vmem>>, %arg4: memref<128x256xf32, #tpu.memory_space<vmem>>, %arg5: memref<1x256xf32, #tpu.memory_space<vmem>>, %arg6: memref<128x256xf32, #tpu.memory_space<vmem>>, %arg7: memref<128x256xf32, #tpu.memory_space<vmem>>) attributes {dimension_semantics = [#tpu.dimension_semantics<parallel>, #tpu.dimension_semantics<parallel>, #tpu.dimension_semantics<arbitrary>], iteration_bounds = array<i64: 1, 4, 1>, scalar_prefetch = 0 : i64, scratch_operands = 1 : i64, tpu.core_type = #tpu.core_type<tc>, window_params = [{transform_indices = @transform_0, window_bounds = array<i64: 128, 128>}, {transform_indices = @transform_1, window_bounds = array<i64: 128, 256>}, {transform_indices = @transform_2, window_bounds = array<i64: 1, 256>}, {transform_indices = @transform_3, window_bounds = array<i64: 128, 256>}]} {
    %c0_i32 = arith.constant 0 : i32
    %0 = arith.cmpi eq, %arg2, %c0_i32 : i32
    %1 = arith.extui %0 : i1 to i32
    %c0_i32_0 = arith.constant 0 : i32
    %2 = arith.cmpi ne, %1, %c0_i32_0 : i32
    scf.if %2 {
      %cst_10 = arith.constant 0.000000e+00 : f32
      %12 = vector.broadcast %cst_10 : f32 to vector<128x256xf32>
      %c0_11 = arith.constant 0 : index
      %c0_12 = arith.constant 0 : index
      %13 = vector.load %arg7[%c0_11, %c0_12] : memref<128x256xf32, #tpu.memory_space<vmem>>, vector<128x256xf32>
      tpu.vector_store %arg7[%c0_11, %c0_12], %12 {strides = array<i32>} : memref<128x256xf32, #tpu.memory_space<vmem>>, vector<128x256xf32>,
    } else {
    }
    %c0 = arith.constant 0 : index
    %c0_1 = arith.constant 0 : index
    %3 = vector.load %arg7[%c0, %c0_1] : memref<128x256xf32, #tpu.memory_space<vmem>>, vector<128x256xf32>
    %c0_2 = arith.constant 0 : index
    %c0_3 = arith.constant 0 : index
    %4 = vector.load %arg3[%c0_2, %c0_3] : memref<128x128xf32, #tpu.memory_space<vmem>>, vector<128x128xf32>
    %c0_4 = arith.constant 0 : index
    %c0_5 = arith.constant 0 : index
    %5 = vector.load %arg4[%c0_4, %c0_5] : memref<128x256xf32, #tpu.memory_space<vmem>>, vector<128x256xf32>
    %cst = arith.constant dense<0.000000e+00> : vector<128x256xf32>
    %6 = tpu.matmul %4, %5, %cst {dimension_numbers = #tpu.dot_dimension_numbers<[1], [0], [0], [1], [0, 0, 1, 1], [], []>} : vector<128x128xf32>, vector<128x256xf32>, vector<128x256xf32> -> vector<128x256xf32>
    %7 = arith.addf %3, %6 : vector<128x256xf32>
    %c0_6 = arith.constant 0 : index
    %c0_7 = arith.constant 0 : index
    %8 = vector.load %arg7[%c0_6, %c0_7] : memref<128x256xf32, #tpu.memory_space<vmem>>, vector<128x256xf32>
    tpu.vector_store %arg7[%c0_6, %c0_7], %7 {strides = array<i32>} : memref<128x256xf32, #tpu.memory_space<vmem>>, vector<128x256xf32>,
    %c0_i32_8 = arith.constant 0 : i32
    %9 = arith.cmpi eq, %arg2, %c0_i32_8 : i32
    %10 = arith.extui %9 : i1 to i32
    %c0_i32_9 = arith.constant 0 : i32
    %11 = arith.cmpi ne, %10, %c0_i32_9 : i32
    scf.if %11 {
      %c0_10 = arith.constant 0 : index
      %c0_11 = arith.constant 0 : index
      %12 = vector.load %arg7[%c0_10, %c0_11] : memref<128x256xf32, #tpu.memory_space<vmem>>, vector<128x256xf32>
      %c0_12 = arith.constant 0 : index
      %c0_13 = arith.constant 0 : index
      %13 = vector.load %arg5[%c0_12, %c0_13] : memref<1x256xf32, #tpu.memory_space<vmem>>, vector<1x256xf32>
      %14 = vector.broadcast %13 : vector<1x256xf32> to vector<128x256xf32>
      %15 = arith.addf %12, %14 : vector<128x256xf32>
      %c0_14 = arith.constant 0 : index
      %c0_15 = arith.constant 0 : index
      %16 = vector.load %arg6[%c0_14, %c0_15] : memref<128x256xf32, #tpu.memory_space<vmem>>, vector<128x256xf32>
      tpu.vector_store %arg6[%c0_14, %c0_15], %15 {strides = array<i32>} : memref<128x256xf32, #tpu.memory_space<vmem>>, vector<128x256xf32>,
    } else {
    }
    return
  }
  func.func @transform_0(%arg0: i32, %arg1: i32, %arg2: i32) -> (i32, i32) {
    %c0_i32 = arith.constant 0 : i32
    return %arg0, %arg2 : i32, i32
  }
  func.func @transform_1(%arg0: i32, %arg1: i32, %arg2: i32) -> (i32, i32) {
    %c0_i32 = arith.constant 0 : i32
    return %arg2, %arg1 : i32, i32
  }
  func.func @transform_2(%arg0: i32, %arg1: i32, %arg2: i32) -> (i32, i32) {
    %c0_i32 = arith.constant 0 : i32
    %c0_i32_0 = arith.constant 0 : i32
    return %c0_i32, %arg1 : i32, i32
  }
  func.func @transform_3(%arg0: i32, %arg1: i32, %arg2: i32) -> (i32, i32) {
    %c0_i32 = arith.constant 0 : i32
    return %arg0, %arg1 : i32, i32
  }
}

module attributes {stable_mosaic.version = 11 : i64} {
  func.func @_seq_ce_nll_kernel(%arg0: i32, %arg1: i32, %arg2: memref<128x512xf32, #tpu.memory_space<vmem>>, %arg3: memref<128x1xi32, #tpu.memory_space<vmem>>, %arg4: memref<128x1xf32, #tpu.memory_space<vmem>>, %arg5: memref<128x1xf32, #tpu.memory_space<vmem>>, %arg6: memref<128x1xf32, #tpu.memory_space<vmem>>, %arg7: memref<128x1xf32, #tpu.memory_space<vmem>>, %arg8: memref<128x1xf32, #tpu.memory_space<vmem>>) attributes {dimension_semantics = [#tpu.dimension_semantics<parallel>, #tpu.dimension_semantics<arbitrary>], iteration_bounds = array<i64: 1, 2>, scalar_prefetch = 0 : i64, scratch_operands = 3 : i64, tpu.core_type = #tpu.core_type<tc>, window_params = [{transform_indices = @transform_0, window_bounds = array<i64: 128, 512>}, {transform_indices = @transform_1, window_bounds = array<i64: 128, 1>}, {transform_indices = @transform_2, window_bounds = array<i64: 128, 1>}, {transform_indices = @transform_3, window_bounds = array<i64: 128, 1>}]} {
    %c0_i32 = arith.constant 0 : i32
    %0 = arith.cmpi eq, %arg1, %c0_i32 : i32
    %1 = arith.extui %0 : i1 to i32
    %c0_i32_0 = arith.constant 0 : i32
    %2 = arith.cmpi ne, %1, %c0_i32_0 : i32
    scf.if %2 {
      %cst_20 = arith.constant -1.000000e+30 : f32
      %37 = vector.broadcast %cst_20 : f32 to vector<128x1xf32>
      %c0_21 = arith.constant 0 : index
      %c0_22 = arith.constant 0 : index
      %38 = vector.load %arg6[%c0_21, %c0_22] : memref<128x1xf32, #tpu.memory_space<vmem>>, vector<128x1xf32>
      tpu.vector_store %arg6[%c0_21, %c0_22], %37 {strides = array<i32>} : memref<128x1xf32, #tpu.memory_space<vmem>>, vector<128x1xf32>,
      %cst_23 = arith.constant 0.000000e+00 : f32
      %39 = vector.broadcast %cst_23 : f32 to vector<128x1xf32>
      %c0_24 = arith.constant 0 : index
      %c0_25 = arith.constant 0 : index
      %40 = vector.load %arg7[%c0_24, %c0_25] : memref<128x1xf32, #tpu.memory_space<vmem>>, vector<128x1xf32>
      tpu.vector_store %arg7[%c0_24, %c0_25], %39 {strides = array<i32>} : memref<128x1xf32, #tpu.memory_space<vmem>>, vector<128x1xf32>,
      %cst_26 = arith.constant 0.000000e+00 : f32
      %41 = vector.broadcast %cst_26 : f32 to vector<128x1xf32>
      %c0_27 = arith.constant 0 : index
      %c0_28 = arith.constant 0 : index
      %42 = vector.load %arg8[%c0_27, %c0_28] : memref<128x1xf32, #tpu.memory_space<vmem>>, vector<128x1xf32>
      tpu.vector_store %arg8[%c0_27, %c0_28], %41 {strides = array<i32>} : memref<128x1xf32, #tpu.memory_space<vmem>>, vector<128x1xf32>,
    } else {
    }
    %c0 = arith.constant 0 : index
    %c0_1 = arith.constant 0 : index
    %3 = vector.load %arg2[%c0, %c0_1] : memref<128x512xf32, #tpu.memory_space<vmem>>, vector<128x512xf32>
    %4 = tpu.iota {dimensions = array<i32: 1>} : vector<128x512xi32>
    %c512_i32 = arith.constant 512 : i32
    %5 = arith.muli %arg1, %c512_i32 : i32
    %6 = vector.broadcast %5 : i32 to vector<128x512xi32>
    %7 = arith.addi %4, %6 : vector<128x512xi32>
    %c0_2 = arith.constant 0 : index
    %c0_3 = arith.constant 0 : index
    %8 = vector.load %arg8[%c0_2, %c0_3] : memref<128x1xf32, #tpu.memory_space<vmem>>, vector<128x1xf32>
    %c0_4 = arith.constant 0 : index
    %c0_5 = arith.constant 0 : index
    %9 = vector.load %arg3[%c0_4, %c0_5] : memref<128x1xi32, #tpu.memory_space<vmem>>, vector<128x1xi32>
    %10 = vector.broadcast %9 : vector<128x1xi32> to vector<128x512xi32>
    %11 = arith.cmpi eq, %7, %10 : vector<128x512xi32>
    %cst = arith.constant 0.000000e+00 : f32
    %12 = vector.broadcast %cst : f32 to vector<128x512xf32>
    %13 = arith.select %11, %3, %12 : vector<128x512xi1>, vector<128x512xf32>
    %cst_6 = arith.constant dense<0.000000e+00> : vector<128xf32>
    %14 = vector.multi_reduction <add>, %13, %cst_6 [1] : vector<128x512xf32> to vector<128xf32>
    %15 = vector.shape_cast %14 : vector<128xf32> to vector<128x1xf32>
    %16 = arith.addf %8, %15 : vector<128x1xf32>
    %c0_7 = arith.constant 0 : index
    %c0_8 = arith.constant 0 : index
    %17 = vector.load %arg8[%c0_7, %c0_8] : memref<128x1xf32, #tpu.memory_space<vmem>>, vector<128x1xf32>
    tpu.vector_store %arg8[%c0_7, %c0_8], %16 {strides = array<i32>} : memref<128x1xf32, #tpu.memory_space<vmem>>, vector<128x1xf32>,
    %c0_9 = arith.constant 0 : index
    %c0_10 = arith.constant 0 : index
    %18 = vector.load %arg6[%c0_9, %c0_10] : memref<128x1xf32, #tpu.memory_space<vmem>>, vector<128x1xf32>
    %cst_11 = arith.constant dense<0xFF800000> : vector<128xf32>
    %19 = vector.multi_reduction <maximumf>, %3, %cst_11 [1] : vector<128x512xf32> to vector<128xf32>
    %20 = vector.shape_cast %19 : vector<128xf32> to vector<128x1xf32>
    %21 = arith.maximumf %18, %20 : vector<128x1xf32>
    %c0_12 = arith.constant 0 : index
    %c0_13 = arith.constant 0 : index
    %22 = vector.load %arg7[%c0_12, %c0_13] : memref<128x1xf32, #tpu.memory_space<vmem>>, vector<128x1xf32>
    %23 = arith.subf %18, %21 : vector<128x1xf32>
    %24 = math.exp %23 : vector<128x1xf32>
    %25 = arith.mulf %22, %24 : vector<128x1xf32>
    %26 = vector.broadcast %21 : vector<128x1xf32> to vector<128x512xf32>
    %27 = arith.subf %3, %26 : vector<128x512xf32>
    %28 = math.exp %27 : vector<128x512xf32>
    %cst_14 = arith.constant dense<0.000000e+00> : vector<128xf32>
    %29 = vector.multi_reduction <add>, %28, %cst_14 [1] : vector<128x512xf32> to vector<128xf32>
    %30 = vector.shape_cast %29 : vector<128xf32> to vector<128x1xf32>
    %31 = arith.addf %25, %30 : vector<128x1xf32>
    %c0_15 = arith.constant 0 : index
    %c0_16 = arith.constant 0 : index
    %32 = vector.load %arg7[%c0_15, %c0_16] : memref<128x1xf32, #tpu.memory_space<vmem>>, vector<128x1xf32>
    tpu.vector_store %arg7[%c0_15, %c0_16], %31 {strides = array<i32>} : memref<128x1xf32, #tpu.memory_space<vmem>>, vector<128x1xf32>,
    %c0_17 = arith.constant 0 : index
    %c0_18 = arith.constant 0 : index
    %33 = vector.load %arg6[%c0_17, %c0_18] : memref<128x1xf32, #tpu.memory_space<vmem>>, vector<128x1xf32>
    tpu.vector_store %arg6[%c0_17, %c0_18], %21 {strides = array<i32>} : memref<128x1xf32, #tpu.memory_space<vmem>>, vector<128x1xf32>,
    %c1_i32 = arith.constant 1 : i32
    %34 = arith.cmpi eq, %arg1, %c1_i32 : i32
    %35 = arith.extui %34 : i1 to i32
    %c0_i32_19 = arith.constant 0 : i32
    %36 = arith.cmpi ne, %35, %c0_i32_19 : i32
    scf.if %36 {
      %c0_20 = arith.constant 0 : index
      %c0_21 = arith.constant 0 : index
      %37 = vector.load %arg6[%c0_20, %c0_21] : memref<128x1xf32, #tpu.memory_space<vmem>>, vector<128x1xf32>
      %c0_22 = arith.constant 0 : index
      %c0_23 = arith.constant 0 : index
      %38 = vector.load %arg7[%c0_22, %c0_23] : memref<128x1xf32, #tpu.memory_space<vmem>>, vector<128x1xf32>
      %39 = math.log %38 : vector<128x1xf32>
      %40 = arith.addf %37, %39 : vector<128x1xf32>
      %c0_24 = arith.constant 0 : index
      %c0_25 = arith.constant 0 : index
      %41 = vector.load %arg8[%c0_24, %c0_25] : memref<128x1xf32, #tpu.memory_space<vmem>>, vector<128x1xf32>
      %42 = arith.subf %40, %41 : vector<128x1xf32>
      %c0_26 = arith.constant 0 : index
      %c0_27 = arith.constant 0 : index
      %43 = vector.load %arg4[%c0_26, %c0_27] : memref<128x1xf32, #tpu.memory_space<vmem>>, vector<128x1xf32>
      %44 = arith.mulf %42, %43 : vector<128x1xf32>
      %c0_28 = arith.constant 0 : index
      %c0_29 = arith.constant 0 : index
      %45 = vector.load %arg5[%c0_28, %c0_29] : memref<128x1xf32, #tpu.memory_space<vmem>>, vector<128x1xf32>
      tpu.vector_store %arg5[%c0_28, %c0_29], %44 {strides = array<i32>} : memref<128x1xf32, #tpu.memory_space<vmem>>, vector<128x1xf32>,
    } else {
    }
    return
  }
  func.func @transform_0(%arg0: i32, %arg1: i32) -> (i32, i32) {
    %c0_i32 = arith.constant 0 : i32
    return %arg0, %arg1 : i32, i32
  }
  func.func @transform_1(%arg0: i32, %arg1: i32) -> (i32, i32) {
    %c0_i32 = arith.constant 0 : i32
    %c0_i32_0 = arith.constant 0 : i32
    return %arg0, %c0_i32 : i32, i32
  }
  func.func @transform_2(%arg0: i32, %arg1: i32) -> (i32, i32) {
    %c0_i32 = arith.constant 0 : i32
    %c0_i32_0 = arith.constant 0 : i32
    return %arg0, %c0_i32 : i32, i32
  }
  func.func @transform_3(%arg0: i32, %arg1: i32) -> (i32, i32) {
    %c0_i32 = arith.constant 0 : i32
    %c0_i32_0 = arith.constant 0 : i32
    return %arg0, %c0_i32 : i32, i32
  }
}

</mosaic_0001>

<llo_original>
// kernel: forward.7
$region0: #{forward.7}
  #allocation0 [shape = 'u32[]', space=smem, size = 0x4, offset = 0x4, fixed_abs, tag = 'smem constant byte address 0x4 - core index']
  #allocation1 [shape = 'u32[144,128]{1,0:T(1,128)}', space=vmem, size = 0x12000, scoped, tag = 'internal scratch']
  #allocation2 [shape = 'f32[128,128]{1,0:T(8,128)}', space=vmem, size = 0x10000, scoped, tag = 'scratch operand']
  %s0 = inlined_call_operand.vmem [shape: f32[128,128], index: 0, kind: input, shape index: {}]
  %s1 = inlined_call_operand.vmem [shape: f32[128,128], index: 1, kind: input, shape index: {}]
  %s2 = inlined_call_operand.vmem [shape: f32[1,128], index: 2, kind: input, shape index: {}]
  %s3 = inlined_call_operand.vmem [shape: f32[128,128], index: 3, kind: output, shape index: {}]
  %s4 = sld [smem:[#allocation0]]
  $region30: #{forward.7} parent=0
    _
  %s6 = ssub.s32 1, %s4
  %s7 = scalar_select 0, %s6, %s4
  // Predicated region
  $region2: #{forward.7} parent=0 // pred_check
    _
  $region3: #{forward.7} parent=0 // pred_check_branch
    %9 = sbr.rel (0) target = $region5
  $region4: #{forward.7} parent=0 // pred_region
    _
  $region5: #{forward.7} parent=0 // pred_fallthru
    _
  // Predicated region
  $region6: #{forward.7} parent=0 // pred_check
    _
  $region7: #{forward.7} parent=0 // pred_check_branch
    %11 = sbr.rel (0) target = $region9
  $region8: #{forward.7} parent=0 // pred_region
    _
  $region9: #{forward.7} parent=0 // pred_fallthru
    _
  // Predicated region
  $region10: #{forward.7} parent=0 // pred_check
    _
  $region11: #{forward.7} parent=0 // pred_check_branch
    %13 = sbr.rel (0) target = $region13
  $region12: #{forward.7} parent=0 // pred_region
    _
  $region13: #{forward.7} parent=0 // pred_fallthru
    _
  %p14 = scmp.eq.s32.totalorder 0, 0
  // Predicated region
  $region14: #{forward.7} parent=0 // pred_check
    %p15 = pneg %p14
  $region15: #{forward.7} parent=0 // pred_check_branch
    %17 = sbr.rel (%p15) target = $region17
  $region16: #{forward.7} parent=0 // pred_region
    %18 = vst [vmem:[#allocation2] sm:$0xff] 0.0
    %19 = vst [vmem:[#allocation2 + $0x8] sm:$0xff] 0.0
    %20 = vst [vmem:[#allocation2 + $0x10] sm:$0xff] 0.0
    %21 = vst [vmem:[#allocation2 + $0x18] sm:$0xff] 0.0
    %22 = vst [vmem:[#allocation2 + $0x20] sm:$0xff] 0.0
    %23 = vst [vmem:[#allocation2 + $0x28] sm:$0xff] 0.0
    %24 = vst [vmem:[#allocation2 + $0x30] sm:$0xff] 0.0
    %25 = vst [vmem:[#allocation2 + $0x38] sm:$0xff] 0.0
    %26 = vst [vmem:[#allocation2 + $0x40] sm:$0xff] 0.0
    %27 = vst [vmem:[#allocation2 + $0x48] sm:$0xff] 0.0
    %28 = vst [vmem:[#allocation2 + $0x50] sm:$0xff] 0.0
    %29 = vst [vmem:[#allocation2 + $0x58] sm:$0xff] 0.0
    %30 = vst [vmem:[#allocation2 + $0x60] sm:$0xff] 0.0
    %31 = vst [vmem:[#allocation2 + $0x68] sm:$0xff] 0.0
    %32 = vst [vmem:[#allocation2 + $0x70] sm:$0xff] 0.0
    %33 = vst [vmem:[#allocation2 + $0x78] sm:$0xff] 0.0
  $region17: #{forward.7} parent=0 // pred_fallthru
    _
  %v34 = vld [vmem:[#allocation2] sm:$0xff]
  %v35 = vld [vmem:[#allocation2 + $0x8] sm:$0xff]
  %v36 = vld [vmem:[#allocation2 + $0x10] sm:$0xff]
  %v37 = vld [vmem:[#allocation2 + $0x18] sm:$0xff]
  %v38 = vld [vmem:[#allocation2 + $0x20] sm:$0xff]
  %v39 = vld [vmem:[#allocation2 + $0x28] sm:$0xff]
  %v40 = vld [vmem:[#allocation2 + $0x30] sm:$0xff]
  %v41 = vld [vmem:[#allocation2 + $0x38] sm:$0xff]
  %v42 = vld [vmem:[#allocation2 + $0x40] sm:$0xff]
  %v43 = vld [vmem:[#allocation2 + $0x48] sm:$0xff]
  %v44 = vld [vmem:[#allocation2 + $0x50] sm:$0xff]
  %v45 = vld [vmem:[#allocation2 + $0x58] sm:$0xff]
  %v46 = vld [vmem:[#allocation2 + $0x60] sm:$0xff]
  %v47 = vld [vmem:[#allocation2 + $0x68] sm:$0xff]
  %v48 = vld [vmem:[#allocation2 + $0x70] sm:$0xff]
  %v49 = vld [vmem:[#allocation2 + $0x78] sm:$0xff]
  %v50 = vld [vmem:[%s0] sm:$0xff]
  %v51 = vld [vmem:[%s0 + $0x8] sm:$0xff]
  %v52 = vld [vmem:[%s0 + $0x10] sm:$0xff]
  %v53 = vld [vmem:[%s0 + $0x18] sm:$0xff]
  %v54 = vld [vmem:[%s0 + $0x20] sm:$0xff]
  %v55 = vld [vmem:[%s0 + $0x28] sm:$0xff]
  %v56 = vld [vmem:[%s0 + $0x30] sm:$0xff]
  %v57 = vld [vmem:[%s0 + $0x38] sm:$0xff]
  %v58 = vld [vmem:[%s0 + $0x40] sm:$0xff]
  %v59 = vld [vmem:[%s0 + $0x48] sm:$0xff]
  %v60 = vld [vmem:[%s0 + $0x50] sm:$0xff]
  %v61 = vld [vmem:[%s0 + $0x58] sm:$0xff]
  %v62 = vld [vmem:[%s0 + $0x60] sm:$0xff]
  %v63 = vld [vmem:[%s0 + $0x68] sm:$0xff]
  %v64 = vld [vmem:[%s0 + $0x70] sm:$0xff]
  %v65 = vld [vmem:[%s0 + $0x78] sm:$0xff]
  %v66 = vld [vmem:[%s1] sm:$0xff]
  %v67 = vld [vmem:[%s1 + $0x8] sm:$0xff]
  %v68 = vld [vmem:[%s1 + $0x10] sm:$0xff]
  %v69 = vld [vmem:[%s1 + $0x18] sm:$0xff]
  %v70 = vld [vmem:[%s1 + $0x20] sm:$0xff]
  %v71 = vld [vmem:[%s1 + $0x28] sm:$0xff]
  %v72 = vld [vmem:[%s1 + $0x30] sm:$0xff]
  %v73 = vld [vmem:[%s1 + $0x38] sm:$0xff]
  %v74 = vld [vmem:[%s1 + $0x40] sm:$0xff]
  %v75 = vld [vmem:[%s1 + $0x48] sm:$0xff]
  %v76 = vld [vmem:[%s1 + $0x50] sm:$0xff]
  %v77 = vld [vmem:[%s1 + $0x58] sm:$0xff]
  %v78 = vld [vmem:[%s1 + $0x60] sm:$0xff]
  %v79 = vld [vmem:[%s1 + $0x68] sm:$0xff]
  %v80 = vld [vmem:[%s1 + $0x70] sm:$0xff]
  %v81 = vld [vmem:[%s1 + $0x78] sm:$0xff]
  %82 = vmatprep.subr.mxu0 0.0
  %83 = vmatpush1.msra.mxu0 %v66
  %84 = vmatprep.subr.mxu0 0.0
  %85 = vmatpush1.msra.mxu0 %v67
  %86 = vmatprep.subr.mxu0 0.0
  %87 = vmatpush1.msra.mxu0 %v68
  %88 = vmatprep.subr.mxu0 0.0
  %89 = vmatpush1.msra.mxu0 %v69
  %90 = vmatprep.subr.mxu0 0.0
  %91 = vmatpush1.msra.mxu0 %v70
  %92 = vmatprep.subr.mxu0 0.0
  %93 = vmatpush1.msra.mxu0 %v71
  %94 = vmatprep.subr.mxu0 0.0
  %95 = vmatpush1.msra.mxu0 %v72
  %96 = vmatprep.subr.mxu0 0.0
  %97 = vmatpush1.msra.mxu0 %v73
  %98 = vmatprep.subr.mxu0 0.0
  %99 = vmatpush1.msra.mxu0 %v74
  %100 = vmatprep.subr.mxu0 0.0
  %101 = vmatpush1.msra.mxu0 %v75
  %102 = vmatprep.subr.mxu0 0.0
  %103 = vmatpush1.msra.mxu0 %v76
  %104 = vmatprep.subr.mxu0 0.0
  %105 = vmatpush1.msra.mxu0 %v77
  %106 = vmatprep.subr.mxu0 0.0
  %107 = vmatpush1.msra.mxu0 %v78
  %108 = vmatprep.subr.mxu0 0.0
  %109 = vmatpush1.msra.mxu0 %v79
  %110 = vmatprep.subr.mxu0 0.0
  %111 = vmatpush1.msra.mxu0 %v80
  %112 = vmatprep.subr.mxu0 0.0
  %113 = vmatpush1.msra.mxu0 %v81
  %114 = vmatprep.subr.mxu0 0.0
  %115 = vmatpush1.msra.mxu0 0.0
  %116 = vmatprep.subr.mxu0 0.0
  %117 = vmatpush1.msra.mxu0 0.0
  %118 = vmatprep.subr.mxu0 0.0
  %119 = vmatpush1.msra.mxu0 0.0
  %120 = vmatprep.subr.mxu0 0.0
  %121 = vmatpush1.msra.mxu0 0.0
  %122 = vmatprep.subr.mxu0 0.0
  %123 = vmatpush1.msra.mxu0 0.0
  %124 = vmatprep.subr.mxu0 0.0
  %125 = vmatpush1.msra.mxu0 0.0
  %126 = vmatprep.subr.mxu0 0.0
  %127 = vmatpush1.msra.mxu0 0.0
  %128 = vmatprep.subr.mxu0 0.0
  %129 = vmatpush1.msra.mxu0 0.0
  %130 = vmatprep.subr.mxu0 0.0
  %131 = vmatpush1.msra.mxu0 0.0
  %132 = vmatprep.subr.mxu0 0.0
  %133 = vmatpush1.msra.mxu0 0.0
  %134 = vmatprep.subr.mxu0 0.0
  %135 = vmatpush1.msra.mxu0 0.0
  %136 = vmatprep.subr.mxu0 0.0
  %137 = vmatpush1.msra.mxu0 0.0
  %138 = vmatprep.subr.mxu0 0.0
  %139 = vmatpush1.msra.mxu0 0.0
  %140 = vmatprep.subr.mxu0 0.0
  %141 = vmatpush1.msra.mxu0 0.0
  %142 = vmatprep.subr.mxu0 0.0
  %143 = vmatpush1.msra.mxu0 0.0
  %144 = vmatprep.subr.mxu0 0.0
  %145 = vmatpush1.msra.mxu0 0.0
  %146 = vmatprep.mubr.f32.mxu0 0.0
  %147 = vmatmul.mubr.f32.gmra.mrb[0].mxu0 %v50
  %v148 = vpop.f32.mrb[0].mxu0
  %v149 = vadd.f32 0.0, %v148
  %v150 = vpop.f32.mrb[0].mxu0
  %151 = vmatprep.mubr.f32.mxu0 0.0
  %152 = vmatmul.mubr.f32.gmra.mrb[0].mxu0 %v51
  %v153 = vpop.f32.mrb[0].mxu0
  %v154 = vadd.f32 0.0, %v153
  %v155 = vpop.f32.mrb[0].mxu0
  %156 = vmatprep.mubr.f32.mxu0 0.0
  %157 = vmatmul.mubr.f32.gmra.mrb[0].mxu0 %v52
  %v158 = vpop.f32.mrb[0].mxu0
  %v159 = vadd.f32 0.0, %v158
  %v160 = vpop.f32.mrb[0].mxu0
  %161 = vmatprep.mubr.f32.mxu0 0.0
  %162 = vmatmul.mubr.f32.gmra.mrb[0].mxu0 %v53
  %v163 = vpop.f32.mrb[0].mxu0
  %v164 = vadd.f32 0.0, %v163
  %v165 = vpop.f32.mrb[0].mxu0
  %166 = vmatprep.mubr.f32.mxu0 0.0
  %167 = vmatmul.mubr.f32.gmra.mrb[0].mxu0 %v54
  %v168 = vpop.f32.mrb[0].mxu0
  %v169 = vadd.f32 0.0, %v168
  %v170 = vpop.f32.mrb[0].mxu0
  %171 = vmatprep.mubr.f32.mxu0 0.0
  %172 = vmatmul.mubr.f32.gmra.mrb[0].mxu0 %v55
  %v173 = vpop.f32.mrb[0].mxu0
  %v174 = vadd.f32 0.0, %v173
  %v175 = vpop.f32.mrb[0].mxu0
  %176 = vmatprep.mubr.f32.mxu0 0.0
  %177 = vmatmul.mubr.f32.gmra.mrb[0].mxu0 %v56
  %v178 = vpop.f32.mrb[0].mxu0
  %v179 = vadd.f32 0.0, %v178
  %v180 = vpop.f32.mrb[0].mxu0
  %181 = vmatprep.mubr.f32.mxu0 0.0
  %182 = vmatmul.mubr.f32.gmra.mrb[0].mxu0 %v57
  %v183 = vpop.f32.mrb[0].mxu0
  %v184 = vadd.f32 0.0, %v183
  %v185 = vpop.f32.mrb[0].mxu0
  %186 = vmatprep.mubr.f32.mxu0 0.0
  %187 = vmatmul.mubr.f32.gmra.mrb[0].mxu0 %v58
  %v188 = vpop.f32.mrb[0].mxu0
  %v189 = vadd.f32 0.0, %v188
  %v190 = vpop.f32.mrb[0].mxu0
  %191 = vmatprep.mubr.f32.mxu0 0.0
  %192 = vmatmul.mubr.f32.gmra.mrb[0].mxu0 %v59
  %v193 = vpop.f32.mrb[0].mxu0
  %v194 = vadd.f32 0.0, %v193
  %v195 = vpop.f32.mrb[0].mxu0
  %196 = vmatprep.mubr.f32.mxu0 0.0
  %197 = vmatmul.mubr.f32.gmra.mrb[0].mxu0 %v60
  %v198 = vpop.f32.mrb[0].mxu0
  %v199 = vadd.f32 0.0, %v198
  %v200 = vpop.f32.mrb[0].mxu0
  %201 = vmatprep.mubr.f32.mxu0 0.0
  %202 = vmatmul.mubr.f32.gmra.mrb[0].mxu0 %v61
  %v203 = vpop.f32.mrb[0].mxu0
  %v204 = vadd.f32 0.0, %v203
  %v205 = vpop.f32.mrb[0].mxu0
  %206 = vmatprep.mubr.f32.mxu0 0.0
  %207 = vmatmul.mubr.f32.gmra.mrb[0].mxu0 %v62
  %v208 = vpop.f32.mrb[0].mxu0
  %v209 = vadd.f32 0.0, %v208
  %v210 = vpop.f32.mrb[0].mxu0
  %211 = vmatprep.mubr.f32.mxu0 0.0
  %212 = vmatmul.mubr.f32.gmra.mrb[0].mxu0 %v63
  %v213 = vpop.f32.mrb[0].mxu0
  %v214 = vadd.f32 0.0, %v213
  %v215 = vpop.f32.mrb[0].mxu0
  %216 = vmatprep.mubr.f32.mxu0 0.0
  %217 = vmatmul.mubr.f32.gmra.mrb[0].mxu0 %v64
  %v218 = vpop.f32.mrb[0].mxu0
  %v219 = vadd.f32 0.0, %v218
  %v220 = vpop.f32.mrb[0].mxu0
  %221 = vmatprep.mubr.f32.mxu0 0.0
  %222 = vmatmul.mubr.f32.gmra.mrb[0].mxu0 %v65
  %v223 = vpop.f32.mrb[0].mxu0
  %v224 = vadd.f32 0.0, %v223
  %v225 = vpop.f32.mrb[0].mxu0
  %226 = vdwg.mxu0
  %v227 = vadd.f32 %v34, %v149
  %v228 = vadd.f32 %v35, %v154
  %v229 = vadd.f32 %v36, %v159
  %v230 = vadd.f32 %v37, %v164
  %v231 = vadd.f32 %v38, %v169
  %v232 = vadd.f32 %v39, %v174
  %v233 = vadd.f32 %v40, %v179
  %v234 = vadd.f32 %v41, %v184
  %v235 = vadd.f32 %v42, %v189
  %v236 = vadd.f32 %v43, %v194
  %v237 = vadd.f32 %v44, %v199
  %v238 = vadd.f32 %v45, %v204
  %v239 = vadd.f32 %v46, %v209
  %v240 = vadd.f32 %v47, %v214
  %v241 = vadd.f32 %v48, %v219
  %v242 = vadd.f32 %v49, %v224
  %243 = vst [vmem:[#allocation2] sm:$0xff] %v227
  %244 = vst [vmem:[#allocation2 + $0x8] sm:$0xff] %v228
  %245 = vst [vmem:[#allocation2 + $0x10] sm:$0xff] %v229
  %246 = vst [vmem:[#allocation2 + $0x18] sm:$0xff] %v230
  %247 = vst [vmem:[#allocation2 + $0x20] sm:$0xff] %v231
  %248 = vst [vmem:[#allocation2 + $0x28] sm:$0xff] %v232
  %249 = vst [vmem:[#allocation2 + $0x30] sm:$0xff] %v233
  %250 = vst [vmem:[#allocation2 + $0x38] sm:$0xff] %v234
  %251 = vst [vmem:[#allocation2 + $0x40] sm:$0xff] %v235
  %252 = vst [vmem:[#allocation2 + $0x48] sm:$0xff] %v236
  %253 = vst [vmem:[#allocation2 + $0x50] sm:$0xff] %v237
  %254 = vst [vmem:[#allocation2 + $0x58] sm:$0xff] %v238
  %255 = vst [vmem:[#allocation2 + $0x60] sm:$0xff] %v239
  %256 = vst [vmem:[#allocation2 + $0x68] sm:$0xff] %v240
  %257 = vst [vmem:[#allocation2 + $0x70] sm:$0xff] %v241
  %258 = vst [vmem:[#allocation2 + $0x78] sm:$0xff] %v242
  // Predicated region
  $region18: #{forward.7} parent=0 // pred_check
    %p259 = pneg %p14
  $region19: #{forward.7} parent=0 // pred_check_branch
    %261 = sbr.rel (%p259) target = $region21
  $region20: #{forward.7} parent=0 // pred_region
    %v262 = vld [vmem:[#allocation2] sm:$0xff]
    %v263 = vld [vmem:[#allocation2 + $0x8] sm:$0xff]
    %v264 = vld [vmem:[#allocation2 + $0x10] sm:$0xff]
    %v265 = vld [vmem:[#allocation2 + $0x18] sm:$0xff]
    %v266 = vld [vmem:[#allocation2 + $0x20] sm:$0xff]
    %v267 = vld [vmem:[#allocation2 + $0x28] sm:$0xff]
    %v268 = vld [vmem:[#allocation2 + $0x30] sm:$0xff]
    %v269 = vld [vmem:[#allocation2 + $0x38] sm:$0xff]
    %v270 = vld [vmem:[#allocation2 + $0x40] sm:$0xff]
    %v271 = vld [vmem:[#allocation2 + $0x48] sm:$0xff]
    %v272 = vld [vmem:[#allocation2 + $0x50] sm:$0xff]
    %v273 = vld [vmem:[#allocation2 + $0x58] sm:$0xff]
    %v274 = vld [vmem:[#allocation2 + $0x60] sm:$0xff]
    %v275 = vld [vmem:[#allocation2 + $0x68] sm:$0xff]
    %v276 = vld [vmem:[#allocation2 + $0x70] sm:$0xff]
    %v277 = vld [vmem:[#allocation2 + $0x78] sm:$0xff]
    %v278 = vld [vmem:[%s2] sm:$0x1]
    %v280 = vlaneseq
    %v281 = vshrl.u32 %v280, 7
    %v282 = vsub.s32 0, %v281
    %v283 = vrot.slane %v278, %v282
    %v285 = vadd.f32 %v262, %v283
    %v286 = vadd.f32 %v263, %v283
    %v287 = vadd.f32 %v264, %v283
    %v288 = vadd.f32 %v265, %v283
    %v289 = vadd.f32 %v266, %v283
    %v290 = vadd.f32 %v267, %v283
    %v291 = vadd.f32 %v268, %v283
    %v292 = vadd.f32 %v269, %v283
    %v293 = vadd.f32 %v270, %v283
    %v294 = vadd.f32 %v271, %v283
    %v295 = vadd.f32 %v272, %v283
    %v296 = vadd.f32 %v273, %v283
    %v297 = vadd.f32 %v274, %v283
    %v298 = vadd.f32 %v275, %v283
    %v299 = vadd.f32 %v276, %v283
    %v300 = vadd.f32 %v277, %v283
    %301 = vst [vmem:[%s3] sm:$0xff] %v285
    %302 = vst [vmem:[%s3 + $0x8] sm:$0xff] %v286
    %303 = vst [vmem:[%s3 + $0x10] sm:$0xff] %v287
    %304 = vst [vmem:[%s3 + $0x18] sm:$0xff] %v288
    %305 = vst [vmem:[%s3 + $0x20] sm:$0xff] %v289
    %306 = vst [vmem:[%s3 + $0x28] sm:$0xff] %v290
    %307 = vst [vmem:[%s3 + $0x30] sm:$0xff] %v291
    %308 = vst [vmem:[%s3 + $0x38] sm:$0xff] %v292
    %309 = vst [vmem:[%s3 + $0x40] sm:$0xff] %v293
    %310 = vst [vmem:[%s3 + $0x48] sm:$0xff] %v294
    %311 = vst [vmem:[%s3 + $0x50] sm:$0xff] %v295
    %312 = vst [vmem:[%s3 + $0x58] sm:$0xff] %v296
    %313 = vst [vmem:[%s3 + $0x60] sm:$0xff] %v297
    %314 = vst [vmem:[%s3 + $0x68] sm:$0xff] %v298
    %315 = vst [vmem:[%s3 + $0x70] sm:$0xff] %v299
    %316 = vst [vmem:[%s3 + $0x78] sm:$0xff] %v300
  $region21: #{forward.7} parent=0 // pred_fallthru
    _
  // Predicated region
  $region22: #{forward.7} parent=0 // pred_check
    _
  $region23: #{forward.7} parent=0 // pred_check_branch
    %318 = sbr.rel (0) target = $region25
  $region24: #{forward.7} parent=0 // pred_region
    _
  $region25: #{forward.7} parent=0 // pred_fallthru
    _
  // Predicated region
  $region26: #{forward.7} parent=0 // pred_check
    _
  $region27: #{forward.7} parent=0 // pred_check_branch
    %320 = sbr.rel (0) target = $region29
  $region28: #{forward.7} parent=0 // pred_region
    _
  $region29: #{forward.7} parent=0 // pred_fallthru
    _

// kernel: forward.8
$region0: #{forward.8}
  #allocation0 [shape = 'u32[]', space=smem, size = 0x4, offset = 0x4, fixed_abs, tag = 'smem constant byte address 0x4 - core index']
  #allocation1 [shape = 'u32[144,128]{1,0:T(1,128)}', space=vmem, size = 0x12000, scoped, tag = 'internal scratch']
  #allocation2 [shape = 'f32[128,128]{1,0:T(8,128)}', space=vmem, size = 0x10000, scoped, tag = 'scratch operand']
  %s0 = inlined_call_operand.vmem [shape: f32[128,128], index: 0, kind: input, shape index: {}]
  %s1 = inlined_call_operand.vmem [shape: f32[128,384], index: 1, kind: input, shape index: {}]
  %s2 = inlined_call_operand.vmem [shape: f32[1,384], index: 2, kind: input, shape index: {}]
  %s3 = inlined_call_operand.vmem [shape: f32[128,384], index: 3, kind: output, shape index: {}]
  %s4 = sld [smem:[#allocation0]]
  $region125: #{forward.8} parent=0
    _
  %s6 = ssub.s32 1, %s4
  %s7 = scalar_select 0, %s6, %s4
  $region1: #{forward.8} parent=0
    #allocation3 [shape = 'u8[131072]{0}', space=vmem, size = 0x20000, scoped, tag = 'input window, operand 1']
    #allocation4 [shape = 'u8[131072]{0}', space=vmem, size = 0x20000, scoped, tag = 'output window, operand 0']
    loop: start=0, step=1, limit=5
    $region2: #{forward.8} parent=1 // loop_pre_header
      _
    $region3: #{forward.8} parent=1 // loop_header
      %s9 = sphi 0, %s13
      %p10 = scmp.ge.s32.totalorder %s9, 5
      %s16 = sphi 0, %s35
      %s17 = sphi 0, %s31
      %s18 = sphi 0, %s27
      %s19 = sphi 0, %s16
      %s20 = sphi 0, %s17
      %s21 = sphi 0, %s18
      %s22 = sphi 0, %s19
      %s23 = sphi 0, %s20
      %s24 = sphi 0, %s21
      %s40 = sphi 0, %s42
      %s43 = sphi 0, %s40
      %s44 = sphi 0, %s43
      %s60 = sphi 0, %s44
      %s68 = sphi 0, %s70
      %s71 = sphi 0, %s68
      %s72 = sphi 0, %s71
      %s88 = sphi 0, %s72
      %s94 = sphi 0, %s96
      %s97 = sphi 0, %s94
      %s98 = sphi 0, %s97
      %s114 = sphi 0, %s98
      %s122 = sphi 0, %s124
      %s125 = sphi 0, %s122
      %s126 = sphi 0, %s125
      %s142 = sphi 0, %s126
    $region4: #{forward.8} parent=1 // loop_header_branch
      %12 = sbr.rel (%p10) target = $region8
    $region5: #{forward.8} parent=1 // loop_body
      %s14 = ssub.s32 %s9, 1
      %s15 = ssub.s32 %s9, 2
      %s25 = sadd.s32 1, %s18
      %p26 = scmp.ge.s32.totalorder %s25, 1
      %s27 = scalar_select %p26, 0, %s25
      %s28 = sadd.s32 1, %s17
      %s29 = scalar_select %p26, %s28, %s17
      %p30 = scmp.ge.s32.totalorder %s29, 3
      %s31 = scalar_select %p30, 0, %s29
      %s32 = sadd.s32 1, %s16
      %s33 = scalar_select %p30, %s32, %s16
      %p34 = scmp.ge.s32.totalorder %s33, 1
      %s35 = scalar_select %p34, 0, %s33
      %s36 = ssub.s32 %s16, %s35
      %s37 = ssub.s32 %s18, %s27
      %s38 = sor.u32 %s36, %s37
      %p39 = scmp.eq.s32.totalorder %s38, 0
      %s41 = sadd.s32 %s40, 1
      %s42 = scalar_select %p39, %s40, %s41
      %p45 = pneg %p39
      %p46 = scmp.eq.s32.totalorder %s9, 2
      %p47 = por %p45, %p46
      %p48 = scmp.ne.s32.totalorder %s40, %s43
      %p49 = scmp.eq.s32.totalorder %s9, 0
      %p50 = por %p48, %p49
      %p51 = scmp.ne.s32.totalorder %s40, %s43
      %p52 = scmp.eq.s32.totalorder %s14, 2
      %p53 = por %p51, %p52
      %p54 = scmp.ne.s32.totalorder %s43, %s44
      %p55 = scmp.eq.s32.totalorder %s14, 0
      %p56 = por %p54, %p55
      %p57 = scmp.ne.s32.totalorder %s43, %s44
      %p58 = scmp.eq.s32.totalorder %s15, 2
      %p59 = por %p57, %p58
      %p61 = scmp.ne.s32.totalorder %s44, %s60
      %p62 = scmp.eq.s32.totalorder %s15, 0
      %p63 = por %p61, %p62
      %s64 = ssub.s32 %s18, %s27
      %s65 = ssub.s32 %s17, %s31
      %s66 = sor.u32 %s64, %s65
      %p67 = scmp.eq.s32.totalorder %s66, 0
      %s69 = sadd.s32 %s68, 1
      %s70 = scalar_select %p67, %s68, %s69
      %p73 = pneg %p67
      %p74 = scmp.eq.s32.totalorder %s9, 2
      %p75 = por %p73, %p74
      %p76 = scmp.ne.s32.totalorder %s68, %s71
      %p77 = scmp.eq.s32.totalorder %s9, 0
      %p78 = por %p76, %p77
      %p79 = scmp.ne.s32.totalorder %s68, %s71
      %p80 = scmp.eq.s32.totalorder %s14, 2
      %p81 = por %p79, %p80
      %p82 = scmp.ne.s32.totalorder %s71, %s72
      %p83 = scmp.eq.s32.totalorder %s14, 0
      %p84 = por %p82, %p83
      %p85 = scmp.ne.s32.totalorder %s71, %s72
      %p86 = scmp.eq.s32.totalorder %s15, 2
      %p87 = por %p85, %p86
      %p89 = scmp.ne.s32.totalorder %s72, %s88
      %p90 = scmp.eq.s32.totalorder %s15, 0
      %p91 = por %p89, %p90
      %s92 = ssub.s32 %s17, %s31
      %p93 = scmp.eq.s32.totalorder %s92, 0
      %s95 = sadd.s32 %s94, 1
      %s96 = scalar_select %p93, %s94, %s95
      %p99 = pneg %p93
      %p100 = scmp.eq.s32.totalorder %s9, 2
      %p101 = por %p99, %p100
      %p102 = scmp.ne.s32.totalorder %s94, %s97
      %p103 = scmp.eq.s32.totalorder %s9, 0
      %p104 = por %p102, %p103
      %p105 = scmp.ne.s32.totalorder %s94, %s97
      %p106 = scmp.eq.s32.totalorder %s14, 2
      %p107 = por %p105, %p106
      %p108 = scmp.ne.s32.totalorder %s97, %s98
      %p109 = scmp.eq.s32.totalorder %s14, 0
      %p110 = por %p108, %p109
      %p111 = scmp.ne.s32.totalorder %s97, %s98
      %p112 = scmp.eq.s32.totalorder %s15, 2
      %p113 = por %p111, %p112
      %p115 = scmp.ne.s32.totalorder %s98, %s114
      %p116 = scmp.eq.s32.totalorder %s15, 0
      %p117 = por %p115, %p116
      %s118 = ssub.s32 %s16, %s35
      %s119 = ssub.s32 %s17, %s31
      %s120 = sor.u32 %s118, %s119
      %p121 = scmp.eq.s32.totalorder %s120, 0
      %s123 = sadd.s32 %s122, 1
      %s124 = scalar_select %p121, %s122, %s123
      %p127 = pneg %p121
      %p128 = scmp.eq.s32.totalorder %s9, 2
      %p129 = por %p127, %p128
      %p130 = scmp.ne.s32.totalorder %s122, %s125
      %p131 = scmp.eq.s32.totalorder %s9, 0
      %p132 = por %p130, %p131
      %p133 = scmp.ne.s32.totalorder %s122, %s125
      %p134 = scmp.eq.s32.totalorder %s14, 2
      %p135 = por %p133, %p134
      %p136 = scmp.ne.s32.totalorder %s125, %s126
      %p137 = scmp.eq.s32.totalorder %s14, 0
      %p138 = por %p136, %p137
      %p139 = scmp.ne.s32.totalorder %s125, %s126
      %p140 = scmp.eq.s32.totalorder %s15, 2
      %p141 = por %p139, %p140
      %p143 = scmp.ne.s32.totalorder %s126, %s142
      %p144 = scmp.eq.s32.totalorder %s15, 0
      %p145 = por %p143, %p144
      %p146 = scmp.le.s32.totalorder 1, %s9
      %p147 = scmp.lt.s32.totalorder %s9, 4
      %p148 = pnand %p146, %p147
      %p149 = pneg %p148
      // Predicated region
      $region9: #{forward.8} parent=5 // pred_check
        _
      $region10: #{forward.8} parent=5 // pred_check_branch
        %151 = sbr.rel (%p148) target = $region12
      $region11: #{forward.8} parent=5 // pred_region
        %s152 = ssub.s32 %s9, 1
        // Predicated region
        $region13: #{forward.8} parent=11 // pred_check
          %p153 = pneg %p56
        $region14: #{forward.8} parent=11 // pred_check_branch
          %155 = sbr.rel (%p153) target = $region16
        $region15: #{forward.8} parent=11 // pred_region
          %s156 = smul.u32 16, %s19
          %p157 = scmp.lt.s32.totalorder %s156, 15
          %s158 = scalar_select %p157, %s156, 15
          %p159 = scmp.lt.s32.totalorder %s21, 0
          %s160 = scalar_select %p159, %s21, 0
          %s161 = sadd.s32 %s160, %s158
          %s162 = smul.addr %s161, 8
          %s163 = scalar_lea.vmem %s0, %s162
          %s164 = smul.u32 16, %s19
        $region16: #{forward.8} parent=11 // pred_fallthru
          _
      $region12: #{forward.8} parent=5 // pred_fallthru
        _
      %p165 = scmp.lt.s32.totalorder %s9, 3
      // Predicated region
      $region17: #{forward.8} parent=5 // pred_check
        %p166 = pneg %p165
      $region18: #{forward.8} parent=5 // pred_check_branch
        %168 = sbr.rel (%p166) target = $region20
      $region19: #{forward.8} parent=5 // pred_region
        // Predicated region
        $region21: #{forward.8} parent=19 // pred_check
          %p169 = pneg %p78
        $region22: #{forward.8} parent=19 // pred_check_branch
          %171 = sbr.rel (%p169) target = $region24
        $region23: #{forward.8} parent=19 // pred_region
          %s172 = sand.u32 %s68, 1
          %s173 = sand.u32 %s68, 1
          %s174 = smul.addr %s173, 128
          %s175 = scalar_lea.vmem [#allocation3], %s174
          %s176 = smul.u32 16, %s18
          %s177 = smul.addr %s176, 3
          %s178 = sadd.s32 %s17, %s177
          %s179 = smul.addr %s178, 8
          %s180 = scalar_lea.vmem %s1, %s179
          // Predicated region
          $region25: #{forward.8} parent=23 // pred_check
            _
          $region26: #{forward.8} parent=23 // pred_check_branch
            %182 = sbr.rel (0) target = $region28
          $region27: #{forward.8} parent=23 // pred_region
            // Predicated region
            $region29: #{forward.8} parent=27 // pred_check
              _
            $region30: #{forward.8} parent=27 // pred_check_branch
              %184 = sbr.rel (0) target = $region32
            $region31: #{forward.8} parent=27 // pred_region
              // Predicated region
              $region44: #{forward.8} parent=31 // pred_check
                _
              $region45: #{forward.8} parent=31 // pred_check_branch
                %229 = sbr.rel (0) target = $region47
              $region46: #{forward.8} parent=31 // pred_region
                loop: start=0, step=1, limit=1
                $region48: #{forward.8} parent=46 // loop_pre_header
                  _
                $region49: #{forward.8} parent=46 // loop_header
                  %s231 = sphi 0, %s235
                  %p232 = scmp.ge.s32.totalorder %s231, 1
                  %s236 = sphi %s180, %s180
                  %s237 = sphi %s175, %s175
                $region50: #{forward.8} parent=46 // loop_header_branch
                  %234 = sbr.rel (%p232) target = $region54
                $region51: #{forward.8} parent=46 // loop_body
                  %v238 = vld [vmem:[%s236] sm:$0xff]
                  %239 = vst [vmem:[%s237] sm:$0xff] %v238
                  %v240 = vld [vmem:[%s236 + $0x18] sm:$0xff]
                  %241 = vst [vmem:[%s237 + $0x8] sm:$0xff] %v240
                  %v242 = vld [vmem:[%s236 + $0x30] sm:$0xff]
                  %243 = vst [vmem:[%s237 + $0x10] sm:$0xff] %v242
                  %v244 = vld [vmem:[%s236 + $0x48] sm:$0xff]
                  %245 = vst [vmem:[%s237 + $0x18] sm:$0xff] %v244
                  %v246 = vld [vmem:[%s236 + $0x60] sm:$0xff]
                  %247 = vst [vmem:[%s237 + $0x20] sm:$0xff] %v246
                  %v248 = vld [vmem:[%s236 + $0x78] sm:$0xff]
                  %249 = vst [vmem:[%s237 + $0x28] sm:$0xff] %v248
                  %v250 = vld [vmem:[%s236 + $0x90] sm:$0xff]
                  %251 = vst [vmem:[%s237 + $0x30] sm:$0xff] %v250
                  %v252 = vld [vmem:[%s236 + $0xa8] sm:$0xff]
                  %253 = vst [vmem:[%s237 + $0x38] sm:$0xff] %v252
                  %v254 = vld [vmem:[%s236 + $0xc0] sm:$0xff]
                  %255 = vst [vmem:[%s237 + $0x40] sm:$0xff] %v254
                  %v256 = vld [vmem:[%s236 + $0xd8] sm:$0xff]
                  %257 = vst [vmem:[%s237 + $0x48] sm:$0xff] %v256
                  %v258 = vld [vmem:[%s236 + $0xf0] sm:$0xff]
                  %259 = vst [vmem:[%s237 + $0x50] sm:$0xff] %v258
                  %v260 = vld [vmem:[%s236 + $0x108] sm:$0xff]
                  %261 = vst [vmem:[%s237 + $0x58] sm:$0xff] %v260
                  %v262 = vld [vmem:[%s236 + $0x120] sm:$0xff]
                  %263 = vst [vmem:[%s237 + $0x60] sm:$0xff] %v262
                  %v264 = vld [vmem:[%s236 + $0x138] sm:$0xff]
                  %265 = vst [vmem:[%s237 + $0x68] sm:$0xff] %v264
                  %v266 = vld [vmem:[%s236 + $0x150] sm:$0xff]
                  %267 = vst [vmem:[%s237 + $0x70] sm:$0xff] %v266
                  %v268 = vld [vmem:[%s236 + $0x168] sm:$0xff]
                  %269 = vst [vmem:[%s237 + $0x78] sm:$0xff] %v268
                $region52: #{forward.8} parent=46 // loop_footer
                  %s235 = sadd.s32 1, %s231
                $region53: #{forward.8} parent=46 // loop_footer_branch
                  %230 = sbr.rel target = $region49
                $region54: #{forward.8} parent=46 // loop_exit
                  _
              $region47: #{forward.8} parent=31 // pred_fallthru
                _
              // Predicated region
              $region55: #{forward.8} parent=31 // pred_check
                _
              $region56: #{forward.8} parent=31 // pred_check_branch
                %271 = sbr.rel target = $region58
              $region57: #{forward.8} parent=31 // pred_region
                _
              $region58: #{forward.8} parent=31 // pred_fallthru
                _
            $region32: #{forward.8} parent=27 // pred_fallthru
              _
            // Predicated region
            $region33: #{forward.8} parent=27 // pred_check
              _
            $region34: #{forward.8} parent=27 // pred_check_branch
              %186 = sbr.rel target = $region36
            $region35: #{forward.8} parent=27 // pred_region
              loop: start=0, step=1, limit=1
              $region37: #{forward.8} parent=35 // loop_pre_header
                _
              $region38: #{forward.8} parent=35 // loop_header
                %s189 = sphi 0, %s193
                %p190 = scmp.ge.s32.totalorder %s189, 1
                %s194 = sphi %s180, %s180
                %s195 = sphi %s175, %s175
              $region39: #{forward.8} parent=35 // loop_header_branch
                %192 = sbr.rel (%p190) target = $region43
              $region40: #{forward.8} parent=35 // loop_body
                %v196 = vld [vmem:[%s194] sm:$0xff]
                %197 = vst [vmem:[%s195] sm:$0xff] %v196
                %v198 = vld [vmem:[%s194 + $0x18] sm:$0xff]
                %199 = vst [vmem:[%s195 + $0x8] sm:$0xff] %v198
                %v200 = vld [vmem:[%s194 + $0x30] sm:$0xff]
                %201 = vst [vmem:[%s195 + $0x10] sm:$0xff] %v200
                %v202 = vld [vmem:[%s194 + $0x48] sm:$0xff]
                %203 = vst [vmem:[%s195 + $0x18] sm:$0xff] %v202
                %v204 = vld [vmem:[%s194 + $0x60] sm:$0xff]
                %205 = vst [vmem:[%s195 + $0x20] sm:$0xff] %v204
                %v206 = vld [vmem:[%s194 + $0x78] sm:$0xff]
                %207 = vst [vmem:[%s195 + $0x28] sm:$0xff] %v206
                %v208 = vld [vmem:[%s194 + $0x90] sm:$0xff]
                %209 = vst [vmem:[%s195 + $0x30] sm:$0xff] %v208
                %v210 = vld [vmem:[%s194 + $0xa8] sm:$0xff]
                %211 = vst [vmem:[%s195 + $0x38] sm:$0xff] %v210
                %v212 = vld [vmem:[%s194 + $0xc0] sm:$0xff]
                %213 = vst [vmem:[%s195 + $0x40] sm:$0xff] %v212
                %v214 = vld [vmem:[%s194 + $0xd8] sm:$0xff]
                %215 = vst [vmem:[%s195 + $0x48] sm:$0xff] %v214
                %v216 = vld [vmem:[%s194 + $0xf0] sm:$0xff]
                %217 = vst [vmem:[%s195 + $0x50] sm:$0xff] %v216
                %v218 = vld [vmem:[%s194 + $0x108] sm:$0xff]
                %219 = vst [vmem:[%s195 + $0x58] sm:$0xff] %v218
                %v220 = vld [vmem:[%s194 + $0x120] sm:$0xff]
                %221 = vst [vmem:[%s195 + $0x60] sm:$0xff] %v220
                %v222 = vld [vmem:[%s194 + $0x138] sm:$0xff]
                %223 = vst [vmem:[%s195 + $0x68] sm:$0xff] %v222
                %v224 = vld [vmem:[%s194 + $0x150] sm:$0xff]
                %225 = vst [vmem:[%s195 + $0x70] sm:$0xff] %v224
                %v226 = vld [vmem:[%s194 + $0x168] sm:$0xff]
                %227 = vst [vmem:[%s195 + $0x78] sm:$0xff] %v226
              $region41: #{forward.8} parent=35 // loop_footer
                %s193 = sadd.s32 1, %s189
              $region42: #{forward.8} parent=35 // loop_footer_branch
                %188 = sbr.rel target = $region38
              $region43: #{forward.8} parent=35 // loop_exit
                _
            $region36: #{forward.8} parent=27 // pred_fallthru
              _
          $region28: #{forward.8} parent=23 // pred_fallthru
            _
          %272 = vnop
        $region24: #{forward.8} parent=19 // pred_fallthru
          _
        // Predicated region
        $region59: #{forward.8} parent=19 // pred_check
          %p273 = pneg %p104
        $region60: #{forward.8} parent=19 // pred_check_branch
          %275 = sbr.rel (%p273) target = $region62
        $region61: #{forward.8} parent=19 // pred_region
          %p276 = scmp.lt.s32.totalorder %s17, 2
          %s277 = scalar_select %p276, %s17, 2
          %s278 = scalar_lea.vmem %s2, %s277
        $region62: #{forward.8} parent=19 // pred_fallthru
          _
      $region20: #{forward.8} parent=5 // pred_fallthru
        _
      %p279 = scmp.le.s32.totalorder 1, %s9
      %p280 = scmp.lt.s32.totalorder %s9, 4
      %p281 = pnand %p279, %p280
      %p282 = pneg %p281
      // Predicated region
      $region63: #{forward.8} parent=5 // pred_check
        _
      $region64: #{forward.8} parent=5 // pred_check_branch
        %284 = sbr.rel (%p281) target = $region66
      $region65: #{forward.8} parent=5 // pred_region
        %s285 = ssub.s32 %s9, 1
        %s286 = sand.u32 %s71, 1
        %s287 = sand.u32 %s71, 1
        %s288 = smul.addr %s287, 128
        %s289 = scalar_lea.vmem [#allocation3], %s288
        // Predicated region
        $region67: #{forward.8} parent=65 // pred_check
          %p290 = pneg %p84
        $region68: #{forward.8} parent=65 // pred_check_branch
          %292 = sbr.rel (%p290) target = $region70
        $region69: #{forward.8} parent=65 // pred_region
          _
        $region70: #{forward.8} parent=65 // pred_fallthru
          _
        %s293 = smul.u32 16, %s19
        %p294 = scmp.lt.s32.totalorder %s293, 15
        %s295 = scalar_select %p294, %s293, 15
        %p296 = scmp.lt.s32.totalorder %s21, 0
        %s297 = scalar_select %p296, %s21, 0
        %s298 = sadd.s32 %s297, %s295
        %s299 = smul.addr %s298, 8
        %s300 = scalar_lea.vmem %s0, %s299
        %p301 = pneg %p56
        %p302 = pneg %p53
        %s303 = sand.u32 %s71, 1
        %s304 = sand.u32 %s71, 1
        %s305 = smul.addr %s304, 128
        %s306 = scalar_lea.vmem [#allocation3], %s305
        %p307 = pneg %p84
        %p308 = pneg %p81
        %p309 = scmp.lt.s32.totalorder %s20, 2
        %s310 = scalar_select %p309, %s20, 2
        %s311 = scalar_lea.vmem %s2, %s310
        %p312 = pneg %p110
        %p313 = pneg %p107
        %p314 = pneg %p138
        %p315 = pneg %p135
        %s316 = sand.u32 %s125, 1
        %s317 = sand.u32 %s125, 1
        %s318 = smul.addr %s317, 128
        %s319 = scalar_lea.vmem [#allocation4], %s318
        %s320 = smul.u32 16, %s19
        %p321 = scmp.lt.s32.totalorder %s320, 15
        %s322 = scalar_select %p321, %s320, 15
        %p323 = scmp.lt.s32.totalorder %s21, 0
        %s324 = scalar_select %p323, %s21, 0
        %s325 = sadd.s32 %s324, %s322
        %s326 = smul.addr %s325, 8
        %s327 = scalar_lea.vmem %s0, %s326
        %s328 = smul.u32 16, %s19
        %s329 = smul.u32 16, %s21
        %p330 = scmp.lt.s32.totalorder %s20, 2
        %s331 = scalar_select %p330, %s20, 2
        %s332 = scalar_lea.vmem %s2, %s331
        %s333 = smul.u32 16, %s19
        %p334 = scmp.eq.s32.totalorder %s21, 0
        // Predicated region
        $region71: #{forward.8} parent=65 // pred_check
          %p335 = pneg %p334
        $region72: #{forward.8} parent=65 // pred_check_branch
          %337 = sbr.rel (%p335) target = $region74
        $region73: #{forward.8} parent=65 // pred_region
          %338 = vst [vmem:[#allocation2] sm:$0xff] 0.0
          %339 = vst [vmem:[#allocation2 + $0x8] sm:$0xff] 0.0
          %340 = vst [vmem:[#allocation2 + $0x10] sm:$0xff] 0.0
          %341 = vst [vmem:[#allocation2 + $0x18] sm:$0xff] 0.0
          %342 = vst [vmem:[#allocation2 + $0x20] sm:$0xff] 0.0
          %343 = vst [vmem:[#allocation2 + $0x28] sm:$0xff] 0.0
          %344 = vst [vmem:[#allocation2 + $0x30] sm:$0xff] 0.0
          %345 = vst [vmem:[#allocation2 + $0x38] sm:$0xff] 0.0
          %346 = vst [vmem:[#allocation2 + $0x40] sm:$0xff] 0.0
          %347 = vst [vmem:[#allocation2 + $0x48] sm:$0xff] 0.0
          %348 = vst [vmem:[#allocation2 + $0x50] sm:$0xff] 0.0
          %349 = vst [vmem:[#allocation2 + $0x58] sm:$0xff] 0.0
          %350 = vst [vmem:[#allocation2 + $0x60] sm:$0xff] 0.0
          %351 = vst [vmem:[#allocation2 + $0x68] sm:$0xff] 0.0
          %352 = vst [vmem:[#allocation2 + $0x70] sm:$0xff] 0.0
          %353 = vst [vmem:[#allocation2 + $0x78] sm:$0xff] 0.0
        $region74: #{forward.8} parent=65 // pred_fallthru
          _
        %v354 = vld [vmem:[#allocation2] sm:$0xff]
        %v355 = vld [vmem:[#allocation2 + $0x8] sm:$0xff]
        %v356 = vld [vmem:[#allocation2 + $0x10] sm:$0xff]
        %v357 = vld [vmem:[#allocation2 + $0x18] sm:$0xff]
        %v358 = vld [vmem:[#allocation2 + $0x20] sm:$0xff]
        %v359 = vld [vmem:[#allocation2 + $0x28] sm:$0xff]
        %v360 = vld [vmem:[#allocation2 + $0x30] sm:$0xff]
        %v361 = vld [vmem:[#allocation2 + $0x38] sm:$0xff]
        %v362 = vld [vmem:[#allocation2 + $0x40] sm:$0xff]
        %v363 = vld [vmem:[#allocation2 + $0x48] sm:$0xff]
        %v364 = vld [vmem:[#allocation2 + $0x50] sm:$0xff]
        %v365 = vld [vmem:[#allocation2 + $0x58] sm:$0xff]
        %v366 = vld [vmem:[#allocation2 + $0x60] sm:$0xff]
        %v367 = vld [vmem:[#allocation2 + $0x68] sm:$0xff]
        %v368 = vld [vmem:[#allocation2 + $0x70] sm:$0xff]
        %v369 = vld [vmem:[#allocation2 + $0x78] sm:$0xff]
        %v370 = vld [vmem:[%s327] sm:$0xff]
        %v371 = vld [vmem:[%s327 + $0x8] sm:$0xff]
        %v372 = vld [vmem:[%s327 + $0x10] sm:$0xff]
        %v373 = vld [vmem:[%s327 + $0x18] sm:$0xff]
        %v374 = vld [vmem:[%s327 + $0x20] sm:$0xff]
        %v375 = vld [vmem:[%s327 + $0x28] sm:$0xff]
        %v376 = vld [vmem:[%s327 + $0x30] sm:$0xff]
        %v377 = vld [vmem:[%s327 + $0x38] sm:$0xff]
        %v378 = vld [vmem:[%s327 + $0x40] sm:$0xff]
        %v379 = vld [vmem:[%s327 + $0x48] sm:$0xff]
        %v380 = vld [vmem:[%s327 + $0x50] sm:$0xff]
        %v381 = vld [vmem:[%s327 + $0x58] sm:$0xff]
        %v382 = vld [vmem:[%s327 + $0x60] sm:$0xff]
        %v383 = vld [vmem:[%s327 + $0x68] sm:$0xff]
        %v384 = vld [vmem:[%s327 + $0x70] sm:$0xff]
        %v385 = vld [vmem:[%s327 + $0x78] sm:$0xff]
        %v386 = vld [vmem:[%s289] sm:$0xff]
        %v387 = vld [vmem:[%s289 + $0x8] sm:$0xff]
        %v388 = vld [vmem:[%s289 + $0x10] sm:$0xff]
        %v389 = vld [vmem:[%s289 + $0x18] sm:$0xff]
        %v390 = vld [vmem:[%s289 + $0x20] sm:$0xff]
        %v391 = vld [vmem:[%s289 + $0x28] sm:$0xff]
        %v392 = vld [vmem:[%s289 + $0x30] sm:$0xff]
        %v393 = vld [vmem:[%s289 + $0x38] sm:$0xff]
        %v394 = vld [vmem:[%s289 + $0x40] sm:$0xff]
        %v395 = vld [vmem:[%s289 + $0x48] sm:$0xff]
        %v396 = vld [vmem:[%s289 + $0x50] sm:$0xff]
        %v397 = vld [vmem:[%s289 + $0x58] sm:$0xff]
        %v398 = vld [vmem:[%s289 + $0x60] sm:$0xff]
        %v399 = vld [vmem:[%s289 + $0x68] sm:$0xff]
        %v400 = vld [vmem:[%s289 + $0x70] sm:$0xff]
        %v401 = vld [vmem:[%s289 + $0x78] sm:$0xff]
        %402 = vmatprep.subr.mxu0 0.0
        %403 = vmatpush1.msra.mxu0 %v386
        %404 = vmatprep.subr.mxu0 0.0
        %405 = vmatpush1.msra.mxu0 %v387
        %406 = vmatprep.subr.mxu0 0.0
        %407 = vmatpush1.msra.mxu0 %v388
        %408 = vmatprep.subr.mxu0 0.0
        %409 = vmatpush1.msra.mxu0 %v389
        %410 = vmatprep.subr.mxu0 0.0
        %411 = vmatpush1.msra.mxu0 %v390
        %412 = vmatprep.subr.mxu0 0.0
        %413 = vmatpush1.msra.mxu0 %v391
        %414 = vmatprep.subr.mxu0 0.0
        %415 = vmatpush1.msra.mxu0 %v392
        %416 = vmatprep.subr.mxu0 0.0
        %417 = vmatpush1.msra.mxu0 %v393
        %418 = vmatprep.subr.mxu0 0.0
        %419 = vmatpush1.msra.mxu0 %v394
        %420 = vmatprep.subr.mxu0 0.0
        %421 = vmatpush1.msra.mxu0 %v395
        %422 = vmatprep.subr.mxu0 0.0
        %423 = vmatpush1.msra.mxu0 %v396
        %424 = vmatprep.subr.mxu0 0.0
        %425 = vmatpush1.msra.mxu0 %v397
        %426 = vmatprep.subr.mxu0 0.0
        %427 = vmatpush1.msra.mxu0 %v398
        %428 = vmatprep.subr.mxu0 0.0
        %429 = vmatpush1.msra.mxu0 %v399
        %430 = vmatprep.subr.mxu0 0.0
        %431 = vmatpush1.msra.mxu0 %v400
        %432 = vmatprep.subr.mxu0 0.0
        %433 = vmatpush1.msra.mxu0 %v401
        %434 = vmatprep.subr.mxu0 0.0
        %435 = vmatpush1.msra.mxu0 0.0
        %436 = vmatprep.subr.mxu0 0.0
        %437 = vmatpush1.msra.mxu0 0.0
        %438 = vmatprep.subr.mxu0 0.0
        %439 = vmatpush1.msra.mxu0 0.0
        %440 = vmatprep.subr.mxu0 0.0
        %441 = vmatpush1.msra.mxu0 0.0
        %442 = vmatprep.subr.mxu0 0.0
        %443 = vmatpush1.msra.mxu0 0.0
        %444 = vmatprep.subr.mxu0 0.0
        %445 = vmatpush1.msra.mxu0 0.0
        %446 = vmatprep.subr.mxu0 0.0
        %447 = vmatpush1.msra.mxu0 0.0
        %448 = vmatprep.subr.mxu0 0.0
        %449 = vmatpush1.msra.mxu0 0.0
        %450 = vmatprep.subr.mxu0 0.0
        %451 = vmatpush1.msra.mxu0 0.0
        %452 = vmatprep.subr.mxu0 0.0
        %453 = vmatpush1.msra.mxu0 0.0
        %454 = vmatprep.subr.mxu0 0.0
        %455 = vmatpush1.msra.mxu0 0.0
        %456 = vmatprep.subr.mxu0 0.0
        %457 = vmatpush1.msra.mxu0 0.0
        %458 = vmatprep.subr.mxu0 0.0
        %459 = vmatpush1.msra.mxu0 0.0
        %460 = vmatprep.subr.mxu0 0.0
        %461 = vmatpush1.msra.mxu0 0.0
        %462 = vmatprep.subr.mxu0 0.0
        %463 = vmatpush1.msra.mxu0 0.0
        %464 = vmatprep.subr.mxu0 0.0
        %465 = vmatpush1.msra.mxu0 0.0
        %466 = vmatprep.mubr.f32.mxu0 0.0
        %467 = vmatmul.mubr.f32.gmra.mrb[0].mxu0 %v370
        %v468 = vpop.f32.mrb[0].mxu0
        %v469 = vadd.f32 0.0, %v468
        %v470 = vpop.f32.mrb[0].mxu0
        %471 = vmatprep.mubr.f32.mxu0 0.0
        %472 = vmatmul.mubr.f32.gmra.mrb[0].mxu0 %v371
        %v473 = vpop.f32.mrb[0].mxu0
        %v474 = vadd.f32 0.0, %v473
        %v475 = vpop.f32.mrb[0].mxu0
        %476 = vmatprep.mubr.f32.mxu0 0.0
        %477 = vmatmul.mubr.f32.gmra.mrb[0].mxu0 %v372
        %v478 = vpop.f32.mrb[0].mxu0
        %v479 = vadd.f32 0.0, %v478
        %v480 = vpop.f32.mrb[0].mxu0
        %481 = vmatprep.mubr.f32.mxu0 0.0
        %482 = vmatmul.mubr.f32.gmra.mrb[0].mxu0 %v373
        %v483 = vpop.f32.mrb[0].mxu0
        %v484 = vadd.f32 0.0, %v483
        %v485 = vpop.f32.mrb[0].mxu0
        %486 = vmatprep.mubr.f32.mxu0 0.0
        %487 = vmatmul.mubr.f32.gmra.mrb[0].mxu0 %v374
        %v488 = vpop.f32.mrb[0].mxu0
        %v489 = vadd.f32 0.0, %v488
        %v490 = vpop.f32.mrb[0].mxu0
        %491 = vmatprep.mubr.f32.mxu0 0.0
        %492 = vmatmul.mubr.f32.gmra.mrb[0].mxu0 %v375
        %v493 = vpop.f32.mrb[0].mxu0
        %v494 = vadd.f32 0.0, %v493
        %v495 = vpop.f32.mrb[0].mxu0
        %496 = vmatprep.mubr.f32.mxu0 0.0
        %497 = vmatmul.mubr.f32.gmra.mrb[0].mxu0 %v376
        %v498 = vpop.f32.mrb[0].mxu0
        %v499 = vadd.f32 0.0, %v498
        %v500 = vpop.f32.mrb[0].mxu0
        %501 = vmatprep.mubr.f32.mxu0 0.0
        %502 = vmatmul.mubr.f32.gmra.mrb[0].mxu0 %v377
        %v503 = vpop.f32.mrb[0].mxu0
        %v504 = vadd.f32 0.0, %v503
        %v505 = vpop.f32.mrb[0].mxu0
        %506 = vmatprep.mubr.f32.mxu0 0.0
        %507 = vmatmul.mubr.f32.gmra.mrb[0].mxu0 %v378
        %v508 = vpop.f32.mrb[0].mxu0
        %v509 = vadd.f32 0.0, %v508
        %v510 = vpop.f32.mrb[0].mxu0
        %511 = vmatprep.mubr.f32.mxu0 0.0
        %512 = vmatmul.mubr.f32.gmra.mrb[0].mxu0 %v379
        %v513 = vpop.f32.mrb[0].mxu0
        %v514 = vadd.f32 0.0, %v513
        %v515 = vpop.f32.mrb[0].mxu0
        %516 = vmatprep.mubr.f32.mxu0 0.0
        %517 = vmatmul.mubr.f32.gmra.mrb[0].mxu0 %v380
        %v518 = vpop.f32.mrb[0].mxu0
        %v519 = vadd.f32 0.0, %v518
        %v520 = vpop.f32.mrb[0].mxu0
        %521 = vmatprep.mubr.f32.mxu0 0.0
        %522 = vmatmul.mubr.f32.gmra.mrb[0].mxu0 %v381
        %v523 = vpop.f32.mrb[0].mxu0
        %v524 = vadd.f32 0.0, %v523
        %v525 = vpop.f32.mrb[0].mxu0
        %526 = vmatprep.mubr.f32.mxu0 0.0
        %527 = vmatmul.mubr.f32.gmra.mrb[0].mxu0 %v382
        %v528 = vpop.f32.mrb[0].mxu0
        %v529 = vadd.f32 0.0, %v528
        %v530 = vpop.f32.mrb[0].mxu0
        %531 = vmatprep.mubr.f32.mxu0 0.0
        %532 = vmatmul.mubr.f32.gmra.mrb[0].mxu0 %v383
        %v533 = vpop.f32.mrb[0].mxu0
        %v534 = vadd.f32 0.0, %v533
        %v535 = vpop.f32.mrb[0].mxu0
        %536 = vmatprep.mubr.f32.mxu0 0.0
        %537 = vmatmul.mubr.f32.gmra.mrb[0].mxu0 %v384
        %v538 = vpop.f32.mrb[0].mxu0
        %v539 = vadd.f32 0.0, %v538
        %v540 = vpop.f32.mrb[0].mxu0
        %541 = vmatprep.mubr.f32.mxu0 0.0
        %542 = vmatmul.mubr.f32.gmra.mrb[0].mxu0 %v385
        %v543 = vpop.f32.mrb[0].mxu0
        %v544 = vadd.f32 0.0, %v543
        %v545 = vpop.f32.mrb[0].mxu0
        %546 = vdwg.mxu0
        %v547 = vadd.f32 %v354, %v469
        %v548 = vadd.f32 %v355, %v474
        %v549 = vadd.f32 %v356, %v479
        %v550 = vadd.f32 %v357, %v484
        %v551 = vadd.f32 %v358, %v489
        %v552 = vadd.f32 %v359, %v494
        %v553 = vadd.f32 %v360, %v499
        %v554 = vadd.f32 %v361, %v504
        %v555 = vadd.f32 %v362, %v509
        %v556 = vadd.f32 %v363, %v514
        %v557 = vadd.f32 %v364, %v519
        %v558 = vadd.f32 %v365, %v524
        %v559 = vadd.f32 %v366, %v529
        %v560 = vadd.f32 %v367, %v534
        %v561 = vadd.f32 %v368, %v539
        %v562 = vadd.f32 %v369, %v544
        %563 = vst [vmem:[#allocation2] sm:$0xff] %v547
        %564 = vst [vmem:[#allocation2 + $0x8] sm:$0xff] %v548
        %565 = vst [vmem:[#allocation2 + $0x10] sm:$0xff] %v549
        %566 = vst [vmem:[#allocation2 + $0x18] sm:$0xff] %v550
        %567 = vst [vmem:[#allocation2 + $0x20] sm:$0xff] %v551
        %568 = vst [vmem:[#allocation2 + $0x28] sm:$0xff] %v552
        %569 = vst [vmem:[#allocation2 + $0x30] sm:$0xff] %v553
        %570 = vst [vmem:[#allocation2 + $0x38] sm:$0xff] %v554
        %571 = vst [vmem:[#allocation2 + $0x40] sm:$0xff] %v555
        %572 = vst [vmem:[#allocation2 + $0x48] sm:$0xff] %v556
        %573 = vst [vmem:[#allocation2 + $0x50] sm:$0xff] %v557
        %574 = vst [vmem:[#allocation2 + $0x58] sm:$0xff] %v558
        %575 = vst [vmem:[#allocation2 + $0x60] sm:$0xff] %v559
        %576 = vst [vmem:[#allocation2 + $0x68] sm:$0xff] %v560
        %577 = vst [vmem:[#allocation2 + $0x70] sm:$0xff] %v561
        %578 = vst [vmem:[#allocation2 + $0x78] sm:$0xff] %v562
        // Predicated region
        $region75: #{forward.8} parent=65 // pred_check
          %p579 = pneg %p334
        $region76: #{forward.8} parent=65 // pred_check_branch
          %581 = sbr.rel (%p579) target = $region78
        $region77: #{forward.8} parent=65 // pred_region
          %v582 = vld [vmem:[#allocation2] sm:$0xff]
          %v583 = vld [vmem:[#allocation2 + $0x8] sm:$0xff]
          %v584 = vld [vmem:[#allocation2 + $0x10] sm:$0xff]
          %v585 = vld [vmem:[#allocation2 + $0x18] sm:$0xff]
          %v586 = vld [vmem:[#allocation2 + $0x20] sm:$0xff]
          %v587 = vld [vmem:[#allocation2 + $0x28] sm:$0xff]
          %v588 = vld [vmem:[#allocation2 + $0x30] sm:$0xff]
          %v589 = vld [vmem:[#allocation2 + $0x38] sm:$0xff]
          %v590 = vld [vmem:[#allocation2 + $0x40] sm:$0xff]
          %v591 = vld [vmem:[#allocation2 + $0x48] sm:$0xff]
          %v592 = vld [vmem:[#allocation2 + $0x50] sm:$0xff]
          %v593 = vld [vmem:[#allocation2 + $0x58] sm:$0xff]
          %v594 = vld [vmem:[#allocation2 + $0x60] sm:$0xff]
          %v595 = vld [vmem:[#allocation2 + $0x68] sm:$0xff]
          %v596 = vld [vmem:[#allocation2 + $0x70] sm:$0xff]
          %v597 = vld [vmem:[#allocation2 + $0x78] sm:$0xff]
          %v598 = vld [vmem:[%s332] sm:$0x1]
          %v600 = vlaneseq
          %v601 = vshrl.u32 %v600, 7
          %v602 = vsub.s32 0, %v601
          %v603 = vrot.slane %v598, %v602
          %v605 = vadd.f32 %v582, %v603
          %v606 = vadd.f32 %v583, %v603
          %v607 = vadd.f32 %v584, %v603
          %v608 = vadd.f32 %v585, %v603
          %v609 = vadd.f32 %v586, %v603
          %v610 = vadd.f32 %v587, %v603
          %v611 = vadd.f32 %v588, %v603
          %v612 = vadd.f32 %v589, %v603
          %v613 = vadd.f32 %v590, %v603
          %v614 = vadd.f32 %v591, %v603
          %v615 = vadd.f32 %v592, %v603
          %v616 = vadd.f32 %v593, %v603
          %v617 = vadd.f32 %v594, %v603
          %v618 = vadd.f32 %v595, %v603
          %v619 = vadd.f32 %v596, %v603
          %v620 = vadd.f32 %v597, %v603
          %621 = vst [vmem:[%s319] sm:$0xff] %v605
          %622 = vst [vmem:[%s319 + $0x8] sm:$0xff] %v606
          %623 = vst [vmem:[%s319 + $0x10] sm:$0xff] %v607
          %624 = vst [vmem:[%s319 + $0x18] sm:$0xff] %v608
          %625 = vst [vmem:[%s319 + $0x20] sm:$0xff] %v609
          %626 = vst [vmem:[%s319 + $0x28] sm:$0xff] %v610
          %627 = vst [vmem:[%s319 + $0x30] sm:$0xff] %v611
          %628 = vst [vmem:[%s319 + $0x38] sm:$0xff] %v612
          %629 = vst [vmem:[%s319 + $0x40] sm:$0xff] %v613
          %630 = vst [vmem:[%s319 + $0x48] sm:$0xff] %v614
          %631 = vst [vmem:[%s319 + $0x50] sm:$0xff] %v615
          %632 = vst [vmem:[%s319 + $0x58] sm:$0xff] %v616
          %633 = vst [vmem:[%s319 + $0x60] sm:$0xff] %v617
          %634 = vst [vmem:[%s319 + $0x68] sm:$0xff] %v618
          %635 = vst [vmem:[%s319 + $0x70] sm:$0xff] %v619
          %636 = vst [vmem:[%s319 + $0x78] sm:$0xff] %v620
        $region78: #{forward.8} parent=65 // pred_fallthru
          _
        %s637 = sand.u32 %s125, 1
        %s638 = sand.u32 %s125, 1
        %s639 = smul.addr %s638, 128
        %s640 = scalar_lea.vmem [#allocation4], %s639
        // Predicated region
        $region79: #{forward.8} parent=65 // pred_check
          %p641 = pneg %p135
        $region80: #{forward.8} parent=65 // pred_check_branch
          %643 = sbr.rel (%p641) target = $region82
        $region81: #{forward.8} parent=65 // pred_region
          %s644 = smul.u32 16, %s19
          %s645 = smul.addr %s644, 3
          %s646 = sadd.s32 %s20, %s645
          %s647 = smul.addr %s646, 8
          %s648 = scalar_lea.vmem %s3, %s647
          // Predicated region
          $region83: #{forward.8} parent=81 // pred_check
            _
          $region84: #{forward.8} parent=81 // pred_check_branch
            %650 = sbr.rel (0) target = $region86
          $region85: #{forward.8} parent=81 // pred_region
            // Predicated region
            $region87: #{forward.8} parent=85 // pred_check
              _
            $region88: #{forward.8} parent=85 // pred_check_branch
              %652 = sbr.rel (0) target = $region90
            $region89: #{forward.8} parent=85 // pred_region
              // Predicated region
              $region102: #{forward.8} parent=89 // pred_check
                _
              $region103: #{forward.8} parent=89 // pred_check_branch
                %697 = sbr.rel (0) target = $region105
              $region104: #{forward.8} parent=89 // pred_region
                loop: start=0, step=1, limit=1
                $region106: #{forward.8} parent=104 // loop_pre_header
                  _
                $region107: #{forward.8} parent=104 // loop_header
                  %s699 = sphi 0, %s703
                  %p700 = scmp.ge.s32.totalorder %s699, 1
                  %s704 = sphi %s640, %s640
                  %s705 = sphi %s648, %s648
                $region108: #{forward.8} parent=104 // loop_header_branch
                  %702 = sbr.rel (%p700) target = $region112
                $region109: #{forward.8} parent=104 // loop_body
                  %v706 = vld [vmem:[%s704] sm:$0xff]
                  %707 = vst [vmem:[%s705] sm:$0xff] %v706
                  %v708 = vld [vmem:[%s704 + $0x8] sm:$0xff]
                  %709 = vst [vmem:[%s705 + $0x18] sm:$0xff] %v708
                  %v710 = vld [vmem:[%s704 + $0x10] sm:$0xff]
                  %711 = vst [vmem:[%s705 + $0x30] sm:$0xff] %v710
                  %v712 = vld [vmem:[%s704 + $0x18] sm:$0xff]
                  %713 = vst [vmem:[%s705 + $0x48] sm:$0xff] %v712
                  %v714 = vld [vmem:[%s704 + $0x20] sm:$0xff]
                  %715 = vst [vmem:[%s705 + $0x60] sm:$0xff] %v714
                  %v716 = vld [vmem:[%s704 + $0x28] sm:$0xff]
                  %717 = vst [vmem:[%s705 + $0x78] sm:$0xff] %v716
                  %v718 = vld [vmem:[%s704 + $0x30] sm:$0xff]
                  %719 = vst [vmem:[%s705 + $0x90] sm:$0xff] %v718
                  %v720 = vld [vmem:[%s704 + $0x38] sm:$0xff]
                  %721 = vst [vmem:[%s705 + $0xa8] sm:$0xff] %v720
                  %v722 = vld [vmem:[%s704 + $0x40] sm:$0xff]
                  %723 = vst [vmem:[%s705 + $0xc0] sm:$0xff] %v722
                  %v724 = vld [vmem:[%s704 + $0x48] sm:$0xff]
                  %725 = vst [vmem:[%s705 + $0xd8] sm:$0xff] %v724
                  %v726 = vld [vmem:[%s704 + $0x50] sm:$0xff]
                  %727 = vst [vmem:[%s705 + $0xf0] sm:$0xff] %v726
                  %v728 = vld [vmem:[%s704 + $0x58] sm:$0xff]
                  %729 = vst [vmem:[%s705 + $0x108] sm:$0xff] %v728
                  %v730 = vld [vmem:[%s704 + $0x60] sm:$0xff]
                  %731 = vst [vmem:[%s705 + $0x120] sm:$0xff] %v730
                  %v732 = vld [vmem:[%s704 + $0x68] sm:$0xff]
                  %733 = vst [vmem:[%s705 + $0x138] sm:$0xff] %v732
                  %v734 = vld [vmem:[%s704 + $0x70] sm:$0xff]
                  %735 = vst [vmem:[%s705 + $0x150] sm:$0xff] %v734
                  %v736 = vld [vmem:[%s704 + $0x78] sm:$0xff]
                  %737 = vst [vmem:[%s705 + $0x168] sm:$0xff] %v736
                $region110: #{forward.8} parent=104 // loop_footer
                  %s703 = sadd.s32 1, %s699
                $region111: #{forward.8} parent=104 // loop_footer_branch
                  %698 = sbr.rel target = $region107
                $region112: #{forward.8} parent=104 // loop_exit
                  _
              $region105: #{forward.8} parent=89 // pred_fallthru
                _
              // Predicated region
              $region113: #{forward.8} parent=89 // pred_check
                _
              $region114: #{forward.8} parent=89 // pred_check_branch
                %739 = sbr.rel target = $region116
              $region115: #{forward.8} parent=89 // pred_region
                _
              $region116: #{forward.8} parent=89 // pred_fallthru
                _
            $region90: #{forward.8} parent=85 // pred_fallthru
              _
            // Predicated region
            $region91: #{forward.8} parent=85 // pred_check
              _
            $region92: #{forward.8} parent=85 // pred_check_branch
              %654 = sbr.rel target = $region94
            $region93: #{forward.8} parent=85 // pred_region
              loop: start=0, step=1, limit=1
              $region95: #{forward.8} parent=93 // loop_pre_header
                _
              $region96: #{forward.8} parent=93 // loop_header
                %s657 = sphi 0, %s661
                %p658 = scmp.ge.s32.totalorder %s657, 1
                %s662 = sphi %s640, %s640
                %s663 = sphi %s648, %s648
              $region97: #{forward.8} parent=93 // loop_header_branch
                %660 = sbr.rel (%p658) target = $region101
              $region98: #{forward.8} parent=93 // loop_body
                %v664 = vld [vmem:[%s662] sm:$0xff]
                %665 = vst [vmem:[%s663] sm:$0xff] %v664
                %v666 = vld [vmem:[%s662 + $0x8] sm:$0xff]
                %667 = vst [vmem:[%s663 + $0x18] sm:$0xff] %v666
                %v668 = vld [vmem:[%s662 + $0x10] sm:$0xff]
                %669 = vst [vmem:[%s663 + $0x30] sm:$0xff] %v668
                %v670 = vld [vmem:[%s662 + $0x18] sm:$0xff]
                %671 = vst [vmem:[%s663 + $0x48] sm:$0xff] %v670
                %v672 = vld [vmem:[%s662 + $0x20] sm:$0xff]
                %673 = vst [vmem:[%s663 + $0x60] sm:$0xff] %v672
                %v674 = vld [vmem:[%s662 + $0x28] sm:$0xff]
                %675 = vst [vmem:[%s663 + $0x78] sm:$0xff] %v674
                %v676 = vld [vmem:[%s662 + $0x30] sm:$0xff]
                %677 = vst [vmem:[%s663 + $0x90] sm:$0xff] %v676
                %v678 = vld [vmem:[%s662 + $0x38] sm:$0xff]
                %679 = vst [vmem:[%s663 + $0xa8] sm:$0xff] %v678
                %v680 = vld [vmem:[%s662 + $0x40] sm:$0xff]
                %681 = vst [vmem:[%s663 + $0xc0] sm:$0xff] %v680
                %v682 = vld [vmem:[%s662 + $0x48] sm:$0xff]
                %683 = vst [vmem:[%s663 + $0xd8] sm:$0xff] %v682
                %v684 = vld [vmem:[%s662 + $0x50] sm:$0xff]
                %685 = vst [vmem:[%s663 + $0xf0] sm:$0xff] %v684
                %v686 = vld [vmem:[%s662 + $0x58] sm:$0xff]
                %687 = vst [vmem:[%s663 + $0x108] sm:$0xff] %v686
                %v688 = vld [vmem:[%s662 + $0x60] sm:$0xff]
                %689 = vst [vmem:[%s663 + $0x120] sm:$0xff] %v688
                %v690 = vld [vmem:[%s662 + $0x68] sm:$0xff]
                %691 = vst [vmem:[%s663 + $0x138] sm:$0xff] %v690
                %v692 = vld [vmem:[%s662 + $0x70] sm:$0xff]
                %693 = vst [vmem:[%s663 + $0x150] sm:$0xff] %v692
                %v694 = vld [vmem:[%s662 + $0x78] sm:$0xff]
                %695 = vst [vmem:[%s663 + $0x168] sm:$0xff] %v694
              $region99: #{forward.8} parent=93 // loop_footer
                %s661 = sadd.s32 1, %s657
              $region100: #{forward.8} parent=93 // loop_footer_branch
                %656 = sbr.rel target = $region96
              $region101: #{forward.8} parent=93 // loop_exit
                _
            $region94: #{forward.8} parent=85 // pred_fallthru
              _
          $region86: #{forward.8} parent=81 // pred_fallthru
            _
          %740 = vnop
        $region82: #{forward.8} parent=65 // pred_fallthru
          _
      $region66: #{forward.8} parent=5 // pred_fallthru
        _
      %p741 = scmp.le.s32.totalorder 2, %s9
      // Predicated region
      $region117: #{forward.8} parent=5 // pred_check
        %p742 = pneg %p741
      $region118: #{forward.8} parent=5 // pred_check_branch
        %744 = sbr.rel (%p742) target = $region120
      $region119: #{forward.8} parent=5 // pred_region
        %s745 = ssub.s32 %s9, 2
        // Predicated region
        $region121: #{forward.8} parent=119 // pred_check
          %p746 = pneg %p141
        $region122: #{forward.8} parent=119 // pred_check_branch
          %748 = sbr.rel (%p746) target = $region124
        $region123: #{forward.8} parent=119 // pred_region
          %s749 = sand.u32 %s126, 1
          %s750 = sand.u32 %s126, 1
          %s751 = smul.addr %s750, 128
          %s752 = scalar_lea.vmem [#allocation4], %s751
        $region124: #{forward.8} parent=119 // pred_fallthru
          _
      $region120: #{forward.8} parent=5 // pred_fallthru
        _
    $region6: #{forward.8} parent=1 // loop_footer
      %s13 = sadd.s32 1, %s9
    $region7: #{forward.8} parent=1 // loop_footer_branch
      %8 = sbr.rel target = $region3
    $region8: #{forward.8} parent=1 // loop_exit
      _

// kernel: forward.9
$region0: #{forward.9}
  #allocation0 [shape = 'u32[]', space=smem, size = 0x4, offset = 0x4, fixed_abs, tag = 'smem constant byte address 0x4 - core index']
  #allocation1 [shape = 'u32[144,128]{1,0:T(1,128)}', space=vmem, size = 0x12000, scoped, tag = 'internal scratch']
  %s0 = inlined_call_operand.vmem [shape: f32[16,8,384], index: 0, kind: input, shape index: {}]
  %s1 = inlined_call_operand.vmem [shape: f32[128,384], index: 1, kind: input, shape index: {}]
  %s2 = inlined_call_operand.vmem [shape: f32[1,384], index: 2, kind: input, shape index: {}]
  %s3 = inlined_call_operand.vmem [shape: f32[16,8,128], index: 3, kind: output, shape index: {}]
  %s4 = sld [smem:[#allocation0]]
  $region29: #{forward.9} parent=0
    _
  %s6 = ssub.s32 1, %s4
  %s7 = scalar_select 0, %s6, %s4
  // Predicated region
  $region2: #{forward.9} parent=0 // pred_check
    _
  $region3: #{forward.9} parent=0 // pred_check_branch
    %9 = sbr.rel (0) target = $region5
  $region4: #{forward.9} parent=0 // pred_region
    _
  $region5: #{forward.9} parent=0 // pred_fallthru
    _
  // Predicated region
  $region6: #{forward.9} parent=0 // pred_check
    _
  $region7: #{forward.9} parent=0 // pred_check_branch
    %11 = sbr.rel (0) target = $region9
  $region8: #{forward.9} parent=0 // pred_region
    _
  $region9: #{forward.9} parent=0 // pred_fallthru
    _
  // Predicated region
  $region10: #{forward.9} parent=0 // pred_check
    _
  $region11: #{forward.9} parent=0 // pred_check_branch
    %13 = sbr.rel (0) target = $region13
  $region12: #{forward.9} parent=0 // pred_region
    _
  $region13: #{forward.9} parent=0 // pred_fallthru
    _
  %v14 = vld [vmem:[%s1] sm:$0xff]
  %v15 = vld [vmem:[%s1 + $0x8] sm:$0xff]
  %v16 = vld [vmem:[%s1 + $0x10] sm:$0xff]
  %v17 = vld [vmem:[%s1 + $0x18] sm:$0xff]
  %v18 = vld [vmem:[%s1 + $0x20] sm:$0xff]
  %v19 = vld [vmem:[%s1 + $0x28] sm:$0xff]
  %v20 = vld [vmem:[%s1 + $0x30] sm:$0xff]
  %v21 = vld [vmem:[%s1 + $0x38] sm:$0xff]
  %v22 = vld [vmem:[%s1 + $0x40] sm:$0xff]
  %v23 = vld [vmem:[%s1 + $0x48] sm:$0xff]
  %v24 = vld [vmem:[%s1 + $0x50] sm:$0xff]
  %v25 = vld [vmem:[%s1 + $0x58] sm:$0xff]
  %v26 = vld [vmem:[%s1 + $0x60] sm:$0xff]
  %v27 = vld [vmem:[%s1 + $0x68] sm:$0xff]
  %v28 = vld [vmem:[%s1 + $0x70] sm:$0xff]
  %v29 = vld [vmem:[%s1 + $0x78] sm:$0xff]
  %v30 = vld [vmem:[%s1 + $0x80] sm:$0xff]
  %v31 = vld [vmem:[%s1 + $0x88] sm:$0xff]
  %v32 = vld [vmem:[%s1 + $0x90] sm:$0xff]
  %v33 = vld [vmem:[%s1 + $0x98] sm:$0xff]
  %v34 = vld [vmem:[%s1 + $0xa0] sm:$0xff]
  %v35 = vld [vmem:[%s1 + $0xa8] sm:$0xff]
  %v36 = vld [vmem:[%s1 + $0xb0] sm:$0xff]
  %v37 = vld [vmem:[%s1 + $0xb8] sm:$0xff]
  %v38 = vld [vmem:[%s1 + $0xc0] sm:$0xff]
  %v39 = vld [vmem:[%s1 + $0xc8] sm:$0xff]
  %v40 = vld [vmem:[%s1 + $0xd0] sm:$0xff]
  %v41 = vld [vmem:[%s1 + $0xd8] sm:$0xff]
  %v42 = vld [vmem:[%s1 + $0xe0] sm:$0xff]
  %v43 = vld [vmem:[%s1 + $0xe8] sm:$0xff]
  %v44 = vld [vmem:[%s1 + $0xf0] sm:$0xff]
  %v45 = vld [vmem:[%s1 + $0xf8] sm:$0xff]
  %v46 = vld [vmem:[%s1 + $0x100] sm:$0xff]
  %v47 = vld [vmem:[%s1 + $0x108] sm:$0xff]
  %v48 = vld [vmem:[%s1 + $0x110] sm:$0xff]
  %v49 = vld [vmem:[%s1 + $0x118] sm:$0xff]
  %v50 = vld [vmem:[%s1 + $0x120] sm:$0xff]
  %v51 = vld [vmem:[%s1 + $0x128] sm:$0xff]
  %v52 = vld [vmem:[%s1 + $0x130] sm:$0xff]
  %v53 = vld [vmem:[%s1 + $0x138] sm:$0xff]
  %v54 = vld [vmem:[%s1 + $0x140] sm:$0xff]
  %v55 = vld [vmem:[%s1 + $0x148] sm:$0xff]
  %v56 = vld [vmem:[%s1 + $0x150] sm:$0xff]
  %v57 = vld [vmem:[%s1 + $0x158] sm:$0xff]
  %v58 = vld [vmem:[%s1 + $0x160] sm:$0xff]
  %v59 = vld [vmem:[%s1 + $0x168] sm:$0xff]
  %v60 = vld [vmem:[%s1 + $0x170] sm:$0xff]
  %v61 = vld [vmem:[%s1 + $0x178] sm:$0xff]
  %v62 = vld [vmem:[%s2] sm:$0x7]
  %v64 = vlaneseq
  %v65 = vshrl.u32 %v64, 7
  %v66 = vsub.s32 0, %v65
  %v67 = vrot.slane %v62, %v66
  %v68 = vlaneseq
  %v69 = vshrl.u32 %v68, 7
  %v70 = vsub.s32 1, %v69
  %v71 = vrot.slane %v62, %v70
  %v72 = vlaneseq
  %v73 = vshrl.u32 %v72, 7
  %v74 = vsub.s32 2, %v73
  %v75 = vrot.slane %v62, %v74
  loop: start=0, step=1, limit=16
  $region14: #{forward.9} parent=0 // loop_pre_header
    _
  $region15: #{forward.9} parent=0 // loop_header
    %s80 = sphi 0, %s84
    %p81 = scmp.ge.s32.totalorder %s80, 16
    %v85 = vphi 0.0, %v253
  $region16: #{forward.9} parent=0 // loop_header_branch
    %83 = sbr.rel (%p81) target = $region20
  $region17: #{forward.9} parent=0 // loop_body
    %s86 = smul.u32 %s80, 3
    %s87 = smul.addr %s86, 8
    %s88 = scalar_lea.vmem %s0, %s87
    %v89 = vld [vmem:[%s88] sm:$0xff]
    %v90 = vld [vmem:[%s88 + $0x8] sm:$0xff]
    %v91 = vld [vmem:[%s88 + $0x10] sm:$0xff]
    %92 = vmatprep.subr.mxu0 %v15
    %93 = vmatpush1.msra.mxu0 %v14
    %94 = vmatprep.subr.mxu0 %v18
    %95 = vmatpush1.msra.mxu0 %v17
    %96 = vmatprep.subr.mxu0 %v21
    %97 = vmatpush1.msra.mxu0 %v20
    %98 = vmatprep.subr.mxu0 %v24
    %99 = vmatpush1.msra.mxu0 %v23
    %100 = vmatprep.subr.mxu0 %v27
    %101 = vmatpush1.msra.mxu0 %v26
    %102 = vmatprep.subr.mxu0 %v30
    %103 = vmatpush1.msra.mxu0 %v29
    %104 = vmatprep.subr.mxu0 %v33
    %105 = vmatpush1.msra.mxu0 %v32
    %106 = vmatprep.subr.mxu0 %v36
    %107 = vmatpush1.msra.mxu0 %v35
    %108 = vmatprep.subr.mxu0 %v39
    %109 = vmatpush1.msra.mxu0 %v38
    %110 = vmatprep.subr.mxu0 %v42
    %111 = vmatpush1.msra.mxu0 %v41
    %112 = vmatprep.subr.mxu0 %v45
    %113 = vmatpush1.msra.mxu0 %v44
    %114 = vmatprep.subr.mxu0 %v48
    %115 = vmatpush1.msra.mxu0 %v47
    %116 = vmatprep.subr.mxu0 %v51
    %117 = vmatpush1.msra.mxu0 %v50
    %118 = vmatprep.subr.mxu0 %v54
    %119 = vmatpush1.msra.mxu0 %v53
    %120 = vmatprep.subr.mxu0 %v57
    %121 = vmatpush1.msra.mxu0 %v56
    %122 = vmatprep.subr.mxu0 %v60
    %123 = vmatpush1.msra.mxu0 %v59
    %124 = vmatprep.subr.mxu0 0.0
    %125 = vmatpush1.msra.mxu0 0.0
    %126 = vmatprep.subr.mxu0 0.0
    %127 = vmatpush1.msra.mxu0 0.0
    %128 = vmatprep.subr.mxu0 0.0
    %129 = vmatpush1.msra.mxu0 0.0
    %130 = vmatprep.subr.mxu0 0.0
    %131 = vmatpush1.msra.mxu0 0.0
    %132 = vmatprep.subr.mxu0 0.0
    %133 = vmatpush1.msra.mxu0 0.0
    %134 = vmatprep.subr.mxu0 0.0
    %135 = vmatpush1.msra.mxu0 0.0
    %136 = vmatprep.subr.mxu0 0.0
    %137 = vmatpush1.msra.mxu0 0.0
    %138 = vmatprep.subr.mxu0 0.0
    %139 = vmatpush1.msra.mxu0 0.0
    %140 = vmatprep.subr.mxu0 0.0
    %141 = vmatpush1.msra.mxu0 0.0
    %142 = vmatprep.subr.mxu0 0.0
    %143 = vmatpush1.msra.mxu0 0.0
    %144 = vmatprep.subr.mxu0 0.0
    %145 = vmatpush1.msra.mxu0 0.0
    %146 = vmatprep.subr.mxu0 0.0
    %147 = vmatpush1.msra.mxu0 0.0
    %148 = vmatprep.subr.mxu0 0.0
    %149 = vmatpush1.msra.mxu0 0.0
    %150 = vmatprep.subr.mxu0 0.0
    %151 = vmatpush1.msra.mxu0 0.0
    %152 = vmatprep.subr.mxu0 0.0
    %153 = vmatpush1.msra.mxu0 0.0
    %154 = vmatprep.subr.mxu0 0.0
    %155 = vmatpush1.msra.mxu0 0.0
    %156 = vmatprep.mubr.f32.mxu0 0.0
    %157 = vmatmul.mubr.f32.gmra.mrb[0].mxu0 %v85
    %v158 = vpop.f32.mrb[0].mxu0
    %v159 = vadd.f32 %v67, %v158
    %v160 = vpop.f32.mrb[0].mxu0
    %v161 = vadd.f32 %v71, %v160
    %162 = vdwg.mxu0
    %163 = vmatprep.subr.mxu0 0.0
    %164 = vmatpush1.msra.mxu0 %v16
    %165 = vmatprep.subr.mxu0 0.0
    %166 = vmatpush1.msra.mxu0 %v19
    %167 = vmatprep.subr.mxu0 0.0
    %168 = vmatpush1.msra.mxu0 %v22
    %169 = vmatprep.subr.mxu0 0.0
    %170 = vmatpush1.msra.mxu0 %v25
    %171 = vmatprep.subr.mxu0 0.0
    %172 = vmatpush1.msra.mxu0 %v28
    %173 = vmatprep.subr.mxu0 0.0
    %174 = vmatpush1.msra.mxu0 %v31
    %175 = vmatprep.subr.mxu0 0.0
    %176 = vmatpush1.msra.mxu0 %v34
    %177 = vmatprep.subr.mxu0 0.0
    %178 = vmatpush1.msra.mxu0 %v37
    %179 = vmatprep.subr.mxu0 0.0
    %180 = vmatpush1.msra.mxu0 %v40
    %181 = vmatprep.subr.mxu0 0.0
    %182 = vmatpush1.msra.mxu0 %v43
    %183 = vmatprep.subr.mxu0 0.0
    %184 = vmatpush1.msra.mxu0 %v46
    %185 = vmatprep.subr.mxu0 0.0
    %186 = vmatpush1.msra.mxu0 %v49
    %187 = vmatprep.subr.mxu0 0.0
    %188 = vmatpush1.msra.mxu0 %v52
    %189 = vmatprep.subr.mxu0 0.0
    %190 = vmatpush1.msra.mxu0 %v55
    %191 = vmatprep.subr.mxu0 0.0
    %192 = vmatpush1.msra.mxu0 %v58
    %193 = vmatprep.subr.mxu0 0.0
    %194 = vmatpush1.msra.mxu0 %v61
    %195 = vmatprep.subr.mxu0 0.0
    %196 = vmatpush1.msra.mxu0 0.0
    %197 = vmatprep.subr.mxu0 0.0
    %198 = vmatpush1.msra.mxu0 0.0
    %199 = vmatprep.subr.mxu0 0.0
    %200 = vmatpush1.msra.mxu0 0.0
    %201 = vmatprep.subr.mxu0 0.0
    %202 = vmatpush1.msra.mxu0 0.0
    %203 = vmatprep.subr.mxu0 0.0
    %204 = vmatpush1.msra.mxu0 0.0
    %205 = vmatprep.subr.mxu0 0.0
    %206 = vmatpush1.msra.mxu0 0.0
    %207 = vmatprep.subr.mxu0 0.0
    %208 = vmatpush1.msra.mxu0 0.0
    %209 = vmatprep.subr.mxu0 0.0
    %210 = vmatpush1.msra.mxu0 0.0
    %211 = vmatprep.subr.mxu0 0.0
    %212 = vmatpush1.msra.mxu0 0.0
    %213 = vmatprep.subr.mxu0 0.0
    %214 = vmatpush1.msra.mxu0 0.0
    %215 = vmatprep.subr.mxu0 0.0
    %216 = vmatpush1.msra.mxu0 0.0
    %217 = vmatprep.subr.mxu0 0.0
    %218 = vmatpush1.msra.mxu0 0.0
    %219 = vmatprep.subr.mxu0 0.0
    %220 = vmatpush1.msra.mxu0 0.0
    %221 = vmatprep.subr.mxu0 0.0
    %222 = vmatpush1.msra.mxu0 0.0
    %223 = vmatprep.subr.mxu0 0.0
    %224 = vmatpush1.msra.mxu0 0.0
    %225 = vmatprep.subr.mxu0 0.0
    %226 = vmatpush1.msra.mxu0 0.0
    %227 = vmatprep.mubr.f32.mxu0 0.0
    %228 = vmatmul.mubr.f32.gmra.mrb[0].mxu0 %v85
    %v229 = vpop.f32.mrb[0].mxu0
    %v230 = vadd.f32 %v75, %v229
    %v231 = vpop.f32.mrb[0].mxu0
    %232 = vdwg.mxu0
    %v233 = vadd.f32 %v89, %v159
    %v234 = vxor.u32 %v233, 2147483648
    %v235 = vmul.f32 %v234, 1.442695
    %v236 = vpow.pop %v235
    %v237 = vadd.f32 %v236, 1.0
    %v238 = vrcp.pop %v237
    %v239 = vmul.f32 1.0, %v238
    %v240 = vadd.f32 %v90, %v161
    %v241 = vxor.u32 %v240, 2147483648
    %v242 = vmul.f32 %v241, 1.442695
    %v243 = vpow.pop %v242
    %v244 = vadd.f32 %v243, 1.0
    %v245 = vrcp.pop %v244
    %v246 = vmul.f32 1.0, %v245
    %v247 = vmul.f32 %v239, %v230
    %v248 = vadd.f32 %v91, %v247
    %v249 = vtanh.pop %v248
    %v250 = vsub.f32 1.0, %v246
    %v251 = vmul.f32 %v250, %v249
    %v252 = vmul.f32 %v246, %v85
    %v253 = vadd.f32 %v251, %v252
    %s254 = smul.u32 %s80, 8
    %s255 = scalar_lea.vmem %s3, %s254
    %256 = vst [vmem:[%s255] sm:$0xff] %v253
  $region18: #{forward.9} parent=0 // loop_footer
    %s84 = sadd.s32 1, %s80
  $region19: #{forward.9} parent=0 // loop_footer_branch
    %79 = sbr.rel target = $region15
  $region20: #{forward.9} parent=0 // loop_exit
    _
  // Predicated region
  $region21: #{forward.9} parent=0 // pred_check
    _
  $region22: #{forward.9} parent=0 // pred_check_branch
    %258 = sbr.rel (0) target = $region24
  $region23: #{forward.9} parent=0 // pred_region
    _
  $region24: #{forward.9} parent=0 // pred_fallthru
    _
  // Predicated region
  $region25: #{forward.9} parent=0 // pred_check
    _
  $region26: #{forward.9} parent=0 // pred_check_branch
    %260 = sbr.rel (0) target = $region28
  $region27: #{forward.9} parent=0 // pred_region
    _
  $region28: #{forward.9} parent=0 // pred_fallthru
    _

// kernel: forward.12
$region0: #{forward.12}
  #allocation0 [shape = 'u32[]', space=smem, size = 0x4, offset = 0x4, fixed_abs, tag = 'smem constant byte address 0x4 - core index']
  #allocation1 [shape = 'u32[144,128]{1,0:T(1,128)}', space=vmem, size = 0x12000, scoped, tag = 'internal scratch']
  #allocation2 [shape = 'f32[128,256]{1,0:T(8,128)}', space=vmem, size = 0x20000, scoped, tag = 'scratch operand']
  %s0 = inlined_call_operand.vmem [shape: f32[128,128], index: 0, kind: input, shape index: {}]
  %s1 = inlined_call_operand.vmem [shape: f32[128,1024], index: 1, kind: input, shape index: {}]
  %s2 = inlined_call_operand.vmem [shape: f32[1,1024], index: 2, kind: input, shape index: {}]
  %s3 = inlined_call_operand.vmem [shape: f32[128,1024], index: 3, kind: output, shape index: {}]
  %s4 = sld [smem:[#allocation0]]
  $region95: #{forward.12} parent=0
    _
  %s6 = ssub.s32 1, %s4
  %s7 = scalar_select 0, %s6, %s4
  $region1: #{forward.12} parent=0
    #allocation3 [shape = 'u8[262144]{0}', space=vmem, size = 0x40000, scoped, tag = 'input window, operand 1']
    #allocation4 [shape = 'u8[262144]{0}', space=vmem, size = 0x40000, scoped, tag = 'output window, operand 0']
    loop: start=0, step=1, limit=6
    $region2: #{forward.12} parent=1 // loop_pre_header
      _
    $region3: #{forward.12} parent=1 // loop_header
      %s9 = sphi 0, %s13
      %p10 = scmp.ge.s32.totalorder %s9, 6
      %s16 = sphi 0, %s35
      %s17 = sphi 0, %s31
      %s18 = sphi 0, %s27
      %s19 = sphi 0, %s16
      %s20 = sphi 0, %s17
      %s21 = sphi 0, %s18
      %s22 = sphi 0, %s19
      %s23 = sphi 0, %s20
      %s24 = sphi 0, %s21
      %s40 = sphi 0, %s42
      %s43 = sphi 0, %s40
      %s44 = sphi 0, %s43
      %s60 = sphi 0, %s44
      %s68 = sphi 0, %s70
      %s71 = sphi 0, %s68
      %s72 = sphi 0, %s71
      %s88 = sphi 0, %s72
      %s94 = sphi 0, %s96
      %s97 = sphi 0, %s94
      %s98 = sphi 0, %s97
      %s114 = sphi 0, %s98
      %s122 = sphi 0, %s124
      %s125 = sphi 0, %s122
      %s126 = sphi 0, %s125
      %s142 = sphi 0, %s126
    $region4: #{forward.12} parent=1 // loop_header_branch
      %12 = sbr.rel (%p10) target = $region8
    $region5: #{forward.12} parent=1 // loop_body
      %s14 = ssub.s32 %s9, 1
      %s15 = ssub.s32 %s9, 2
      %s25 = sadd.s32 1, %s18
      %p26 = scmp.ge.s32.totalorder %s25, 1
      %s27 = scalar_select %p26, 0, %s25
      %s28 = sadd.s32 1, %s17
      %s29 = scalar_select %p26, %s28, %s17
      %p30 = scmp.ge.s32.totalorder %s29, 4
      %s31 = scalar_select %p30, 0, %s29
      %s32 = sadd.s32 1, %s16
      %s33 = scalar_select %p30, %s32, %s16
      %p34 = scmp.ge.s32.totalorder %s33, 1
      %s35 = scalar_select %p34, 0, %s33
      %s36 = ssub.s32 %s16, %s35
      %s37 = ssub.s32 %s18, %s27
      %s38 = sor.u32 %s36, %s37
      %p39 = scmp.eq.s32.totalorder %s38, 0
      %s41 = sadd.s32 %s40, 1
      %s42 = scalar_select %p39, %s40, %s41
      %p45 = pneg %p39
      %p46 = scmp.eq.s32.totalorder %s9, 3
      %p47 = por %p45, %p46
      %p48 = scmp.ne.s32.totalorder %s40, %s43
      %p49 = scmp.eq.s32.totalorder %s9, 0
      %p50 = por %p48, %p49
      %p51 = scmp.ne.s32.totalorder %s40, %s43
      %p52 = scmp.eq.s32.totalorder %s14, 3
      %p53 = por %p51, %p52
      %p54 = scmp.ne.s32.totalorder %s43, %s44
      %p55 = scmp.eq.s32.totalorder %s14, 0
      %p56 = por %p54, %p55
      %p57 = scmp.ne.s32.totalorder %s43, %s44
      %p58 = scmp.eq.s32.totalorder %s15, 3
      %p59 = por %p57, %p58
      %p61 = scmp.ne.s32.totalorder %s44, %s60
      %p62 = scmp.eq.s32.totalorder %s15, 0
      %p63 = por %p61, %p62
      %s64 = ssub.s32 %s18, %s27
      %s65 = ssub.s32 %s17, %s31
      %s66 = sor.u32 %s64, %s65
      %p67 = scmp.eq.s32.totalorder %s66, 0
      %s69 = sadd.s32 %s68, 1
      %s70 = scalar_select %p67, %s68, %s69
      %p73 = pneg %p67
      %p74 = scmp.eq.s32.totalorder %s9, 3
      %p75 = por %p73, %p74
      %p76 = scmp.ne.s32.totalorder %s68, %s71
      %p77 = scmp.eq.s32.totalorder %s9, 0
      %p78 = por %p76, %p77
      %p79 = scmp.ne.s32.totalorder %s68, %s71
      %p80 = scmp.eq.s32.totalorder %s14, 3
      %p81 = por %p79, %p80
      %p82 = scmp.ne.s32.totalorder %s71, %s72
      %p83 = scmp.eq.s32.totalorder %s14, 0
      %p84 = por %p82, %p83
      %p85 = scmp.ne.s32.totalorder %s71, %s72
      %p86 = scmp.eq.s32.totalorder %s15, 3
      %p87 = por %p85, %p86
      %p89 = scmp.ne.s32.totalorder %s72, %s88
      %p90 = scmp.eq.s32.totalorder %s15, 0
      %p91 = por %p89, %p90
      %s92 = ssub.s32 %s17, %s31
      %p93 = scmp.eq.s32.totalorder %s92, 0
      %s95 = sadd.s32 %s94, 1
      %s96 = scalar_select %p93, %s94, %s95
      %p99 = pneg %p93
      %p100 = scmp.eq.s32.totalorder %s9, 3
      %p101 = por %p99, %p100
      %p102 = scmp.ne.s32.totalorder %s94, %s97
      %p103 = scmp.eq.s32.totalorder %s9, 0
      %p104 = por %p102, %p103
      %p105 = scmp.ne.s32.totalorder %s94, %s97
      %p106 = scmp.eq.s32.totalorder %s14, 3
      %p107 = por %p105, %p106
      %p108 = scmp.ne.s32.totalorder %s97, %s98
      %p109 = scmp.eq.s32.totalorder %s14, 0
      %p110 = por %p108, %p109
      %p111 = scmp.ne.s32.totalorder %s97, %s98
      %p112 = scmp.eq.s32.totalorder %s15, 3
      %p113 = por %p111, %p112
      %p115 = scmp.ne.s32.totalorder %s98, %s114
      %p116 = scmp.eq.s32.totalorder %s15, 0
      %p117 = por %p115, %p116
      %s118 = ssub.s32 %s16, %s35
      %s119 = ssub.s32 %s17, %s31
      %s120 = sor.u32 %s118, %s119
      %p121 = scmp.eq.s32.totalorder %s120, 0
      %s123 = sadd.s32 %s122, 1
      %s124 = scalar_select %p121, %s122, %s123
      %p127 = pneg %p121
      %p128 = scmp.eq.s32.totalorder %s9, 3
      %p129 = por %p127, %p128
      %p130 = scmp.ne.s32.totalorder %s122, %s125
      %p131 = scmp.eq.s32.totalorder %s9, 0
      %p132 = por %p130, %p131
      %p133 = scmp.ne.s32.totalorder %s122, %s125
      %p134 = scmp.eq.s32.totalorder %s14, 3
      %p135 = por %p133, %p134
      %p136 = scmp.ne.s32.totalorder %s125, %s126
      %p137 = scmp.eq.s32.totalorder %s14, 0
      %p138 = por %p136, %p137
      %p139 = scmp.ne.s32.totalorder %s125, %s126
      %p140 = scmp.eq.s32.totalorder %s15, 3
      %p141 = por %p139, %p140
      %p143 = scmp.ne.s32.totalorder %s126, %s142
      %p144 = scmp.eq.s32.totalorder %s15, 0
      %p145 = por %p143, %p144
      %p146 = scmp.le.s32.totalorder 1, %s9
      %p147 = scmp.lt.s32.totalorder %s9, 5
      %p148 = pnand %p146, %p147
      %p149 = pneg %p148
      // Predicated region
      $region9: #{forward.12} parent=5 // pred_check
        _
      $region10: #{forward.12} parent=5 // pred_check_branch
        %151 = sbr.rel (%p148) target = $region12
      $region11: #{forward.12} parent=5 // pred_region
        %s152 = ssub.s32 %s9, 1
        // Predicated region
        $region13: #{forward.12} parent=11 // pred_check
          %p153 = pneg %p56
        $region14: #{forward.12} parent=11 // pred_check_branch
          %155 = sbr.rel (%p153) target = $region16
        $region15: #{forward.12} parent=11 // pred_region
          %s156 = smul.u32 16, %s19
          %p157 = scmp.lt.s32.totalorder %s156, 15
          %s158 = scalar_select %p157, %s156, 15
          %p159 = scmp.lt.s32.totalorder %s21, 0
          %s160 = scalar_select %p159, %s21, 0
          %s161 = sadd.s32 %s160, %s158
          %s162 = smul.addr %s161, 8
          %s163 = scalar_lea.vmem %s0, %s162
          %s164 = smul.u32 16, %s19
        $region16: #{forward.12} parent=11 // pred_fallthru
          _
      $region12: #{forward.12} parent=5 // pred_fallthru
        _
      %p165 = scmp.lt.s32.totalorder %s9, 4
      // Predicated region
      $region17: #{forward.12} parent=5 // pred_check
        %p166 = pneg %p165
      $region18: #{forward.12} parent=5 // pred_check_branch
        %168 = sbr.rel (%p166) target = $region20
      $region19: #{forward.12} parent=5 // pred_region
        // Predicated region
        $region21: #{forward.12} parent=19 // pred_check
          %p169 = pneg %p78
        $region22: #{forward.12} parent=19 // pred_check_branch
          %171 = sbr.rel (%p169) target = $region24
        $region23: #{forward.12} parent=19 // pred_region
          %s172 = sand.u32 %s68, 1
          %s173 = sand.u32 %s68, 1
          %s174 = smul.addr %s173, 256
          %s175 = scalar_lea.vmem [#allocation3], %s174
          %s176 = smul.u32 16, %s18
          %s177 = smul.u32 2, %s17
          %s178 = smul.addr %s176, 8
          %s179 = sadd.s32 %s177, %s178
          %s180 = smul.addr %s179, 8
          %s181 = scalar_lea.vmem %s1, %s180
          // Predicated region
          $region25: #{forward.12} parent=23 // pred_check
            _
          $region26: #{forward.12} parent=23 // pred_check_branch
            %183 = sbr.rel (0) target = $region28
          $region27: #{forward.12} parent=23 // pred_region
            // Predicated region
            $region29: #{forward.12} parent=27 // pred_check
              _
            $region30: #{forward.12} parent=27 // pred_check_branch
              %185 = sbr.rel (0) target = $region32
            $region31: #{forward.12} parent=27 // pred_region
              loop: start=0, step=1, limit=1
              $region33: #{forward.12} parent=31 // loop_pre_header
                _
              $region34: #{forward.12} parent=31 // loop_header
                %s187 = sphi 0, %s191
                %p188 = scmp.ge.s32.totalorder %s187, 1
                %s192 = sphi %s181, %s181
                %s193 = sphi %s175, %s175
              $region35: #{forward.12} parent=31 // loop_header_branch
                %190 = sbr.rel (%p188) target = $region39
              $region36: #{forward.12} parent=31 // loop_body
                %v194 = vld [vmem:[%s192] sm:$0xff]
                %195 = vst [vmem:[%s193] sm:$0xff] %v194
                %v196 = vld [vmem:[%s192 + $0x8] sm:$0xff]
                %197 = vst [vmem:[%s193 + $0x8] sm:$0xff] %v196
                %v198 = vld [vmem:[%s192 + $0x40] sm:$0xff]
                %199 = vst [vmem:[%s193 + $0x10] sm:$0xff] %v198
                %v200 = vld [vmem:[%s192 + $0x48] sm:$0xff]
                %201 = vst [vmem:[%s193 + $0x18] sm:$0xff] %v200
                %v202 = vld [vmem:[%s192 + $0x80] sm:$0xff]
                %203 = vst [vmem:[%s193 + $0x20] sm:$0xff] %v202
                %v204 = vld [vmem:[%s192 + $0x88] sm:$0xff]
                %205 = vst [vmem:[%s193 + $0x28] sm:$0xff] %v204
                %v206 = vld [vmem:[%s192 + $0xc0] sm:$0xff]
                %207 = vst [vmem:[%s193 + $0x30] sm:$0xff] %v206
                %v208 = vld [vmem:[%s192 + $0xc8] sm:$0xff]
                %209 = vst [vmem:[%s193 + $0x38] sm:$0xff] %v208
                %v210 = vld [vmem:[%s192 + $0x100] sm:$0xff]
                %211 = vst [vmem:[%s193 + $0x40] sm:$0xff] %v210
                %v212 = vld [vmem:[%s192 + $0x108] sm:$0xff]
                %213 = vst [vmem:[%s193 + $0x48] sm:$0xff] %v212
                %v214 = vld [vmem:[%s192 + $0x140] sm:$0xff]
                %215 = vst [vmem:[%s193 + $0x50] sm:$0xff] %v214
                %v216 = vld [vmem:[%s192 + $0x148] sm:$0xff]
                %217 = vst [vmem:[%s193 + $0x58] sm:$0xff] %v216
                %v218 = vld [vmem:[%s192 + $0x180] sm:$0xff]
                %219 = vst [vmem:[%s193 + $0x60] sm:$0xff] %v218
                %v220 = vld [vmem:[%s192 + $0x188] sm:$0xff]
                %221 = vst [vmem:[%s193 + $0x68] sm:$0xff] %v220
                %v222 = vld [vmem:[%s192 + $0x1c0] sm:$0xff]
                %223 = vst [vmem:[%s193 + $0x70] sm:$0xff] %v222
                %v224 = vld [vmem:[%s192 + $0x1c8] sm:$0xff]
                %225 = vst [vmem:[%s193 + $0x78] sm:$0xff] %v224
                %v226 = vld [vmem:[%s192 + $0x200] sm:$0xff]
                %227 = vst [vmem:[%s193 + $0x80] sm:$0xff] %v226
                %v228 = vld [vmem:[%s192 + $0x208] sm:$0xff]
                %229 = vst [vmem:[%s193 + $0x88] sm:$0xff] %v228
                %v230 = vld [vmem:[%s192 + $0x240] sm:$0xff]
                %231 = vst [vmem:[%s193 + $0x90] sm:$0xff] %v230
                %v232 = vld [vmem:[%s192 + $0x248] sm:$0xff]
                %233 = vst [vmem:[%s193 + $0x98] sm:$0xff] %v232
                %v234 = vld [vmem:[%s192 + $0x280] sm:$0xff]
                %235 = vst [vmem:[%s193 + $0xa0] sm:$0xff] %v234
                %v236 = vld [vmem:[%s192 + $0x288] sm:$0xff]
                %237 = vst [vmem:[%s193 + $0xa8] sm:$0xff] %v236
                %v238 = vld [vmem:[%s192 + $0x2c0] sm:$0xff]
                %239 = vst [vmem:[%s193 + $0xb0] sm:$0xff] %v238
                %v240 = vld [vmem:[%s192 + $0x2c8] sm:$0xff]
                %241 = vst [vmem:[%s193 + $0xb8] sm:$0xff] %v240
                %v242 = vld [vmem:[%s192 + $0x300] sm:$0xff]
                %243 = vst [vmem:[%s193 + $0xc0] sm:$0xff] %v242
                %v244 = vld [vmem:[%s192 + $0x308] sm:$0xff]
                %245 = vst [vmem:[%s193 + $0xc8] sm:$0xff] %v244
                %v246 = vld [vmem:[%s192 + $0x340] sm:$0xff]
                %247 = vst [vmem:[%s193 + $0xd0] sm:$0xff] %v246
                %v248 = vld [vmem:[%s192 + $0x348] sm:$0xff]
                %249 = vst [vmem:[%s193 + $0xd8] sm:$0xff] %v248
                %v250 = vld [vmem:[%s192 + $0x380] sm:$0xff]
                %251 = vst [vmem:[%s193 + $0xe0] sm:$0xff] %v250
                %v252 = vld [vmem:[%s192 + $0x388] sm:$0xff]
                %253 = vst [vmem:[%s193 + $0xe8] sm:$0xff] %v252
                %v254 = vld [vmem:[%s192 + $0x3c0] sm:$0xff]
                %255 = vst [vmem:[%s193 + $0xf0] sm:$0xff] %v254
                %v256 = vld [vmem:[%s192 + $0x3c8] sm:$0xff]
                %257 = vst [vmem:[%s193 + $0xf8] sm:$0xff] %v256
              $region37: #{forward.12} parent=31 // loop_footer
                %s191 = sadd.s32 1, %s187
              $region38: #{forward.12} parent=31 // loop_footer_branch
                %186 = sbr.rel target = $region34
              $region39: #{forward.12} parent=31 // loop_exit
                _
            $region32: #{forward.12} parent=27 // pred_fallthru
              _
            // Predicated region
            $region40: #{forward.12} parent=27 // pred_check
              _
            $region41: #{forward.12} parent=27 // pred_check_branch
              %259 = sbr.rel target = $region43
            $region42: #{forward.12} parent=27 // pred_region
              _
            $region43: #{forward.12} parent=27 // pred_fallthru
              _
          $region28: #{forward.12} parent=23 // pred_fallthru
            _
          %260 = vnop
        $region24: #{forward.12} parent=19 // pred_fallthru
          _
        // Predicated region
        $region44: #{forward.12} parent=19 // pred_check
          %p261 = pneg %p104
        $region45: #{forward.12} parent=19 // pred_check_branch
          %263 = sbr.rel (%p261) target = $region47
        $region46: #{forward.12} parent=19 // pred_region
          %s264 = smul.u32 2, %s17
          %p265 = scmp.lt.s32.totalorder %s264, 7
          %s266 = scalar_select %p265, %s264, 7
          %s267 = scalar_lea.vmem %s2, %s266
          %s268 = smul.u32 2, %s17
        $region47: #{forward.12} parent=19 // pred_fallthru
          _
      $region20: #{forward.12} parent=5 // pred_fallthru
        _
      %p269 = scmp.le.s32.totalorder 1, %s9
      %p270 = scmp.lt.s32.totalorder %s9, 5
      %p271 = pnand %p269, %p270
      %p272 = pneg %p271
      // Predicated region
      $region48: #{forward.12} parent=5 // pred_check
        _
      $region49: #{forward.12} parent=5 // pred_check_branch
        %274 = sbr.rel (%p271) target = $region51
      $region50: #{forward.12} parent=5 // pred_region
        %s275 = ssub.s32 %s9, 1
        %s276 = sand.u32 %s71, 1
        %s277 = sand.u32 %s71, 1
        %s278 = smul.addr %s277, 256
        %s279 = scalar_lea.vmem [#allocation3], %s278
        // Predicated region
        $region52: #{forward.12} parent=50 // pred_check
          %p280 = pneg %p84
        $region53: #{forward.12} parent=50 // pred_check_branch
          %282 = sbr.rel (%p280) target = $region55
        $region54: #{forward.12} parent=50 // pred_region
          _
        $region55: #{forward.12} parent=50 // pred_fallthru
          _
        %s283 = smul.u32 16, %s19
        %p284 = scmp.lt.s32.totalorder %s283, 15
        %s285 = scalar_select %p284, %s283, 15
        %p286 = scmp.lt.s32.totalorder %s21, 0
        %s287 = scalar_select %p286, %s21, 0
        %s288 = sadd.s32 %s287, %s285
        %s289 = smul.addr %s288, 8
        %s290 = scalar_lea.vmem %s0, %s289
        %p291 = pneg %p56
        %p292 = pneg %p53
        %s293 = sand.u32 %s71, 1
        %s294 = sand.u32 %s71, 1
        %s295 = smul.addr %s294, 256
        %s296 = scalar_lea.vmem [#allocation3], %s295
        %p297 = pneg %p84
        %p298 = pneg %p81
        %s299 = smul.u32 2, %s20
        %p300 = scmp.lt.s32.totalorder %s299, 7
        %s301 = scalar_select %p300, %s299, 7
        %s302 = scalar_lea.vmem %s2, %s301
        %p303 = pneg %p110
        %p304 = pneg %p107
        %p305 = pneg %p138
        %p306 = pneg %p135
        %s307 = sand.u32 %s125, 1
        %s308 = sand.u32 %s125, 1
        %s309 = smul.addr %s308, 256
        %s310 = scalar_lea.vmem [#allocation4], %s309
        %s311 = smul.u32 16, %s19
        %p312 = scmp.lt.s32.totalorder %s311, 15
        %s313 = scalar_select %p312, %s311, 15
        %p314 = scmp.lt.s32.totalorder %s21, 0
        %s315 = scalar_select %p314, %s21, 0
        %s316 = sadd.s32 %s315, %s313
        %s317 = smul.addr %s316, 8
        %s318 = scalar_lea.vmem %s0, %s317
        %s319 = smul.u32 16, %s19
        %s320 = smul.u32 16, %s21
        %s321 = smul.u32 2, %s20
        %s322 = smul.u32 2, %s20
        %p323 = scmp.lt.s32.totalorder %s322, 7
        %s324 = scalar_select %p323, %s322, 7
        %s325 = scalar_lea.vmem %s2, %s324
        %s326 = smul.u32 2, %s20
        %s327 = smul.u32 16, %s19
        %s328 = smul.u32 2, %s20
        %p329 = scmp.eq.s32.totalorder %s21, 0
        // Predicated region
        $region56: #{forward.12} parent=50 // pred_check
          %p330 = pneg %p329
        $region57: #{forward.12} parent=50 // pred_check_branch
          %332 = sbr.rel (%p330) target = $region59
        $region58: #{forward.12} parent=50 // pred_region
          %333 = vst [vmem:[#allocation2] sm:$0xff] 0.0
          %334 = vst [vmem:[#allocation2 + $0x8] sm:$0xff] 0.0
          %335 = vst [vmem:[#allocation2 + $0x10] sm:$0xff] 0.0
          %336 = vst [vmem:[#allocation2 + $0x18] sm:$0xff] 0.0
          %337 = vst [vmem:[#allocation2 + $0x20] sm:$0xff] 0.0
          %338 = vst [vmem:[#allocation2 + $0x28] sm:$0xff] 0.0
          %339 = vst [vmem:[#allocation2 + $0x30] sm:$0xff] 0.0
          %340 = vst [vmem:[#allocation2 + $0x38] sm:$0xff] 0.0
          %341 = vst [vmem:[#allocation2 + $0x40] sm:$0xff] 0.0
          %342 = vst [vmem:[#allocation2 + $0x48] sm:$0xff] 0.0
          %343 = vst [vmem:[#allocation2 + $0x50] sm:$0xff] 0.0
          %344 = vst [vmem:[#allocation2 + $0x58] sm:$0xff] 0.0
          %345 = vst [vmem:[#allocation2 + $0x60] sm:$0xff] 0.0
          %346 = vst [vmem:[#allocation2 + $0x68] sm:$0xff] 0.0
          %347 = vst [vmem:[#allocation2 + $0x70] sm:$0xff] 0.0
          %348 = vst [vmem:[#allocation2 + $0x78] sm:$0xff] 0.0
          %349 = vst [vmem:[#allocation2 + $0x80] sm:$0xff] 0.0
          %350 = vst [vmem:[#allocation2 + $0x88] sm:$0xff] 0.0
          %351 = vst [vmem:[#allocation2 + $0x90] sm:$0xff] 0.0
          %352 = vst [vmem:[#allocation2 + $0x98] sm:$0xff] 0.0
          %353 = vst [vmem:[#allocation2 + $0xa0] sm:$0xff] 0.0
          %354 = vst [vmem:[#allocation2 + $0xa8] sm:$0xff] 0.0
          %355 = vst [vmem:[#allocation2 + $0xb0] sm:$0xff] 0.0
          %356 = vst [vmem:[#allocation2 + $0xb8] sm:$0xff] 0.0
          %357 = vst [vmem:[#allocation2 + $0xc0] sm:$0xff] 0.0
          %358 = vst [vmem:[#allocation2 + $0xc8] sm:$0xff] 0.0
          %359 = vst [vmem:[#allocation2 + $0xd0] sm:$0xff] 0.0
          %360 = vst [vmem:[#allocation2 + $0xd8] sm:$0xff] 0.0
          %361 = vst [vmem:[#allocation2 + $0xe0] sm:$0xff] 0.0
          %362 = vst [vmem:[#allocation2 + $0xe8] sm:$0xff] 0.0
          %363 = vst [vmem:[#allocation2 + $0xf0] sm:$0xff] 0.0
          %364 = vst [vmem:[#allocation2 + $0xf8] sm:$0xff] 0.0
        $region59: #{forward.12} parent=50 // pred_fallthru
          _
        %v365 = vld [vmem:[#allocation2] sm:$0xff]
        %v366 = vld [vmem:[#allocation2 + $0x8] sm:$0xff]
        %v367 = vld [vmem:[#allocation2 + $0x10] sm:$0xff]
        %v368 = vld [vmem:[#allocation2 + $0x18] sm:$0xff]
        %v369 = vld [vmem:[#allocation2 + $0x20] sm:$0xff]
        %v370 = vld [vmem:[#allocation2 + $0x28] sm:$0xff]
        %v371 = vld [vmem:[#allocation2 + $0x30] sm:$0xff]
        %v372 = vld [vmem:[#allocation2 + $0x38] sm:$0xff]
        %v373 = vld [vmem:[#allocation2 + $0x40] sm:$0xff]
        %v374 = vld [vmem:[#allocation2 + $0x48] sm:$0xff]
        %v375 = vld [vmem:[#allocation2 + $0x50] sm:$0xff]
        %v376 = vld [vmem:[#allocation2 + $0x58] sm:$0xff]
        %v377 = vld [vmem:[#allocation2 + $0x60] sm:$0xff]
        %v378 = vld [vmem:[#allocation2 + $0x68] sm:$0xff]
        %v379 = vld [vmem:[#allocation2 + $0x70] sm:$0xff]
        %v380 = vld [vmem:[#allocation2 + $0x78] sm:$0xff]
        %v381 = vld [vmem:[#allocation2 + $0x80] sm:$0xff]
        %v382 = vld [vmem:[#allocation2 + $0x88] sm:$0xff]
        %v383 = vld [vmem:[#allocation2 + $0x90] sm:$0xff]
        %v384 = vld [vmem:[#allocation2 + $0x98] sm:$0xff]
        %v385 = vld [vmem:[#allocation2 + $0xa0] sm:$0xff]
        %v386 = vld [vmem:[#allocation2 + $0xa8] sm:$0xff]
        %v387 = vld [vmem:[#allocation2 + $0xb0] sm:$0xff]
        %v388 = vld [vmem:[#allocation2 + $0xb8] sm:$0xff]
        %v389 = vld [vmem:[#allocation2 + $0xc0] sm:$0xff]
        %v390 = vld [vmem:[#allocation2 + $0xc8] sm:$0xff]
        %v391 = vld [vmem:[#allocation2 + $0xd0] sm:$0xff]
        %v392 = vld [vmem:[#allocation2 + $0xd8] sm:$0xff]
        %v393 = vld [vmem:[#allocation2 + $0xe0] sm:$0xff]
        %v394 = vld [vmem:[#allocation2 + $0xe8] sm:$0xff]
        %v395 = vld [vmem:[#allocation2 + $0xf0] sm:$0xff]
        %v396 = vld [vmem:[#allocation2 + $0xf8] sm:$0xff]
        %v397 = vld [vmem:[%s318] sm:$0xff]
        %v398 = vld [vmem:[%s318 + $0x8] sm:$0xff]
        %v399 = vld [vmem:[%s318 + $0x10] sm:$0xff]
        %v400 = vld [vmem:[%s318 + $0x18] sm:$0xff]
        %v401 = vld [vmem:[%s318 + $0x20] sm:$0xff]
        %v402 = vld [vmem:[%s318 + $0x28] sm:$0xff]
        %v403 = vld [vmem:[%s318 + $0x30] sm:$0xff]
        %v404 = vld [vmem:[%s318 + $0x38] sm:$0xff]
        %v405 = vld [vmem:[%s318 + $0x40] sm:$0xff]
        %v406 = vld [vmem:[%s318 + $0x48] sm:$0xff]
        %v407 = vld [vmem:[%s318 + $0x50] sm:$0xff]
        %v408 = vld [vmem:[%s318 + $0x58] sm:$0xff]
        %v409 = vld [vmem:[%s318 + $0x60] sm:$0xff]
        %v410 = vld [vmem:[%s318 + $0x68] sm:$0xff]
        %v411 = vld [vmem:[%s318 + $0x70] sm:$0xff]
        %v412 = vld [vmem:[%s318 + $0x78] sm:$0xff]
        %v413 = vld [vmem:[%s279] sm:$0xff]
        %v414 = vld [vmem:[%s279 + $0x8] sm:$0xff]
        %v415 = vld [vmem:[%s279 + $0x10] sm:$0xff]
        %v416 = vld [vmem:[%s279 + $0x18] sm:$0xff]
        %v417 = vld [vmem:[%s279 + $0x20] sm:$0xff]
        %v418 = vld [vmem:[%s279 + $0x28] sm:$0xff]
        %v419 = vld [vmem:[%s279 + $0x30] sm:$0xff]
        %v420 = vld [vmem:[%s279 + $0x38] sm:$0xff]
        %v421 = vld [vmem:[%s279 + $0x40] sm:$0xff]
        %v422 = vld [vmem:[%s279 + $0x48] sm:$0xff]
        %v423 = vld [vmem:[%s279 + $0x50] sm:$0xff]
        %v424 = vld [vmem:[%s279 + $0x58] sm:$0xff]
        %v425 = vld [vmem:[%s279 + $0x60] sm:$0xff]
        %v426 = vld [vmem:[%s279 + $0x68] sm:$0xff]
        %v427 = vld [vmem:[%s279 + $0x70] sm:$0xff]
        %v428 = vld [vmem:[%s279 + $0x78] sm:$0xff]
        %v429 = vld [vmem:[%s279 + $0x80] sm:$0xff]
        %v430 = vld [vmem:[%s279 + $0x88] sm:$0xff]
        %v431 = vld [vmem:[%s279 + $0x90] sm:$0xff]
        %v432 = vld [vmem:[%s279 + $0x98] sm:$0xff]
        %v433 = vld [vmem:[%s279 + $0xa0] sm:$0xff]
        %v434 = vld [vmem:[%s279 + $0xa8] sm:$0xff]
        %v435 = vld [vmem:[%s279 + $0xb0] sm:$0xff]
        %v436 = vld [vmem:[%s279 + $0xb8] sm:$0xff]
        %v437 = vld [vmem:[%s279 + $0xc0] sm:$0xff]
        %v438 = vld [vmem:[%s279 + $0xc8] sm:$0xff]
        %v439 = vld [vmem:[%s279 + $0xd0] sm:$0xff]
        %v440 = vld [vmem:[%s279 + $0xd8] sm:$0xff]
        %v441 = vld [vmem:[%s279 + $0xe0] sm:$0xff]
        %v442 = vld [vmem:[%s279 + $0xe8] sm:$0xff]
        %v443 = vld [vmem:[%s279 + $0xf0] sm:$0xff]
        %v444 = vld [vmem:[%s279 + $0xf8] sm:$0xff]
        %445 = vmatprep.subr.mxu0 %v414
        %446 = vmatpush1.msra.mxu0 %v413
        %447 = vmatprep.subr.mxu0 %v416
        %448 = vmatpush1.msra.mxu0 %v415
        %449 = vmatprep.subr.mxu0 %v418
        %450 = vmatpush1.msra.mxu0 %v417
        %451 = vmatprep.subr.mxu0 %v420
        %452 = vmatpush1.msra.mxu0 %v419
        %453 = vmatprep.subr.mxu0 %v422
        %454 = vmatpush1.msra.mxu0 %v421
        %455 = vmatprep.subr.mxu0 %v424
        %456 = vmatpush1.msra.mxu0 %v423
        %457 = vmatprep.subr.mxu0 %v426
        %458 = vmatpush1.msra.mxu0 %v425
        %459 = vmatprep.subr.mxu0 %v428
        %460 = vmatpush1.msra.mxu0 %v427
        %461 = vmatprep.subr.mxu0 %v430
        %462 = vmatpush1.msra.mxu0 %v429
        %463 = vmatprep.subr.mxu0 %v432
        %464 = vmatpush1.msra.mxu0 %v431
        %465 = vmatprep.subr.mxu0 %v434
        %466 = vmatpush1.msra.mxu0 %v433
        %467 = vmatprep.subr.mxu0 %v436
        %468 = vmatpush1.msra.mxu0 %v435
        %469 = vmatprep.subr.mxu0 %v438
        %470 = vmatpush1.msra.mxu0 %v437
        %471 = vmatprep.subr.mxu0 %v440
        %472 = vmatpush1.msra.mxu0 %v439
        %473 = vmatprep.subr.mxu0 %v442
        %474 = vmatpush1.msra.mxu0 %v441
        %475 = vmatprep.subr.mxu0 %v444
        %476 = vmatpush1.msra.mxu0 %v443
        %477 = vmatprep.subr.mxu0 0.0
        %478 = vmatpush1.msra.mxu0 0.0
        %479 = vmatprep.subr.mxu0 0.0
        %480 = vmatpush1.msra.mxu0 0.0
        %481 = vmatprep.subr.mxu0 0.0
        %482 = vmatpush1.msra.mxu0 0.0
        %483 = vmatprep.subr.mxu0 0.0
        %484 = vmatpush1.msra.mxu0 0.0
        %485 = vmatprep.subr.mxu0 0.0
        %486 = vmatpush1.msra.mxu0 0.0
        %487 = vmatprep.subr.mxu0 0.0
        %488 = vmatpush1.msra.mxu0 0.0
        %489 = vmatprep.subr.mxu0 0.0
        %490 = vmatpush1.msra.mxu0 0.0
        %491 = vmatprep.subr.mxu0 0.0
        %492 = vmatpush1.msra.mxu0 0.0
        %493 = vmatprep.subr.mxu0 0.0
        %494 = vmatpush1.msra.mxu0 0.0
        %495 = vmatprep.subr.mxu0 0.0
        %496 = vmatpush1.msra.mxu0 0.0
        %497 = vmatprep.subr.mxu0 0.0
        %498 = vmatpush1.msra.mxu0 0.0
        %499 = vmatprep.subr.mxu0 0.0
        %500 = vmatpush1.msra.mxu0 0.0
        %501 = vmatprep.subr.mxu0 0.0
        %502 = vmatpush1.msra.mxu0 0.0
        %503 = vmatprep.subr.mxu0 0.0
        %504 = vmatpush1.msra.mxu0 0.0
        %505 = vmatprep.subr.mxu0 0.0
        %506 = vmatpush1.msra.mxu0 0.0
        %507 = vmatprep.subr.mxu0 0.0
        %508 = vmatpush1.msra.mxu0 0.0
        %509 = vmatprep.mubr.f32.mxu0 0.0
        %510 = vmatmul.mubr.f32.gmra.mrb[0].mxu0 %v397
        %v511 = vpop.f32.mrb[0].mxu0
        %v512 = vadd.f32 0.0, %v511
        %v513 = vpop.f32.mrb[0].mxu0
        %v514 = vadd.f32 0.0, %v513
        %515 = vmatprep.mubr.f32.mxu0 0.0
        %516 = vmatmul.mubr.f32.gmra.mrb[0].mxu0 %v398
        %v517 = vpop.f32.mrb[0].mxu0
        %v518 = vadd.f32 0.0, %v517
        %v519 = vpop.f32.mrb[0].mxu0
        %v520 = vadd.f32 0.0, %v519
        %521 = vmatprep.mubr.f32.mxu0 0.0
        %522 = vmatmul.mubr.f32.gmra.mrb[0].mxu0 %v399
        %v523 = vpop.f32.mrb[0].mxu0
        %v524 = vadd.f32 0.0, %v523
        %v525 = vpop.f32.mrb[0].mxu0
        %v526 = vadd.f32 0.0, %v525
        %527 = vmatprep.mubr.f32.mxu0 0.0
        %528 = vmatmul.mubr.f32.gmra.mrb[0].mxu0 %v400
        %v529 = vpop.f32.mrb[0].mxu0
        %v530 = vadd.f32 0.0, %v529
        %v531 = vpop.f32.mrb[0].mxu0
        %v532 = vadd.f32 0.0, %v531
        %533 = vmatprep.mubr.f32.mxu0 0.0
        %534 = vmatmul.mubr.f32.gmra.mrb[0].mxu0 %v401
        %v535 = vpop.f32.mrb[0].mxu0
        %v536 = vadd.f32 0.0, %v535
        %v537 = vpop.f32.mrb[0].mxu0
        %v538 = vadd.f32 0.0, %v537
        %539 = vmatprep.mubr.f32.mxu0 0.0
        %540 = vmatmul.mubr.f32.gmra.mrb[0].mxu0 %v402
        %v541 = vpop.f32.mrb[0].mxu0
        %v542 = vadd.f32 0.0, %v541
        %v543 = vpop.f32.mrb[0].mxu0
        %v544 = vadd.f32 0.0, %v543
        %545 = vmatprep.mubr.f32.mxu0 0.0
        %546 = vmatmul.mubr.f32.gmra.mrb[0].mxu0 %v403
        %v547 = vpop.f32.mrb[0].mxu0
        %v548 = vadd.f32 0.0, %v547
        %v549 = vpop.f32.mrb[0].mxu0
        %v550 = vadd.f32 0.0, %v549
        %551 = vmatprep.mubr.f32.mxu0 0.0
        %552 = vmatmul.mubr.f32.gmra.mrb[0].mxu0 %v404
        %v553 = vpop.f32.mrb[0].mxu0
        %v554 = vadd.f32 0.0, %v553
        %v555 = vpop.f32.mrb[0].mxu0
        %v556 = vadd.f32 0.0, %v555
        %557 = vmatprep.mubr.f32.mxu0 0.0
        %558 = vmatmul.mubr.f32.gmra.mrb[0].mxu0 %v405
        %v559 = vpop.f32.mrb[0].mxu0
        %v560 = vadd.f32 0.0, %v559
        %v561 = vpop.f32.mrb[0].mxu0
        %v562 = vadd.f32 0.0, %v561
        %563 = vmatprep.mubr.f32.mxu0 0.0
        %564 = vmatmul.mubr.f32.gmra.mrb[0].mxu0 %v406
        %v565 = vpop.f32.mrb[0].mxu0
        %v566 = vadd.f32 0.0, %v565
        %v567 = vpop.f32.mrb[0].mxu0
        %v568 = vadd.f32 0.0, %v567
        %569 = vmatprep.mubr.f32.mxu0 0.0
        %570 = vmatmul.mubr.f32.gmra.mrb[0].mxu0 %v407
        %v571 = vpop.f32.mrb[0].mxu0
        %v572 = vadd.f32 0.0, %v571
        %v573 = vpop.f32.mrb[0].mxu0
        %v574 = vadd.f32 0.0, %v573
        %575 = vmatprep.mubr.f32.mxu0 0.0
        %576 = vmatmul.mubr.f32.gmra.mrb[0].mxu0 %v408
        %v577 = vpop.f32.mrb[0].mxu0
        %v578 = vadd.f32 0.0, %v577
        %v579 = vpop.f32.mrb[0].mxu0
        %v580 = vadd.f32 0.0, %v579
        %581 = vmatprep.mubr.f32.mxu0 0.0
        %582 = vmatmul.mubr.f32.gmra.mrb[0].mxu0 %v409
        %v583 = vpop.f32.mrb[0].mxu0
        %v584 = vadd.f32 0.0, %v583
        %v585 = vpop.f32.mrb[0].mxu0
        %v586 = vadd.f32 0.0, %v585
        %587 = vmatprep.mubr.f32.mxu0 0.0
        %588 = vmatmul.mubr.f32.gmra.mrb[0].mxu0 %v410
        %v589 = vpop.f32.mrb[0].mxu0
        %v590 = vadd.f32 0.0, %v589
        %v591 = vpop.f32.mrb[0].mxu0
        %v592 = vadd.f32 0.0, %v591
        %593 = vmatprep.mubr.f32.mxu0 0.0
        %594 = vmatmul.mubr.f32.gmra.mrb[0].mxu0 %v411
        %v595 = vpop.f32.mrb[0].mxu0
        %v596 = vadd.f32 0.0, %v595
        %v597 = vpop.f32.mrb[0].mxu0
        %v598 = vadd.f32 0.0, %v597
        %599 = vmatprep.mubr.f32.mxu0 0.0
        %600 = vmatmul.mubr.f32.gmra.mrb[0].mxu0 %v412
        %v601 = vpop.f32.mrb[0].mxu0
        %v602 = vadd.f32 0.0, %v601
        %v603 = vpop.f32.mrb[0].mxu0
        %v604 = vadd.f32 0.0, %v603
        %605 = vdwg.mxu0
        %v606 = vadd.f32 %v365, %v512
        %v607 = vadd.f32 %v366, %v514
        %v608 = vadd.f32 %v367, %v518
        %v609 = vadd.f32 %v368, %v520
        %v610 = vadd.f32 %v369, %v524
        %v611 = vadd.f32 %v370, %v526
        %v612 = vadd.f32 %v371, %v530
        %v613 = vadd.f32 %v372, %v532
        %v614 = vadd.f32 %v373, %v536
        %v615 = vadd.f32 %v374, %v538
        %v616 = vadd.f32 %v375, %v542
        %v617 = vadd.f32 %v376, %v544
        %v618 = vadd.f32 %v377, %v548
        %v619 = vadd.f32 %v378, %v550
        %v620 = vadd.f32 %v379, %v554
        %v621 = vadd.f32 %v380, %v556
        %v622 = vadd.f32 %v381, %v560
        %v623 = vadd.f32 %v382, %v562
        %v624 = vadd.f32 %v383, %v566
        %v625 = vadd.f32 %v384, %v568
        %v626 = vadd.f32 %v385, %v572
        %v627 = vadd.f32 %v386, %v574
        %v628 = vadd.f32 %v387, %v578
        %v629 = vadd.f32 %v388, %v580
        %v630 = vadd.f32 %v389, %v584
        %v631 = vadd.f32 %v390, %v586
        %v632 = vadd.f32 %v391, %v590
        %v633 = vadd.f32 %v392, %v592
        %v634 = vadd.f32 %v393, %v596
        %v635 = vadd.f32 %v394, %v598
        %v636 = vadd.f32 %v395, %v602
        %v637 = vadd.f32 %v396, %v604
        %638 = vst [vmem:[#allocation2] sm:$0xff] %v606
        %639 = vst [vmem:[#allocation2 + $0x8] sm:$0xff] %v607
        %640 = vst [vmem:[#allocation2 + $0x10] sm:$0xff] %v608
        %641 = vst [vmem:[#allocation2 + $0x18] sm:$0xff] %v609
        %642 = vst [vmem:[#allocation2 + $0x20] sm:$0xff] %v610
        %643 = vst [vmem:[#allocation2 + $0x28] sm:$0xff] %v611
        %644 = vst [vmem:[#allocation2 + $0x30] sm:$0xff] %v612
        %645 = vst [vmem:[#allocation2 + $0x38] sm:$0xff] %v613
        %646 = vst [vmem:[#allocation2 + $0x40] sm:$0xff] %v614
        %647 = vst [vmem:[#allocation2 + $0x48] sm:$0xff] %v615
        %648 = vst [vmem:[#allocation2 + $0x50] sm:$0xff] %v616
        %649 = vst [vmem:[#allocation2 + $0x58] sm:$0xff] %v617
        %650 = vst [vmem:[#allocation2 + $0x60] sm:$0xff] %v618
        %651 = vst [vmem:[#allocation2 + $0x68] sm:$0xff] %v619
        %652 = vst [vmem:[#allocation2 + $0x70] sm:$0xff] %v620
        %653 = vst [vmem:[#allocation2 + $0x78] sm:$0xff] %v621
        %654 = vst [vmem:[#allocation2 + $0x80] sm:$0xff] %v622
        %655 = vst [vmem:[#allocation2 + $0x88] sm:$0xff] %v623
        %656 = vst [vmem:[#allocation2 + $0x90] sm:$0xff] %v624
        %657 = vst [vmem:[#allocation2 + $0x98] sm:$0xff] %v625
        %658 = vst [vmem:[#allocation2 + $0xa0] sm:$0xff] %v626
        %659 = vst [vmem:[#allocation2 + $0xa8] sm:$0xff] %v627
        %660 = vst [vmem:[#allocation2 + $0xb0] sm:$0xff] %v628
        %661 = vst [vmem:[#allocation2 + $0xb8] sm:$0xff] %v629
        %662 = vst [vmem:[#allocation2 + $0xc0] sm:$0xff] %v630
        %663 = vst [vmem:[#allocation2 + $0xc8] sm:$0xff] %v631
        %664 = vst [vmem:[#allocation2 + $0xd0] sm:$0xff] %v632
        %665 = vst [vmem:[#allocation2 + $0xd8] sm:$0xff] %v633
        %666 = vst [vmem:[#allocation2 + $0xe0] sm:$0xff] %v634
        %667 = vst [vmem:[#allocation2 + $0xe8] sm:$0xff] %v635
        %668 = vst [vmem:[#allocation2 + $0xf0] sm:$0xff] %v636
        %669 = vst [vmem:[#allocation2 + $0xf8] sm:$0xff] %v637
        // Predicated region
        $region60: #{forward.12} parent=50 // pred_check
          %p670 = pneg %p329
        $region61: #{forward.12} parent=50 // pred_check_branch
          %672 = sbr.rel (%p670) target = $region63
        $region62: #{forward.12} parent=50 // pred_region
          %v673 = vld [vmem:[#allocation2] sm:$0xff]
          %v674 = vld [vmem:[#allocation2 + $0x8] sm:$0xff]
          %v675 = vld [vmem:[#allocation2 + $0x10] sm:$0xff]
          %v676 = vld [vmem:[#allocation2 + $0x18] sm:$0xff]
          %v677 = vld [vmem:[#allocation2 + $0x20] sm:$0xff]
          %v678 = vld [vmem:[#allocation2 + $0x28] sm:$0xff]
          %v679 = vld [vmem:[#allocation2 + $0x30] sm:$0xff]
          %v680 = vld [vmem:[#allocation2 + $0x38] sm:$0xff]
          %v681 = vld [vmem:[#allocation2 + $0x40] sm:$0xff]
          %v682 = vld [vmem:[#allocation2 + $0x48] sm:$0xff]
          %v683 = vld [vmem:[#allocation2 + $0x50] sm:$0xff]
          %v684 = vld [vmem:[#allocation2 + $0x58] sm:$0xff]
          %v685 = vld [vmem:[#allocation2 + $0x60] sm:$0xff]
          %v686 = vld [vmem:[#allocation2 + $0x68] sm:$0xff]
          %v687 = vld [vmem:[#allocation2 + $0x70] sm:$0xff]
          %v688 = vld [vmem:[#allocation2 + $0x78] sm:$0xff]
          %v689 = vld [vmem:[#allocation2 + $0x80] sm:$0xff]
          %v690 = vld [vmem:[#allocation2 + $0x88] sm:$0xff]
          %v691 = vld [vmem:[#allocation2 + $0x90] sm:$0xff]
          %v692 = vld [vmem:[#allocation2 + $0x98] sm:$0xff]
          %v693 = vld [vmem:[#allocation2 + $0xa0] sm:$0xff]
          %v694 = vld [vmem:[#allocation2 + $0xa8] sm:$0xff]
          %v695 = vld [vmem:[#allocation2 + $0xb0] sm:$0xff]
          %v696 = vld [vmem:[#allocation2 + $0xb8] sm:$0xff]
          %v697 = vld [vmem:[#allocation2 + $0xc0] sm:$0xff]
          %v698 = vld [vmem:[#allocation2 + $0xc8] sm:$0xff]
          %v699 = vld [vmem:[#allocation2 + $0xd0] sm:$0xff]
          %v700 = vld [vmem:[#allocation2 + $0xd8] sm:$0xff]
          %v701 = vld [vmem:[#allocation2 + $0xe0] sm:$0xff]
          %v702 = vld [vmem:[#allocation2 + $0xe8] sm:$0xff]
          %v703 = vld [vmem:[#allocation2 + $0xf0] sm:$0xff]
          %v704 = vld [vmem:[#allocation2 + $0xf8] sm:$0xff]
          %v705 = vld [vmem:[%s325] sm:$0x3]
          %v707 = vlaneseq
          %v708 = vshrl.u32 %v707, 7
          %v709 = vsub.s32 0, %v708
          %v710 = vrot.slane %v705, %v709
          %v711 = vlaneseq
          %v712 = vshrl.u32 %v711, 7
          %v713 = vsub.s32 1, %v712
          %v714 = vrot.slane %v705, %v713
          %v717 = vadd.f32 %v673, %v710
          %v718 = vadd.f32 %v674, %v714
          %v719 = vadd.f32 %v675, %v710
          %v720 = vadd.f32 %v676, %v714
          %v721 = vadd.f32 %v677, %v710
          %v722 = vadd.f32 %v678, %v714
          %v723 = vadd.f32 %v679, %v710
          %v724 = vadd.f32 %v680, %v714
          %v725 = vadd.f32 %v681, %v710
          %v726 = vadd.f32 %v682, %v714
          %v727 = vadd.f32 %v683, %v710
          %v728 = vadd.f32 %v684, %v714
          %v729 = vadd.f32 %v685, %v710
          %v730 = vadd.f32 %v686, %v714
          %v731 = vadd.f32 %v687, %v710
          %v732 = vadd.f32 %v688, %v714
          %v733 = vadd.f32 %v689, %v710
          %v734 = vadd.f32 %v690, %v714
          %v735 = vadd.f32 %v691, %v710
          %v736 = vadd.f32 %v692, %v714
          %v737 = vadd.f32 %v693, %v710
          %v738 = vadd.f32 %v694, %v714
          %v739 = vadd.f32 %v695, %v710
          %v740 = vadd.f32 %v696, %v714
          %v741 = vadd.f32 %v697, %v710
          %v742 = vadd.f32 %v698, %v714
          %v743 = vadd.f32 %v699, %v710
          %v744 = vadd.f32 %v700, %v714
          %v745 = vadd.f32 %v701, %v710
          %v746 = vadd.f32 %v702, %v714
          %v747 = vadd.f32 %v703, %v710
          %v748 = vadd.f32 %v704, %v714
          %749 = vst [vmem:[%s310] sm:$0xff] %v717
          %750 = vst [vmem:[%s310 + $0x8] sm:$0xff] %v718
          %751 = vst [vmem:[%s310 + $0x10] sm:$0xff] %v719
          %752 = vst [vmem:[%s310 + $0x18] sm:$0xff] %v720
          %753 = vst [vmem:[%s310 + $0x20] sm:$0xff] %v721
          %754 = vst [vmem:[%s310 + $0x28] sm:$0xff] %v722
          %755 = vst [vmem:[%s310 + $0x30] sm:$0xff] %v723
          %756 = vst [vmem:[%s310 + $0x38] sm:$0xff] %v724
          %757 = vst [vmem:[%s310 + $0x40] sm:$0xff] %v725
          %758 = vst [vmem:[%s310 + $0x48] sm:$0xff] %v726
          %759 = vst [vmem:[%s310 + $0x50] sm:$0xff] %v727
          %760 = vst [vmem:[%s310 + $0x58] sm:$0xff] %v728
          %761 = vst [vmem:[%s310 + $0x60] sm:$0xff] %v729
          %762 = vst [vmem:[%s310 + $0x68] sm:$0xff] %v730
          %763 = vst [vmem:[%s310 + $0x70] sm:$0xff] %v731
          %764 = vst [vmem:[%s310 + $0x78] sm:$0xff] %v732
          %765 = vst [vmem:[%s310 + $0x80] sm:$0xff] %v733
          %766 = vst [vmem:[%s310 + $0x88] sm:$0xff] %v734
          %767 = vst [vmem:[%s310 + $0x90] sm:$0xff] %v735
          %768 = vst [vmem:[%s310 + $0x98] sm:$0xff] %v736
          %769 = vst [vmem:[%s310 + $0xa0] sm:$0xff] %v737
          %770 = vst [vmem:[%s310 + $0xa8] sm:$0xff] %v738
          %771 = vst [vmem:[%s310 + $0xb0] sm:$0xff] %v739
          %772 = vst [vmem:[%s310 + $0xb8] sm:$0xff] %v740
          %773 = vst [vmem:[%s310 + $0xc0] sm:$0xff] %v741
          %774 = vst [vmem:[%s310 + $0xc8] sm:$0xff] %v742
          %775 = vst [vmem:[%s310 + $0xd0] sm:$0xff] %v743
          %776 = vst [vmem:[%s310 + $0xd8] sm:$0xff] %v744
          %777 = vst [vmem:[%s310 + $0xe0] sm:$0xff] %v745
          %778 = vst [vmem:[%s310 + $0xe8] sm:$0xff] %v746
          %779 = vst [vmem:[%s310 + $0xf0] sm:$0xff] %v747
          %780 = vst [vmem:[%s310 + $0xf8] sm:$0xff] %v748
        $region63: #{forward.12} parent=50 // pred_fallthru
          _
        %s781 = sand.u32 %s125, 1
        %s782 = sand.u32 %s125, 1
        %s783 = smul.addr %s782, 256
        %s784 = scalar_lea.vmem [#allocation4], %s783
        // Predicated region
        $region64: #{forward.12} parent=50 // pred_check
          %p785 = pneg %p135
        $region65: #{forward.12} parent=50 // pred_check_branch
          %787 = sbr.rel (%p785) target = $region67
        $region66: #{forward.12} parent=50 // pred_region
          %s788 = smul.u32 16, %s19
          %s789 = smul.u32 2, %s20
          %s790 = smul.addr %s788, 8
          %s791 = sadd.s32 %s789, %s790
          %s792 = smul.addr %s791, 8
          %s793 = scalar_lea.vmem %s3, %s792
          // Predicated region
          $region68: #{forward.12} parent=66 // pred_check
            _
          $region69: #{forward.12} parent=66 // pred_check_branch
            %795 = sbr.rel (0) target = $region71
          $region70: #{forward.12} parent=66 // pred_region
            // Predicated region
            $region72: #{forward.12} parent=70 // pred_check
              _
            $region73: #{forward.12} parent=70 // pred_check_branch
              %797 = sbr.rel (0) target = $region75
            $region74: #{forward.12} parent=70 // pred_region
              loop: start=0, step=1, limit=1
              $region76: #{forward.12} parent=74 // loop_pre_header
                _
              $region77: #{forward.12} parent=74 // loop_header
                %s799 = sphi 0, %s803
                %p800 = scmp.ge.s32.totalorder %s799, 1
                %s804 = sphi %s784, %s784
                %s805 = sphi %s793, %s793
              $region78: #{forward.12} parent=74 // loop_header_branch
                %802 = sbr.rel (%p800) target = $region82
              $region79: #{forward.12} parent=74 // loop_body
                %v806 = vld [vmem:[%s804] sm:$0xff]
                %807 = vst [vmem:[%s805] sm:$0xff] %v806
                %v808 = vld [vmem:[%s804 + $0x8] sm:$0xff]
                %809 = vst [vmem:[%s805 + $0x8] sm:$0xff] %v808
                %v810 = vld [vmem:[%s804 + $0x10] sm:$0xff]
                %811 = vst [vmem:[%s805 + $0x40] sm:$0xff] %v810
                %v812 = vld [vmem:[%s804 + $0x18] sm:$0xff]
                %813 = vst [vmem:[%s805 + $0x48] sm:$0xff] %v812
                %v814 = vld [vmem:[%s804 + $0x20] sm:$0xff]
                %815 = vst [vmem:[%s805 + $0x80] sm:$0xff] %v814
                %v816 = vld [vmem:[%s804 + $0x28] sm:$0xff]
                %817 = vst [vmem:[%s805 + $0x88] sm:$0xff] %v816
                %v818 = vld [vmem:[%s804 + $0x30] sm:$0xff]
                %819 = vst [vmem:[%s805 + $0xc0] sm:$0xff] %v818
                %v820 = vld [vmem:[%s804 + $0x38] sm:$0xff]
                %821 = vst [vmem:[%s805 + $0xc8] sm:$0xff] %v820
                %v822 = vld [vmem:[%s804 + $0x40] sm:$0xff]
                %823 = vst [vmem:[%s805 + $0x100] sm:$0xff] %v822
                %v824 = vld [vmem:[%s804 + $0x48] sm:$0xff]
                %825 = vst [vmem:[%s805 + $0x108] sm:$0xff] %v824
                %v826 = vld [vmem:[%s804 + $0x50] sm:$0xff]
                %827 = vst [vmem:[%s805 + $0x140] sm:$0xff] %v826
                %v828 = vld [vmem:[%s804 + $0x58] sm:$0xff]
                %829 = vst [vmem:[%s805 + $0x148] sm:$0xff] %v828
                %v830 = vld [vmem:[%s804 + $0x60] sm:$0xff]
                %831 = vst [vmem:[%s805 + $0x180] sm:$0xff] %v830
                %v832 = vld [vmem:[%s804 + $0x68] sm:$0xff]
                %833 = vst [vmem:[%s805 + $0x188] sm:$0xff] %v832
                %v834 = vld [vmem:[%s804 + $0x70] sm:$0xff]
                %835 = vst [vmem:[%s805 + $0x1c0] sm:$0xff] %v834
                %v836 = vld [vmem:[%s804 + $0x78] sm:$0xff]
                %837 = vst [vmem:[%s805 + $0x1c8] sm:$0xff] %v836
                %v838 = vld [vmem:[%s804 + $0x80] sm:$0xff]
                %839 = vst [vmem:[%s805 + $0x200] sm:$0xff] %v838
                %v840 = vld [vmem:[%s804 + $0x88] sm:$0xff]
                %841 = vst [vmem:[%s805 + $0x208] sm:$0xff] %v840
                %v842 = vld [vmem:[%s804 + $0x90] sm:$0xff]
                %843 = vst [vmem:[%s805 + $0x240] sm:$0xff] %v842
                %v844 = vld [vmem:[%s804 + $0x98] sm:$0xff]
                %845 = vst [vmem:[%s805 + $0x248] sm:$0xff] %v844
                %v846 = vld [vmem:[%s804 + $0xa0] sm:$0xff]
                %847 = vst [vmem:[%s805 + $0x280] sm:$0xff] %v846
                %v848 = vld [vmem:[%s804 + $0xa8] sm:$0xff]
                %849 = vst [vmem:[%s805 + $0x288] sm:$0xff] %v848
                %v850 = vld [vmem:[%s804 + $0xb0] sm:$0xff]
                %851 = vst [vmem:[%s805 + $0x2c0] sm:$0xff] %v850
                %v852 = vld [vmem:[%s804 + $0xb8] sm:$0xff]
                %853 = vst [vmem:[%s805 + $0x2c8] sm:$0xff] %v852
                %v854 = vld [vmem:[%s804 + $0xc0] sm:$0xff]
                %855 = vst [vmem:[%s805 + $0x300] sm:$0xff] %v854
                %v856 = vld [vmem:[%s804 + $0xc8] sm:$0xff]
                %857 = vst [vmem:[%s805 + $0x308] sm:$0xff] %v856
                %v858 = vld [vmem:[%s804 + $0xd0] sm:$0xff]
                %859 = vst [vmem:[%s805 + $0x340] sm:$0xff] %v858
                %v860 = vld [vmem:[%s804 + $0xd8] sm:$0xff]
                %861 = vst [vmem:[%s805 + $0x348] sm:$0xff] %v860
                %v862 = vld [vmem:[%s804 + $0xe0] sm:$0xff]
                %863 = vst [vmem:[%s805 + $0x380] sm:$0xff] %v862
                %v864 = vld [vmem:[%s804 + $0xe8] sm:$0xff]
                %865 = vst [vmem:[%s805 + $0x388] sm:$0xff] %v864
                %v866 = vld [vmem:[%s804 + $0xf0] sm:$0xff]
                %867 = vst [vmem:[%s805 + $0x3c0] sm:$0xff] %v866
                %v868 = vld [vmem:[%s804 + $0xf8] sm:$0xff]
                %869 = vst [vmem:[%s805 + $0x3c8] sm:$0xff] %v868
              $region80: #{forward.12} parent=74 // loop_footer
                %s803 = sadd.s32 1, %s799
              $region81: #{forward.12} parent=74 // loop_footer_branch
                %798 = sbr.rel target = $region77
              $region82: #{forward.12} parent=74 // loop_exit
                _
            $region75: #{forward.12} parent=70 // pred_fallthru
              _
            // Predicated region
            $region83: #{forward.12} parent=70 // pred_check
              _
            $region84: #{forward.12} parent=70 // pred_check_branch
              %871 = sbr.rel target = $region86
            $region85: #{forward.12} parent=70 // pred_region
              _
            $region86: #{forward.12} parent=70 // pred_fallthru
              _
          $region71: #{forward.12} parent=66 // pred_fallthru
            _
          %872 = vnop
        $region67: #{forward.12} parent=50 // pred_fallthru
          _
      $region51: #{forward.12} parent=5 // pred_fallthru
        _
      %p873 = scmp.le.s32.totalorder 2, %s9
      // Predicated region
      $region87: #{forward.12} parent=5 // pred_check
        %p874 = pneg %p873
      $region88: #{forward.12} parent=5 // pred_check_branch
        %876 = sbr.rel (%p874) target = $region90
      $region89: #{forward.12} parent=5 // pred_region
        %s877 = ssub.s32 %s9, 2
        // Predicated region
        $region91: #{forward.12} parent=89 // pred_check
          %p878 = pneg %p141
        $region92: #{forward.12} parent=89 // pred_check_branch
          %880 = sbr.rel (%p878) target = $region94
        $region93: #{forward.12} parent=89 // pred_region
          %s881 = sand.u32 %s126, 1
          %s882 = sand.u32 %s126, 1
          %s883 = smul.addr %s882, 256
          %s884 = scalar_lea.vmem [#allocation4], %s883
        $region94: #{forward.12} parent=89 // pred_fallthru
          _
      $region90: #{forward.12} parent=5 // pred_fallthru
        _
    $region6: #{forward.12} parent=1 // loop_footer
      %s13 = sadd.s32 1, %s9
    $region7: #{forward.12} parent=1 // loop_footer_branch
      %8 = sbr.rel target = $region3
    $region8: #{forward.12} parent=1 // loop_exit
      _

// kernel: forward.11
$region0: #{forward.11}
  #allocation0 [shape = 'u32[]', space=smem, size = 0x4, offset = 0x4, fixed_abs, tag = 'smem constant byte address 0x4 - core index']
  #allocation1 [shape = 'u32[144,128]{1,0:T(1,128)}', space=vmem, size = 0x12000, scoped, tag = 'internal scratch']
  %s0 = inlined_call_operand.vmem [shape: f32[16,8,384], index: 0, kind: input, shape index: {}]
  %s1 = inlined_call_operand.vmem [shape: f32[8,16,128], index: 1, kind: input, shape index: {}]
  %s2 = inlined_call_operand.vmem [shape: f32[8,16], index: 2, kind: input, shape index: {}]
  %s3 = inlined_call_operand.vmem [shape: f32[8,128], index: 3, kind: input, shape index: {}]
  %s4 = inlined_call_operand.vmem [shape: f32[128,384], index: 4, kind: input, shape index: {}]
  %s5 = inlined_call_operand.vmem [shape: f32[1,384], index: 5, kind: input, shape index: {}]
  %s6 = inlined_call_operand.vmem [shape: f32[128,128], index: 6, kind: input, shape index: {}]
  %s7 = inlined_call_operand.vmem [shape: f32[128,128], index: 7, kind: input, shape index: {}]
  %s8 = inlined_call_operand.vmem [shape: f32[1,128], index: 8, kind: input, shape index: {}]
  %s9 = inlined_call_operand.vmem [shape: f32[16,8,128], index: 9, kind: output, shape index: {}]
  %s10 = sld [smem:[#allocation0]]
  $region53: #{forward.11} parent=0
    _
  %s12 = ssub.s32 1, %s10
  %s13 = scalar_select 0, %s12, %s10
  // Predicated region
  $region2: #{forward.11} parent=0 // pred_check
    _
  $region3: #{forward.11} parent=0 // pred_check_branch
    %15 = sbr.rel (0) target = $region5
  $region4: #{forward.11} parent=0 // pred_region
    _
  $region5: #{forward.11} parent=0 // pred_fallthru
    _
  // Predicated region
  $region6: #{forward.11} parent=0 // pred_check
    _
  $region7: #{forward.11} parent=0 // pred_check_branch
    %17 = sbr.rel (0) target = $region9
  $region8: #{forward.11} parent=0 // pred_region
    _
  $region9: #{forward.11} parent=0 // pred_fallthru
    _
  // Predicated region
  $region10: #{forward.11} parent=0 // pred_check
    _
  $region11: #{forward.11} parent=0 // pred_check_branch
    %19 = sbr.rel (0) target = $region13
  $region12: #{forward.11} parent=0 // pred_region
    _
  $region13: #{forward.11} parent=0 // pred_fallthru
    _
  // Predicated region
  $region14: #{forward.11} parent=0 // pred_check
    _
  $region15: #{forward.11} parent=0 // pred_check_branch
    %21 = sbr.rel (0) target = $region17
  $region16: #{forward.11} parent=0 // pred_region
    _
  $region17: #{forward.11} parent=0 // pred_fallthru
    _
  // Predicated region
  $region18: #{forward.11} parent=0 // pred_check
    _
  $region19: #{forward.11} parent=0 // pred_check_branch
    %23 = sbr.rel (0) target = $region21
  $region20: #{forward.11} parent=0 // pred_region
    _
  $region21: #{forward.11} parent=0 // pred_fallthru
    _
  // Predicated region
  $region22: #{forward.11} parent=0 // pred_check
    _
  $region23: #{forward.11} parent=0 // pred_check_branch
    %25 = sbr.rel (0) target = $region25
  $region24: #{forward.11} parent=0 // pred_region
    _
  $region25: #{forward.11} parent=0 // pred_fallthru
    _
  // Predicated region
  $region26: #{forward.11} parent=0 // pred_check
    _
  $region27: #{forward.11} parent=0 // pred_check_branch
    %27 = sbr.rel (0) target = $region29
  $region28: #{forward.11} parent=0 // pred_region
    _
  $region29: #{forward.11} parent=0 // pred_fallthru
    _
  // Predicated region
  $region30: #{forward.11} parent=0 // pred_check
    _
  $region31: #{forward.11} parent=0 // pred_check_branch
    %29 = sbr.rel (0) target = $region33
  $region32: #{forward.11} parent=0 // pred_region
    _
  $region33: #{forward.11} parent=0 // pred_fallthru
    _
  // Predicated region
  $region34: #{forward.11} parent=0 // pred_check
    _
  $region35: #{forward.11} parent=0 // pred_check_branch
    %31 = sbr.rel (0) target = $region37
  $region36: #{forward.11} parent=0 // pred_region
    _
  $region37: #{forward.11} parent=0 // pred_fallthru
    _
  %v32 = vld [vmem:[%s1] sm:$0xff]
  %v33 = vld [vmem:[%s1 + $0x8] sm:$0xff]
  %v34 = vld [vmem:[%s1 + $0x10] sm:$0xff]
  %v35 = vld [vmem:[%s1 + $0x18] sm:$0xff]
  %v36 = vld [vmem:[%s1 + $0x20] sm:$0xff]
  %v37 = vld [vmem:[%s1 + $0x28] sm:$0xff]
  %v38 = vld [vmem:[%s1 + $0x30] sm:$0xff]
  %v39 = vld [vmem:[%s1 + $0x38] sm:$0xff]
  %v40 = vld [vmem:[%s1 + $0x40] sm:$0xff]
  %v41 = vld [vmem:[%s1 + $0x48] sm:$0xff]
  %v42 = vld [vmem:[%s1 + $0x50] sm:$0xff]
  %v43 = vld [vmem:[%s1 + $0x58] sm:$0xff]
  %v44 = vld [vmem:[%s1 + $0x60] sm:$0xff]
  %v45 = vld [vmem:[%s1 + $0x68] sm:$0xff]
  %v46 = vld [vmem:[%s1 + $0x70] sm:$0xff]
  %v47 = vld [vmem:[%s1 + $0x78] sm:$0xff]
  %v48 = vld [vmem:[%s2] sm:$0xff]
  %vm49 = vcmp.gt.f32.partialorder %v48, 0.0
  %v50 = vsel %vm49, 1, 0
  %v51 = vcvt.s32.f32 %v50
  %v52 = vld [vmem:[%s4] sm:$0xff]
  %v53 = vld [vmem:[%s4 + $0x8] sm:$0xff]
  %v54 = vld [vmem:[%s4 + $0x10] sm:$0xff]
  %v55 = vld [vmem:[%s4 + $0x18] sm:$0xff]
  %v56 = vld [vmem:[%s4 + $0x20] sm:$0xff]
  %v57 = vld [vmem:[%s4 + $0x28] sm:$0xff]
  %v58 = vld [vmem:[%s4 + $0x30] sm:$0xff]
  %v59 = vld [vmem:[%s4 + $0x38] sm:$0xff]
  %v60 = vld [vmem:[%s4 + $0x40] sm:$0xff]
  %v61 = vld [vmem:[%s4 + $0x48] sm:$0xff]
  %v62 = vld [vmem:[%s4 + $0x50] sm:$0xff]
  %v63 = vld [vmem:[%s4 + $0x58] sm:$0xff]
  %v64 = vld [vmem:[%s4 + $0x60] sm:$0xff]
  %v65 = vld [vmem:[%s4 + $0x68] sm:$0xff]
  %v66 = vld [vmem:[%s4 + $0x70] sm:$0xff]
  %v67 = vld [vmem:[%s4 + $0x78] sm:$0xff]
  %v68 = vld [vmem:[%s4 + $0x80] sm:$0xff]
  %v69 = vld [vmem:[%s4 + $0x88] sm:$0xff]
  %v70 = vld [vmem:[%s4 + $0x90] sm:$0xff]
  %v71 = vld [vmem:[%s4 + $0x98] sm:$0xff]
  %v72 = vld [vmem:[%s4 + $0xa0] sm:$0xff]
  %v73 = vld [vmem:[%s4 + $0xa8] sm:$0xff]
  %v74 = vld [vmem:[%s4 + $0xb0] sm:$0xff]
  %v75 = vld [vmem:[%s4 + $0xb8] sm:$0xff]
  %v76 = vld [vmem:[%s4 + $0xc0] sm:$0xff]
  %v77 = vld [vmem:[%s4 + $0xc8] sm:$0xff]
  %v78 = vld [vmem:[%s4 + $0xd0] sm:$0xff]
  %v79 = vld [vmem:[%s4 + $0xd8] sm:$0xff]
  %v80 = vld [vmem:[%s4 + $0xe0] sm:$0xff]
  %v81 = vld [vmem:[%s4 + $0xe8] sm:$0xff]
  %v82 = vld [vmem:[%s4 + $0xf0] sm:$0xff]
  %v83 = vld [vmem:[%s4 + $0xf8] sm:$0xff]
  %v84 = vld [vmem:[%s4 + $0x100] sm:$0xff]
  %v85 = vld [vmem:[%s4 + $0x108] sm:$0xff]
  %v86 = vld [vmem:[%s4 + $0x110] sm:$0xff]
  %v87 = vld [vmem:[%s4 + $0x118] sm:$0xff]
  %v88 = vld [vmem:[%s4 + $0x120] sm:$0xff]
  %v89 = vld [vmem:[%s4 + $0x128] sm:$0xff]
  %v90 = vld [vmem:[%s4 + $0x130] sm:$0xff]
  %v91 = vld [vmem:[%s4 + $0x138] sm:$0xff]
  %v92 = vld [vmem:[%s4 + $0x140] sm:$0xff]
  %v93 = vld [vmem:[%s4 + $0x148] sm:$0xff]
  %v94 = vld [vmem:[%s4 + $0x150] sm:$0xff]
  %v95 = vld [vmem:[%s4 + $0x158] sm:$0xff]
  %v96 = vld [vmem:[%s4 + $0x160] sm:$0xff]
  %v97 = vld [vmem:[%s4 + $0x168] sm:$0xff]
  %v98 = vld [vmem:[%s4 + $0x170] sm:$0xff]
  %v99 = vld [vmem:[%s4 + $0x178] sm:$0xff]
  %v100 = vld [vmem:[%s5] sm:$0x7]
  %v102 = vlaneseq
  %v103 = vshrl.u32 %v102, 7
  %v104 = vsub.s32 0, %v103
  %v105 = vrot.slane %v100, %v104
  %v106 = vlaneseq
  %v107 = vshrl.u32 %v106, 7
  %v108 = vsub.s32 1, %v107
  %v109 = vrot.slane %v100, %v108
  %v110 = vlaneseq
  %v111 = vshrl.u32 %v110, 7
  %v112 = vsub.s32 2, %v111
  %v113 = vrot.slane %v100, %v112
  %v117 = vld [vmem:[%s6] sm:$0xff]
  %v118 = vld [vmem:[%s6 + $0x8] sm:$0xff]
  %v119 = vld [vmem:[%s6 + $0x10] sm:$0xff]
  %v120 = vld [vmem:[%s6 + $0x18] sm:$0xff]
  %v121 = vld [vmem:[%s6 + $0x20] sm:$0xff]
  %v122 = vld [vmem:[%s6 + $0x28] sm:$0xff]
  %v123 = vld [vmem:[%s6 + $0x30] sm:$0xff]
  %v124 = vld [vmem:[%s6 + $0x38] sm:$0xff]
  %v125 = vld [vmem:[%s6 + $0x40] sm:$0xff]
  %v126 = vld [vmem:[%s6 + $0x48] sm:$0xff]
  %v127 = vld [vmem:[%s6 + $0x50] sm:$0xff]
  %v128 = vld [vmem:[%s6 + $0x58] sm:$0xff]
  %v129 = vld [vmem:[%s6 + $0x60] sm:$0xff]
  %v130 = vld [vmem:[%s6 + $0x68] sm:$0xff]
  %v131 = vld [vmem:[%s6 + $0x70] sm:$0xff]
  %v132 = vld [vmem:[%s6 + $0x78] sm:$0xff]
  %v133 = vld [vmem:[%s7] sm:$0xff]
  %v134 = vld [vmem:[%s7 + $0x8] sm:$0xff]
  %v135 = vld [vmem:[%s7 + $0x10] sm:$0xff]
  %v136 = vld [vmem:[%s7 + $0x18] sm:$0xff]
  %v137 = vld [vmem:[%s7 + $0x20] sm:$0xff]
  %v138 = vld [vmem:[%s7 + $0x28] sm:$0xff]
  %v139 = vld [vmem:[%s7 + $0x30] sm:$0xff]
  %v140 = vld [vmem:[%s7 + $0x38] sm:$0xff]
  %v141 = vld [vmem:[%s7 + $0x40] sm:$0xff]
  %v142 = vld [vmem:[%s7 + $0x48] sm:$0xff]
  %v143 = vld [vmem:[%s7 + $0x50] sm:$0xff]
  %v144 = vld [vmem:[%s7 + $0x58] sm:$0xff]
  %v145 = vld [vmem:[%s7 + $0x60] sm:$0xff]
  %v146 = vld [vmem:[%s7 + $0x68] sm:$0xff]
  %v147 = vld [vmem:[%s7 + $0x70] sm:$0xff]
  %v148 = vld [vmem:[%s7 + $0x78] sm:$0xff]
  %v149 = vld [vmem:[%s8] sm:$0x1]
  %v151 = vlaneseq
  %v152 = vshrl.u32 %v151, 7
  %v153 = vsub.s32 0, %v152
  %v154 = vrot.slane %v149, %v153
  %v156 = vld [vmem:[%s3] sm:$0xff]
  loop: start=0, step=1, limit=16
  $region38: #{forward.11} parent=0 // loop_pre_header
    _
  $region39: #{forward.11} parent=0 // loop_header
    %s158 = sphi 0, %s162
    %p159 = scmp.ge.s32.totalorder %s158, 16
    %v163 = vphi %v156, %v331
  $region40: #{forward.11} parent=0 // loop_header_branch
    %161 = sbr.rel (%p159) target = $region44
  $region41: #{forward.11} parent=0 // loop_body
    %s164 = smul.u32 %s158, 3
    %s165 = smul.addr %s164, 8
    %s166 = scalar_lea.vmem %s0, %s165
    %v167 = vld [vmem:[%s166] sm:$0xff]
    %v168 = vld [vmem:[%s166 + $0x8] sm:$0xff]
    %v169 = vld [vmem:[%s166 + $0x10] sm:$0xff]
    %170 = vmatprep.subr.mxu0 %v53
    %171 = vmatpush1.msra.mxu0 %v52
    %172 = vmatprep.subr.mxu0 %v56
    %173 = vmatpush1.msra.mxu0 %v55
    %174 = vmatprep.subr.mxu0 %v59
    %175 = vmatpush1.msra.mxu0 %v58
    %176 = vmatprep.subr.mxu0 %v62
    %177 = vmatpush1.msra.mxu0 %v61
    %178 = vmatprep.subr.mxu0 %v65
    %179 = vmatpush1.msra.mxu0 %v64
    %180 = vmatprep.subr.mxu0 %v68
    %181 = vmatpush1.msra.mxu0 %v67
    %182 = vmatprep.subr.mxu0 %v71
    %183 = vmatpush1.msra.mxu0 %v70
    %184 = vmatprep.subr.mxu0 %v74
    %185 = vmatpush1.msra.mxu0 %v73
    %186 = vmatprep.subr.mxu0 %v77
    %187 = vmatpush1.msra.mxu0 %v76
    %188 = vmatprep.subr.mxu0 %v80
    %189 = vmatpush1.msra.mxu0 %v79
    %190 = vmatprep.subr.mxu0 %v83
    %191 = vmatpush1.msra.mxu0 %v82
    %192 = vmatprep.subr.mxu0 %v86
    %193 = vmatpush1.msra.mxu0 %v85
    %194 = vmatprep.subr.mxu0 %v89
    %195 = vmatpush1.msra.mxu0 %v88
    %196 = vmatprep.subr.mxu0 %v92
    %197 = vmatpush1.msra.mxu0 %v91
    %198 = vmatprep.subr.mxu0 %v95
    %199 = vmatpush1.msra.mxu0 %v94
    %200 = vmatprep.subr.mxu0 %v98
    %201 = vmatpush1.msra.mxu0 %v97
    %202 = vmatprep.subr.mxu0 0.0
    %203 = vmatpush1.msra.mxu0 0.0
    %204 = vmatprep.subr.mxu0 0.0
    %205 = vmatpush1.msra.mxu0 0.0
    %206 = vmatprep.subr.mxu0 0.0
    %207 = vmatpush1.msra.mxu0 0.0
    %208 = vmatprep.subr.mxu0 0.0
    %209 = vmatpush1.msra.mxu0 0.0
    %210 = vmatprep.subr.mxu0 0.0
    %211 = vmatpush1.msra.mxu0 0.0
    %212 = vmatprep.subr.mxu0 0.0
    %213 = vmatpush1.msra.mxu0 0.0
    %214 = vmatprep.subr.mxu0 0.0
    %215 = vmatpush1.msra.mxu0 0.0
    %216 = vmatprep.subr.mxu0 0.0
    %217 = vmatpush1.msra.mxu0 0.0
    %218 = vmatprep.subr.mxu0 0.0
    %219 = vmatpush1.msra.mxu0 0.0
    %220 = vmatprep.subr.mxu0 0.0
    %221 = vmatpush1.msra.mxu0 0.0
    %222 = vmatprep.subr.mxu0 0.0
    %223 = vmatpush1.msra.mxu0 0.0
    %224 = vmatprep.subr.mxu0 0.0
    %225 = vmatpush1.msra.mxu0 0.0
    %226 = vmatprep.subr.mxu0 0.0
    %227 = vmatpush1.msra.mxu0 0.0
    %228 = vmatprep.subr.mxu0 0.0
    %229 = vmatpush1.msra.mxu0 0.0
    %230 = vmatprep.subr.mxu0 0.0
    %231 = vmatpush1.msra.mxu0 0.0
    %232 = vmatprep.subr.mxu0 0.0
    %233 = vmatpush1.msra.mxu0 0.0
    %234 = vmatprep.mubr.f32.mxu0 0.0
    %235 = vmatmul.mubr.f32.gmra.mrb[0].mxu0 %v163
    %v236 = vpop.f32.mrb[0].mxu0
    %v237 = vadd.f32 %v105, %v236
    %v238 = vpop.f32.mrb[0].mxu0
    %v239 = vadd.f32 %v109, %v238
    %240 = vdwg.mxu0
    %241 = vmatprep.subr.mxu0 0.0
    %242 = vmatpush1.msra.mxu0 %v54
    %243 = vmatprep.subr.mxu0 0.0
    %244 = vmatpush1.msra.mxu0 %v57
    %245 = vmatprep.subr.mxu0 0.0
    %246 = vmatpush1.msra.mxu0 %v60
    %247 = vmatprep.subr.mxu0 0.0
    %248 = vmatpush1.msra.mxu0 %v63
    %249 = vmatprep.subr.mxu0 0.0
    %250 = vmatpush1.msra.mxu0 %v66
    %251 = vmatprep.subr.mxu0 0.0
    %252 = vmatpush1.msra.mxu0 %v69
    %253 = vmatprep.subr.mxu0 0.0
    %254 = vmatpush1.msra.mxu0 %v72
    %255 = vmatprep.subr.mxu0 0.0
    %256 = vmatpush1.msra.mxu0 %v75
    %257 = vmatprep.subr.mxu0 0.0
    %258 = vmatpush1.msra.mxu0 %v78
    %259 = vmatprep.subr.mxu0 0.0
    %260 = vmatpush1.msra.mxu0 %v81
    %261 = vmatprep.subr.mxu0 0.0
    %262 = vmatpush1.msra.mxu0 %v84
    %263 = vmatprep.subr.mxu0 0.0
    %264 = vmatpush1.msra.mxu0 %v87
    %265 = vmatprep.subr.mxu0 0.0
    %266 = vmatpush1.msra.mxu0 %v90
    %267 = vmatprep.subr.mxu0 0.0
    %268 = vmatpush1.msra.mxu0 %v93
    %269 = vmatprep.subr.mxu0 0.0
    %270 = vmatpush1.msra.mxu0 %v96
    %271 = vmatprep.subr.mxu0 0.0
    %272 = vmatpush1.msra.mxu0 %v99
    %273 = vmatprep.subr.mxu0 0.0
    %274 = vmatpush1.msra.mxu0 0.0
    %275 = vmatprep.subr.mxu0 0.0
    %276 = vmatpush1.msra.mxu0 0.0
    %277 = vmatprep.subr.mxu0 0.0
    %278 = vmatpush1.msra.mxu0 0.0
    %279 = vmatprep.subr.mxu0 0.0
    %280 = vmatpush1.msra.mxu0 0.0
    %281 = vmatprep.subr.mxu0 0.0
    %282 = vmatpush1.msra.mxu0 0.0
    %283 = vmatprep.subr.mxu0 0.0
    %284 = vmatpush1.msra.mxu0 0.0
    %285 = vmatprep.subr.mxu0 0.0
    %286 = vmatpush1.msra.mxu0 0.0
    %287 = vmatprep.subr.mxu0 0.0
    %288 = vmatpush1.msra.mxu0 0.0
    %289 = vmatprep.subr.mxu0 0.0
    %290 = vmatpush1.msra.mxu0 0.0
    %291 = vmatprep.subr.mxu0 0.0
    %292 = vmatpush1.msra.mxu0 0.0
    %293 = vmatprep.subr.mxu0 0.0
    %294 = vmatpush1.msra.mxu0 0.0
    %295 = vmatprep.subr.mxu0 0.0
    %296 = vmatpush1.msra.mxu0 0.0
    %297 = vmatprep.subr.mxu0 0.0
    %298 = vmatpush1.msra.mxu0 0.0
    %299 = vmatprep.subr.mxu0 0.0
    %300 = vmatpush1.msra.mxu0 0.0
    %301 = vmatprep.subr.mxu0 0.0
    %302 = vmatpush1.msra.mxu0 0.0
    %303 = vmatprep.subr.mxu0 0.0
    %304 = vmatpush1.msra.mxu0 0.0
    %305 = vmatprep.mubr.f32.mxu0 0.0
    %306 = vmatmul.mubr.f32.gmra.mrb[0].mxu0 %v163
    %v307 = vpop.f32.mrb[0].mxu0
    %v308 = vadd.f32 %v113, %v307
    %v309 = vpop.f32.mrb[0].mxu0
    %310 = vdwg.mxu0
    %v311 = vadd.f32 %v167, %v237
    %v312 = vxor.u32 %v311, 2147483648
    %v313 = vmul.f32 %v312, 1.442695
    %v314 = vpow.pop %v313
    %v315 = vadd.f32 %v314, 1.0
    %v316 = vrcp.pop %v315
    %v317 = vmul.f32 1.0, %v316
    %v318 = vadd.f32 %v168, %v239
    %v319 = vxor.u32 %v318, 2147483648
    %v320 = vmul.f32 %v319, 1.442695
    %v321 = vpow.pop %v320
    %v322 = vadd.f32 %v321, 1.0
    %v323 = vrcp.pop %v322
    %v324 = vmul.f32 1.0, %v323
    %v325 = vmul.f32 %v317, %v308
    %v326 = vadd.f32 %v169, %v325
    %v327 = vtanh.pop %v326
    %v328 = vsub.f32 1.0, %v324
    %v329 = vmul.f32 %v328, %v327
    %v330 = vmul.f32 %v324, %v163
    %v331 = vadd.f32 %v329, %v330
    %v333 = vcombine.high %v331, %v331
    %v335 = vunpack.c.l.s4 1966171168
    %v336 = vunpack.c.0.s8 %v335
    %v337 = vlaneseq
    %v338 = vshrl.u32 %v337, 7
    %v339 = vsub.s32 %v336, %v338
    %v340 = vrot.slane %v331, %v339
    %v342 = vunpack.c.l.s4 1966171168
    %v343 = vunpack.c.0.s8 %v342
    %v344 = vlaneseq
    %v345 = vshrl.u32 %v344, 7
    %v346 = vsub.s32 %v343, %v345
    %v347 = vrot.slane %v333, %v346
    %v348 = vcombine.high %v340, %v340
    %v349 = vcombine.high %v347, %v347
    %v351 = vunpack.c.l.s4 1966171168
    %v352 = vunpack.c.0.s8 %v351
    %v353 = vlaneseq
    %v354 = vshrl.u32 %v353, 7
    %v355 = vsub.s32 %v352, %v354
    %v356 = vrot.slane %v340, %v355
    %v358 = vunpack.c.l.s4 1966171168
    %v359 = vunpack.c.0.s8 %v358
    %v360 = vlaneseq
    %v361 = vshrl.u32 %v360, 7
    %v362 = vsub.s32 %v359, %v361
    %v363 = vrot.slane %v347, %v362
    %v365 = vunpack.c.l.s4 1966171168
    %v366 = vunpack.c.0.s8 %v365
    %v367 = vlaneseq
    %v368 = vshrl.u32 %v367, 7
    %v369 = vsub.s32 %v366, %v368
    %v370 = vrot.slane %v348, %v369
    %v372 = vunpack.c.l.s4 1966171168
    %v373 = vunpack.c.0.s8 %v372
    %v374 = vlaneseq
    %v375 = vshrl.u32 %v374, 7
    %v376 = vsub.s32 %v373, %v375
    %v377 = vrot.slane %v349, %v376
    %v378 = vcombine.high %v356, %v356
    %v379 = vcombine.high %v363, %v363
    %v380 = vcombine.high %v370, %v370
    %v381 = vcombine.high %v377, %v377
    %390 = vmatprep.subr.mxu0 0.0
    %391 = vmatpush1.xpose.msra.mxu0 %v32
    %392 = vmatprep.subr.mxu0 0.0
    %393 = vmatpush1.xpose.msra.mxu0 %v33
    %394 = vmatprep.subr.mxu0 0.0
    %395 = vmatpush1.xpose.msra.mxu0 0.0
    %396 = vmatprep.subr.mxu0 0.0
    %397 = vmatpush1.xpose.msra.mxu0 0.0
    %398 = vmatprep.subr.mxu0 0.0
    %399 = vmatpush1.xpose.msra.mxu0 0.0
    %400 = vmatprep.subr.mxu0 0.0
    %401 = vmatpush1.xpose.msra.mxu0 0.0
    %402 = vmatprep.subr.mxu0 0.0
    %403 = vmatpush1.xpose.msra.mxu0 0.0
    %404 = vmatprep.subr.mxu0 0.0
    %405 = vmatpush1.xpose.msra.mxu0 0.0
    %406 = vmatprep.subr.mxu0 0.0
    %407 = vmatpush1.xpose.msra.mxu0 0.0
    %408 = vmatprep.subr.mxu0 0.0
    %409 = vmatpush1.xpose.msra.mxu0 0.0
    %410 = vmatprep.subr.mxu0 0.0
    %411 = vmatpush1.xpose.msra.mxu0 0.0
    %412 = vmatprep.subr.mxu0 0.0
    %413 = vmatpush1.xpose.msra.mxu0 0.0
    %414 = vmatprep.subr.mxu0 0.0
    %415 = vmatpush1.xpose.msra.mxu0 0.0
    %416 = vmatprep.subr.mxu0 0.0
    %417 = vmatpush1.xpose.msra.mxu0 0.0
    %418 = vmatprep.subr.mxu0 0.0
    %419 = vmatpush1.xpose.msra.mxu0 0.0
    %420 = vmatprep.subr.mxu0 0.0
    %421 = vmatpush1.xpose.msra.mxu0 0.0
    %422 = vmatprep.subr.mxu0 0.0
    %423 = vmatpush1.xpose.msra.mxu0 0.0
    %424 = vmatprep.subr.mxu0 0.0
    %425 = vmatpush1.xpose.msra.mxu0 0.0
    %426 = vmatprep.subr.mxu0 0.0
    %427 = vmatpush1.xpose.msra.mxu0 0.0
    %428 = vmatprep.subr.mxu0 0.0
    %429 = vmatpush1.xpose.msra.mxu0 0.0
    %430 = vmatprep.subr.mxu0 0.0
    %431 = vmatpush1.xpose.msra.mxu0 0.0
    %432 = vmatprep.subr.mxu0 0.0
    %433 = vmatpush1.xpose.msra.mxu0 0.0
    %434 = vmatprep.subr.mxu0 0.0
    %435 = vmatpush1.xpose.msra.mxu0 0.0
    %436 = vmatprep.subr.mxu0 0.0
    %437 = vmatpush1.xpose.msra.mxu0 0.0
    %438 = vmatprep.subr.mxu0 0.0
    %439 = vmatpush1.xpose.msra.mxu0 0.0
    %440 = vmatprep.subr.mxu0 0.0
    %441 = vmatpush1.xpose.msra.mxu0 0.0
    %442 = vmatprep.subr.mxu0 0.0
    %443 = vmatpush1.xpose.msra.mxu0 0.0
    %444 = vmatprep.subr.mxu0 0.0
    %445 = vmatpush1.xpose.msra.mxu0 0.0
    %446 = vmatprep.subr.mxu0 0.0
    %447 = vmatpush1.xpose.msra.mxu0 0.0
    %448 = vmatprep.subr.mxu0 0.0
    %449 = vmatpush1.xpose.msra.mxu0 0.0
    %450 = vmatprep.subr.mxu0 0.0
    %451 = vmatpush1.xpose.msra.mxu0 0.0
    %452 = vmatprep.subr.mxu0 0.0
    %453 = vmatpush1.xpose.msra.mxu0 0.0
    %454 = vmatprep.mubr.f32.mxu0 0.0
    %455 = vmatmul.mubr.f32.gmra.mrb[0].mxu0 %v356
    %v456 = vpop.f32.mrb[0].mxu0
    %v457 = vadd.f32 0.0, %v456
    %v458 = vpop.f32.mrb[0].mxu0
    %459 = vdwg.mxu0
    %460 = vmatprep.subr.mxu0 0.0
    %461 = vmatpush1.xpose.msra.mxu0 %v34
    %462 = vmatprep.subr.mxu0 0.0
    %463 = vmatpush1.xpose.msra.mxu0 %v35
    %464 = vmatprep.subr.mxu0 0.0
    %465 = vmatpush1.xpose.msra.mxu0 0.0
    %466 = vmatprep.subr.mxu0 0.0
    %467 = vmatpush1.xpose.msra.mxu0 0.0
    %468 = vmatprep.subr.mxu0 0.0
    %469 = vmatpush1.xpose.msra.mxu0 0.0
    %470 = vmatprep.subr.mxu0 0.0
    %471 = vmatpush1.xpose.msra.mxu0 0.0
    %472 = vmatprep.subr.mxu0 0.0
    %473 = vmatpush1.xpose.msra.mxu0 0.0
    %474 = vmatprep.subr.mxu0 0.0
    %475 = vmatpush1.xpose.msra.mxu0 0.0
    %476 = vmatprep.subr.mxu0 0.0
    %477 = vmatpush1.xpose.msra.mxu0 0.0
    %478 = vmatprep.subr.mxu0 0.0
    %479 = vmatpush1.xpose.msra.mxu0 0.0
    %480 = vmatprep.subr.mxu0 0.0
    %481 = vmatpush1.xpose.msra.mxu0 0.0
    %482 = vmatprep.subr.mxu0 0.0
    %483 = vmatpush1.xpose.msra.mxu0 0.0
    %484 = vmatprep.subr.mxu0 0.0
    %485 = vmatpush1.xpose.msra.mxu0 0.0
    %486 = vmatprep.subr.mxu0 0.0
    %487 = vmatpush1.xpose.msra.mxu0 0.0
    %488 = vmatprep.subr.mxu0 0.0
    %489 = vmatpush1.xpose.msra.mxu0 0.0
    %490 = vmatprep.subr.mxu0 0.0
    %491 = vmatpush1.xpose.msra.mxu0 0.0
    %492 = vmatprep.subr.mxu0 0.0
    %493 = vmatpush1.xpose.msra.mxu0 0.0
    %494 = vmatprep.subr.mxu0 0.0
    %495 = vmatpush1.xpose.msra.mxu0 0.0
    %496 = vmatprep.subr.mxu0 0.0
    %497 = vmatpush1.xpose.msra.mxu0 0.0
    %498 = vmatprep.subr.mxu0 0.0
    %499 = vmatpush1.xpose.msra.mxu0 0.0
    %500 = vmatprep.subr.mxu0 0.0
    %501 = vmatpush1.xpose.msra.mxu0 0.0
    %502 = vmatprep.subr.mxu0 0.0
    %503 = vmatpush1.xpose.msra.mxu0 0.0
    %504 = vmatprep.subr.mxu0 0.0
    %505 = vmatpush1.xpose.msra.mxu0 0.0
    %506 = vmatprep.subr.mxu0 0.0
    %507 = vmatpush1.xpose.msra.mxu0 0.0
    %508 = vmatprep.subr.mxu0 0.0
    %509 = vmatpush1.xpose.msra.mxu0 0.0
    %510 = vmatprep.subr.mxu0 0.0
    %511 = vmatpush1.xpose.msra.mxu0 0.0
    %512 = vmatprep.subr.mxu0 0.0
    %513 = vmatpush1.xpose.msra.mxu0 0.0
    %514 = vmatprep.subr.mxu0 0.0
    %515 = vmatpush1.xpose.msra.mxu0 0.0
    %516 = vmatprep.subr.mxu0 0.0
    %517 = vmatpush1.xpose.msra.mxu0 0.0
    %518 = vmatprep.subr.mxu0 0.0
    %519 = vmatpush1.xpose.msra.mxu0 0.0
    %520 = vmatprep.subr.mxu0 0.0
    %521 = vmatpush1.xpose.msra.mxu0 0.0
    %522 = vmatprep.subr.mxu0 0.0
    %523 = vmatpush1.xpose.msra.mxu0 0.0
    %524 = vmatprep.mubr.f32.mxu0 0.0
    %525 = vmatmul.mubr.f32.gmra.mrb[0].mxu0 %v370
    %v526 = vpop.f32.mrb[0].mxu0
    %v527 = vadd.f32 0.0, %v526
    %v528 = vpop.f32.mrb[0].mxu0
    %529 = vdwg.mxu0
    %530 = vmatprep.subr.mxu0 0.0
    %531 = vmatpush1.xpose.msra.mxu0 %v36
    %532 = vmatprep.subr.mxu0 0.0
    %533 = vmatpush1.xpose.msra.mxu0 %v37
    %534 = vmatprep.subr.mxu0 0.0
    %535 = vmatpush1.xpose.msra.mxu0 0.0
    %536 = vmatprep.subr.mxu0 0.0
    %537 = vmatpush1.xpose.msra.mxu0 0.0
    %538 = vmatprep.subr.mxu0 0.0
    %539 = vmatpush1.xpose.msra.mxu0 0.0
    %540 = vmatprep.subr.mxu0 0.0
    %541 = vmatpush1.xpose.msra.mxu0 0.0
    %542 = vmatprep.subr.mxu0 0.0
    %543 = vmatpush1.xpose.msra.mxu0 0.0
    %544 = vmatprep.subr.mxu0 0.0
    %545 = vmatpush1.xpose.msra.mxu0 0.0
    %546 = vmatprep.subr.mxu0 0.0
    %547 = vmatpush1.xpose.msra.mxu0 0.0
    %548 = vmatprep.subr.mxu0 0.0
    %549 = vmatpush1.xpose.msra.mxu0 0.0
    %550 = vmatprep.subr.mxu0 0.0
    %551 = vmatpush1.xpose.msra.mxu0 0.0
    %552 = vmatprep.subr.mxu0 0.0
    %553 = vmatpush1.xpose.msra.mxu0 0.0
    %554 = vmatprep.subr.mxu0 0.0
    %555 = vmatpush1.xpose.msra.mxu0 0.0
    %556 = vmatprep.subr.mxu0 0.0
    %557 = vmatpush1.xpose.msra.mxu0 0.0
    %558 = vmatprep.subr.mxu0 0.0
    %559 = vmatpush1.xpose.msra.mxu0 0.0
    %560 = vmatprep.subr.mxu0 0.0
    %561 = vmatpush1.xpose.msra.mxu0 0.0
    %562 = vmatprep.subr.mxu0 0.0
    %563 = vmatpush1.xpose.msra.mxu0 0.0
    %564 = vmatprep.subr.mxu0 0.0
    %565 = vmatpush1.xpose.msra.mxu0 0.0
    %566 = vmatprep.subr.mxu0 0.0
    %567 = vmatpush1.xpose.msra.mxu0 0.0
    %568 = vmatprep.subr.mxu0 0.0
    %569 = vmatpush1.xpose.msra.mxu0 0.0
    %570 = vmatprep.subr.mxu0 0.0
    %571 = vmatpush1.xpose.msra.mxu0 0.0
    %572 = vmatprep.subr.mxu0 0.0
    %573 = vmatpush1.xpose.msra.mxu0 0.0
    %574 = vmatprep.subr.mxu0 0.0
    %575 = vmatpush1.xpose.msra.mxu0 0.0
    %576 = vmatprep.subr.mxu0 0.0
    %577 = vmatpush1.xpose.msra.mxu0 0.0
    %578 = vmatprep.subr.mxu0 0.0
    %579 = vmatpush1.xpose.msra.mxu0 0.0
    %580 = vmatprep.subr.mxu0 0.0
    %581 = vmatpush1.xpose.msra.mxu0 0.0
    %582 = vmatprep.subr.mxu0 0.0
    %583 = vmatpush1.xpose.msra.mxu0 0.0
    %584 = vmatprep.subr.mxu0 0.0
    %585 = vmatpush1.xpose.msra.mxu0 0.0
    %586 = vmatprep.subr.mxu0 0.0
    %587 = vmatpush1.xpose.msra.mxu0 0.0
    %588 = vmatprep.subr.mxu0 0.0
    %589 = vmatpush1.xpose.msra.mxu0 0.0
    %590 = vmatprep.subr.mxu0 0.0
    %591 = vmatpush1.xpose.msra.mxu0 0.0
    %592 = vmatprep.subr.mxu0 0.0
    %593 = vmatpush1.xpose.msra.mxu0 0.0
    %594 = vmatprep.mubr.f32.mxu0 0.0
    %595 = vmatmul.mubr.f32.gmra.mrb[0].mxu0 %v378
    %v596 = vpop.f32.mrb[0].mxu0
    %v597 = vadd.f32 0.0, %v596
    %v598 = vpop.f32.mrb[0].mxu0
    %599 = vdwg.mxu0
    %600 = vmatprep.subr.mxu0 0.0
    %601 = vmatpush1.xpose.msra.mxu0 %v38
    %602 = vmatprep.subr.mxu0 0.0
    %603 = vmatpush1.xpose.msra.mxu0 %v39
    %604 = vmatprep.subr.mxu0 0.0
    %605 = vmatpush1.xpose.msra.mxu0 0.0
    %606 = vmatprep.subr.mxu0 0.0
    %607 = vmatpush1.xpose.msra.mxu0 0.0
    %608 = vmatprep.subr.mxu0 0.0
    %609 = vmatpush1.xpose.msra.mxu0 0.0
    %610 = vmatprep.subr.mxu0 0.0
    %611 = vmatpush1.xpose.msra.mxu0 0.0
    %612 = vmatprep.subr.mxu0 0.0
    %613 = vmatpush1.xpose.msra.mxu0 0.0
    %614 = vmatprep.subr.mxu0 0.0
    %615 = vmatpush1.xpose.msra.mxu0 0.0
    %616 = vmatprep.subr.mxu0 0.0
    %617 = vmatpush1.xpose.msra.mxu0 0.0
    %618 = vmatprep.subr.mxu0 0.0
    %619 = vmatpush1.xpose.msra.mxu0 0.0
    %620 = vmatprep.subr.mxu0 0.0
    %621 = vmatpush1.xpose.msra.mxu0 0.0
    %622 = vmatprep.subr.mxu0 0.0
    %623 = vmatpush1.xpose.msra.mxu0 0.0
    %624 = vmatprep.subr.mxu0 0.0
    %625 = vmatpush1.xpose.msra.mxu0 0.0
    %626 = vmatprep.subr.mxu0 0.0
    %627 = vmatpush1.xpose.msra.mxu0 0.0
    %628 = vmatprep.subr.mxu0 0.0
    %629 = vmatpush1.xpose.msra.mxu0 0.0
    %630 = vmatprep.subr.mxu0 0.0
    %631 = vmatpush1.xpose.msra.mxu0 0.0
    %632 = vmatprep.subr.mxu0 0.0
    %633 = vmatpush1.xpose.msra.mxu0 0.0
    %634 = vmatprep.subr.mxu0 0.0
    %635 = vmatpush1.xpose.msra.mxu0 0.0
    %636 = vmatprep.subr.mxu0 0.0
    %637 = vmatpush1.xpose.msra.mxu0 0.0
    %638 = vmatprep.subr.mxu0 0.0
    %639 = vmatpush1.xpose.msra.mxu0 0.0
    %640 = vmatprep.subr.mxu0 0.0
    %641 = vmatpush1.xpose.msra.mxu0 0.0
    %642 = vmatprep.subr.mxu0 0.0
    %643 = vmatpush1.xpose.msra.mxu0 0.0
    %644 = vmatprep.subr.mxu0 0.0
    %645 = vmatpush1.xpose.msra.mxu0 0.0
    %646 = vmatprep.subr.mxu0 0.0
    %647 = vmatpush1.xpose.msra.mxu0 0.0
    %648 = vmatprep.subr.mxu0 0.0
    %649 = vmatpush1.xpose.msra.mxu0 0.0
    %650 = vmatprep.subr.mxu0 0.0
    %651 = vmatpush1.xpose.msra.mxu0 0.0
    %652 = vmatprep.subr.mxu0 0.0
    %653 = vmatpush1.xpose.msra.mxu0 0.0
    %654 = vmatprep.subr.mxu0 0.0
    %655 = vmatpush1.xpose.msra.mxu0 0.0
    %656 = vmatprep.subr.mxu0 0.0
    %657 = vmatpush1.xpose.msra.mxu0 0.0
    %658 = vmatprep.subr.mxu0 0.0
    %659 = vmatpush1.xpose.msra.mxu0 0.0
    %660 = vmatprep.subr.mxu0 0.0
    %661 = vmatpush1.xpose.msra.mxu0 0.0
    %662 = vmatprep.subr.mxu0 0.0
    %663 = vmatpush1.xpose.msra.mxu0 0.0
    %664 = vmatprep.mubr.f32.mxu0 0.0
    %665 = vmatmul.mubr.f32.gmra.mrb[0].mxu0 %v380
    %v666 = vpop.f32.mrb[0].mxu0
    %v667 = vadd.f32 0.0, %v666
    %v668 = vpop.f32.mrb[0].mxu0
    %669 = vdwg.mxu0
    %670 = vmatprep.subr.mxu0 0.0
    %671 = vmatpush1.xpose.msra.mxu0 %v40
    %672 = vmatprep.subr.mxu0 0.0
    %673 = vmatpush1.xpose.msra.mxu0 %v41
    %674 = vmatprep.subr.mxu0 0.0
    %675 = vmatpush1.xpose.msra.mxu0 0.0
    %676 = vmatprep.subr.mxu0 0.0
    %677 = vmatpush1.xpose.msra.mxu0 0.0
    %678 = vmatprep.subr.mxu0 0.0
    %679 = vmatpush1.xpose.msra.mxu0 0.0
    %680 = vmatprep.subr.mxu0 0.0
    %681 = vmatpush1.xpose.msra.mxu0 0.0
    %682 = vmatprep.subr.mxu0 0.0
    %683 = vmatpush1.xpose.msra.mxu0 0.0
    %684 = vmatprep.subr.mxu0 0.0
    %685 = vmatpush1.xpose.msra.mxu0 0.0
    %686 = vmatprep.subr.mxu0 0.0
    %687 = vmatpush1.xpose.msra.mxu0 0.0
    %688 = vmatprep.subr.mxu0 0.0
    %689 = vmatpush1.xpose.msra.mxu0 0.0
    %690 = vmatprep.subr.mxu0 0.0
    %691 = vmatpush1.xpose.msra.mxu0 0.0
    %692 = vmatprep.subr.mxu0 0.0
    %693 = vmatpush1.xpose.msra.mxu0 0.0
    %694 = vmatprep.subr.mxu0 0.0
    %695 = vmatpush1.xpose.msra.mxu0 0.0
    %696 = vmatprep.subr.mxu0 0.0
    %697 = vmatpush1.xpose.msra.mxu0 0.0
    %698 = vmatprep.subr.mxu0 0.0
    %699 = vmatpush1.xpose.msra.mxu0 0.0
    %700 = vmatprep.subr.mxu0 0.0
    %701 = vmatpush1.xpose.msra.mxu0 0.0
    %702 = vmatprep.subr.mxu0 0.0
    %703 = vmatpush1.xpose.msra.mxu0 0.0
    %704 = vmatprep.subr.mxu0 0.0
    %705 = vmatpush1.xpose.msra.mxu0 0.0
    %706 = vmatprep.subr.mxu0 0.0
    %707 = vmatpush1.xpose.msra.mxu0 0.0
    %708 = vmatprep.subr.mxu0 0.0
    %709 = vmatpush1.xpose.msra.mxu0 0.0
    %710 = vmatprep.subr.mxu0 0.0
    %711 = vmatpush1.xpose.msra.mxu0 0.0
    %712 = vmatprep.subr.mxu0 0.0
    %713 = vmatpush1.xpose.msra.mxu0 0.0
    %714 = vmatprep.subr.mxu0 0.0
    %715 = vmatpush1.xpose.msra.mxu0 0.0
    %716 = vmatprep.subr.mxu0 0.0
    %717 = vmatpush1.xpose.msra.mxu0 0.0
    %718 = vmatprep.subr.mxu0 0.0
    %719 = vmatpush1.xpose.msra.mxu0 0.0
    %720 = vmatprep.subr.mxu0 0.0
    %721 = vmatpush1.xpose.msra.mxu0 0.0
    %722 = vmatprep.subr.mxu0 0.0
    %723 = vmatpush1.xpose.msra.mxu0 0.0
    %724 = vmatprep.subr.mxu0 0.0
    %725 = vmatpush1.xpose.msra.mxu0 0.0
    %726 = vmatprep.subr.mxu0 0.0
    %727 = vmatpush1.xpose.msra.mxu0 0.0
    %728 = vmatprep.subr.mxu0 0.0
    %729 = vmatpush1.xpose.msra.mxu0 0.0
    %730 = vmatprep.subr.mxu0 0.0
    %731 = vmatpush1.xpose.msra.mxu0 0.0
    %732 = vmatprep.subr.mxu0 0.0
    %733 = vmatpush1.xpose.msra.mxu0 0.0
    %734 = vmatprep.mubr.f32.mxu0 0.0
    %735 = vmatmul.mubr.f32.gmra.mrb[0].mxu0 %v363
    %v736 = vpop.f32.mrb[0].mxu0
    %v737 = vadd.f32 0.0, %v736
    %v738 = vpop.f32.mrb[0].mxu0
    %739 = vdwg.mxu0
    %740 = vmatprep.subr.mxu0 0.0
    %741 = vmatpush1.xpose.msra.mxu0 %v42
    %742 = vmatprep.subr.mxu0 0.0
    %743 = vmatpush1.xpose.msra.mxu0 %v43
    %744 = vmatprep.subr.mxu0 0.0
    %745 = vmatpush1.xpose.msra.mxu0 0.0
    %746 = vmatprep.subr.mxu0 0.0
    %747 = vmatpush1.xpose.msra.mxu0 0.0
    %748 = vmatprep.subr.mxu0 0.0
    %749 = vmatpush1.xpose.msra.mxu0 0.0
    %750 = vmatprep.subr.mxu0 0.0
    %751 = vmatpush1.xpose.msra.mxu0 0.0
    %752 = vmatprep.subr.mxu0 0.0
    %753 = vmatpush1.xpose.msra.mxu0 0.0
    %754 = vmatprep.subr.mxu0 0.0
    %755 = vmatpush1.xpose.msra.mxu0 0.0
    %756 = vmatprep.subr.mxu0 0.0
    %757 = vmatpush1.xpose.msra.mxu0 0.0
    %758 = vmatprep.subr.mxu0 0.0
    %759 = vmatpush1.xpose.msra.mxu0 0.0
    %760 = vmatprep.subr.mxu0 0.0
    %761 = vmatpush1.xpose.msra.mxu0 0.0
    %762 = vmatprep.subr.mxu0 0.0
    %763 = vmatpush1.xpose.msra.mxu0 0.0
    %764 = vmatprep.subr.mxu0 0.0
    %765 = vmatpush1.xpose.msra.mxu0 0.0
    %766 = vmatprep.subr.mxu0 0.0
    %767 = vmatpush1.xpose.msra.mxu0 0.0
    %768 = vmatprep.subr.mxu0 0.0
    %769 = vmatpush1.xpose.msra.mxu0 0.0
    %770 = vmatprep.subr.mxu0 0.0
    %771 = vmatpush1.xpose.msra.mxu0 0.0
    %772 = vmatprep.subr.mxu0 0.0
    %773 = vmatpush1.xpose.msra.mxu0 0.0
    %774 = vmatprep.subr.mxu0 0.0
    %775 = vmatpush1.xpose.msra.mxu0 0.0
    %776 = vmatprep.subr.mxu0 0.0
    %777 = vmatpush1.xpose.msra.mxu0 0.0
    %778 = vmatprep.subr.mxu0 0.0
    %779 = vmatpush1.xpose.msra.mxu0 0.0
    %780 = vmatprep.subr.mxu0 0.0
    %781 = vmatpush1.xpose.msra.mxu0 0.0
    %782 = vmatprep.subr.mxu0 0.0
    %783 = vmatpush1.xpose.msra.mxu0 0.0
    %784 = vmatprep.subr.mxu0 0.0
    %785 = vmatpush1.xpose.msra.mxu0 0.0
    %786 = vmatprep.subr.mxu0 0.0
    %787 = vmatpush1.xpose.msra.mxu0 0.0
    %788 = vmatprep.subr.mxu0 0.0
    %789 = vmatpush1.xpose.msra.mxu0 0.0
    %790 = vmatprep.subr.mxu0 0.0
    %791 = vmatpush1.xpose.msra.mxu0 0.0
    %792 = vmatprep.subr.mxu0 0.0
    %793 = vmatpush1.xpose.msra.mxu0 0.0
    %794 = vmatprep.subr.mxu0 0.0
    %795 = vmatpush1.xpose.msra.mxu0 0.0
    %796 = vmatprep.subr.mxu0 0.0
    %797 = vmatpush1.xpose.msra.mxu0 0.0
    %798 = vmatprep.subr.mxu0 0.0
    %799 = vmatpush1.xpose.msra.mxu0 0.0
    %800 = vmatprep.subr.mxu0 0.0
    %801 = vmatpush1.xpose.msra.mxu0 0.0
    %802 = vmatprep.subr.mxu0 0.0
    %803 = vmatpush1.xpose.msra.mxu0 0.0
    %804 = vmatprep.mubr.f32.mxu0 0.0
    %805 = vmatmul.mubr.f32.gmra.mrb[0].mxu0 %v377
    %v806 = vpop.f32.mrb[0].mxu0
    %v807 = vadd.f32 0.0, %v806
    %v808 = vpop.f32.mrb[0].mxu0
    %809 = vdwg.mxu0
    %810 = vmatprep.subr.mxu0 0.0
    %811 = vmatpush1.xpose.msra.mxu0 %v44
    %812 = vmatprep.subr.mxu0 0.0
    %813 = vmatpush1.xpose.msra.mxu0 %v45
    %814 = vmatprep.subr.mxu0 0.0
    %815 = vmatpush1.xpose.msra.mxu0 0.0
    %816 = vmatprep.subr.mxu0 0.0
    %817 = vmatpush1.xpose.msra.mxu0 0.0
    %818 = vmatprep.subr.mxu0 0.0
    %819 = vmatpush1.xpose.msra.mxu0 0.0
    %820 = vmatprep.subr.mxu0 0.0
    %821 = vmatpush1.xpose.msra.mxu0 0.0
    %822 = vmatprep.subr.mxu0 0.0
    %823 = vmatpush1.xpose.msra.mxu0 0.0
    %824 = vmatprep.subr.mxu0 0.0
    %825 = vmatpush1.xpose.msra.mxu0 0.0
    %826 = vmatprep.subr.mxu0 0.0
    %827 = vmatpush1.xpose.msra.mxu0 0.0
    %828 = vmatprep.subr.mxu0 0.0
    %829 = vmatpush1.xpose.msra.mxu0 0.0
    %830 = vmatprep.subr.mxu0 0.0
    %831 = vmatpush1.xpose.msra.mxu0 0.0
    %832 = vmatprep.subr.mxu0 0.0
    %833 = vmatpush1.xpose.msra.mxu0 0.0
    %834 = vmatprep.subr.mxu0 0.0
    %835 = vmatpush1.xpose.msra.mxu0 0.0
    %836 = vmatprep.subr.mxu0 0.0
    %837 = vmatpush1.xpose.msra.mxu0 0.0
    %838 = vmatprep.subr.mxu0 0.0
    %839 = vmatpush1.xpose.msra.mxu0 0.0
    %840 = vmatprep.subr.mxu0 0.0
    %841 = vmatpush1.xpose.msra.mxu0 0.0
    %842 = vmatprep.subr.mxu0 0.0
    %843 = vmatpush1.xpose.msra.mxu0 0.0
    %844 = vmatprep.subr.mxu0 0.0
    %845 = vmatpush1.xpose.msra.mxu0 0.0
    %846 = vmatprep.subr.mxu0 0.0
    %847 = vmatpush1.xpose.msra.mxu0 0.0
    %848 = vmatprep.subr.mxu0 0.0
    %849 = vmatpush1.xpose.msra.mxu0 0.0
    %850 = vmatprep.subr.mxu0 0.0
    %851 = vmatpush1.xpose.msra.mxu0 0.0
    %852 = vmatprep.subr.mxu0 0.0
    %853 = vmatpush1.xpose.msra.mxu0 0.0
    %854 = vmatprep.subr.mxu0 0.0
    %855 = vmatpush1.xpose.msra.mxu0 0.0
    %856 = vmatprep.subr.mxu0 0.0
    %857 = vmatpush1.xpose.msra.mxu0 0.0
    %858 = vmatprep.subr.mxu0 0.0
    %859 = vmatpush1.xpose.msra.mxu0 0.0
    %860 = vmatprep.subr.mxu0 0.0
    %861 = vmatpush1.xpose.msra.mxu0 0.0
    %862 = vmatprep.subr.mxu0 0.0
    %863 = vmatpush1.xpose.msra.mxu0 0.0
    %864 = vmatprep.subr.mxu0 0.0
    %865 = vmatpush1.xpose.msra.mxu0 0.0
    %866 = vmatprep.subr.mxu0 0.0
    %867 = vmatpush1.xpose.msra.mxu0 0.0
    %868 = vmatprep.subr.mxu0 0.0
    %869 = vmatpush1.xpose.msra.mxu0 0.0
    %870 = vmatprep.subr.mxu0 0.0
    %871 = vmatpush1.xpose.msra.mxu0 0.0
    %872 = vmatprep.subr.mxu0 0.0
    %873 = vmatpush1.xpose.msra.mxu0 0.0
    %874 = vmatprep.mubr.f32.mxu0 0.0
    %875 = vmatmul.mubr.f32.gmra.mrb[0].mxu0 %v379
    %v876 = vpop.f32.mrb[0].mxu0
    %v877 = vadd.f32 0.0, %v876
    %v878 = vpop.f32.mrb[0].mxu0
    %879 = vdwg.mxu0
    %880 = vmatprep.subr.mxu0 0.0
    %881 = vmatpush1.xpose.msra.mxu0 %v46
    %882 = vmatprep.subr.mxu0 0.0
    %883 = vmatpush1.xpose.msra.mxu0 %v47
    %884 = vmatprep.subr.mxu0 0.0
    %885 = vmatpush1.xpose.msra.mxu0 0.0
    %886 = vmatprep.subr.mxu0 0.0
    %887 = vmatpush1.xpose.msra.mxu0 0.0
    %888 = vmatprep.subr.mxu0 0.0
    %889 = vmatpush1.xpose.msra.mxu0 0.0
    %890 = vmatprep.subr.mxu0 0.0
    %891 = vmatpush1.xpose.msra.mxu0 0.0
    %892 = vmatprep.subr.mxu0 0.0
    %893 = vmatpush1.xpose.msra.mxu0 0.0
    %894 = vmatprep.subr.mxu0 0.0
    %895 = vmatpush1.xpose.msra.mxu0 0.0
    %896 = vmatprep.subr.mxu0 0.0
    %897 = vmatpush1.xpose.msra.mxu0 0.0
    %898 = vmatprep.subr.mxu0 0.0
    %899 = vmatpush1.xpose.msra.mxu0 0.0
    %900 = vmatprep.subr.mxu0 0.0
    %901 = vmatpush1.xpose.msra.mxu0 0.0
    %902 = vmatprep.subr.mxu0 0.0
    %903 = vmatpush1.xpose.msra.mxu0 0.0
    %904 = vmatprep.subr.mxu0 0.0
    %905 = vmatpush1.xpose.msra.mxu0 0.0
    %906 = vmatprep.subr.mxu0 0.0
    %907 = vmatpush1.xpose.msra.mxu0 0.0
    %908 = vmatprep.subr.mxu0 0.0
    %909 = vmatpush1.xpose.msra.mxu0 0.0
    %910 = vmatprep.subr.mxu0 0.0
    %911 = vmatpush1.xpose.msra.mxu0 0.0
    %912 = vmatprep.subr.mxu0 0.0
    %913 = vmatpush1.xpose.msra.mxu0 0.0
    %914 = vmatprep.subr.mxu0 0.0
    %915 = vmatpush1.xpose.msra.mxu0 0.0
    %916 = vmatprep.subr.mxu0 0.0
    %917 = vmatpush1.xpose.msra.mxu0 0.0
    %918 = vmatprep.subr.mxu0 0.0
    %919 = vmatpush1.xpose.msra.mxu0 0.0
    %920 = vmatprep.subr.mxu0 0.0
    %921 = vmatpush1.xpose.msra.mxu0 0.0
    %922 = vmatprep.subr.mxu0 0.0
    %923 = vmatpush1.xpose.msra.mxu0 0.0
    %924 = vmatprep.subr.mxu0 0.0
    %925 = vmatpush1.xpose.msra.mxu0 0.0
    %926 = vmatprep.subr.mxu0 0.0
    %927 = vmatpush1.xpose.msra.mxu0 0.0
    %928 = vmatprep.subr.mxu0 0.0
    %929 = vmatpush1.xpose.msra.mxu0 0.0
    %930 = vmatprep.subr.mxu0 0.0
    %931 = vmatpush1.xpose.msra.mxu0 0.0
    %932 = vmatprep.subr.mxu0 0.0
    %933 = vmatpush1.xpose.msra.mxu0 0.0
    %934 = vmatprep.subr.mxu0 0.0
    %935 = vmatpush1.xpose.msra.mxu0 0.0
    %936 = vmatprep.subr.mxu0 0.0
    %937 = vmatpush1.xpose.msra.mxu0 0.0
    %938 = vmatprep.subr.mxu0 0.0
    %939 = vmatpush1.xpose.msra.mxu0 0.0
    %940 = vmatprep.subr.mxu0 0.0
    %941 = vmatpush1.xpose.msra.mxu0 0.0
    %942 = vmatprep.subr.mxu0 0.0
    %943 = vmatpush1.xpose.msra.mxu0 0.0
    %944 = vmatprep.mubr.f32.mxu0 0.0
    %945 = vmatmul.mubr.f32.gmra.mrb[0].mxu0 %v381
    %v946 = vpop.f32.mrb[0].mxu0
    %v947 = vadd.f32 0.0, %v946
    %v948 = vpop.f32.mrb[0].mxu0
    %949 = vdwg.mxu0
    %v958 = vrot.slane %v527, 7
    %vm959 = vcmask 1041409
    %v960 = vsel %vm959, %v958, %v457
    %v961 = vrot.slane %v597, 6
    %vm962 = vcmask 1042434
    %v963 = vsel %vm962, %v961, %v960
    %v964 = vrot.slane %v667, 5
    %vm965 = vcmask 1043459
    %v966 = vsel %vm965, %v964, %v963
    %v967 = vrot.slane %v737, 4
    %vm968 = vcmask 1044484
    %v969 = vsel %vm968, %v967, %v966
    %v970 = vrot.slane %v807, 3
    %vm971 = vcmask 1045509
    %v972 = vsel %vm971, %v970, %v969
    %v973 = vrot.slane %v877, 2
    %vm974 = vcmask 1046534
    %v975 = vsel %vm974, %v973, %v972
    %v976 = vrot.slane %v947, 1
    %vm977 = vcmask 1047559
    %v978 = vsel %vm977, %v976, %v975
    %v980 = vsel %vm49, %v978, -1e+30
    %vm981 = vcmask 130048
    %v982 = vsel %vm981, %v980, -inf
    %983 = vmax.xlane.f32.xlu0 %v982
    %v984 = vpop.xlane.xlu0 %983
    %v985 = vsub.f32 %v980, %v984
    %v986 = vmul.f32 %v985, 1.442695
    %v987 = vpow.pop %v986
    %v988 = vmul.f32 %v987, %v51
    %v989 = vsel %vm981, %v988, 0.0
    %990 = vadd.xlane.f32.xlu0 %v989
    %v991 = vpop.xlane.xlu0 %990
    %v992 = vadd.f32 %v991, 1e-13
    %v993 = vrcp.pop %v992
    %v994 = vmul.f32 %v988, %v993
    %v996 = vcombine.high %v994, %v994
    %v998 = vunpack.c.l.s4 1966171168
    %v999 = vunpack.c.0.s8 %v998
    %v1000 = vlaneseq
    %v1001 = vshrl.u32 %v1000, 7
    %v1002 = vsub.s32 %v999, %v1001
    %v1003 = vrot.slane %v994, %v1002
    %v1005 = vunpack.c.l.s4 1966171168
    %v1006 = vunpack.c.0.s8 %v1005
    %v1007 = vlaneseq
    %v1008 = vshrl.u32 %v1007, 7
    %v1009 = vsub.s32 %v1006, %v1008
    %v1010 = vrot.slane %v996, %v1009
    %v1011 = vcombine.high %v1003, %v1003
    %v1012 = vcombine.high %v1010, %v1010
    %v1014 = vunpack.c.l.s4 1966171168
    %v1015 = vunpack.c.0.s8 %v1014
    %v1016 = vlaneseq
    %v1017 = vshrl.u32 %v1016, 7
    %v1018 = vsub.s32 %v1015, %v1017
    %v1019 = vrot.slane %v1003, %v1018
    %v1021 = vunpack.c.l.s4 1966171168
    %v1022 = vunpack.c.0.s8 %v1021
    %v1023 = vlaneseq
    %v1024 = vshrl.u32 %v1023, 7
    %v1025 = vsub.s32 %v1022, %v1024
    %v1026 = vrot.slane %v1010, %v1025
    %v1028 = vunpack.c.l.s4 1966171168
    %v1029 = vunpack.c.0.s8 %v1028
    %v1030 = vlaneseq
    %v1031 = vshrl.u32 %v1030, 7
    %v1032 = vsub.s32 %v1029, %v1031
    %v1033 = vrot.slane %v1011, %v1032
    %v1035 = vunpack.c.l.s4 1966171168
    %v1036 = vunpack.c.0.s8 %v1035
    %v1037 = vlaneseq
    %v1038 = vshrl.u32 %v1037, 7
    %v1039 = vsub.s32 %v1036, %v1038
    %v1040 = vrot.slane %v1012, %v1039
    %v1041 = vcombine.high %v1019, %v1019
    %v1042 = vcombine.high %v1026, %v1026
    %v1043 = vcombine.high %v1033, %v1033
    %v1044 = vcombine.high %v1040, %v1040
    %v1045 = vsel %vm981, %v1019, 0
    %1047 = vmatprep.subr.mxu0 0.0
    %1048 = vmatpush1.msra.mxu0 %v32
    %1049 = vmatprep.subr.mxu0 0.0
    %1050 = vmatpush1.msra.mxu0 %v33
    %1051 = vmatprep.subr.mxu0 0.0
    %1052 = vmatpush1.msra.mxu0 0.0
    %1053 = vmatprep.subr.mxu0 0.0
    %1054 = vmatpush1.msra.mxu0 0.0
    %1055 = vmatprep.subr.mxu0 0.0
    %1056 = vmatpush1.msra.mxu0 0.0
    %1057 = vmatprep.subr.mxu0 0.0
    %1058 = vmatpush1.msra.mxu0 0.0
    %1059 = vmatprep.subr.mxu0 0.0
    %1060 = vmatpush1.msra.mxu0 0.0
    %1061 = vmatprep.subr.mxu0 0.0
    %1062 = vmatpush1.msra.mxu0 0.0
    %1063 = vmatprep.subr.mxu0 0.0
    %1064 = vmatpush1.msra.mxu0 0.0
    %1065 = vmatprep.subr.mxu0 0.0
    %1066 = vmatpush1.msra.mxu0 0.0
    %1067 = vmatprep.subr.mxu0 0.0
    %1068 = vmatpush1.msra.mxu0 0.0
    %1069 = vmatprep.subr.mxu0 0.0
    %1070 = vmatpush1.msra.mxu0 0.0
    %1071 = vmatprep.subr.mxu0 0.0
    %1072 = vmatpush1.msra.mxu0 0.0
    %1073 = vmatprep.subr.mxu0 0.0
    %1074 = vmatpush1.msra.mxu0 0.0
    %1075 = vmatprep.subr.mxu0 0.0
    %1076 = vmatpush1.msra.mxu0 0.0
    %1077 = vmatprep.subr.mxu0 0.0
    %1078 = vmatpush1.msra.mxu0 0.0
    %1079 = vmatprep.subr.mxu0 0.0
    %1080 = vmatpush1.msra.mxu0 0.0
    %1081 = vmatprep.subr.mxu0 0.0
    %1082 = vmatpush1.msra.mxu0 0.0
    %1083 = vmatprep.subr.mxu0 0.0
    %1084 = vmatpush1.msra.mxu0 0.0
    %1085 = vmatprep.subr.mxu0 0.0
    %1086 = vmatpush1.msra.mxu0 0.0
    %1087 = vmatprep.subr.mxu0 0.0
    %1088 = vmatpush1.msra.mxu0 0.0
    %1089 = vmatprep.subr.mxu0 0.0
    %1090 = vmatpush1.msra.mxu0 0.0
    %1091 = vmatprep.subr.mxu0 0.0
    %1092 = vmatpush1.msra.mxu0 0.0
    %1093 = vmatprep.subr.mxu0 0.0
    %1094 = vmatpush1.msra.mxu0 0.0
    %1095 = vmatprep.subr.mxu0 0.0
    %1096 = vmatpush1.msra.mxu0 0.0
    %1097 = vmatprep.subr.mxu0 0.0
    %1098 = vmatpush1.msra.mxu0 0.0
    %1099 = vmatprep.subr.mxu0 0.0
    %1100 = vmatpush1.msra.mxu0 0.0
    %1101 = vmatprep.subr.mxu0 0.0
    %1102 = vmatpush1.msra.mxu0 0.0
    %1103 = vmatprep.subr.mxu0 0.0
    %1104 = vmatpush1.msra.mxu0 0.0
    %1105 = vmatprep.subr.mxu0 0.0
    %1106 = vmatpush1.msra.mxu0 0.0
    %1107 = vmatprep.subr.mxu0 0.0
    %1108 = vmatpush1.msra.mxu0 0.0
    %1109 = vmatprep.subr.mxu0 0.0
    %1110 = vmatpush1.msra.mxu0 0.0
    %1111 = vmatprep.mubr.f32.mxu0 0.0
    %1112 = vmatmul.mubr.f32.gmra.mrb[0].mxu0 %v1045
    %v1113 = vpop.f32.mrb[0].mxu0
    %v1114 = vadd.f32 0.0, %v1113
    %v1115 = vpop.f32.mrb[0].mxu0
    %1116 = vdwg.mxu0
    %v1117 = vsel %vm981, %v1033, 0
    %1119 = vmatprep.subr.mxu0 0.0
    %1120 = vmatpush1.msra.mxu0 %v34
    %1121 = vmatprep.subr.mxu0 0.0
    %1122 = vmatpush1.msra.mxu0 %v35
    %1123 = vmatprep.subr.mxu0 0.0
    %1124 = vmatpush1.msra.mxu0 0.0
    %1125 = vmatprep.subr.mxu0 0.0
    %1126 = vmatpush1.msra.mxu0 0.0
    %1127 = vmatprep.subr.mxu0 0.0
    %1128 = vmatpush1.msra.mxu0 0.0
    %1129 = vmatprep.subr.mxu0 0.0
    %1130 = vmatpush1.msra.mxu0 0.0
    %1131 = vmatprep.subr.mxu0 0.0
    %1132 = vmatpush1.msra.mxu0 0.0
    %1133 = vmatprep.subr.mxu0 0.0
    %1134 = vmatpush1.msra.mxu0 0.0
    %1135 = vmatprep.subr.mxu0 0.0
    %1136 = vmatpush1.msra.mxu0 0.0
    %1137 = vmatprep.subr.mxu0 0.0
    %1138 = vmatpush1.msra.mxu0 0.0
    %1139 = vmatprep.subr.mxu0 0.0
    %1140 = vmatpush1.msra.mxu0 0.0
    %1141 = vmatprep.subr.mxu0 0.0
    %1142 = vmatpush1.msra.mxu0 0.0
    %1143 = vmatprep.subr.mxu0 0.0
    %1144 = vmatpush1.msra.mxu0 0.0
    %1145 = vmatprep.subr.mxu0 0.0
    %1146 = vmatpush1.msra.mxu0 0.0
    %1147 = vmatprep.subr.mxu0 0.0
    %1148 = vmatpush1.msra.mxu0 0.0
    %1149 = vmatprep.subr.mxu0 0.0
    %1150 = vmatpush1.msra.mxu0 0.0
    %1151 = vmatprep.subr.mxu0 0.0
    %1152 = vmatpush1.msra.mxu0 0.0
    %1153 = vmatprep.subr.mxu0 0.0
    %1154 = vmatpush1.msra.mxu0 0.0
    %1155 = vmatprep.subr.mxu0 0.0
    %1156 = vmatpush1.msra.mxu0 0.0
    %1157 = vmatprep.subr.mxu0 0.0
    %1158 = vmatpush1.msra.mxu0 0.0
    %1159 = vmatprep.subr.mxu0 0.0
    %1160 = vmatpush1.msra.mxu0 0.0
    %1161 = vmatprep.subr.mxu0 0.0
    %1162 = vmatpush1.msra.mxu0 0.0
    %1163 = vmatprep.subr.mxu0 0.0
    %1164 = vmatpush1.msra.mxu0 0.0
    %1165 = vmatprep.subr.mxu0 0.0
    %1166 = vmatpush1.msra.mxu0 0.0
    %1167 = vmatprep.subr.mxu0 0.0
    %1168 = vmatpush1.msra.mxu0 0.0
    %1169 = vmatprep.subr.mxu0 0.0
    %1170 = vmatpush1.msra.mxu0 0.0
    %1171 = vmatprep.subr.mxu0 0.0
    %1172 = vmatpush1.msra.mxu0 0.0
    %1173 = vmatprep.subr.mxu0 0.0
    %1174 = vmatpush1.msra.mxu0 0.0
    %1175 = vmatprep.subr.mxu0 0.0
    %1176 = vmatpush1.msra.mxu0 0.0
    %1177 = vmatprep.subr.mxu0 0.0
    %1178 = vmatpush1.msra.mxu0 0.0
    %1179 = vmatprep.subr.mxu0 0.0
    %1180 = vmatpush1.msra.mxu0 0.0
    %1181 = vmatprep.subr.mxu0 0.0
    %1182 = vmatpush1.msra.mxu0 0.0
    %1183 = vmatprep.mubr.f32.mxu0 0.0
    %1184 = vmatmul.mubr.f32.gmra.mrb[0].mxu0 %v1117
    %v1185 = vpop.f32.mrb[0].mxu0
    %v1186 = vadd.f32 0.0, %v1185
    %v1187 = vpop.f32.mrb[0].mxu0
    %1188 = vdwg.mxu0
    %v1189 = vsel %vm981, %v1041, 0
    %1191 = vmatprep.subr.mxu0 0.0
    %1192 = vmatpush1.msra.mxu0 %v36
    %1193 = vmatprep.subr.mxu0 0.0
    %1194 = vmatpush1.msra.mxu0 %v37
    %1195 = vmatprep.subr.mxu0 0.0
    %1196 = vmatpush1.msra.mxu0 0.0
    %1197 = vmatprep.subr.mxu0 0.0
    %1198 = vmatpush1.msra.mxu0 0.0
    %1199 = vmatprep.subr.mxu0 0.0
    %1200 = vmatpush1.msra.mxu0 0.0
    %1201 = vmatprep.subr.mxu0 0.0
    %1202 = vmatpush1.msra.mxu0 0.0
    %1203 = vmatprep.subr.mxu0 0.0
    %1204 = vmatpush1.msra.mxu0 0.0
    %1205 = vmatprep.subr.mxu0 0.0
    %1206 = vmatpush1.msra.mxu0 0.0
    %1207 = vmatprep.subr.mxu0 0.0
    %1208 = vmatpush1.msra.mxu0 0.0
    %1209 = vmatprep.subr.mxu0 0.0
    %1210 = vmatpush1.msra.mxu0 0.0
    %1211 = vmatprep.subr.mxu0 0.0
    %1212 = vmatpush1.msra.mxu0 0.0
    %1213 = vmatprep.subr.mxu0 0.0
    %1214 = vmatpush1.msra.mxu0 0.0
    %1215 = vmatprep.subr.mxu0 0.0
    %1216 = vmatpush1.msra.mxu0 0.0
    %1217 = vmatprep.subr.mxu0 0.0
    %1218 = vmatpush1.msra.mxu0 0.0
    %1219 = vmatprep.subr.mxu0 0.0
    %1220 = vmatpush1.msra.mxu0 0.0
    %1221 = vmatprep.subr.mxu0 0.0
    %1222 = vmatpush1.msra.mxu0 0.0
    %1223 = vmatprep.subr.mxu0 0.0
    %1224 = vmatpush1.msra.mxu0 0.0
    %1225 = vmatprep.subr.mxu0 0.0
    %1226 = vmatpush1.msra.mxu0 0.0
    %1227 = vmatprep.subr.mxu0 0.0
    %1228 = vmatpush1.msra.mxu0 0.0
    %1229 = vmatprep.subr.mxu0 0.0
    %1230 = vmatpush1.msra.mxu0 0.0
    %1231 = vmatprep.subr.mxu0 0.0
    %1232 = vmatpush1.msra.mxu0 0.0
    %1233 = vmatprep.subr.mxu0 0.0
    %1234 = vmatpush1.msra.mxu0 0.0
    %1235 = vmatprep.subr.mxu0 0.0
    %1236 = vmatpush1.msra.mxu0 0.0
    %1237 = vmatprep.subr.mxu0 0.0
    %1238 = vmatpush1.msra.mxu0 0.0
    %1239 = vmatprep.subr.mxu0 0.0
    %1240 = vmatpush1.msra.mxu0 0.0
    %1241 = vmatprep.subr.mxu0 0.0
    %1242 = vmatpush1.msra.mxu0 0.0
    %1243 = vmatprep.subr.mxu0 0.0
    %1244 = vmatpush1.msra.mxu0 0.0
    %1245 = vmatprep.subr.mxu0 0.0
    %1246 = vmatpush1.msra.mxu0 0.0
    %1247 = vmatprep.subr.mxu0 0.0
    %1248 = vmatpush1.msra.mxu0 0.0
    %1249 = vmatprep.subr.mxu0 0.0
    %1250 = vmatpush1.msra.mxu0 0.0
    %1251 = vmatprep.subr.mxu0 0.0
    %1252 = vmatpush1.msra.mxu0 0.0
    %1253 = vmatprep.subr.mxu0 0.0
    %1254 = vmatpush1.msra.mxu0 0.0
    %1255 = vmatprep.mubr.f32.mxu0 0.0
    %1256 = vmatmul.mubr.f32.gmra.mrb[0].mxu0 %v1189
    %v1257 = vpop.f32.mrb[0].mxu0
    %v1258 = vadd.f32 0.0, %v1257
    %v1259 = vpop.f32.mrb[0].mxu0
    %1260 = vdwg.mxu0
    %v1261 = vsel %vm981, %v1043, 0
    %1263 = vmatprep.subr.mxu0 0.0
    %1264 = vmatpush1.msra.mxu0 %v38
    %1265 = vmatprep.subr.mxu0 0.0
    %1266 = vmatpush1.msra.mxu0 %v39
    %1267 = vmatprep.subr.mxu0 0.0
    %1268 = vmatpush1.msra.mxu0 0.0
    %1269 = vmatprep.subr.mxu0 0.0
    %1270 = vmatpush1.msra.mxu0 0.0
    %1271 = vmatprep.subr.mxu0 0.0
    %1272 = vmatpush1.msra.mxu0 0.0
    %1273 = vmatprep.subr.mxu0 0.0
    %1274 = vmatpush1.msra.mxu0 0.0
    %1275 = vmatprep.subr.mxu0 0.0
    %1276 = vmatpush1.msra.mxu0 0.0
    %1277 = vmatprep.subr.mxu0 0.0
    %1278 = vmatpush1.msra.mxu0 0.0
    %1279 = vmatprep.subr.mxu0 0.0
    %1280 = vmatpush1.msra.mxu0 0.0
    %1281 = vmatprep.subr.mxu0 0.0
    %1282 = vmatpush1.msra.mxu0 0.0
    %1283 = vmatprep.subr.mxu0 0.0
    %1284 = vmatpush1.msra.mxu0 0.0
    %1285 = vmatprep.subr.mxu0 0.0
    %1286 = vmatpush1.msra.mxu0 0.0
    %1287 = vmatprep.subr.mxu0 0.0
    %1288 = vmatpush1.msra.mxu0 0.0
    %1289 = vmatprep.subr.mxu0 0.0
    %1290 = vmatpush1.msra.mxu0 0.0
    %1291 = vmatprep.subr.mxu0 0.0
    %1292 = vmatpush1.msra.mxu0 0.0
    %1293 = vmatprep.subr.mxu0 0.0
    %1294 = vmatpush1.msra.mxu0 0.0
    %1295 = vmatprep.subr.mxu0 0.0
    %1296 = vmatpush1.msra.mxu0 0.0
    %1297 = vmatprep.subr.mxu0 0.0
    %1298 = vmatpush1.msra.mxu0 0.0
    %1299 = vmatprep.subr.mxu0 0.0
    %1300 = vmatpush1.msra.mxu0 0.0
    %1301 = vmatprep.subr.mxu0 0.0
    %1302 = vmatpush1.msra.mxu0 0.0
    %1303 = vmatprep.subr.mxu0 0.0
    %1304 = vmatpush1.msra.mxu0 0.0
    %1305 = vmatprep.subr.mxu0 0.0
    %1306 = vmatpush1.msra.mxu0 0.0
    %1307 = vmatprep.subr.mxu0 0.0
    %1308 = vmatpush1.msra.mxu0 0.0
    %1309 = vmatprep.subr.mxu0 0.0
    %1310 = vmatpush1.msra.mxu0 0.0
    %1311 = vmatprep.subr.mxu0 0.0
    %1312 = vmatpush1.msra.mxu0 0.0
    %1313 = vmatprep.subr.mxu0 0.0
    %1314 = vmatpush1.msra.mxu0 0.0
    %1315 = vmatprep.subr.mxu0 0.0
    %1316 = vmatpush1.msra.mxu0 0.0
    %1317 = vmatprep.subr.mxu0 0.0
    %1318 = vmatpush1.msra.mxu0 0.0
    %1319 = vmatprep.subr.mxu0 0.0
    %1320 = vmatpush1.msra.mxu0 0.0
    %1321 = vmatprep.subr.mxu0 0.0
    %1322 = vmatpush1.msra.mxu0 0.0
    %1323 = vmatprep.subr.mxu0 0.0
    %1324 = vmatpush1.msra.mxu0 0.0
    %1325 = vmatprep.subr.mxu0 0.0
    %1326 = vmatpush1.msra.mxu0 0.0
    %1327 = vmatprep.mubr.f32.mxu0 0.0
    %1328 = vmatmul.mubr.f32.gmra.mrb[0].mxu0 %v1261
    %v1329 = vpop.f32.mrb[0].mxu0
    %v1330 = vadd.f32 0.0, %v1329
    %v1331 = vpop.f32.mrb[0].mxu0
    %1332 = vdwg.mxu0
    %v1333 = vsel %vm981, %v1026, 0
    %1335 = vmatprep.subr.mxu0 0.0
    %1336 = vmatpush1.msra.mxu0 %v40
    %1337 = vmatprep.subr.mxu0 0.0
    %1338 = vmatpush1.msra.mxu0 %v41
    %1339 = vmatprep.subr.mxu0 0.0
    %1340 = vmatpush1.msra.mxu0 0.0
    %1341 = vmatprep.subr.mxu0 0.0
    %1342 = vmatpush1.msra.mxu0 0.0
    %1343 = vmatprep.subr.mxu0 0.0
    %1344 = vmatpush1.msra.mxu0 0.0
    %1345 = vmatprep.subr.mxu0 0.0
    %1346 = vmatpush1.msra.mxu0 0.0
    %1347 = vmatprep.subr.mxu0 0.0
    %1348 = vmatpush1.msra.mxu0 0.0
    %1349 = vmatprep.subr.mxu0 0.0
    %1350 = vmatpush1.msra.mxu0 0.0
    %1351 = vmatprep.subr.mxu0 0.0
    %1352 = vmatpush1.msra.mxu0 0.0
    %1353 = vmatprep.subr.mxu0 0.0
    %1354 = vmatpush1.msra.mxu0 0.0
    %1355 = vmatprep.subr.mxu0 0.0
    %1356 = vmatpush1.msra.mxu0 0.0
    %1357 = vmatprep.subr.mxu0 0.0
    %1358 = vmatpush1.msra.mxu0 0.0
    %1359 = vmatprep.subr.mxu0 0.0
    %1360 = vmatpush1.msra.mxu0 0.0
    %1361 = vmatprep.subr.mxu0 0.0
    %1362 = vmatpush1.msra.mxu0 0.0
    %1363 = vmatprep.subr.mxu0 0.0
    %1364 = vmatpush1.msra.mxu0 0.0
    %1365 = vmatprep.subr.mxu0 0.0
    %1366 = vmatpush1.msra.mxu0 0.0
    %1367 = vmatprep.subr.mxu0 0.0
    %1368 = vmatpush1.msra.mxu0 0.0
    %1369 = vmatprep.subr.mxu0 0.0
    %1370 = vmatpush1.msra.mxu0 0.0
    %1371 = vmatprep.subr.mxu0 0.0
    %1372 = vmatpush1.msra.mxu0 0.0
    %1373 = vmatprep.subr.mxu0 0.0
    %1374 = vmatpush1.msra.mxu0 0.0
    %1375 = vmatprep.subr.mxu0 0.0
    %1376 = vmatpush1.msra.mxu0 0.0
    %1377 = vmatprep.subr.mxu0 0.0
    %1378 = vmatpush1.msra.mxu0 0.0
    %1379 = vmatprep.subr.mxu0 0.0
    %1380 = vmatpush1.msra.mxu0 0.0
    %1381 = vmatprep.subr.mxu0 0.0
    %1382 = vmatpush1.msra.mxu0 0.0
    %1383 = vmatprep.subr.mxu0 0.0
    %1384 = vmatpush1.msra.mxu0 0.0
    %1385 = vmatprep.subr.mxu0 0.0
    %1386 = vmatpush1.msra.mxu0 0.0
    %1387 = vmatprep.subr.mxu0 0.0
    %1388 = vmatpush1.msra.mxu0 0.0
    %1389 = vmatprep.subr.mxu0 0.0
    %1390 = vmatpush1.msra.mxu0 0.0
    %1391 = vmatprep.subr.mxu0 0.0
    %1392 = vmatpush1.msra.mxu0 0.0
    %1393 = vmatprep.subr.mxu0 0.0
    %1394 = vmatpush1.msra.mxu0 0.0
    %1395 = vmatprep.subr.mxu0 0.0
    %1396 = vmatpush1.msra.mxu0 0.0
    %1397 = vmatprep.subr.mxu0 0.0
    %1398 = vmatpush1.msra.mxu0 0.0
    %1399 = vmatprep.mubr.f32.mxu0 0.0
    %1400 = vmatmul.mubr.f32.gmra.mrb[0].mxu0 %v1333
    %v1401 = vpop.f32.mrb[0].mxu0
    %v1402 = vadd.f32 0.0, %v1401
    %v1403 = vpop.f32.mrb[0].mxu0
    %1404 = vdwg.mxu0
    %v1405 = vsel %vm981, %v1040, 0
    %1407 = vmatprep.subr.mxu0 0.0
    %1408 = vmatpush1.msra.mxu0 %v42
    %1409 = vmatprep.subr.mxu0 0.0
    %1410 = vmatpush1.msra.mxu0 %v43
    %1411 = vmatprep.subr.mxu0 0.0
    %1412 = vmatpush1.msra.mxu0 0.0
    %1413 = vmatprep.subr.mxu0 0.0
    %1414 = vmatpush1.msra.mxu0 0.0
    %1415 = vmatprep.subr.mxu0 0.0
    %1416 = vmatpush1.msra.mxu0 0.0
    %1417 = vmatprep.subr.mxu0 0.0
    %1418 = vmatpush1.msra.mxu0 0.0
    %1419 = vmatprep.subr.mxu0 0.0
    %1420 = vmatpush1.msra.mxu0 0.0
    %1421 = vmatprep.subr.mxu0 0.0
    %1422 = vmatpush1.msra.mxu0 0.0
    %1423 = vmatprep.subr.mxu0 0.0
    %1424 = vmatpush1.msra.mxu0 0.0
    %1425 = vmatprep.subr.mxu0 0.0
    %1426 = vmatpush1.msra.mxu0 0.0
    %1427 = vmatprep.subr.mxu0 0.0
    %1428 = vmatpush1.msra.mxu0 0.0
    %1429 = vmatprep.subr.mxu0 0.0
    %1430 = vmatpush1.msra.mxu0 0.0
    %1431 = vmatprep.subr.mxu0 0.0
    %1432 = vmatpush1.msra.mxu0 0.0
    %1433 = vmatprep.subr.mxu0 0.0
    %1434 = vmatpush1.msra.mxu0 0.0
    %1435 = vmatprep.subr.mxu0 0.0
    %1436 = vmatpush1.msra.mxu0 0.0
    %1437 = vmatprep.subr.mxu0 0.0
    %1438 = vmatpush1.msra.mxu0 0.0
    %1439 = vmatprep.subr.mxu0 0.0
    %1440 = vmatpush1.msra.mxu0 0.0
    %1441 = vmatprep.subr.mxu0 0.0
    %1442 = vmatpush1.msra.mxu0 0.0
    %1443 = vmatprep.subr.mxu0 0.0
    %1444 = vmatpush1.msra.mxu0 0.0
    %1445 = vmatprep.subr.mxu0 0.0
    %1446 = vmatpush1.msra.mxu0 0.0
    %1447 = vmatprep.subr.mxu0 0.0
    %1448 = vmatpush1.msra.mxu0 0.0
    %1449 = vmatprep.subr.mxu0 0.0
    %1450 = vmatpush1.msra.mxu0 0.0
    %1451 = vmatprep.subr.mxu0 0.0
    %1452 = vmatpush1.msra.mxu0 0.0
    %1453 = vmatprep.subr.mxu0 0.0
    %1454 = vmatpush1.msra.mxu0 0.0
    %1455 = vmatprep.subr.mxu0 0.0
    %1456 = vmatpush1.msra.mxu0 0.0
    %1457 = vmatprep.subr.mxu0 0.0
    %1458 = vmatpush1.msra.mxu0 0.0
    %1459 = vmatprep.subr.mxu0 0.0
    %1460 = vmatpush1.msra.mxu0 0.0
    %1461 = vmatprep.subr.mxu0 0.0
    %1462 = vmatpush1.msra.mxu0 0.0
    %1463 = vmatprep.subr.mxu0 0.0
    %1464 = vmatpush1.msra.mxu0 0.0
    %1465 = vmatprep.subr.mxu0 0.0
    %1466 = vmatpush1.msra.mxu0 0.0
    %1467 = vmatprep.subr.mxu0 0.0
    %1468 = vmatpush1.msra.mxu0 0.0
    %1469 = vmatprep.subr.mxu0 0.0
    %1470 = vmatpush1.msra.mxu0 0.0
    %1471 = vmatprep.mubr.f32.mxu0 0.0
    %1472 = vmatmul.mubr.f32.gmra.mrb[0].mxu0 %v1405
    %v1473 = vpop.f32.mrb[0].mxu0
    %v1474 = vadd.f32 0.0, %v1473
    %v1475 = vpop.f32.mrb[0].mxu0
    %1476 = vdwg.mxu0
    %v1477 = vsel %vm981, %v1042, 0
    %1479 = vmatprep.subr.mxu0 0.0
    %1480 = vmatpush1.msra.mxu0 %v44
    %1481 = vmatprep.subr.mxu0 0.0
    %1482 = vmatpush1.msra.mxu0 %v45
    %1483 = vmatprep.subr.mxu0 0.0
    %1484 = vmatpush1.msra.mxu0 0.0
    %1485 = vmatprep.subr.mxu0 0.0
    %1486 = vmatpush1.msra.mxu0 0.0
    %1487 = vmatprep.subr.mxu0 0.0
    %1488 = vmatpush1.msra.mxu0 0.0
    %1489 = vmatprep.subr.mxu0 0.0
    %1490 = vmatpush1.msra.mxu0 0.0
    %1491 = vmatprep.subr.mxu0 0.0
    %1492 = vmatpush1.msra.mxu0 0.0
    %1493 = vmatprep.subr.mxu0 0.0
    %1494 = vmatpush1.msra.mxu0 0.0
    %1495 = vmatprep.subr.mxu0 0.0
    %1496 = vmatpush1.msra.mxu0 0.0
    %1497 = vmatprep.subr.mxu0 0.0
    %1498 = vmatpush1.msra.mxu0 0.0
    %1499 = vmatprep.subr.mxu0 0.0
    %1500 = vmatpush1.msra.mxu0 0.0
    %1501 = vmatprep.subr.mxu0 0.0
    %1502 = vmatpush1.msra.mxu0 0.0
    %1503 = vmatprep.subr.mxu0 0.0
    %1504 = vmatpush1.msra.mxu0 0.0
    %1505 = vmatprep.subr.mxu0 0.0
    %1506 = vmatpush1.msra.mxu0 0.0
    %1507 = vmatprep.subr.mxu0 0.0
    %1508 = vmatpush1.msra.mxu0 0.0
    %1509 = vmatprep.subr.mxu0 0.0
    %1510 = vmatpush1.msra.mxu0 0.0
    %1511 = vmatprep.subr.mxu0 0.0
    %1512 = vmatpush1.msra.mxu0 0.0
    %1513 = vmatprep.subr.mxu0 0.0
    %1514 = vmatpush1.msra.mxu0 0.0
    %1515 = vmatprep.subr.mxu0 0.0
    %1516 = vmatpush1.msra.mxu0 0.0
    %1517 = vmatprep.subr.mxu0 0.0
    %1518 = vmatpush1.msra.mxu0 0.0
    %1519 = vmatprep.subr.mxu0 0.0
    %1520 = vmatpush1.msra.mxu0 0.0
    %1521 = vmatprep.subr.mxu0 0.0
    %1522 = vmatpush1.msra.mxu0 0.0
    %1523 = vmatprep.subr.mxu0 0.0
    %1524 = vmatpush1.msra.mxu0 0.0
    %1525 = vmatprep.subr.mxu0 0.0
    %1526 = vmatpush1.msra.mxu0 0.0
    %1527 = vmatprep.subr.mxu0 0.0
    %1528 = vmatpush1.msra.mxu0 0.0
    %1529 = vmatprep.subr.mxu0 0.0
    %1530 = vmatpush1.msra.mxu0 0.0
    %1531 = vmatprep.subr.mxu0 0.0
    %1532 = vmatpush1.msra.mxu0 0.0
    %1533 = vmatprep.subr.mxu0 0.0
    %1534 = vmatpush1.msra.mxu0 0.0
    %1535 = vmatprep.subr.mxu0 0.0
    %1536 = vmatpush1.msra.mxu0 0.0
    %1537 = vmatprep.subr.mxu0 0.0
    %1538 = vmatpush1.msra.mxu0 0.0
    %1539 = vmatprep.subr.mxu0 0.0
    %1540 = vmatpush1.msra.mxu0 0.0
    %1541 = vmatprep.subr.mxu0 0.0
    %1542 = vmatpush1.msra.mxu0 0.0
    %1543 = vmatprep.mubr.f32.mxu0 0.0
    %1544 = vmatmul.mubr.f32.gmra.mrb[0].mxu0 %v1477
    %v1545 = vpop.f32.mrb[0].mxu0
    %v1546 = vadd.f32 0.0, %v1545
    %v1547 = vpop.f32.mrb[0].mxu0
    %1548 = vdwg.mxu0
    %v1549 = vsel %vm981, %v1044, 0
    %1551 = vmatprep.subr.mxu0 0.0
    %1552 = vmatpush1.msra.mxu0 %v46
    %1553 = vmatprep.subr.mxu0 0.0
    %1554 = vmatpush1.msra.mxu0 %v47
    %1555 = vmatprep.subr.mxu0 0.0
    %1556 = vmatpush1.msra.mxu0 0.0
    %1557 = vmatprep.subr.mxu0 0.0
    %1558 = vmatpush1.msra.mxu0 0.0
    %1559 = vmatprep.subr.mxu0 0.0
    %1560 = vmatpush1.msra.mxu0 0.0
    %1561 = vmatprep.subr.mxu0 0.0
    %1562 = vmatpush1.msra.mxu0 0.0
    %1563 = vmatprep.subr.mxu0 0.0
    %1564 = vmatpush1.msra.mxu0 0.0
    %1565 = vmatprep.subr.mxu0 0.0
    %1566 = vmatpush1.msra.mxu0 0.0
    %1567 = vmatprep.subr.mxu0 0.0
    %1568 = vmatpush1.msra.mxu0 0.0
    %1569 = vmatprep.subr.mxu0 0.0
    %1570 = vmatpush1.msra.mxu0 0.0
    %1571 = vmatprep.subr.mxu0 0.0
    %1572 = vmatpush1.msra.mxu0 0.0
    %1573 = vmatprep.subr.mxu0 0.0
    %1574 = vmatpush1.msra.mxu0 0.0
    %1575 = vmatprep.subr.mxu0 0.0
    %1576 = vmatpush1.msra.mxu0 0.0
    %1577 = vmatprep.subr.mxu0 0.0
    %1578 = vmatpush1.msra.mxu0 0.0
    %1579 = vmatprep.subr.mxu0 0.0
    %1580 = vmatpush1.msra.mxu0 0.0
    %1581 = vmatprep.subr.mxu0 0.0
    %1582 = vmatpush1.msra.mxu0 0.0
    %1583 = vmatprep.subr.mxu0 0.0
    %1584 = vmatpush1.msra.mxu0 0.0
    %1585 = vmatprep.subr.mxu0 0.0
    %1586 = vmatpush1.msra.mxu0 0.0
    %1587 = vmatprep.subr.mxu0 0.0
    %1588 = vmatpush1.msra.mxu0 0.0
    %1589 = vmatprep.subr.mxu0 0.0
    %1590 = vmatpush1.msra.mxu0 0.0
    %1591 = vmatprep.subr.mxu0 0.0
    %1592 = vmatpush1.msra.mxu0 0.0
    %1593 = vmatprep.subr.mxu0 0.0
    %1594 = vmatpush1.msra.mxu0 0.0
    %1595 = vmatprep.subr.mxu0 0.0
    %1596 = vmatpush1.msra.mxu0 0.0
    %1597 = vmatprep.subr.mxu0 0.0
    %1598 = vmatpush1.msra.mxu0 0.0
    %1599 = vmatprep.subr.mxu0 0.0
    %1600 = vmatpush1.msra.mxu0 0.0
    %1601 = vmatprep.subr.mxu0 0.0
    %1602 = vmatpush1.msra.mxu0 0.0
    %1603 = vmatprep.subr.mxu0 0.0
    %1604 = vmatpush1.msra.mxu0 0.0
    %1605 = vmatprep.subr.mxu0 0.0
    %1606 = vmatpush1.msra.mxu0 0.0
    %1607 = vmatprep.subr.mxu0 0.0
    %1608 = vmatpush1.msra.mxu0 0.0
    %1609 = vmatprep.subr.mxu0 0.0
    %1610 = vmatpush1.msra.mxu0 0.0
    %1611 = vmatprep.subr.mxu0 0.0
    %1612 = vmatpush1.msra.mxu0 0.0
    %1613 = vmatprep.subr.mxu0 0.0
    %1614 = vmatpush1.msra.mxu0 0.0
    %1615 = vmatprep.mubr.f32.mxu0 0.0
    %1616 = vmatmul.mubr.f32.gmra.mrb[0].mxu0 %v1549
    %v1617 = vpop.f32.mrb[0].mxu0
    %v1618 = vadd.f32 0.0, %v1617
    %v1619 = vpop.f32.mrb[0].mxu0
    %1620 = vdwg.mxu0
    %v1629 = vrot.slane %v1186, 7
    %v1630 = vsel %vm959, %v1629, %v1114
    %v1631 = vrot.slane %v1258, 6
    %v1632 = vsel %vm962, %v1631, %v1630
    %v1633 = vrot.slane %v1330, 5
    %v1634 = vsel %vm965, %v1633, %v1632
    %v1635 = vrot.slane %v1402, 4
    %v1636 = vsel %vm968, %v1635, %v1634
    %v1637 = vrot.slane %v1474, 3
    %v1638 = vsel %vm971, %v1637, %v1636
    %v1639 = vrot.slane %v1546, 2
    %v1640 = vsel %vm974, %v1639, %v1638
    %v1641 = vrot.slane %v1618, 1
    %v1642 = vsel %vm977, %v1641, %v1640
    %1644 = vmatprep.subr.mxu0 0.0
    %1645 = vmatpush1.msra.mxu0 %v133
    %1646 = vmatprep.subr.mxu0 0.0
    %1647 = vmatpush1.msra.mxu0 %v134
    %1648 = vmatprep.subr.mxu0 0.0
    %1649 = vmatpush1.msra.mxu0 %v135
    %1650 = vmatprep.subr.mxu0 0.0
    %1651 = vmatpush1.msra.mxu0 %v136
    %1652 = vmatprep.subr.mxu0 0.0
    %1653 = vmatpush1.msra.mxu0 %v137
    %1654 = vmatprep.subr.mxu0 0.0
    %1655 = vmatpush1.msra.mxu0 %v138
    %1656 = vmatprep.subr.mxu0 0.0
    %1657 = vmatpush1.msra.mxu0 %v139
    %1658 = vmatprep.subr.mxu0 0.0
    %1659 = vmatpush1.msra.mxu0 %v140
    %1660 = vmatprep.subr.mxu0 0.0
    %1661 = vmatpush1.msra.mxu0 %v141
    %1662 = vmatprep.subr.mxu0 0.0
    %1663 = vmatpush1.msra.mxu0 %v142
    %1664 = vmatprep.subr.mxu0 0.0
    %1665 = vmatpush1.msra.mxu0 %v143
    %1666 = vmatprep.subr.mxu0 0.0
    %1667 = vmatpush1.msra.mxu0 %v144
    %1668 = vmatprep.subr.mxu0 0.0
    %1669 = vmatpush1.msra.mxu0 %v145
    %1670 = vmatprep.subr.mxu0 0.0
    %1671 = vmatpush1.msra.mxu0 %v146
    %1672 = vmatprep.subr.mxu0 0.0
    %1673 = vmatpush1.msra.mxu0 %v147
    %1674 = vmatprep.subr.mxu0 0.0
    %1675 = vmatpush1.msra.mxu0 %v148
    %1676 = vmatprep.subr.mxu0 0.0
    %1677 = vmatpush1.msra.mxu0 0.0
    %1678 = vmatprep.subr.mxu0 0.0
    %1679 = vmatpush1.msra.mxu0 0.0
    %1680 = vmatprep.subr.mxu0 0.0
    %1681 = vmatpush1.msra.mxu0 0.0
    %1682 = vmatprep.subr.mxu0 0.0
    %1683 = vmatpush1.msra.mxu0 0.0
    %1684 = vmatprep.subr.mxu0 0.0
    %1685 = vmatpush1.msra.mxu0 0.0
    %1686 = vmatprep.subr.mxu0 0.0
    %1687 = vmatpush1.msra.mxu0 0.0
    %1688 = vmatprep.subr.mxu0 0.0
    %1689 = vmatpush1.msra.mxu0 0.0
    %1690 = vmatprep.subr.mxu0 0.0
    %1691 = vmatpush1.msra.mxu0 0.0
    %1692 = vmatprep.subr.mxu0 0.0
    %1693 = vmatpush1.msra.mxu0 0.0
    %1694 = vmatprep.subr.mxu0 0.0
    %1695 = vmatpush1.msra.mxu0 0.0
    %1696 = vmatprep.subr.mxu0 0.0
    %1697 = vmatpush1.msra.mxu0 0.0
    %1698 = vmatprep.subr.mxu0 0.0
    %1699 = vmatpush1.msra.mxu0 0.0
    %1700 = vmatprep.subr.mxu0 0.0
    %1701 = vmatpush1.msra.mxu0 0.0
    %1702 = vmatprep.subr.mxu0 0.0
    %1703 = vmatpush1.msra.mxu0 0.0
    %1704 = vmatprep.subr.mxu0 0.0
    %1705 = vmatpush1.msra.mxu0 0.0
    %1706 = vmatprep.subr.mxu0 0.0
    %1707 = vmatpush1.msra.mxu0 0.0
    %1708 = vmatprep.mubr.f32.mxu0 0.0
    %1709 = vmatmul.mubr.f32.gmra.mrb[0].mxu0 %v1642
    %v1710 = vpop.f32.mrb[0].mxu0
    %v1711 = vadd.f32 0.0, %v1710
    %v1712 = vpop.f32.mrb[0].mxu0
    %1713 = vdwg.mxu0
    %1714 = vmatprep.subr.mxu0 0.0
    %1715 = vmatpush1.msra.mxu0 %v117
    %1716 = vmatprep.subr.mxu0 0.0
    %1717 = vmatpush1.msra.mxu0 %v118
    %1718 = vmatprep.subr.mxu0 0.0
    %1719 = vmatpush1.msra.mxu0 %v119
    %1720 = vmatprep.subr.mxu0 0.0
    %1721 = vmatpush1.msra.mxu0 %v120
    %1722 = vmatprep.subr.mxu0 0.0
    %1723 = vmatpush1.msra.mxu0 %v121
    %1724 = vmatprep.subr.mxu0 0.0
    %1725 = vmatpush1.msra.mxu0 %v122
    %1726 = vmatprep.subr.mxu0 0.0
    %1727 = vmatpush1.msra.mxu0 %v123
    %1728 = vmatprep.subr.mxu0 0.0
    %1729 = vmatpush1.msra.mxu0 %v124
    %1730 = vmatprep.subr.mxu0 0.0
    %1731 = vmatpush1.msra.mxu0 %v125
    %1732 = vmatprep.subr.mxu0 0.0
    %1733 = vmatpush1.msra.mxu0 %v126
    %1734 = vmatprep.subr.mxu0 0.0
    %1735 = vmatpush1.msra.mxu0 %v127
    %1736 = vmatprep.subr.mxu0 0.0
    %1737 = vmatpush1.msra.mxu0 %v128
    %1738 = vmatprep.subr.mxu0 0.0
    %1739 = vmatpush1.msra.mxu0 %v129
    %1740 = vmatprep.subr.mxu0 0.0
    %1741 = vmatpush1.msra.mxu0 %v130
    %1742 = vmatprep.subr.mxu0 0.0
    %1743 = vmatpush1.msra.mxu0 %v131
    %1744 = vmatprep.subr.mxu0 0.0
    %1745 = vmatpush1.msra.mxu0 %v132
    %1746 = vmatprep.subr.mxu0 0.0
    %1747 = vmatpush1.msra.mxu0 0.0
    %1748 = vmatprep.subr.mxu0 0.0
    %1749 = vmatpush1.msra.mxu0 0.0
    %1750 = vmatprep.subr.mxu0 0.0
    %1751 = vmatpush1.msra.mxu0 0.0
    %1752 = vmatprep.subr.mxu0 0.0
    %1753 = vmatpush1.msra.mxu0 0.0
    %1754 = vmatprep.subr.mxu0 0.0
    %1755 = vmatpush1.msra.mxu0 0.0
    %1756 = vmatprep.subr.mxu0 0.0
    %1757 = vmatpush1.msra.mxu0 0.0
    %1758 = vmatprep.subr.mxu0 0.0
    %1759 = vmatpush1.msra.mxu0 0.0
    %1760 = vmatprep.subr.mxu0 0.0
    %1761 = vmatpush1.msra.mxu0 0.0
    %1762 = vmatprep.subr.mxu0 0.0
    %1763 = vmatpush1.msra.mxu0 0.0
    %1764 = vmatprep.subr.mxu0 0.0
    %1765 = vmatpush1.msra.mxu0 0.0
    %1766 = vmatprep.subr.mxu0 0.0
    %1767 = vmatpush1.msra.mxu0 0.0
    %1768 = vmatprep.subr.mxu0 0.0
    %1769 = vmatpush1.msra.mxu0 0.0
    %1770 = vmatprep.subr.mxu0 0.0
    %1771 = vmatpush1.msra.mxu0 0.0
    %1772 = vmatprep.subr.mxu0 0.0
    %1773 = vmatpush1.msra.mxu0 0.0
    %1774 = vmatprep.subr.mxu0 0.0
    %1775 = vmatpush1.msra.mxu0 0.0
    %1776 = vmatprep.subr.mxu0 0.0
    %1777 = vmatpush1.msra.mxu0 0.0
    %1778 = vmatprep.mubr.f32.mxu0 0.0
    %1779 = vmatmul.mubr.f32.gmra.mrb[0].mxu0 %v331
    %v1780 = vpop.f32.mrb[0].mxu0
    %v1781 = vadd.f32 %v1711, %v1780
    %v1782 = vpop.f32.mrb[0].mxu0
    %1783 = vdwg.mxu0
    %v1784 = vadd.f32 %v1781, %v154
    %v1785 = vtanh.pop %v1784
    %s1786 = smul.u32 %s158, 8
    %s1787 = scalar_lea.vmem %s9, %s1786
    %1788 = vst [vmem:[%s1787] sm:$0xff] %v1785
  $region42: #{forward.11} parent=0 // loop_footer
    %s162 = sadd.s32 1, %s158
  $region43: #{forward.11} parent=0 // loop_footer_branch
    %157 = sbr.rel target = $region39
  $region44: #{forward.11} parent=0 // loop_exit
    _
  // Predicated region
  $region45: #{forward.11} parent=0 // pred_check
    _
  $region46: #{forward.11} parent=0 // pred_check_branch
    %1790 = sbr.rel (0) target = $region48
  $region47: #{forward.11} parent=0 // pred_region
    _
  $region48: #{forward.11} parent=0 // pred_fallthru
    _
  // Predicated region
  $region49: #{forward.11} parent=0 // pred_check
    _
  $region50: #{forward.11} parent=0 // pred_check_branch
    %1792 = sbr.rel (0) target = $region52
  $region51: #{forward.11} parent=0 // pred_region
    _
  $region52: #{forward.11} parent=0 // pred_fallthru
    _

// kernel: forward.13
$region0: #{forward.13}
  #allocation0 [shape = 'u32[]', space=smem, size = 0x4, offset = 0x4, fixed_abs, tag = 'smem constant byte address 0x4 - core index']
  #allocation1 [shape = 'u32[144,128]{1,0:T(1,128)}', space=vmem, size = 0x12000, scoped, tag = 'internal scratch']
  #allocation2 [shape = 'f32[128,1]{1,0:T(8,128)}', space=vmem, size = 0x10000, scoped, tag = 'scratch operand']
  #allocation3 [shape = 'f32[128,1]{1,0:T(8,128)}', space=vmem, size = 0x10000, scoped, tag = 'scratch operand']
  #allocation4 [shape = 'f32[128,1]{1,0:T(8,128)}', space=vmem, size = 0x10000, scoped, tag = 'scratch operand']
  %s0 = inlined_call_operand.vmem [shape: f32[128,1024], index: 0, kind: input, shape index: {}]
  %s1 = inlined_call_operand.vmem [shape: s32[128,1], index: 1, kind: input, shape index: {}]
  %s2 = inlined_call_operand.vmem [shape: f32[128,1], index: 2, kind: input, shape index: {}]
  %s3 = inlined_call_operand.vmem [shape: f32[128,1], index: 3, kind: output, shape index: {}]
  %s4 = sld [smem:[#allocation0]]
  $region76: #{forward.13} parent=0
    _
  %s6 = ssub.s32 1, %s4
  %s7 = scalar_select 0, %s6, %s4
  $region1: #{forward.13} parent=0
    #allocation5 [shape = 'u8[524288]{0}', space=vmem, size = 0x80000, scoped, tag = 'input window, operand 0']
    loop: start=0, step=1, limit=4
    $region2: #{forward.13} parent=1 // loop_pre_header
      _
    $region3: #{forward.13} parent=1 // loop_header
      %s9 = sphi 0, %s13
      %p10 = scmp.ge.s32.totalorder %s9, 4
      %s16 = sphi 0, %s28
      %s17 = sphi 0, %s24
      %s18 = sphi 0, %s16
      %s19 = sphi 0, %s17
      %s20 = sphi 0, %s18
      %s21 = sphi 0, %s19
      %s33 = sphi 0, %s35
      %s36 = sphi 0, %s33
      %s37 = sphi 0, %s36
      %s53 = sphi 0, %s37
      %s59 = sphi 0, %s61
      %s62 = sphi 0, %s59
      %s63 = sphi 0, %s62
      %s79 = sphi 0, %s63
      %s85 = sphi 0, %s87
      %s88 = sphi 0, %s85
      %s89 = sphi 0, %s88
      %s105 = sphi 0, %s89
      %s111 = sphi 0, %s113
      %s114 = sphi 0, %s111
      %s115 = sphi 0, %s114
      %s131 = sphi 0, %s115
    $region4: #{forward.13} parent=1 // loop_header_branch
      %12 = sbr.rel (%p10) target = $region8
    $region5: #{forward.13} parent=1 // loop_body
      %s14 = ssub.s32 %s9, 1
      %s15 = ssub.s32 %s9, 2
      %s22 = sadd.s32 1, %s17
      %p23 = scmp.ge.s32.totalorder %s22, 2
      %s24 = scalar_select %p23, 0, %s22
      %s25 = sadd.s32 1, %s16
      %s26 = scalar_select %p23, %s25, %s16
      %p27 = scmp.ge.s32.totalorder %s26, 1
      %s28 = scalar_select %p27, 0, %s26
      %s29 = ssub.s32 %s16, %s28
      %s30 = ssub.s32 %s17, %s24
      %s31 = sor.u32 %s29, %s30
      %p32 = scmp.eq.s32.totalorder %s31, 0
      %s34 = sadd.s32 %s33, 1
      %s35 = scalar_select %p32, %s33, %s34
      %p38 = pneg %p32
      %p39 = scmp.eq.s32.totalorder %s9, 1
      %p40 = por %p38, %p39
      %p41 = scmp.ne.s32.totalorder %s33, %s36
      %p42 = scmp.eq.s32.totalorder %s9, 0
      %p43 = por %p41, %p42
      %p44 = scmp.ne.s32.totalorder %s33, %s36
      %p45 = scmp.eq.s32.totalorder %s14, 1
      %p46 = por %p44, %p45
      %p47 = scmp.ne.s32.totalorder %s36, %s37
      %p48 = scmp.eq.s32.totalorder %s14, 0
      %p49 = por %p47, %p48
      %p50 = scmp.ne.s32.totalorder %s36, %s37
      %p51 = scmp.eq.s32.totalorder %s15, 1
      %p52 = por %p50, %p51
      %p54 = scmp.ne.s32.totalorder %s37, %s53
      %p55 = scmp.eq.s32.totalorder %s15, 0
      %p56 = por %p54, %p55
      %s57 = ssub.s32 %s16, %s28
      %p58 = scmp.eq.s32.totalorder %s57, 0
      %s60 = sadd.s32 %s59, 1
      %s61 = scalar_select %p58, %s59, %s60
      %p64 = pneg %p58
      %p65 = scmp.eq.s32.totalorder %s9, 1
      %p66 = por %p64, %p65
      %p67 = scmp.ne.s32.totalorder %s59, %s62
      %p68 = scmp.eq.s32.totalorder %s9, 0
      %p69 = por %p67, %p68
      %p70 = scmp.ne.s32.totalorder %s59, %s62
      %p71 = scmp.eq.s32.totalorder %s14, 1
      %p72 = por %p70, %p71
      %p73 = scmp.ne.s32.totalorder %s62, %s63
      %p74 = scmp.eq.s32.totalorder %s14, 0
      %p75 = por %p73, %p74
      %p76 = scmp.ne.s32.totalorder %s62, %s63
      %p77 = scmp.eq.s32.totalorder %s15, 1
      %p78 = por %p76, %p77
      %p80 = scmp.ne.s32.totalorder %s63, %s79
      %p81 = scmp.eq.s32.totalorder %s15, 0
      %p82 = por %p80, %p81
      %s83 = ssub.s32 %s16, %s28
      %p84 = scmp.eq.s32.totalorder %s83, 0
      %s86 = sadd.s32 %s85, 1
      %s87 = scalar_select %p84, %s85, %s86
      %p90 = pneg %p84
      %p91 = scmp.eq.s32.totalorder %s9, 1
      %p92 = por %p90, %p91
      %p93 = scmp.ne.s32.totalorder %s85, %s88
      %p94 = scmp.eq.s32.totalorder %s9, 0
      %p95 = por %p93, %p94
      %p96 = scmp.ne.s32.totalorder %s85, %s88
      %p97 = scmp.eq.s32.totalorder %s14, 1
      %p98 = por %p96, %p97
      %p99 = scmp.ne.s32.totalorder %s88, %s89
      %p100 = scmp.eq.s32.totalorder %s14, 0
      %p101 = por %p99, %p100
      %p102 = scmp.ne.s32.totalorder %s88, %s89
      %p103 = scmp.eq.s32.totalorder %s15, 1
      %p104 = por %p102, %p103
      %p106 = scmp.ne.s32.totalorder %s89, %s105
      %p107 = scmp.eq.s32.totalorder %s15, 0
      %p108 = por %p106, %p107
      %s109 = ssub.s32 %s16, %s28
      %p110 = scmp.eq.s32.totalorder %s109, 0
      %s112 = sadd.s32 %s111, 1
      %s113 = scalar_select %p110, %s111, %s112
      %p116 = pneg %p110
      %p117 = scmp.eq.s32.totalorder %s9, 1
      %p118 = por %p116, %p117
      %p119 = scmp.ne.s32.totalorder %s111, %s114
      %p120 = scmp.eq.s32.totalorder %s9, 0
      %p121 = por %p119, %p120
      %p122 = scmp.ne.s32.totalorder %s111, %s114
      %p123 = scmp.eq.s32.totalorder %s14, 1
      %p124 = por %p122, %p123
      %p125 = scmp.ne.s32.totalorder %s114, %s115
      %p126 = scmp.eq.s32.totalorder %s14, 0
      %p127 = por %p125, %p126
      %p128 = scmp.ne.s32.totalorder %s114, %s115
      %p129 = scmp.eq.s32.totalorder %s15, 1
      %p130 = por %p128, %p129
      %p132 = scmp.ne.s32.totalorder %s115, %s131
      %p133 = scmp.eq.s32.totalorder %s15, 0
      %p134 = por %p132, %p133
      %p135 = scmp.le.s32.totalorder 1, %s9
      %p136 = scmp.lt.s32.totalorder %s9, 3
      %p137 = pnand %p135, %p136
      %p138 = pneg %p137
      // Predicated region
      $region9: #{forward.13} parent=5 // pred_check
        _
      $region10: #{forward.13} parent=5 // pred_check_branch
        %140 = sbr.rel (%p137) target = $region12
      $region11: #{forward.13} parent=5 // pred_region
        %s141 = ssub.s32 %s9, 1
        // Predicated region
        $region13: #{forward.13} parent=11 // pred_check
          %p142 = pneg %p75
        $region14: #{forward.13} parent=11 // pred_check_branch
          %144 = sbr.rel (%p142) target = $region16
        $region15: #{forward.13} parent=11 // pred_region
          %s145 = smul.u32 16, %s18
          %p146 = scmp.lt.s32.totalorder %s145, 15
          %s147 = scalar_select %p146, %s145, 15
          %s148 = smul.addr %s147, 8
          %s149 = scalar_lea.vmem %s1, %s148
          %s150 = smul.u32 16, %s18
        $region16: #{forward.13} parent=11 // pred_fallthru
          _
        // Predicated region
        $region17: #{forward.13} parent=11 // pred_check
          %p151 = pneg %p101
        $region18: #{forward.13} parent=11 // pred_check_branch
          %153 = sbr.rel (%p151) target = $region20
        $region19: #{forward.13} parent=11 // pred_region
          %s154 = smul.u32 16, %s18
          %p155 = scmp.lt.s32.totalorder %s154, 15
          %s156 = scalar_select %p155, %s154, 15
          %s157 = smul.addr %s156, 8
          %s158 = scalar_lea.vmem %s2, %s157
          %s159 = smul.u32 16, %s18
        $region20: #{forward.13} parent=11 // pred_fallthru
          _
      $region12: #{forward.13} parent=5 // pred_fallthru
        _
      %p160 = scmp.lt.s32.totalorder %s9, 2
      // Predicated region
      $region21: #{forward.13} parent=5 // pred_check
        %p161 = pneg %p160
      $region22: #{forward.13} parent=5 // pred_check_branch
        %163 = sbr.rel (%p161) target = $region24
      $region23: #{forward.13} parent=5 // pred_region
        // Predicated region
        $region25: #{forward.13} parent=23 // pred_check
          %p164 = pneg %p43
        $region26: #{forward.13} parent=23 // pred_check_branch
          %166 = sbr.rel (%p164) target = $region28
        $region27: #{forward.13} parent=23 // pred_region
          %s167 = sand.u32 %s33, 1
          %s168 = sand.u32 %s33, 1
          %s169 = smul.addr %s168, 512
          %s170 = scalar_lea.vmem [#allocation5], %s169
          %s171 = smul.u32 16, %s16
          %s172 = smul.u32 4, %s17
          %s173 = smul.addr %s171, 8
          %s174 = sadd.s32 %s172, %s173
          %s175 = smul.addr %s174, 8
          %s176 = scalar_lea.vmem %s0, %s175
          // Predicated region
          $region29: #{forward.13} parent=27 // pred_check
            _
          $region30: #{forward.13} parent=27 // pred_check_branch
            %178 = sbr.rel (0) target = $region32
          $region31: #{forward.13} parent=27 // pred_region
            // Predicated region
            $region33: #{forward.13} parent=31 // pred_check
              _
            $region34: #{forward.13} parent=31 // pred_check_branch
              %180 = sbr.rel (0) target = $region36
            $region35: #{forward.13} parent=31 // pred_region
              loop: start=0, step=1, limit=1
              $region37: #{forward.13} parent=35 // loop_pre_header
                _
              $region38: #{forward.13} parent=35 // loop_header
                %s182 = sphi 0, %s186
                %p183 = scmp.ge.s32.totalorder %s182, 1
                %s187 = sphi %s176, %s176
                %s188 = sphi %s170, %s170
              $region39: #{forward.13} parent=35 // loop_header_branch
                %185 = sbr.rel (%p183) target = $region43
              $region40: #{forward.13} parent=35 // loop_body
                %v189 = vld [vmem:[%s187] sm:$0xff]
                %190 = vst [vmem:[%s188] sm:$0xff] %v189
                %v191 = vld [vmem:[%s187 + $0x8] sm:$0xff]
                %192 = vst [vmem:[%s188 + $0x8] sm:$0xff] %v191
                %v193 = vld [vmem:[%s187 + $0x10] sm:$0xff]
                %194 = vst [vmem:[%s188 + $0x10] sm:$0xff] %v193
                %v195 = vld [vmem:[%s187 + $0x18] sm:$0xff]
                %196 = vst [vmem:[%s188 + $0x18] sm:$0xff] %v195
                %v197 = vld [vmem:[%s187 + $0x40] sm:$0xff]
                %198 = vst [vmem:[%s188 + $0x20] sm:$0xff] %v197
                %v199 = vld [vmem:[%s187 + $0x48] sm:$0xff]
                %200 = vst [vmem:[%s188 + $0x28] sm:$0xff] %v199
                %v201 = vld [vmem:[%s187 + $0x50] sm:$0xff]
                %202 = vst [vmem:[%s188 + $0x30] sm:$0xff] %v201
                %v203 = vld [vmem:[%s187 + $0x58] sm:$0xff]
                %204 = vst [vmem:[%s188 + $0x38] sm:$0xff] %v203
                %v205 = vld [vmem:[%s187 + $0x80] sm:$0xff]
                %206 = vst [vmem:[%s188 + $0x40] sm:$0xff] %v205
                %v207 = vld [vmem:[%s187 + $0x88] sm:$0xff]
                %208 = vst [vmem:[%s188 + $0x48] sm:$0xff] %v207
                %v209 = vld [vmem:[%s187 + $0x90] sm:$0xff]
                %210 = vst [vmem:[%s188 + $0x50] sm:$0xff] %v209
                %v211 = vld [vmem:[%s187 + $0x98] sm:$0xff]
                %212 = vst [vmem:[%s188 + $0x58] sm:$0xff] %v211
                %v213 = vld [vmem:[%s187 + $0xc0] sm:$0xff]
                %214 = vst [vmem:[%s188 + $0x60] sm:$0xff] %v213
                %v215 = vld [vmem:[%s187 + $0xc8] sm:$0xff]
                %216 = vst [vmem:[%s188 + $0x68] sm:$0xff] %v215
                %v217 = vld [vmem:[%s187 + $0xd0] sm:$0xff]
                %218 = vst [vmem:[%s188 + $0x70] sm:$0xff] %v217
                %v219 = vld [vmem:[%s187 + $0xd8] sm:$0xff]
                %220 = vst [vmem:[%s188 + $0x78] sm:$0xff] %v219
                %v221 = vld [vmem:[%s187 + $0x100] sm:$0xff]
                %222 = vst [vmem:[%s188 + $0x80] sm:$0xff] %v221
                %v223 = vld [vmem:[%s187 + $0x108] sm:$0xff]
                %224 = vst [vmem:[%s188 + $0x88] sm:$0xff] %v223
                %v225 = vld [vmem:[%s187 + $0x110] sm:$0xff]
                %226 = vst [vmem:[%s188 + $0x90] sm:$0xff] %v225
                %v227 = vld [vmem:[%s187 + $0x118] sm:$0xff]
                %228 = vst [vmem:[%s188 + $0x98] sm:$0xff] %v227
                %v229 = vld [vmem:[%s187 + $0x140] sm:$0xff]
                %230 = vst [vmem:[%s188 + $0xa0] sm:$0xff] %v229
                %v231 = vld [vmem:[%s187 + $0x148] sm:$0xff]
                %232 = vst [vmem:[%s188 + $0xa8] sm:$0xff] %v231
                %v233 = vld [vmem:[%s187 + $0x150] sm:$0xff]
                %234 = vst [vmem:[%s188 + $0xb0] sm:$0xff] %v233
                %v235 = vld [vmem:[%s187 + $0x158] sm:$0xff]
                %236 = vst [vmem:[%s188 + $0xb8] sm:$0xff] %v235
                %v237 = vld [vmem:[%s187 + $0x180] sm:$0xff]
                %238 = vst [vmem:[%s188 + $0xc0] sm:$0xff] %v237
                %v239 = vld [vmem:[%s187 + $0x188] sm:$0xff]
                %240 = vst [vmem:[%s188 + $0xc8] sm:$0xff] %v239
                %v241 = vld [vmem:[%s187 + $0x190] sm:$0xff]
                %242 = vst [vmem:[%s188 + $0xd0] sm:$0xff] %v241
                %v243 = vld [vmem:[%s187 + $0x198] sm:$0xff]
                %244 = vst [vmem:[%s188 + $0xd8] sm:$0xff] %v243
                %v245 = vld [vmem:[%s187 + $0x1c0] sm:$0xff]
                %246 = vst [vmem:[%s188 + $0xe0] sm:$0xff] %v245
                %v247 = vld [vmem:[%s187 + $0x1c8] sm:$0xff]
                %248 = vst [vmem:[%s188 + $0xe8] sm:$0xff] %v247
                %v249 = vld [vmem:[%s187 + $0x1d0] sm:$0xff]
                %250 = vst [vmem:[%s188 + $0xf0] sm:$0xff] %v249
                %v251 = vld [vmem:[%s187 + $0x1d8] sm:$0xff]
                %252 = vst [vmem:[%s188 + $0xf8] sm:$0xff] %v251
                %v253 = vld [vmem:[%s187 + $0x200] sm:$0xff]
                %254 = vst [vmem:[%s188 + $0x100] sm:$0xff] %v253
                %v255 = vld [vmem:[%s187 + $0x208] sm:$0xff]
                %256 = vst [vmem:[%s188 + $0x108] sm:$0xff] %v255
                %v257 = vld [vmem:[%s187 + $0x210] sm:$0xff]
                %258 = vst [vmem:[%s188 + $0x110] sm:$0xff] %v257
                %v259 = vld [vmem:[%s187 + $0x218] sm:$0xff]
                %260 = vst [vmem:[%s188 + $0x118] sm:$0xff] %v259
                %v261 = vld [vmem:[%s187 + $0x240] sm:$0xff]
                %262 = vst [vmem:[%s188 + $0x120] sm:$0xff] %v261
                %v263 = vld [vmem:[%s187 + $0x248] sm:$0xff]
                %264 = vst [vmem:[%s188 + $0x128] sm:$0xff] %v263
                %v265 = vld [vmem:[%s187 + $0x250] sm:$0xff]
                %266 = vst [vmem:[%s188 + $0x130] sm:$0xff] %v265
                %v267 = vld [vmem:[%s187 + $0x258] sm:$0xff]
                %268 = vst [vmem:[%s188 + $0x138] sm:$0xff] %v267
                %v269 = vld [vmem:[%s187 + $0x280] sm:$0xff]
                %270 = vst [vmem:[%s188 + $0x140] sm:$0xff] %v269
                %v271 = vld [vmem:[%s187 + $0x288] sm:$0xff]
                %272 = vst [vmem:[%s188 + $0x148] sm:$0xff] %v271
                %v273 = vld [vmem:[%s187 + $0x290] sm:$0xff]
                %274 = vst [vmem:[%s188 + $0x150] sm:$0xff] %v273
                %v275 = vld [vmem:[%s187 + $0x298] sm:$0xff]
                %276 = vst [vmem:[%s188 + $0x158] sm:$0xff] %v275
                %v277 = vld [vmem:[%s187 + $0x2c0] sm:$0xff]
                %278 = vst [vmem:[%s188 + $0x160] sm:$0xff] %v277
                %v279 = vld [vmem:[%s187 + $0x2c8] sm:$0xff]
                %280 = vst [vmem:[%s188 + $0x168] sm:$0xff] %v279
                %v281 = vld [vmem:[%s187 + $0x2d0] sm:$0xff]
                %282 = vst [vmem:[%s188 + $0x170] sm:$0xff] %v281
                %v283 = vld [vmem:[%s187 + $0x2d8] sm:$0xff]
                %284 = vst [vmem:[%s188 + $0x178] sm:$0xff] %v283
                %v285 = vld [vmem:[%s187 + $0x300] sm:$0xff]
                %286 = vst [vmem:[%s188 + $0x180] sm:$0xff] %v285
                %v287 = vld [vmem:[%s187 + $0x308] sm:$0xff]
                %288 = vst [vmem:[%s188 + $0x188] sm:$0xff] %v287
                %v289 = vld [vmem:[%s187 + $0x310] sm:$0xff]
                %290 = vst [vmem:[%s188 + $0x190] sm:$0xff] %v289
                %v291 = vld [vmem:[%s187 + $0x318] sm:$0xff]
                %292 = vst [vmem:[%s188 + $0x198] sm:$0xff] %v291
                %v293 = vld [vmem:[%s187 + $0x340] sm:$0xff]
                %294 = vst [vmem:[%s188 + $0x1a0] sm:$0xff] %v293
                %v295 = vld [vmem:[%s187 + $0x348] sm:$0xff]
                %296 = vst [vmem:[%s188 + $0x1a8] sm:$0xff] %v295
                %v297 = vld [vmem:[%s187 + $0x350] sm:$0xff]
                %298 = vst [vmem:[%s188 + $0x1b0] sm:$0xff] %v297
                %v299 = vld [vmem:[%s187 + $0x358] sm:$0xff]
                %300 = vst [vmem:[%s188 + $0x1b8] sm:$0xff] %v299
                %v301 = vld [vmem:[%s187 + $0x380] sm:$0xff]
                %302 = vst [vmem:[%s188 + $0x1c0] sm:$0xff] %v301
                %v303 = vld [vmem:[%s187 + $0x388] sm:$0xff]
                %304 = vst [vmem:[%s188 + $0x1c8] sm:$0xff] %v303
                %v305 = vld [vmem:[%s187 + $0x390] sm:$0xff]
                %306 = vst [vmem:[%s188 + $0x1d0] sm:$0xff] %v305
                %v307 = vld [vmem:[%s187 + $0x398] sm:$0xff]
                %308 = vst [vmem:[%s188 + $0x1d8] sm:$0xff] %v307
                %v309 = vld [vmem:[%s187 + $0x3c0] sm:$0xff]
                %310 = vst [vmem:[%s188 + $0x1e0] sm:$0xff] %v309
                %v311 = vld [vmem:[%s187 + $0x3c8] sm:$0xff]
                %312 = vst [vmem:[%s188 + $0x1e8] sm:$0xff] %v311
                %v313 = vld [vmem:[%s187 + $0x3d0] sm:$0xff]
                %314 = vst [vmem:[%s188 + $0x1f0] sm:$0xff] %v313
                %v315 = vld [vmem:[%s187 + $0x3d8] sm:$0xff]
                %316 = vst [vmem:[%s188 + $0x1f8] sm:$0xff] %v315
              $region41: #{forward.13} parent=35 // loop_footer
                %s186 = sadd.s32 1, %s182
              $region42: #{forward.13} parent=35 // loop_footer_branch
                %181 = sbr.rel target = $region38
              $region43: #{forward.13} parent=35 // loop_exit
                _
            $region36: #{forward.13} parent=31 // pred_fallthru
              _
            // Predicated region
            $region44: #{forward.13} parent=31 // pred_check
              _
            $region45: #{forward.13} parent=31 // pred_check_branch
              %318 = sbr.rel target = $region47
            $region46: #{forward.13} parent=31 // pred_region
              _
            $region47: #{forward.13} parent=31 // pred_fallthru
              _
          $region32: #{forward.13} parent=27 // pred_fallthru
            _
          %319 = vnop
        $region28: #{forward.13} parent=23 // pred_fallthru
          _
      $region24: #{forward.13} parent=5 // pred_fallthru
        _
      %p320 = scmp.le.s32.totalorder 1, %s9
      %p321 = scmp.lt.s32.totalorder %s9, 3
      %p322 = pnand %p320, %p321
      %p323 = pneg %p322
      // Predicated region
      $region48: #{forward.13} parent=5 // pred_check
        _
      $region49: #{forward.13} parent=5 // pred_check_branch
        %325 = sbr.rel (%p322) target = $region51
      $region50: #{forward.13} parent=5 // pred_region
        %s326 = ssub.s32 %s9, 1
        %s327 = sand.u32 %s36, 1
        %s328 = sand.u32 %s36, 1
        %s329 = smul.addr %s328, 512
        %s330 = scalar_lea.vmem [#allocation5], %s329
        // Predicated region
        $region52: #{forward.13} parent=50 // pred_check
          %p331 = pneg %p49
        $region53: #{forward.13} parent=50 // pred_check_branch
          %333 = sbr.rel (%p331) target = $region55
        $region54: #{forward.13} parent=50 // pred_region
          _
        $region55: #{forward.13} parent=50 // pred_fallthru
          _
        %s334 = sand.u32 %s36, 1
        %s335 = sand.u32 %s36, 1
        %s336 = smul.addr %s335, 512
        %s337 = scalar_lea.vmem [#allocation5], %s336
        %p338 = pneg %p49
        %p339 = pneg %p46
        %s340 = smul.u32 16, %s18
        %p341 = scmp.lt.s32.totalorder %s340, 15
        %s342 = scalar_select %p341, %s340, 15
        %s343 = smul.addr %s342, 8
        %s344 = scalar_lea.vmem %s1, %s343
        %p345 = pneg %p75
        %p346 = pneg %p72
        %s347 = smul.u32 16, %s18
        %p348 = scmp.lt.s32.totalorder %s347, 15
        %s349 = scalar_select %p348, %s347, 15
        %s350 = smul.addr %s349, 8
        %s351 = scalar_lea.vmem %s2, %s350
        %p352 = pneg %p101
        %p353 = pneg %p98
        %p354 = pneg %p127
        %p355 = pneg %p124
        %s356 = smul.u32 16, %s18
        %p357 = scmp.lt.s32.totalorder %s356, 15
        %s358 = scalar_select %p357, %s356, 15
        %s359 = smul.addr %s358, 8
        %s360 = scalar_lea.vmem %s3, %s359
        %s361 = smul.u32 16, %s18
        %s362 = smul.u32 4, %s19
        %s363 = smul.u32 16, %s18
        %p364 = scmp.lt.s32.totalorder %s363, 15
        %s365 = scalar_select %p364, %s363, 15
        %s366 = smul.addr %s365, 8
        %s367 = scalar_lea.vmem %s1, %s366
        %s368 = smul.u32 16, %s18
        %s369 = smul.u32 16, %s18
        %p370 = scmp.lt.s32.totalorder %s369, 15
        %s371 = scalar_select %p370, %s369, 15
        %s372 = smul.addr %s371, 8
        %s373 = scalar_lea.vmem %s2, %s372
        %s374 = smul.u32 16, %s18
        %s375 = smul.u32 16, %s18
        %p376 = scmp.lt.s32.totalorder %s375, 15
        %s377 = scalar_select %p376, %s375, 15
        %s378 = smul.addr %s377, 8
        %s379 = scalar_lea.vmem %s3, %s378
        %s380 = smul.u32 16, %s18
        %p381 = scmp.eq.s32.totalorder %s19, 0
        // Predicated region
        $region56: #{forward.13} parent=50 // pred_check
          %p382 = pneg %p381
        $region57: #{forward.13} parent=50 // pred_check_branch
          %384 = sbr.rel (%p382) target = $region59
        $region58: #{forward.13} parent=50 // pred_region
          %vm385 = vcmask 7168
          %386 = vst.msk [vmem:[#allocation2] sm:$0xff] %vm385, -1e+30
          %387 = vst.msk [vmem:[#allocation2 + $0x8] sm:$0xff] %vm385, -1e+30
          %388 = vst.msk [vmem:[#allocation2 + $0x10] sm:$0xff] %vm385, -1e+30
          %389 = vst.msk [vmem:[#allocation2 + $0x18] sm:$0xff] %vm385, -1e+30
          %390 = vst.msk [vmem:[#allocation2 + $0x20] sm:$0xff] %vm385, -1e+30
          %391 = vst.msk [vmem:[#allocation2 + $0x28] sm:$0xff] %vm385, -1e+30
          %392 = vst.msk [vmem:[#allocation2 + $0x30] sm:$0xff] %vm385, -1e+30
          %393 = vst.msk [vmem:[#allocation2 + $0x38] sm:$0xff] %vm385, -1e+30
          %394 = vst.msk [vmem:[#allocation2 + $0x40] sm:$0xff] %vm385, -1e+30
          %395 = vst.msk [vmem:[#allocation2 + $0x48] sm:$0xff] %vm385, -1e+30
          %396 = vst.msk [vmem:[#allocation2 + $0x50] sm:$0xff] %vm385, -1e+30
          %397 = vst.msk [vmem:[#allocation2 + $0x58] sm:$0xff] %vm385, -1e+30
          %398 = vst.msk [vmem:[#allocation2 + $0x60] sm:$0xff] %vm385, -1e+30
          %399 = vst.msk [vmem:[#allocation2 + $0x68] sm:$0xff] %vm385, -1e+30
          %400 = vst.msk [vmem:[#allocation2 + $0x70] sm:$0xff] %vm385, -1e+30
          %401 = vst.msk [vmem:[#allocation2 + $0x78] sm:$0xff] %vm385, -1e+30
          %402 = vst.msk [vmem:[#allocation3] sm:$0xff] %vm385, 0.0
          %403 = vst.msk [vmem:[#allocation3 + $0x8] sm:$0xff] %vm385, 0.0
          %404 = vst.msk [vmem:[#allocation3 + $0x10] sm:$0xff] %vm385, 0.0
          %405 = vst.msk [vmem:[#allocation3 + $0x18] sm:$0xff] %vm385, 0.0
          %406 = vst.msk [vmem:[#allocation3 + $0x20] sm:$0xff] %vm385, 0.0
          %407 = vst.msk [vmem:[#allocation3 + $0x28] sm:$0xff] %vm385, 0.0
          %408 = vst.msk [vmem:[#allocation3 + $0x30] sm:$0xff] %vm385, 0.0
          %409 = vst.msk [vmem:[#allocation3 + $0x38] sm:$0xff] %vm385, 0.0
          %410 = vst.msk [vmem:[#allocation3 + $0x40] sm:$0xff] %vm385, 0.0
          %411 = vst.msk [vmem:[#allocation3 + $0x48] sm:$0xff] %vm385, 0.0
          %412 = vst.msk [vmem:[#allocation3 + $0x50] sm:$0xff] %vm385, 0.0
          %413 = vst.msk [vmem:[#allocation3 + $0x58] sm:$0xff] %vm385, 0.0
          %414 = vst.msk [vmem:[#allocation3 + $0x60] sm:$0xff] %vm385, 0.0
          %415 = vst.msk [vmem:[#allocation3 + $0x68] sm:$0xff] %vm385, 0.0
          %416 = vst.msk [vmem:[#allocation3 + $0x70] sm:$0xff] %vm385, 0.0
          %417 = vst.msk [vmem:[#allocation3 + $0x78] sm:$0xff] %vm385, 0.0
          %418 = vst.msk [vmem:[#allocation4] sm:$0xff] %vm385, 0.0
          %419 = vst.msk [vmem:[#allocation4 + $0x8] sm:$0xff] %vm385, 0.0
          %420 = vst.msk [vmem:[#allocation4 + $0x10] sm:$0xff] %vm385, 0.0
          %421 = vst.msk [vmem:[#allocation4 + $0x18] sm:$0xff] %vm385, 0.0
          %422 = vst.msk [vmem:[#allocation4 + $0x20] sm:$0xff] %vm385, 0.0
          %423 = vst.msk [vmem:[#allocation4 + $0x28] sm:$0xff] %vm385, 0.0
          %424 = vst.msk [vmem:[#allocation4 + $0x30] sm:$0xff] %vm385, 0.0
          %425 = vst.msk [vmem:[#allocation4 + $0x38] sm:$0xff] %vm385, 0.0
          %426 = vst.msk [vmem:[#allocation4 + $0x40] sm:$0xff] %vm385, 0.0
          %427 = vst.msk [vmem:[#allocation4 + $0x48] sm:$0xff] %vm385, 0.0
          %428 = vst.msk [vmem:[#allocation4 + $0x50] sm:$0xff] %vm385, 0.0
          %429 = vst.msk [vmem:[#allocation4 + $0x58] sm:$0xff] %vm385, 0.0
          %430 = vst.msk [vmem:[#allocation4 + $0x60] sm:$0xff] %vm385, 0.0
          %431 = vst.msk [vmem:[#allocation4 + $0x68] sm:$0xff] %vm385, 0.0
          %432 = vst.msk [vmem:[#allocation4 + $0x70] sm:$0xff] %vm385, 0.0
          %433 = vst.msk [vmem:[#allocation4 + $0x78] sm:$0xff] %vm385, 0.0
        $region59: #{forward.13} parent=50 // pred_fallthru
          _
        %v434 = vld [vmem:[%s330] sm:$0xff]
        %v435 = vld [vmem:[%s330 + $0x8] sm:$0xff]
        %v436 = vld [vmem:[%s330 + $0x10] sm:$0xff]
        %v437 = vld [vmem:[%s330 + $0x18] sm:$0xff]
        %v438 = vld [vmem:[%s330 + $0x20] sm:$0xff]
        %v439 = vld [vmem:[%s330 + $0x28] sm:$0xff]
        %v440 = vld [vmem:[%s330 + $0x30] sm:$0xff]
        %v441 = vld [vmem:[%s330 + $0x38] sm:$0xff]
        %v442 = vld [vmem:[%s330 + $0x40] sm:$0xff]
        %v443 = vld [vmem:[%s330 + $0x48] sm:$0xff]
        %v444 = vld [vmem:[%s330 + $0x50] sm:$0xff]
        %v445 = vld [vmem:[%s330 + $0x58] sm:$0xff]
        %v446 = vld [vmem:[%s330 + $0x60] sm:$0xff]
        %v447 = vld [vmem:[%s330 + $0x68] sm:$0xff]
        %v448 = vld [vmem:[%s330 + $0x70] sm:$0xff]
        %v449 = vld [vmem:[%s330 + $0x78] sm:$0xff]
        %v450 = vld [vmem:[%s330 + $0x80] sm:$0xff]
        %v451 = vld [vmem:[%s330 + $0x88] sm:$0xff]
        %v452 = vld [vmem:[%s330 + $0x90] sm:$0xff]
        %v453 = vld [vmem:[%s330 + $0x98] sm:$0xff]
        %v454 = vld [vmem:[%s330 + $0xa0] sm:$0xff]
        %v455 = vld [vmem:[%s330 + $0xa8] sm:$0xff]
        %v456 = vld [vmem:[%s330 + $0xb0] sm:$0xff]
        %v457 = vld [vmem:[%s330 + $0xb8] sm:$0xff]
        %v458 = vld [vmem:[%s330 + $0xc0] sm:$0xff]
        %v459 = vld [vmem:[%s330 + $0xc8] sm:$0xff]
        %v460 = vld [vmem:[%s330 + $0xd0] sm:$0xff]
        %v461 = vld [vmem:[%s330 + $0xd8] sm:$0xff]
        %v462 = vld [vmem:[%s330 + $0xe0] sm:$0xff]
        %v463 = vld [vmem:[%s330 + $0xe8] sm:$0xff]
        %v464 = vld [vmem:[%s330 + $0xf0] sm:$0xff]
        %v465 = vld [vmem:[%s330 + $0xf8] sm:$0xff]
        %v466 = vld [vmem:[%s330 + $0x100] sm:$0xff]
        %v467 = vld [vmem:[%s330 + $0x108] sm:$0xff]
        %v468 = vld [vmem:[%s330 + $0x110] sm:$0xff]
        %v469 = vld [vmem:[%s330 + $0x118] sm:$0xff]
        %v470 = vld [vmem:[%s330 + $0x120] sm:$0xff]
        %v471 = vld [vmem:[%s330 + $0x128] sm:$0xff]
        %v472 = vld [vmem:[%s330 + $0x130] sm:$0xff]
        %v473 = vld [vmem:[%s330 + $0x138] sm:$0xff]
        %v474 = vld [vmem:[%s330 + $0x140] sm:$0xff]
        %v475 = vld [vmem:[%s330 + $0x148] sm:$0xff]
        %v476 = vld [vmem:[%s330 + $0x150] sm:$0xff]
        %v477 = vld [vmem:[%s330 + $0x158] sm:$0xff]
        %v478 = vld [vmem:[%s330 + $0x160] sm:$0xff]
        %v479 = vld [vmem:[%s330 + $0x168] sm:$0xff]
        %v480 = vld [vmem:[%s330 + $0x170] sm:$0xff]
        %v481 = vld [vmem:[%s330 + $0x178] sm:$0xff]
        %v482 = vld [vmem:[%s330 + $0x180] sm:$0xff]
        %v483 = vld [vmem:[%s330 + $0x188] sm:$0xff]
        %v484 = vld [vmem:[%s330 + $0x190] sm:$0xff]
        %v485 = vld [vmem:[%s330 + $0x198] sm:$0xff]
        %v486 = vld [vmem:[%s330 + $0x1a0] sm:$0xff]
        %v487 = vld [vmem:[%s330 + $0x1a8] sm:$0xff]
        %v488 = vld [vmem:[%s330 + $0x1b0] sm:$0xff]
        %v489 = vld [vmem:[%s330 + $0x1b8] sm:$0xff]
        %v490 = vld [vmem:[%s330 + $0x1c0] sm:$0xff]
        %v491 = vld [vmem:[%s330 + $0x1c8] sm:$0xff]
        %v492 = vld [vmem:[%s330 + $0x1d0] sm:$0xff]
        %v493 = vld [vmem:[%s330 + $0x1d8] sm:$0xff]
        %v494 = vld [vmem:[%s330 + $0x1e0] sm:$0xff]
        %v495 = vld [vmem:[%s330 + $0x1e8] sm:$0xff]
        %v496 = vld [vmem:[%s330 + $0x1f0] sm:$0xff]
        %v497 = vld [vmem:[%s330 + $0x1f8] sm:$0xff]
        %v498 = vlaneseq
        %v499 = vand.u32 %v498, 127
        %v500 = vadd.s32 %v499, 128
        %v501 = vadd.s32 %v499, 256
        %v502 = vadd.s32 %v499, 384
        %s503 = smul.u32 %s19, 512
        %v504 = vstv %s503
        %v505 = vadd.s32 %v499, %v504
        %v506 = vadd.s32 %v500, %v504
        %v507 = vadd.s32 %v501, %v504
        %v508 = vadd.s32 %v502, %v504
        %v509 = vld [vmem:[#allocation4] sm:$0xff]
        %v510 = vld [vmem:[#allocation4 + $0x8] sm:$0xff]
        %v511 = vld [vmem:[#allocation4 + $0x10] sm:$0xff]
        %v512 = vld [vmem:[#allocation4 + $0x18] sm:$0xff]
        %v513 = vld [vmem:[#allocation4 + $0x20] sm:$0xff]
        %v514 = vld [vmem:[#allocation4 + $0x28] sm:$0xff]
        %v515 = vld [vmem:[#allocation4 + $0x30] sm:$0xff]
        %v516 = vld [vmem:[#allocation4 + $0x38] sm:$0xff]
        %v517 = vld [vmem:[#allocation4 + $0x40] sm:$0xff]
        %v518 = vld [vmem:[#allocation4 + $0x48] sm:$0xff]
        %v519 = vld [vmem:[#allocation4 + $0x50] sm:$0xff]
        %v520 = vld [vmem:[#allocation4 + $0x58] sm:$0xff]
        %v521 = vld [vmem:[#allocation4 + $0x60] sm:$0xff]
        %v522 = vld [vmem:[#allocation4 + $0x68] sm:$0xff]
        %v523 = vld [vmem:[#allocation4 + $0x70] sm:$0xff]
        %v524 = vld [vmem:[#allocation4 + $0x78] sm:$0xff]
        %v525 = vld [vmem:[%s367] sm:$0xff]
        %v526 = vld [vmem:[%s367 + $0x8] sm:$0xff]
        %v527 = vld [vmem:[%s367 + $0x10] sm:$0xff]
        %v528 = vld [vmem:[%s367 + $0x18] sm:$0xff]
        %v529 = vld [vmem:[%s367 + $0x20] sm:$0xff]
        %v530 = vld [vmem:[%s367 + $0x28] sm:$0xff]
        %v531 = vld [vmem:[%s367 + $0x30] sm:$0xff]
        %v532 = vld [vmem:[%s367 + $0x38] sm:$0xff]
        %v533 = vld [vmem:[%s367 + $0x40] sm:$0xff]
        %v534 = vld [vmem:[%s367 + $0x48] sm:$0xff]
        %v535 = vld [vmem:[%s367 + $0x50] sm:$0xff]
        %v536 = vld [vmem:[%s367 + $0x58] sm:$0xff]
        %v537 = vld [vmem:[%s367 + $0x60] sm:$0xff]
        %v538 = vld [vmem:[%s367 + $0x68] sm:$0xff]
        %v539 = vld [vmem:[%s367 + $0x70] sm:$0xff]
        %v540 = vld [vmem:[%s367 + $0x78] sm:$0xff]
        %541 = vset.pattern.permute.xlu0 0
        %542 = vperm.xlu0 %541, %v525
        %v543 = vpop.permute.xlu0 %542
        %544 = vset.pattern.permute.xlu0 0
        %545 = vperm.xlu0 %544, %v526
        %v546 = vpop.permute.xlu0 %545
        %547 = vset.pattern.permute.xlu0 0
        %548 = vperm.xlu0 %547, %v527
        %v549 = vpop.permute.xlu0 %548
        %550 = vset.pattern.permute.xlu0 0
        %551 = vperm.xlu0 %550, %v528
        %v552 = vpop.permute.xlu0 %551
        %553 = vset.pattern.permute.xlu0 0
        %554 = vperm.xlu0 %553, %v529
        %v555 = vpop.permute.xlu0 %554
        %556 = vset.pattern.permute.xlu0 0
        %557 = vperm.xlu0 %556, %v530
        %v558 = vpop.permute.xlu0 %557
        %559 = vset.pattern.permute.xlu0 0
        %560 = vperm.xlu0 %559, %v531
        %v561 = vpop.permute.xlu0 %560
        %562 = vset.pattern.permute.xlu0 0
        %563 = vperm.xlu0 %562, %v532
        %v564 = vpop.permute.xlu0 %563
        %565 = vset.pattern.permute.xlu0 0
        %566 = vperm.xlu0 %565, %v533
        %v567 = vpop.permute.xlu0 %566
        %568 = vset.pattern.permute.xlu0 0
        %569 = vperm.xlu0 %568, %v534
        %v570 = vpop.permute.xlu0 %569
        %571 = vset.pattern.permute.xlu0 0
        %572 = vperm.xlu0 %571, %v535
        %v573 = vpop.permute.xlu0 %572
        %574 = vset.pattern.permute.xlu0 0
        %575 = vperm.xlu0 %574, %v536
        %v576 = vpop.permute.xlu0 %575
        %577 = vset.pattern.permute.xlu0 0
        %578 = vperm.xlu0 %577, %v537
        %v579 = vpop.permute.xlu0 %578
        %580 = vset.pattern.permute.xlu0 0
        %581 = vperm.xlu0 %580, %v538
        %v582 = vpop.permute.xlu0 %581
        %583 = vset.pattern.permute.xlu0 0
        %584 = vperm.xlu0 %583, %v539
        %v585 = vpop.permute.xlu0 %584
        %586 = vset.pattern.permute.xlu0 0
        %587 = vperm.xlu0 %586, %v540
        %v588 = vpop.permute.xlu0 %587
        %vm589 = vcmp.eq.s32.totalorder %v505, %v543
        %vm590 = vcmp.eq.s32.totalorder %v506, %v543
        %vm591 = vcmp.eq.s32.totalorder %v507, %v543
        %vm592 = vcmp.eq.s32.totalorder %v508, %v543
        %vm593 = vcmp.eq.s32.totalorder %v505, %v546
        %vm594 = vcmp.eq.s32.totalorder %v506, %v546
        %vm595 = vcmp.eq.s32.totalorder %v507, %v546
        %vm596 = vcmp.eq.s32.totalorder %v508, %v546
        %vm597 = vcmp.eq.s32.totalorder %v505, %v549
        %vm598 = vcmp.eq.s32.totalorder %v506, %v549
        %vm599 = vcmp.eq.s32.totalorder %v507, %v549
        %vm600 = vcmp.eq.s32.totalorder %v508, %v549
        %vm601 = vcmp.eq.s32.totalorder %v505, %v552
        %vm602 = vcmp.eq.s32.totalorder %v506, %v552
        %vm603 = vcmp.eq.s32.totalorder %v507, %v552
        %vm604 = vcmp.eq.s32.totalorder %v508, %v552
        %vm605 = vcmp.eq.s32.totalorder %v505, %v555
        %vm606 = vcmp.eq.s32.totalorder %v506, %v555
        %vm607 = vcmp.eq.s32.totalorder %v507, %v555
        %vm608 = vcmp.eq.s32.totalorder %v508, %v555
        %vm609 = vcmp.eq.s32.totalorder %v505, %v558
        %vm610 = vcmp.eq.s32.totalorder %v506, %v558
        %vm611 = vcmp.eq.s32.totalorder %v507, %v558
        %vm612 = vcmp.eq.s32.totalorder %v508, %v558
        %vm613 = vcmp.eq.s32.totalorder %v505, %v561
        %vm614 = vcmp.eq.s32.totalorder %v506, %v561
        %vm615 = vcmp.eq.s32.totalorder %v507, %v561
        %vm616 = vcmp.eq.s32.totalorder %v508, %v561
        %vm617 = vcmp.eq.s32.totalorder %v505, %v564
        %vm618 = vcmp.eq.s32.totalorder %v506, %v564
        %vm619 = vcmp.eq.s32.totalorder %v507, %v564
        %vm620 = vcmp.eq.s32.totalorder %v508, %v564
        %vm621 = vcmp.eq.s32.totalorder %v505, %v567
        %vm622 = vcmp.eq.s32.totalorder %v506, %v567
        %vm623 = vcmp.eq.s32.totalorder %v507, %v567
        %vm624 = vcmp.eq.s32.totalorder %v508, %v567
        %vm625 = vcmp.eq.s32.totalorder %v505, %v570
        %vm626 = vcmp.eq.s32.totalorder %v506, %v570
        %vm627 = vcmp.eq.s32.totalorder %v507, %v570
        %vm628 = vcmp.eq.s32.totalorder %v508, %v570
        %vm629 = vcmp.eq.s32.totalorder %v505, %v573
        %vm630 = vcmp.eq.s32.totalorder %v506, %v573
        %vm631 = vcmp.eq.s32.totalorder %v507, %v573
        %vm632 = vcmp.eq.s32.totalorder %v508, %v573
        %vm633 = vcmp.eq.s32.totalorder %v505, %v576
        %vm634 = vcmp.eq.s32.totalorder %v506, %v576
        %vm635 = vcmp.eq.s32.totalorder %v507, %v576
        %vm636 = vcmp.eq.s32.totalorder %v508, %v576
        %vm637 = vcmp.eq.s32.totalorder %v505, %v579
        %vm638 = vcmp.eq.s32.totalorder %v506, %v579
        %vm639 = vcmp.eq.s32.totalorder %v507, %v579
        %vm640 = vcmp.eq.s32.totalorder %v508, %v579
        %vm641 = vcmp.eq.s32.totalorder %v505, %v582
        %vm642 = vcmp.eq.s32.totalorder %v506, %v582
        %vm643 = vcmp.eq.s32.totalorder %v507, %v582
        %vm644 = vcmp.eq.s32.totalorder %v508, %v582
        %vm645 = vcmp.eq.s32.totalorder %v505, %v585
        %vm646 = vcmp.eq.s32.totalorder %v506, %v585
        %vm647 = vcmp.eq.s32.totalorder %v507, %v585
        %vm648 = vcmp.eq.s32.totalorder %v508, %v585
        %vm649 = vcmp.eq.s32.totalorder %v505, %v588
        %vm650 = vcmp.eq.s32.totalorder %v506, %v588
        %vm651 = vcmp.eq.s32.totalorder %v507, %v588
        %vm652 = vcmp.eq.s32.totalorder %v508, %v588
        %v653 = vsel %vm589, %v434, 0.0
        %v654 = vsel %vm590, %v435, 0.0
        %v655 = vsel %vm591, %v436, 0.0
        %v656 = vsel %vm592, %v437, 0.0
        %v657 = vsel %vm593, %v438, 0.0
        %v658 = vsel %vm594, %v439, 0.0
        %v659 = vsel %vm595, %v440, 0.0
        %v660 = vsel %vm596, %v441, 0.0
        %v661 = vsel %vm597, %v442, 0.0
        %v662 = vsel %vm598, %v443, 0.0
        %v663 = vsel %vm599, %v444, 0.0
        %v664 = vsel %vm600, %v445, 0.0
        %v665 = vsel %vm601, %v446, 0.0
        %v666 = vsel %vm602, %v447, 0.0
        %v667 = vsel %vm603, %v448, 0.0
        %v668 = vsel %vm604, %v449, 0.0
        %v669 = vsel %vm605, %v450, 0.0
        %v670 = vsel %vm606, %v451, 0.0
        %v671 = vsel %vm607, %v452, 0.0
        %v672 = vsel %vm608, %v453, 0.0
        %v673 = vsel %vm609, %v454, 0.0
        %v674 = vsel %vm610, %v455, 0.0
        %v675 = vsel %vm611, %v456, 0.0
        %v676 = vsel %vm612, %v457, 0.0
        %v677 = vsel %vm613, %v458, 0.0
        %v678 = vsel %vm614, %v459, 0.0
        %v679 = vsel %vm615, %v460, 0.0
        %v680 = vsel %vm616, %v461, 0.0
        %v681 = vsel %vm617, %v462, 0.0
        %v682 = vsel %vm618, %v463, 0.0
        %v683 = vsel %vm619, %v464, 0.0
        %v684 = vsel %vm620, %v465, 0.0
        %v685 = vsel %vm621, %v466, 0.0
        %v686 = vsel %vm622, %v467, 0.0
        %v687 = vsel %vm623, %v468, 0.0
        %v688 = vsel %vm624, %v469, 0.0
        %v689 = vsel %vm625, %v470, 0.0
        %v690 = vsel %vm626, %v471, 0.0
        %v691 = vsel %vm627, %v472, 0.0
        %v692 = vsel %vm628, %v473, 0.0
        %v693 = vsel %vm629, %v474, 0.0
        %v694 = vsel %vm630, %v475, 0.0
        %v695 = vsel %vm631, %v476, 0.0
        %v696 = vsel %vm632, %v477, 0.0
        %v697 = vsel %vm633, %v478, 0.0
        %v698 = vsel %vm634, %v479, 0.0
        %v699 = vsel %vm635, %v480, 0.0
        %v700 = vsel %vm636, %v481, 0.0
        %v701 = vsel %vm637, %v482, 0.0
        %v702 = vsel %vm638, %v483, 0.0
        %v703 = vsel %vm639, %v484, 0.0
        %v704 = vsel %vm640, %v485, 0.0
        %v705 = vsel %vm641, %v486, 0.0
        %v706 = vsel %vm642, %v487, 0.0
        %v707 = vsel %vm643, %v488, 0.0
        %v708 = vsel %vm644, %v489, 0.0
        %v709 = vsel %vm645, %v490, 0.0
        %v710 = vsel %vm646, %v491, 0.0
        %v711 = vsel %vm647, %v492, 0.0
        %v712 = vsel %vm648, %v493, 0.0
        %v713 = vsel %vm649, %v494, 0.0
        %v714 = vsel %vm650, %v495, 0.0
        %v715 = vsel %vm651, %v496, 0.0
        %v716 = vsel %vm652, %v497, 0.0
        %v717 = vadd.f32 %v653, %v654
        %v718 = vadd.f32 %v717, %v655
        %v719 = vadd.f32 %v718, %v656
        %720 = vadd.xlane.f32.xlu0 %v719
        %v721 = vpop.xlane.xlu0 %720
        %v722 = vadd.f32 %v657, %v658
        %v723 = vadd.f32 %v722, %v659
        %v724 = vadd.f32 %v723, %v660
        %725 = vadd.xlane.f32.xlu0 %v724
        %v726 = vpop.xlane.xlu0 %725
        %v727 = vadd.f32 %v661, %v662
        %v728 = vadd.f32 %v727, %v663
        %v729 = vadd.f32 %v728, %v664
        %730 = vadd.xlane.f32.xlu0 %v729
        %v731 = vpop.xlane.xlu0 %730
        %v732 = vadd.f32 %v665, %v666
        %v733 = vadd.f32 %v732, %v667
        %v734 = vadd.f32 %v733, %v668
        %735 = vadd.xlane.f32.xlu0 %v734
        %v736 = vpop.xlane.xlu0 %735
        %v737 = vadd.f32 %v669, %v670
        %v738 = vadd.f32 %v737, %v671
        %v739 = vadd.f32 %v738, %v672
        %740 = vadd.xlane.f32.xlu0 %v739
        %v741 = vpop.xlane.xlu0 %740
        %v742 = vadd.f32 %v673, %v674
        %v743 = vadd.f32 %v742, %v675
        %v744 = vadd.f32 %v743, %v676
        %745 = vadd.xlane.f32.xlu0 %v744
        %v746 = vpop.xlane.xlu0 %745
        %v747 = vadd.f32 %v677, %v678
        %v748 = vadd.f32 %v747, %v679
        %v749 = vadd.f32 %v748, %v680
        %750 = vadd.xlane.f32.xlu0 %v749
        %v751 = vpop.xlane.xlu0 %750
        %v752 = vadd.f32 %v681, %v682
        %v753 = vadd.f32 %v752, %v683
        %v754 = vadd.f32 %v753, %v684
        %755 = vadd.xlane.f32.xlu0 %v754
        %v756 = vpop.xlane.xlu0 %755
        %v757 = vadd.f32 %v685, %v686
        %v758 = vadd.f32 %v757, %v687
        %v759 = vadd.f32 %v758, %v688
        %760 = vadd.xlane.f32.xlu0 %v759
        %v761 = vpop.xlane.xlu0 %760
        %v762 = vadd.f32 %v689, %v690
        %v763 = vadd.f32 %v762, %v691
        %v764 = vadd.f32 %v763, %v692
        %765 = vadd.xlane.f32.xlu0 %v764
        %v766 = vpop.xlane.xlu0 %765
        %v767 = vadd.f32 %v693, %v694
        %v768 = vadd.f32 %v767, %v695
        %v769 = vadd.f32 %v768, %v696
        %770 = vadd.xlane.f32.xlu0 %v769
        %v771 = vpop.xlane.xlu0 %770
        %v772 = vadd.f32 %v697, %v698
        %v773 = vadd.f32 %v772, %v699
        %v774 = vadd.f32 %v773, %v700
        %775 = vadd.xlane.f32.xlu0 %v774
        %v776 = vpop.xlane.xlu0 %775
        %v777 = vadd.f32 %v701, %v702
        %v778 = vadd.f32 %v777, %v703
        %v779 = vadd.f32 %v778, %v704
        %780 = vadd.xlane.f32.xlu0 %v779
        %v781 = vpop.xlane.xlu0 %780
        %v782 = vadd.f32 %v705, %v706
        %v783 = vadd.f32 %v782, %v707
        %v784 = vadd.f32 %v783, %v708
        %785 = vadd.xlane.f32.xlu0 %v784
        %v786 = vpop.xlane.xlu0 %785
        %v787 = vadd.f32 %v709, %v710
        %v788 = vadd.f32 %v787, %v711
        %v789 = vadd.f32 %v788, %v712
        %790 = vadd.xlane.f32.xlu0 %v789
        %v791 = vpop.xlane.xlu0 %790
        %v792 = vadd.f32 %v713, %v714
        %v793 = vadd.f32 %v792, %v715
        %v794 = vadd.f32 %v793, %v716
        %795 = vadd.xlane.f32.xlu0 %v794
        %v796 = vpop.xlane.xlu0 %795
        %v797 = vadd.f32 %v509, %v721
        %v798 = vadd.f32 %v510, %v726
        %v799 = vadd.f32 %v511, %v731
        %v800 = vadd.f32 %v512, %v736
        %v801 = vadd.f32 %v513, %v741
        %v802 = vadd.f32 %v514, %v746
        %v803 = vadd.f32 %v515, %v751
        %v804 = vadd.f32 %v516, %v756
        %v805 = vadd.f32 %v517, %v761
        %v806 = vadd.f32 %v518, %v766
        %v807 = vadd.f32 %v519, %v771
        %v808 = vadd.f32 %v520, %v776
        %v809 = vadd.f32 %v521, %v781
        %v810 = vadd.f32 %v522, %v786
        %v811 = vadd.f32 %v523, %v791
        %v812 = vadd.f32 %v524, %v796
        %vm813 = vcmask 7168
        %814 = vst.msk [vmem:[#allocation4] sm:$0xff] %vm813, %v797
        %815 = vst.msk [vmem:[#allocation4 + $0x8] sm:$0xff] %vm813, %v798
        %816 = vst.msk [vmem:[#allocation4 + $0x10] sm:$0xff] %vm813, %v799
        %817 = vst.msk [vmem:[#allocation4 + $0x18] sm:$0xff] %vm813, %v800
        %818 = vst.msk [vmem:[#allocation4 + $0x20] sm:$0xff] %vm813, %v801
        %819 = vst.msk [vmem:[#allocation4 + $0x28] sm:$0xff] %vm813, %v802
        %820 = vst.msk [vmem:[#allocation4 + $0x30] sm:$0xff] %vm813, %v803
        %821 = vst.msk [vmem:[#allocation4 + $0x38] sm:$0xff] %vm813, %v804
        %822 = vst.msk [vmem:[#allocation4 + $0x40] sm:$0xff] %vm813, %v805
        %823 = vst.msk [vmem:[#allocation4 + $0x48] sm:$0xff] %vm813, %v806
        %824 = vst.msk [vmem:[#allocation4 + $0x50] sm:$0xff] %vm813, %v807
        %825 = vst.msk [vmem:[#allocation4 + $0x58] sm:$0xff] %vm813, %v808
        %826 = vst.msk [vmem:[#allocation4 + $0x60] sm:$0xff] %vm813, %v809
        %827 = vst.msk [vmem:[#allocation4 + $0x68] sm:$0xff] %vm813, %v810
        %828 = vst.msk [vmem:[#allocation4 + $0x70] sm:$0xff] %vm813, %v811
        %829 = vst.msk [vmem:[#allocation4 + $0x78] sm:$0xff] %vm813, %v812
        %v830 = vld [vmem:[#allocation2] sm:$0xff]
        %v831 = vld [vmem:[#allocation2 + $0x8] sm:$0xff]
        %v832 = vld [vmem:[#allocation2 + $0x10] sm:$0xff]
        %v833 = vld [vmem:[#allocation2 + $0x18] sm:$0xff]
        %v834 = vld [vmem:[#allocation2 + $0x20] sm:$0xff]
        %v835 = vld [vmem:[#allocation2 + $0x28] sm:$0xff]
        %v836 = vld [vmem:[#allocation2 + $0x30] sm:$0xff]
        %v837 = vld [vmem:[#allocation2 + $0x38] sm:$0xff]
        %v838 = vld [vmem:[#allocation2 + $0x40] sm:$0xff]
        %v839 = vld [vmem:[#allocation2 + $0x48] sm:$0xff]
        %v840 = vld [vmem:[#allocation2 + $0x50] sm:$0xff]
        %v841 = vld [vmem:[#allocation2 + $0x58] sm:$0xff]
        %v842 = vld [vmem:[#allocation2 + $0x60] sm:$0xff]
        %v843 = vld [vmem:[#allocation2 + $0x68] sm:$0xff]
        %v844 = vld [vmem:[#allocation2 + $0x70] sm:$0xff]
        %v845 = vld [vmem:[#allocation2 + $0x78] sm:$0xff]
        %v846 = vmax.f32 %v434, %v435
        %v847 = vmax.f32 %v846, %v436
        %v848 = vmax.f32 %v847, %v437
        %849 = vmax.xlane.f32.xlu0 %v848
        %v850 = vpop.xlane.xlu0 %849
        %v851 = vmax.f32 %v438, %v439
        %v852 = vmax.f32 %v851, %v440
        %v853 = vmax.f32 %v852, %v441
        %854 = vmax.xlane.f32.xlu0 %v853
        %v855 = vpop.xlane.xlu0 %854
        %v856 = vmax.f32 %v442, %v443
        %v857 = vmax.f32 %v856, %v444
        %v858 = vmax.f32 %v857, %v445
        %859 = vmax.xlane.f32.xlu0 %v858
        %v860 = vpop.xlane.xlu0 %859
        %v861 = vmax.f32 %v446, %v447
        %v862 = vmax.f32 %v861, %v448
        %v863 = vmax.f32 %v862, %v449
        %864 = vmax.xlane.f32.xlu0 %v863
        %v865 = vpop.xlane.xlu0 %864
        %v866 = vmax.f32 %v450, %v451
        %v867 = vmax.f32 %v866, %v452
        %v868 = vmax.f32 %v867, %v453
        %869 = vmax.xlane.f32.xlu0 %v868
        %v870 = vpop.xlane.xlu0 %869
        %v871 = vmax.f32 %v454, %v455
        %v872 = vmax.f32 %v871, %v456
        %v873 = vmax.f32 %v872, %v457
        %874 = vmax.xlane.f32.xlu0 %v873
        %v875 = vpop.xlane.xlu0 %874
        %v876 = vmax.f32 %v458, %v459
        %v877 = vmax.f32 %v876, %v460
        %v878 = vmax.f32 %v877, %v461
        %879 = vmax.xlane.f32.xlu0 %v878
        %v880 = vpop.xlane.xlu0 %879
        %v881 = vmax.f32 %v462, %v463
        %v882 = vmax.f32 %v881, %v464
        %v883 = vmax.f32 %v882, %v465
        %884 = vmax.xlane.f32.xlu0 %v883
        %v885 = vpop.xlane.xlu0 %884
        %v886 = vmax.f32 %v466, %v467
        %v887 = vmax.f32 %v886, %v468
        %v888 = vmax.f32 %v887, %v469
        %889 = vmax.xlane.f32.xlu0 %v888
        %v890 = vpop.xlane.xlu0 %889
        %v891 = vmax.f32 %v470, %v471
        %v892 = vmax.f32 %v891, %v472
        %v893 = vmax.f32 %v892, %v473
        %894 = vmax.xlane.f32.xlu0 %v893
        %v895 = vpop.xlane.xlu0 %894
        %v896 = vmax.f32 %v474, %v475
        %v897 = vmax.f32 %v896, %v476
        %v898 = vmax.f32 %v897, %v477
        %899 = vmax.xlane.f32.xlu0 %v898
        %v900 = vpop.xlane.xlu0 %899
        %v901 = vmax.f32 %v478, %v479
        %v902 = vmax.f32 %v901, %v480
        %v903 = vmax.f32 %v902, %v481
        %904 = vmax.xlane.f32.xlu0 %v903
        %v905 = vpop.xlane.xlu0 %904
        %v906 = vmax.f32 %v482, %v483
        %v907 = vmax.f32 %v906, %v484
        %v908 = vmax.f32 %v907, %v485
        %909 = vmax.xlane.f32.xlu0 %v908
        %v910 = vpop.xlane.xlu0 %909
        %v911 = vmax.f32 %v486, %v487
        %v912 = vmax.f32 %v911, %v488
        %v913 = vmax.f32 %v912, %v489
        %914 = vmax.xlane.f32.xlu0 %v913
        %v915 = vpop.xlane.xlu0 %914
        %v916 = vmax.f32 %v490, %v491
        %v917 = vmax.f32 %v916, %v492
        %v918 = vmax.f32 %v917, %v493
        %919 = vmax.xlane.f32.xlu0 %v918
        %v920 = vpop.xlane.xlu0 %919
        %v921 = vmax.f32 %v494, %v495
        %v922 = vmax.f32 %v921, %v496
        %v923 = vmax.f32 %v922, %v497
        %924 = vmax.xlane.f32.xlu0 %v923
        %v925 = vpop.xlane.xlu0 %924
        %v926 = vmax.f32 %v830, %v850
        %v927 = vmax.f32 %v831, %v855
        %v928 = vmax.f32 %v832, %v860
        %v929 = vmax.f32 %v833, %v865
        %v930 = vmax.f32 %v834, %v870
        %v931 = vmax.f32 %v835, %v875
        %v932 = vmax.f32 %v836, %v880
        %v933 = vmax.f32 %v837, %v885
        %v934 = vmax.f32 %v838, %v890
        %v935 = vmax.f32 %v839, %v895
        %v936 = vmax.f32 %v840, %v900
        %v937 = vmax.f32 %v841, %v905
        %v938 = vmax.f32 %v842, %v910
        %v939 = vmax.f32 %v843, %v915
        %v940 = vmax.f32 %v844, %v920
        %v941 = vmax.f32 %v845, %v925
        %v942 = vld [vmem:[#allocation3] sm:$0xff]
        %v943 = vld [vmem:[#allocation3 + $0x8] sm:$0xff]
        %v944 = vld [vmem:[#allocation3 + $0x10] sm:$0xff]
        %v945 = vld [vmem:[#allocation3 + $0x18] sm:$0xff]
        %v946 = vld [vmem:[#allocation3 + $0x20] sm:$0xff]
        %v947 = vld [vmem:[#allocation3 + $0x28] sm:$0xff]
        %v948 = vld [vmem:[#allocation3 + $0x30] sm:$0xff]
        %v949 = vld [vmem:[#allocation3 + $0x38] sm:$0xff]
        %v950 = vld [vmem:[#allocation3 + $0x40] sm:$0xff]
        %v951 = vld [vmem:[#allocation3 + $0x48] sm:$0xff]
        %v952 = vld [vmem:[#allocation3 + $0x50] sm:$0xff]
        %v953 = vld [vmem:[#allocation3 + $0x58] sm:$0xff]
        %v954 = vld [vmem:[#allocation3 + $0x60] sm:$0xff]
        %v955 = vld [vmem:[#allocation3 + $0x68] sm:$0xff]
        %v956 = vld [vmem:[#allocation3 + $0x70] sm:$0xff]
        %v957 = vld [vmem:[#allocation3 + $0x78] sm:$0xff]
        %v958 = vsub.f32 %v830, %v926
        %v959 = vsub.f32 %v831, %v927
        %v960 = vsub.f32 %v832, %v928
        %v961 = vsub.f32 %v833, %v929
        %v962 = vsub.f32 %v834, %v930
        %v963 = vsub.f32 %v835, %v931
        %v964 = vsub.f32 %v836, %v932
        %v965 = vsub.f32 %v837, %v933
        %v966 = vsub.f32 %v838, %v934
        %v967 = vsub.f32 %v839, %v935
        %v968 = vsub.f32 %v840, %v936
        %v969 = vsub.f32 %v841, %v937
        %v970 = vsub.f32 %v842, %v938
        %v971 = vsub.f32 %v843, %v939
        %v972 = vsub.f32 %v844, %v940
        %v973 = vsub.f32 %v845, %v941
        %v974 = vmul.f32 %v958, 1.442695
        %v975 = vpow.pop %v974
        %v976 = vmul.f32 %v959, 1.442695
        %v977 = vpow.pop %v976
        %v978 = vmul.f32 %v960, 1.442695
        %v979 = vpow.pop %v978
        %v980 = vmul.f32 %v961, 1.442695
        %v981 = vpow.pop %v980
        %v982 = vmul.f32 %v962, 1.442695
        %v983 = vpow.pop %v982
        %v984 = vmul.f32 %v963, 1.442695
        %v985 = vpow.pop %v984
        %v986 = vmul.f32 %v964, 1.442695
        %v987 = vpow.pop %v986
        %v988 = vmul.f32 %v965, 1.442695
        %v989 = vpow.pop %v988
        %v990 = vmul.f32 %v966, 1.442695
        %v991 = vpow.pop %v990
        %v992 = vmul.f32 %v967, 1.442695
        %v993 = vpow.pop %v992
        %v994 = vmul.f32 %v968, 1.442695
        %v995 = vpow.pop %v994
        %v996 = vmul.f32 %v969, 1.442695
        %v997 = vpow.pop %v996
        %v998 = vmul.f32 %v970, 1.442695
        %v999 = vpow.pop %v998
        %v1000 = vmul.f32 %v971, 1.442695
        %v1001 = vpow.pop %v1000
        %v1002 = vmul.f32 %v972, 1.442695
        %v1003 = vpow.pop %v1002
        %v1004 = vmul.f32 %v973, 1.442695
        %v1005 = vpow.pop %v1004
        %v1006 = vmul.f32 %v942, %v975
        %v1007 = vmul.f32 %v943, %v977
        %v1008 = vmul.f32 %v944, %v979
        %v1009 = vmul.f32 %v945, %v981
        %v1010 = vmul.f32 %v946, %v983
        %v1011 = vmul.f32 %v947, %v985
        %v1012 = vmul.f32 %v948, %v987
        %v1013 = vmul.f32 %v949, %v989
        %v1014 = vmul.f32 %v950, %v991
        %v1015 = vmul.f32 %v951, %v993
        %v1016 = vmul.f32 %v952, %v995
        %v1017 = vmul.f32 %v953, %v997
        %v1018 = vmul.f32 %v954, %v999
        %v1019 = vmul.f32 %v955, %v1001
        %v1020 = vmul.f32 %v956, %v1003
        %v1021 = vmul.f32 %v957, %v1005
        %1023 = vset.pattern.permute.xlu0 0
        %1024 = vperm.xlu0 %1023, %v926
        %v1025 = vpop.permute.xlu0 %1024
        %1028 = vset.pattern.permute.xlu0 0
        %1029 = vperm.xlu0 %1028, %v927
        %v1030 = vpop.permute.xlu0 %1029
        %1033 = vset.pattern.permute.xlu0 0
        %1034 = vperm.xlu0 %1033, %v928
        %v1035 = vpop.permute.xlu0 %1034
        %1038 = vset.pattern.permute.xlu0 0
        %1039 = vperm.xlu0 %1038, %v929
        %v1040 = vpop.permute.xlu0 %1039
        %1043 = vset.pattern.permute.xlu0 0
        %1044 = vperm.xlu0 %1043, %v930
        %v1045 = vpop.permute.xlu0 %1044
        %1048 = vset.pattern.permute.xlu0 0
        %1049 = vperm.xlu0 %1048, %v931
        %v1050 = vpop.permute.xlu0 %1049
        %1053 = vset.pattern.permute.xlu0 0
        %1054 = vperm.xlu0 %1053, %v932
        %v1055 = vpop.permute.xlu0 %1054
        %1058 = vset.pattern.permute.xlu0 0
        %1059 = vperm.xlu0 %1058, %v933
        %v1060 = vpop.permute.xlu0 %1059
        %1063 = vset.pattern.permute.xlu0 0
        %1064 = vperm.xlu0 %1063, %v934
        %v1065 = vpop.permute.xlu0 %1064
        %1068 = vset.pattern.permute.xlu0 0
        %1069 = vperm.xlu0 %1068, %v935
        %v1070 = vpop.permute.xlu0 %1069
        %1073 = vset.pattern.permute.xlu0 0
        %1074 = vperm.xlu0 %1073, %v936
        %v1075 = vpop.permute.xlu0 %1074
        %1078 = vset.pattern.permute.xlu0 0
        %1079 = vperm.xlu0 %1078, %v937
        %v1080 = vpop.permute.xlu0 %1079
        %1083 = vset.pattern.permute.xlu0 0
        %1084 = vperm.xlu0 %1083, %v938
        %v1085 = vpop.permute.xlu0 %1084
        %1088 = vset.pattern.permute.xlu0 0
        %1089 = vperm.xlu0 %1088, %v939
        %v1090 = vpop.permute.xlu0 %1089
        %1093 = vset.pattern.permute.xlu0 0
        %1094 = vperm.xlu0 %1093, %v940
        %v1095 = vpop.permute.xlu0 %1094
        %1098 = vset.pattern.permute.xlu0 0
        %1099 = vperm.xlu0 %1098, %v941
        %v1100 = vpop.permute.xlu0 %1099
        %v1102 = vsub.f32 %v434, %v1025
        %v1103 = vsub.f32 %v435, %v1025
        %v1104 = vsub.f32 %v436, %v1025
        %v1105 = vsub.f32 %v437, %v1025
        %v1106 = vsub.f32 %v438, %v1030
        %v1107 = vsub.f32 %v439, %v1030
        %v1108 = vsub.f32 %v440, %v1030
        %v1109 = vsub.f32 %v441, %v1030
        %v1110 = vsub.f32 %v442, %v1035
        %v1111 = vsub.f32 %v443, %v1035
        %v1112 = vsub.f32 %v444, %v1035
        %v1113 = vsub.f32 %v445, %v1035
        %v1114 = vsub.f32 %v446, %v1040
        %v1115 = vsub.f32 %v447, %v1040
        %v1116 = vsub.f32 %v448, %v1040
        %v1117 = vsub.f32 %v449, %v1040
        %v1118 = vsub.f32 %v450, %v1045
        %v1119 = vsub.f32 %v451, %v1045
        %v1120 = vsub.f32 %v452, %v1045
        %v1121 = vsub.f32 %v453, %v1045
        %v1122 = vsub.f32 %v454, %v1050
        %v1123 = vsub.f32 %v455, %v1050
        %v1124 = vsub.f32 %v456, %v1050
        %v1125 = vsub.f32 %v457, %v1050
        %v1126 = vsub.f32 %v458, %v1055
        %v1127 = vsub.f32 %v459, %v1055
        %v1128 = vsub.f32 %v460, %v1055
        %v1129 = vsub.f32 %v461, %v1055
        %v1130 = vsub.f32 %v462, %v1060
        %v1131 = vsub.f32 %v463, %v1060
        %v1132 = vsub.f32 %v464, %v1060
        %v1133 = vsub.f32 %v465, %v1060
        %v1134 = vsub.f32 %v466, %v1065
        %v1135 = vsub.f32 %v467, %v1065
        %v1136 = vsub.f32 %v468, %v1065
        %v1137 = vsub.f32 %v469, %v1065
        %v1138 = vsub.f32 %v470, %v1070
        %v1139 = vsub.f32 %v471, %v1070
        %v1140 = vsub.f32 %v472, %v1070
        %v1141 = vsub.f32 %v473, %v1070
        %v1142 = vsub.f32 %v474, %v1075
        %v1143 = vsub.f32 %v475, %v1075
        %v1144 = vsub.f32 %v476, %v1075
        %v1145 = vsub.f32 %v477, %v1075
        %v1146 = vsub.f32 %v478, %v1080
        %v1147 = vsub.f32 %v479, %v1080
        %v1148 = vsub.f32 %v480, %v1080
        %v1149 = vsub.f32 %v481, %v1080
        %v1150 = vsub.f32 %v482, %v1085
        %v1151 = vsub.f32 %v483, %v1085
        %v1152 = vsub.f32 %v484, %v1085
        %v1153 = vsub.f32 %v485, %v1085
        %v1154 = vsub.f32 %v486, %v1090
        %v1155 = vsub.f32 %v487, %v1090
        %v1156 = vsub.f32 %v488, %v1090
        %v1157 = vsub.f32 %v489, %v1090
        %v1158 = vsub.f32 %v490, %v1095
        %v1159 = vsub.f32 %v491, %v1095
        %v1160 = vsub.f32 %v492, %v1095
        %v1161 = vsub.f32 %v493, %v1095
        %v1162 = vsub.f32 %v494, %v1100
        %v1163 = vsub.f32 %v495, %v1100
        %v1164 = vsub.f32 %v496, %v1100
        %v1165 = vsub.f32 %v497, %v1100
        %v1166 = vmul.f32 %v1102, 1.442695
        %v1167 = vpow.pop %v1166
        %v1168 = vmul.f32 %v1103, 1.442695
        %v1169 = vpow.pop %v1168
        %v1170 = vmul.f32 %v1104, 1.442695
        %v1171 = vpow.pop %v1170
        %v1172 = vmul.f32 %v1105, 1.442695
        %v1173 = vpow.pop %v1172
        %v1174 = vmul.f32 %v1106, 1.442695
        %v1175 = vpow.pop %v1174
        %v1176 = vmul.f32 %v1107, 1.442695
        %v1177 = vpow.pop %v1176
        %v1178 = vmul.f32 %v1108, 1.442695
        %v1179 = vpow.pop %v1178
        %v1180 = vmul.f32 %v1109, 1.442695
        %v1181 = vpow.pop %v1180
        %v1182 = vmul.f32 %v1110, 1.442695
        %v1183 = vpow.pop %v1182
        %v1184 = vmul.f32 %v1111, 1.442695
        %v1185 = vpow.pop %v1184
        %v1186 = vmul.f32 %v1112, 1.442695
        %v1187 = vpow.pop %v1186
        %v1188 = vmul.f32 %v1113, 1.442695
        %v1189 = vpow.pop %v1188
        %v1190 = vmul.f32 %v1114, 1.442695
        %v1191 = vpow.pop %v1190
        %v1192 = vmul.f32 %v1115, 1.442695
        %v1193 = vpow.pop %v1192
        %v1194 = vmul.f32 %v1116, 1.442695
        %v1195 = vpow.pop %v1194
        %v1196 = vmul.f32 %v1117, 1.442695
        %v1197 = vpow.pop %v1196
        %v1198 = vmul.f32 %v1118, 1.442695
        %v1199 = vpow.pop %v1198
        %v1200 = vmul.f32 %v1119, 1.442695
        %v1201 = vpow.pop %v1200
        %v1202 = vmul.f32 %v1120, 1.442695
        %v1203 = vpow.pop %v1202
        %v1204 = vmul.f32 %v1121, 1.442695
        %v1205 = vpow.pop %v1204
        %v1206 = vmul.f32 %v1122, 1.442695
        %v1207 = vpow.pop %v1206
        %v1208 = vmul.f32 %v1123, 1.442695
        %v1209 = vpow.pop %v1208
        %v1210 = vmul.f32 %v1124, 1.442695
        %v1211 = vpow.pop %v1210
        %v1212 = vmul.f32 %v1125, 1.442695
        %v1213 = vpow.pop %v1212
        %v1214 = vmul.f32 %v1126, 1.442695
        %v1215 = vpow.pop %v1214
        %v1216 = vmul.f32 %v1127, 1.442695
        %v1217 = vpow.pop %v1216
        %v1218 = vmul.f32 %v1128, 1.442695
        %v1219 = vpow.pop %v1218
        %v1220 = vmul.f32 %v1129, 1.442695
        %v1221 = vpow.pop %v1220
        %v1222 = vmul.f32 %v1130, 1.442695
        %v1223 = vpow.pop %v1222
        %v1224 = vmul.f32 %v1131, 1.442695
        %v1225 = vpow.pop %v1224
        %v1226 = vmul.f32 %v1132, 1.442695
        %v1227 = vpow.pop %v1226
        %v1228 = vmul.f32 %v1133, 1.442695
        %v1229 = vpow.pop %v1228
        %v1230 = vmul.f32 %v1134, 1.442695
        %v1231 = vpow.pop %v1230
        %v1232 = vmul.f32 %v1135, 1.442695
        %v1233 = vpow.pop %v1232
        %v1234 = vmul.f32 %v1136, 1.442695
        %v1235 = vpow.pop %v1234
        %v1236 = vmul.f32 %v1137, 1.442695
        %v1237 = vpow.pop %v1236
        %v1238 = vmul.f32 %v1138, 1.442695
        %v1239 = vpow.pop %v1238
        %v1240 = vmul.f32 %v1139, 1.442695
        %v1241 = vpow.pop %v1240
        %v1242 = vmul.f32 %v1140, 1.442695
        %v1243 = vpow.pop %v1242
        %v1244 = vmul.f32 %v1141, 1.442695
        %v1245 = vpow.pop %v1244
        %v1246 = vmul.f32 %v1142, 1.442695
        %v1247 = vpow.pop %v1246
        %v1248 = vmul.f32 %v1143, 1.442695
        %v1249 = vpow.pop %v1248
        %v1250 = vmul.f32 %v1144, 1.442695
        %v1251 = vpow.pop %v1250
        %v1252 = vmul.f32 %v1145, 1.442695
        %v1253 = vpow.pop %v1252
        %v1254 = vmul.f32 %v1146, 1.442695
        %v1255 = vpow.pop %v1254
        %v1256 = vmul.f32 %v1147, 1.442695
        %v1257 = vpow.pop %v1256
        %v1258 = vmul.f32 %v1148, 1.442695
        %v1259 = vpow.pop %v1258
        %v1260 = vmul.f32 %v1149, 1.442695
        %v1261 = vpow.pop %v1260
        %v1262 = vmul.f32 %v1150, 1.442695
        %v1263 = vpow.pop %v1262
        %v1264 = vmul.f32 %v1151, 1.442695
        %v1265 = vpow.pop %v1264
        %v1266 = vmul.f32 %v1152, 1.442695
        %v1267 = vpow.pop %v1266
        %v1268 = vmul.f32 %v1153, 1.442695
        %v1269 = vpow.pop %v1268
        %v1270 = vmul.f32 %v1154, 1.442695
        %v1271 = vpow.pop %v1270
        %v1272 = vmul.f32 %v1155, 1.442695
        %v1273 = vpow.pop %v1272
        %v1274 = vmul.f32 %v1156, 1.442695
        %v1275 = vpow.pop %v1274
        %v1276 = vmul.f32 %v1157, 1.442695
        %v1277 = vpow.pop %v1276
        %v1278 = vmul.f32 %v1158, 1.442695
        %v1279 = vpow.pop %v1278
        %v1280 = vmul.f32 %v1159, 1.442695
        %v1281 = vpow.pop %v1280
        %v1282 = vmul.f32 %v1160, 1.442695
        %v1283 = vpow.pop %v1282
        %v1284 = vmul.f32 %v1161, 1.442695
        %v1285 = vpow.pop %v1284
        %v1286 = vmul.f32 %v1162, 1.442695
        %v1287 = vpow.pop %v1286
        %v1288 = vmul.f32 %v1163, 1.442695
        %v1289 = vpow.pop %v1288
        %v1290 = vmul.f32 %v1164, 1.442695
        %v1291 = vpow.pop %v1290
        %v1292 = vmul.f32 %v1165, 1.442695
        %v1293 = vpow.pop %v1292
        %v1294 = vadd.f32 %v1167, %v1169
        %v1295 = vadd.f32 %v1294, %v1171
        %v1296 = vadd.f32 %v1295, %v1173
        %1297 = vadd.xlane.f32.xlu0 %v1296
        %v1298 = vpop.xlane.xlu0 %1297
        %v1299 = vadd.f32 %v1175, %v1177
        %v1300 = vadd.f32 %v1299, %v1179
        %v1301 = vadd.f32 %v1300, %v1181
        %1302 = vadd.xlane.f32.xlu0 %v1301
        %v1303 = vpop.xlane.xlu0 %1302
        %v1304 = vadd.f32 %v1183, %v1185
        %v1305 = vadd.f32 %v1304, %v1187
        %v1306 = vadd.f32 %v1305, %v1189
        %1307 = vadd.xlane.f32.xlu0 %v1306
        %v1308 = vpop.xlane.xlu0 %1307
        %v1309 = vadd.f32 %v1191, %v1193
        %v1310 = vadd.f32 %v1309, %v1195
        %v1311 = vadd.f32 %v1310, %v1197
        %1312 = vadd.xlane.f32.xlu0 %v1311
        %v1313 = vpop.xlane.xlu0 %1312
        %v1314 = vadd.f32 %v1199, %v1201
        %v1315 = vadd.f32 %v1314, %v1203
        %v1316 = vadd.f32 %v1315, %v1205
        %1317 = vadd.xlane.f32.xlu0 %v1316
        %v1318 = vpop.xlane.xlu0 %1317
        %v1319 = vadd.f32 %v1207, %v1209
        %v1320 = vadd.f32 %v1319, %v1211
        %v1321 = vadd.f32 %v1320, %v1213
        %1322 = vadd.xlane.f32.xlu0 %v1321
        %v1323 = vpop.xlane.xlu0 %1322
        %v1324 = vadd.f32 %v1215, %v1217
        %v1325 = vadd.f32 %v1324, %v1219
        %v1326 = vadd.f32 %v1325, %v1221
        %1327 = vadd.xlane.f32.xlu0 %v1326
        %v1328 = vpop.xlane.xlu0 %1327
        %v1329 = vadd.f32 %v1223, %v1225
        %v1330 = vadd.f32 %v1329, %v1227
        %v1331 = vadd.f32 %v1330, %v1229
        %1332 = vadd.xlane.f32.xlu0 %v1331
        %v1333 = vpop.xlane.xlu0 %1332
        %v1334 = vadd.f32 %v1231, %v1233
        %v1335 = vadd.f32 %v1334, %v1235
        %v1336 = vadd.f32 %v1335, %v1237
        %1337 = vadd.xlane.f32.xlu0 %v1336
        %v1338 = vpop.xlane.xlu0 %1337
        %v1339 = vadd.f32 %v1239, %v1241
        %v1340 = vadd.f32 %v1339, %v1243
        %v1341 = vadd.f32 %v1340, %v1245
        %1342 = vadd.xlane.f32.xlu0 %v1341
        %v1343 = vpop.xlane.xlu0 %1342
        %v1344 = vadd.f32 %v1247, %v1249
        %v1345 = vadd.f32 %v1344, %v1251
        %v1346 = vadd.f32 %v1345, %v1253
        %1347 = vadd.xlane.f32.xlu0 %v1346
        %v1348 = vpop.xlane.xlu0 %1347
        %v1349 = vadd.f32 %v1255, %v1257
        %v1350 = vadd.f32 %v1349, %v1259
        %v1351 = vadd.f32 %v1350, %v1261
        %1352 = vadd.xlane.f32.xlu0 %v1351
        %v1353 = vpop.xlane.xlu0 %1352
        %v1354 = vadd.f32 %v1263, %v1265
        %v1355 = vadd.f32 %v1354, %v1267
        %v1356 = vadd.f32 %v1355, %v1269
        %1357 = vadd.xlane.f32.xlu0 %v1356
        %v1358 = vpop.xlane.xlu0 %1357
        %v1359 = vadd.f32 %v1271, %v1273
        %v1360 = vadd.f32 %v1359, %v1275
        %v1361 = vadd.f32 %v1360, %v1277
        %1362 = vadd.xlane.f32.xlu0 %v1361
        %v1363 = vpop.xlane.xlu0 %1362
        %v1364 = vadd.f32 %v1279, %v1281
        %v1365 = vadd.f32 %v1364, %v1283
        %v1366 = vadd.f32 %v1365, %v1285
        %1367 = vadd.xlane.f32.xlu0 %v1366
        %v1368 = vpop.xlane.xlu0 %1367
        %v1369 = vadd.f32 %v1287, %v1289
        %v1370 = vadd.f32 %v1369, %v1291
        %v1371 = vadd.f32 %v1370, %v1293
        %1372 = vadd.xlane.f32.xlu0 %v1371
        %v1373 = vpop.xlane.xlu0 %1372
        %v1374 = vadd.f32 %v1006, %v1298
        %v1375 = vadd.f32 %v1007, %v1303
        %v1376 = vadd.f32 %v1008, %v1308
        %v1377 = vadd.f32 %v1009, %v1313
        %v1378 = vadd.f32 %v1010, %v1318
        %v1379 = vadd.f32 %v1011, %v1323
        %v1380 = vadd.f32 %v1012, %v1328
        %v1381 = vadd.f32 %v1013, %v1333
        %v1382 = vadd.f32 %v1014, %v1338
        %v1383 = vadd.f32 %v1015, %v1343
        %v1384 = vadd.f32 %v1016, %v1348
        %v1385 = vadd.f32 %v1017, %v1353
        %v1386 = vadd.f32 %v1018, %v1358
        %v1387 = vadd.f32 %v1019, %v1363
        %v1388 = vadd.f32 %v1020, %v1368
        %v1389 = vadd.f32 %v1021, %v1373
        %1390 = vst.msk [vmem:[#allocation3] sm:$0xff] %vm813, %v1374
        %1391 = vst.msk [vmem:[#allocation3 + $0x8] sm:$0xff] %vm813, %v1375
        %1392 = vst.msk [vmem:[#allocation3 + $0x10] sm:$0xff] %vm813, %v1376
        %1393 = vst.msk [vmem:[#allocation3 + $0x18] sm:$0xff] %vm813, %v1377
        %1394 = vst.msk [vmem:[#allocation3 + $0x20] sm:$0xff] %vm813, %v1378
        %1395 = vst.msk [vmem:[#allocation3 + $0x28] sm:$0xff] %vm813, %v1379
        %1396 = vst.msk [vmem:[#allocation3 + $0x30] sm:$0xff] %vm813, %v1380
        %1397 = vst.msk [vmem:[#allocation3 + $0x38] sm:$0xff] %vm813, %v1381
        %1398 = vst.msk [vmem:[#allocation3 + $0x40] sm:$0xff] %vm813, %v1382
        %1399 = vst.msk [vmem:[#allocation3 + $0x48] sm:$0xff] %vm813, %v1383
        %1400 = vst.msk [vmem:[#allocation3 + $0x50] sm:$0xff] %vm813, %v1384
        %1401 = vst.msk [vmem:[#allocation3 + $0x58] sm:$0xff] %vm813, %v1385
        %1402 = vst.msk [vmem:[#allocation3 + $0x60] sm:$0xff] %vm813, %v1386
        %1403 = vst.msk [vmem:[#allocation3 + $0x68] sm:$0xff] %vm813, %v1387
        %1404 = vst.msk [vmem:[#allocation3 + $0x70] sm:$0xff] %vm813, %v1388
        %1405 = vst.msk [vmem:[#allocation3 + $0x78] sm:$0xff] %vm813, %v1389
        %1406 = vst.msk [vmem:[#allocation2] sm:$0xff] %vm813, %v926
        %1407 = vst.msk [vmem:[#allocation2 + $0x8] sm:$0xff] %vm813, %v927
        %1408 = vst.msk [vmem:[#allocation2 + $0x10] sm:$0xff] %vm813, %v928
        %1409 = vst.msk [vmem:[#allocation2 + $0x18] sm:$0xff] %vm813, %v929
        %1410 = vst.msk [vmem:[#allocation2 + $0x20] sm:$0xff] %vm813, %v930
        %1411 = vst.msk [vmem:[#allocation2 + $0x28] sm:$0xff] %vm813, %v931
        %1412 = vst.msk [vmem:[#allocation2 + $0x30] sm:$0xff] %vm813, %v932
        %1413 = vst.msk [vmem:[#allocation2 + $0x38] sm:$0xff] %vm813, %v933
        %1414 = vst.msk [vmem:[#allocation2 + $0x40] sm:$0xff] %vm813, %v934
        %1415 = vst.msk [vmem:[#allocation2 + $0x48] sm:$0xff] %vm813, %v935
        %1416 = vst.msk [vmem:[#allocation2 + $0x50] sm:$0xff] %vm813, %v936
        %1417 = vst.msk [vmem:[#allocation2 + $0x58] sm:$0xff] %vm813, %v937
        %1418 = vst.msk [vmem:[#allocation2 + $0x60] sm:$0xff] %vm813, %v938
        %1419 = vst.msk [vmem:[#allocation2 + $0x68] sm:$0xff] %vm813, %v939
        %1420 = vst.msk [vmem:[#allocation2 + $0x70] sm:$0xff] %vm813, %v940
        %1421 = vst.msk [vmem:[#allocation2 + $0x78] sm:$0xff] %vm813, %v941
        %p1422 = scmp.eq.s32.totalorder %s19, 1
        // Predicated region
        $region60: #{forward.13} parent=50 // pred_check
          %p1423 = pneg %p1422
        $region61: #{forward.13} parent=50 // pred_check_branch
          %1425 = sbr.rel (%p1423) target = $region63
        $region62: #{forward.13} parent=50 // pred_region
          %v1426 = vld [vmem:[#allocation2] sm:$0xff]
          %v1427 = vld [vmem:[#allocation2 + $0x8] sm:$0xff]
          %v1428 = vld [vmem:[#allocation2 + $0x10] sm:$0xff]
          %v1429 = vld [vmem:[#allocation2 + $0x18] sm:$0xff]
          %v1430 = vld [vmem:[#allocation2 + $0x20] sm:$0xff]
          %v1431 = vld [vmem:[#allocation2 + $0x28] sm:$0xff]
          %v1432 = vld [vmem:[#allocation2 + $0x30] sm:$0xff]
          %v1433 = vld [vmem:[#allocation2 + $0x38] sm:$0xff]
          %v1434 = vld [vmem:[#allocation2 + $0x40] sm:$0xff]
          %v1435 = vld [vmem:[#allocation2 + $0x48] sm:$0xff]
          %v1436 = vld [vmem:[#allocation2 + $0x50] sm:$0xff]
          %v1437 = vld [vmem:[#allocation2 + $0x58] sm:$0xff]
          %v1438 = vld [vmem:[#allocation2 + $0x60] sm:$0xff]
          %v1439 = vld [vmem:[#allocation2 + $0x68] sm:$0xff]
          %v1440 = vld [vmem:[#allocation2 + $0x70] sm:$0xff]
          %v1441 = vld [vmem:[#allocation2 + $0x78] sm:$0xff]
          %v1442 = vld [vmem:[#allocation3] sm:$0xff]
          %v1443 = vld [vmem:[#allocation3 + $0x8] sm:$0xff]
          %v1444 = vld [vmem:[#allocation3 + $0x10] sm:$0xff]
          %v1445 = vld [vmem:[#allocation3 + $0x18] sm:$0xff]
          %v1446 = vld [vmem:[#allocation3 + $0x20] sm:$0xff]
          %v1447 = vld [vmem:[#allocation3 + $0x28] sm:$0xff]
          %v1448 = vld [vmem:[#allocation3 + $0x30] sm:$0xff]
          %v1449 = vld [vmem:[#allocation3 + $0x38] sm:$0xff]
          %v1450 = vld [vmem:[#allocation3 + $0x40] sm:$0xff]
          %v1451 = vld [vmem:[#allocation3 + $0x48] sm:$0xff]
          %v1452 = vld [vmem:[#allocation3 + $0x50] sm:$0xff]
          %v1453 = vld [vmem:[#allocation3 + $0x58] sm:$0xff]
          %v1454 = vld [vmem:[#allocation3 + $0x60] sm:$0xff]
          %v1455 = vld [vmem:[#allocation3 + $0x68] sm:$0xff]
          %v1456 = vld [vmem:[#allocation3 + $0x70] sm:$0xff]
          %v1457 = vld [vmem:[#allocation3 + $0x78] sm:$0xff]
          %v1458 = vlog2.pop %v1442
          %v1459 = vmul.f32 %v1458, 0.6931472
          %v1460 = vlog2.pop %v1443
          %v1461 = vmul.f32 %v1460, 0.6931472
          %v1462 = vlog2.pop %v1444
          %v1463 = vmul.f32 %v1462, 0.6931472
          %v1464 = vlog2.pop %v1445
          %v1465 = vmul.f32 %v1464, 0.6931472
          %v1466 = vlog2.pop %v1446
          %v1467 = vmul.f32 %v1466, 0.6931472
          %v1468 = vlog2.pop %v1447
          %v1469 = vmul.f32 %v1468, 0.6931472
          %v1470 = vlog2.pop %v1448
          %v1471 = vmul.f32 %v1470, 0.6931472
          %v1472 = vlog2.pop %v1449
          %v1473 = vmul.f32 %v1472, 0.6931472
          %v1474 = vlog2.pop %v1450
          %v1475 = vmul.f32 %v1474, 0.6931472
          %v1476 = vlog2.pop %v1451
          %v1477 = vmul.f32 %v1476, 0.6931472
          %v1478 = vlog2.pop %v1452
          %v1479 = vmul.f32 %v1478, 0.6931472
          %v1480 = vlog2.pop %v1453
          %v1481 = vmul.f32 %v1480, 0.6931472
          %v1482 = vlog2.pop %v1454
          %v1483 = vmul.f32 %v1482, 0.6931472
          %v1484 = vlog2.pop %v1455
          %v1485 = vmul.f32 %v1484, 0.6931472
          %v1486 = vlog2.pop %v1456
          %v1487 = vmul.f32 %v1486, 0.6931472
          %v1488 = vlog2.pop %v1457
          %v1489 = vmul.f32 %v1488, 0.6931472
          %v1490 = vadd.f32 %v1426, %v1459
          %v1491 = vadd.f32 %v1427, %v1461
          %v1492 = vadd.f32 %v1428, %v1463
          %v1493 = vadd.f32 %v1429, %v1465
          %v1494 = vadd.f32 %v1430, %v1467
          %v1495 = vadd.f32 %v1431, %v1469
          %v1496 = vadd.f32 %v1432, %v1471
          %v1497 = vadd.f32 %v1433, %v1473
          %v1498 = vadd.f32 %v1434, %v1475
          %v1499 = vadd.f32 %v1435, %v1477
          %v1500 = vadd.f32 %v1436, %v1479
          %v1501 = vadd.f32 %v1437, %v1481
          %v1502 = vadd.f32 %v1438, %v1483
          %v1503 = vadd.f32 %v1439, %v1485
          %v1504 = vadd.f32 %v1440, %v1487
          %v1505 = vadd.f32 %v1441, %v1489
          %v1506 = vld [vmem:[#allocation4] sm:$0xff]
          %v1507 = vld [vmem:[#allocation4 + $0x8] sm:$0xff]
          %v1508 = vld [vmem:[#allocation4 + $0x10] sm:$0xff]
          %v1509 = vld [vmem:[#allocation4 + $0x18] sm:$0xff]
          %v1510 = vld [vmem:[#allocation4 + $0x20] sm:$0xff]
          %v1511 = vld [vmem:[#allocation4 + $0x28] sm:$0xff]
          %v1512 = vld [vmem:[#allocation4 + $0x30] sm:$0xff]
          %v1513 = vld [vmem:[#allocation4 + $0x38] sm:$0xff]
          %v1514 = vld [vmem:[#allocation4 + $0x40] sm:$0xff]
          %v1515 = vld [vmem:[#allocation4 + $0x48] sm:$0xff]
          %v1516 = vld [vmem:[#allocation4 + $0x50] sm:$0xff]
          %v1517 = vld [vmem:[#allocation4 + $0x58] sm:$0xff]
          %v1518 = vld [vmem:[#allocation4 + $0x60] sm:$0xff]
          %v1519 = vld [vmem:[#allocation4 + $0x68] sm:$0xff]
          %v1520 = vld [vmem:[#allocation4 + $0x70] sm:$0xff]
          %v1521 = vld [vmem:[#allocation4 + $0x78] sm:$0xff]
          %v1522 = vsub.f32 %v1490, %v1506
          %v1523 = vsub.f32 %v1491, %v1507
          %v1524 = vsub.f32 %v1492, %v1508
          %v1525 = vsub.f32 %v1493, %v1509
          %v1526 = vsub.f32 %v1494, %v1510
          %v1527 = vsub.f32 %v1495, %v1511
          %v1528 = vsub.f32 %v1496, %v1512
          %v1529 = vsub.f32 %v1497, %v1513
          %v1530 = vsub.f32 %v1498, %v1514
          %v1531 = vsub.f32 %v1499, %v1515
          %v1532 = vsub.f32 %v1500, %v1516
          %v1533 = vsub.f32 %v1501, %v1517
          %v1534 = vsub.f32 %v1502, %v1518
          %v1535 = vsub.f32 %v1503, %v1519
          %v1536 = vsub.f32 %v1504, %v1520
          %v1537 = vsub.f32 %v1505, %v1521
          %v1538 = vld [vmem:[%s373] sm:$0xff]
          %v1539 = vld [vmem:[%s373 + $0x8] sm:$0xff]
          %v1540 = vld [vmem:[%s373 + $0x10] sm:$0xff]
          %v1541 = vld [vmem:[%s373 + $0x18] sm:$0xff]
          %v1542 = vld [vmem:[%s373 + $0x20] sm:$0xff]
          %v1543 = vld [vmem:[%s373 + $0x28] sm:$0xff]
          %v1544 = vld [vmem:[%s373 + $0x30] sm:$0xff]
          %v1545 = vld [vmem:[%s373 + $0x38] sm:$0xff]
          %v1546 = vld [vmem:[%s373 + $0x40] sm:$0xff]
          %v1547 = vld [vmem:[%s373 + $0x48] sm:$0xff]
          %v1548 = vld [vmem:[%s373 + $0x50] sm:$0xff]
          %v1549 = vld [vmem:[%s373 + $0x58] sm:$0xff]
          %v1550 = vld [vmem:[%s373 + $0x60] sm:$0xff]
          %v1551 = vld [vmem:[%s373 + $0x68] sm:$0xff]
          %v1552 = vld [vmem:[%s373 + $0x70] sm:$0xff]
          %v1553 = vld [vmem:[%s373 + $0x78] sm:$0xff]
          %v1554 = vmul.f32 %v1522, %v1538
          %v1555 = vmul.f32 %v1523, %v1539
          %v1556 = vmul.f32 %v1524, %v1540
          %v1557 = vmul.f32 %v1525, %v1541
          %v1558 = vmul.f32 %v1526, %v1542
          %v1559 = vmul.f32 %v1527, %v1543
          %v1560 = vmul.f32 %v1528, %v1544
          %v1561 = vmul.f32 %v1529, %v1545
          %v1562 = vmul.f32 %v1530, %v1546
          %v1563 = vmul.f32 %v1531, %v1547
          %v1564 = vmul.f32 %v1532, %v1548
          %v1565 = vmul.f32 %v1533, %v1549
          %v1566 = vmul.f32 %v1534, %v1550
          %v1567 = vmul.f32 %v1535, %v1551
          %v1568 = vmul.f32 %v1536, %v1552
          %v1569 = vmul.f32 %v1537, %v1553
          %1570 = vst.msk [vmem:[%s379] sm:$0xff] %vm813, %v1554
          %1571 = vst.msk [vmem:[%s379 + $0x8] sm:$0xff] %vm813, %v1555
          %1572 = vst.msk [vmem:[%s379 + $0x10] sm:$0xff] %vm813, %v1556
          %1573 = vst.msk [vmem:[%s379 + $0x18] sm:$0xff] %vm813, %v1557
          %1574 = vst.msk [vmem:[%s379 + $0x20] sm:$0xff] %vm813, %v1558
          %1575 = vst.msk [vmem:[%s379 + $0x28] sm:$0xff] %vm813, %v1559
          %1576 = vst.msk [vmem:[%s379 + $0x30] sm:$0xff] %vm813, %v1560
          %1577 = vst.msk [vmem:[%s379 + $0x38] sm:$0xff] %vm813, %v1561
          %1578 = vst.msk [vmem:[%s379 + $0x40] sm:$0xff] %vm813, %v1562
          %1579 = vst.msk [vmem:[%s379 + $0x48] sm:$0xff] %vm813, %v1563
          %1580 = vst.msk [vmem:[%s379 + $0x50] sm:$0xff] %vm813, %v1564
          %1581 = vst.msk [vmem:[%s379 + $0x58] sm:$0xff] %vm813, %v1565
          %1582 = vst.msk [vmem:[%s379 + $0x60] sm:$0xff] %vm813, %v1566
          %1583 = vst.msk [vmem:[%s379 + $0x68] sm:$0xff] %vm813, %v1567
          %1584 = vst.msk [vmem:[%s379 + $0x70] sm:$0xff] %vm813, %v1568
          %1585 = vst.msk [vmem:[%s379 + $0x78] sm:$0xff] %vm813, %v1569
        $region63: #{forward.13} parent=50 // pred_fallthru
          _
        %s1586 = smul.u32 16, %s18
        %p1587 = scmp.lt.s32.totalorder %s1586, 15
        %s1588 = scalar_select %p1587, %s1586, 15
        %s1589 = smul.addr %s1588, 8
        %s1590 = scalar_lea.vmem %s3, %s1589
        // Predicated region
        $region64: #{forward.13} parent=50 // pred_check
          %p1591 = pneg %p124
        $region65: #{forward.13} parent=50 // pred_check_branch
          %1593 = sbr.rel (%p1591) target = $region67
        $region66: #{forward.13} parent=50 // pred_region
          %s1594 = smul.u32 16, %s18
        $region67: #{forward.13} parent=50 // pred_fallthru
          _
        // Predicated region
        $region68: #{forward.13} parent=50 // pred_check
          %p1595 = pneg %p124
        $region69: #{forward.13} parent=50 // pred_check_branch
          %1597 = sbr.rel (%p1595) target = $region71
        $region70: #{forward.13} parent=50 // pred_region
          %s1598 = smul.u32 16, %s18
          %p1599 = scmp.lt.s32.totalorder %s1598, 15
          %s1600 = scalar_select %p1599, %s1598, 15
          %s1601 = smul.addr %s1600, 8
          %s1602 = scalar_lea.vmem %s3, %s1601
        $region71: #{forward.13} parent=50 // pred_fallthru
          _
      $region51: #{forward.13} parent=5 // pred_fallthru
        _
      %p1603 = scmp.le.s32.totalorder 2, %s9
      // Predicated region
      $region72: #{forward.13} parent=5 // pred_check
        %p1604 = pneg %p1603
      $region73: #{forward.13} parent=5 // pred_check_branch
        %1606 = sbr.rel (%p1604) target = $region75
      $region74: #{forward.13} parent=5 // pred_region
        %s1607 = ssub.s32 %s9, 2
      $region75: #{forward.13} parent=5 // pred_fallthru
        _
    $region6: #{forward.13} parent=1 // loop_footer
      %s13 = sadd.s32 1, %s9
    $region7: #{forward.13} parent=1 // loop_footer_branch
      %8 = sbr.rel target = $region3
    $region8: #{forward.13} parent=1 // loop_exit
      _

</llo_original>
